<compile_context>
chip_gen: v7x
topology: tpu7x:2x2x1
jax: 0.10.0
libtpu: 0.0.40
codegen_flags: <defaults>
</compile_context>

<pallas_src>
import functools

import jax
import jax.numpy as jnp
from jax.experimental import pallas as pl
from jax.experimental.pallas import tpu as pltpu

# --- small, module-consistent shapes -----------------------------------------
NUM_LAYER = 2
D_MODEL = 32
D_FF = 64
NUM_HEAD = 4
SEQ = 8
BATCH = 2
LN_EPS = 1e-5
NEG_INF = -1e30

# encoder per-layer bias/LN rows: [bq, bk, bv, bo, attn_g, attn_b, b2, ffn_g, ffn_b]
_ENC_VEC_ROWS = 9
# decoder per-layer rows: self[bq,bk,bv,bo,g,b] + cross[bq,bk,bv,bo,g,b] + ffn[b2,g,b]
_DEC_VEC_ROWS = 15


# --- in-kernel helpers ---------------------------------------------------------
def _mm(a, b):
    """MXU matmul: bf16 operands, f32 accumulation."""
    return jnp.dot(a.astype(jnp.bfloat16), b.astype(jnp.bfloat16),
                   preferred_element_type=jnp.float32)


def _mm_t(a, b):
    """a @ b.T (contract last dims of both): bf16 operands, f32 accumulation."""
    return jax.lax.dot_general(
        a.astype(jnp.bfloat16), b.astype(jnp.bfloat16),
        (((1,), (1,)), ((), ())), preferred_element_type=jnp.float32)


def _layernorm(x, gamma, beta):
    mean = jnp.mean(x, axis=-1, keepdims=True)
    var = jnp.mean((x - mean) ** 2, axis=-1, keepdims=True)
    return (x - mean) * jax.lax.rsqrt(var + LN_EPS) * gamma + beta


def _row(ref, l, j):
    """(1, width) slice of a packed per-layer vector slab (static indices)."""
    return ref[l, j:j + 1, :]


def _split_heads(t, batch, seq, num_head, dh):
    """(B*S, nh*dh) -> (B*nh, S, dh) via static slices + stack."""
    parts = [t[b * seq:(b + 1) * seq, h * dh:(h + 1) * dh]
             for b in range(batch) for h in range(num_head)]
    return jnp.stack(parts, axis=0)


def _merge_heads(t, batch, num_head):
    """(B*nh, S, dh) -> (B*S, nh*dh) via concat along lanes then sublanes."""
    rows = [jnp.concatenate([t[b * num_head + h] for h in range(num_head)], axis=-1)
            for b in range(batch)]
    return jnp.concatenate(rows, axis=0)


def _mha_block(x_q, x_kv, w4, bq, bk, bv, bo, ln_g, ln_b, *,
               batch, num_head, attn_bias):
    """Multi-head attention + residual + post-LayerNorm over the whole batch.

    x_q:  (B*Sq, D) f32;  x_kv: (B*Sk, D) f32
    w4:   (4, D, D) bf16 = [Wq (scale pre-folded), Wk, Wv, Wo], applied as x @ W
    biases / LN params: (1, D) f32
    """
    m_q, d = x_q.shape
    sq = m_q // batch
    sk = x_kv.shape[0] // batch
    dh = d // num_head

    # Full-width projections (no per-head matmuls, no serial accumulate chain).
    q = _mm(x_q, w4[0]) + bq                             # (B*Sq, D)
    k = _mm(x_kv, w4[1]) + bk                            # (B*Sk, D)
    v = _mm(x_kv, w4[2]) + bv

    qh = _split_heads(q, batch, sq, num_head, dh)        # (B*nh, Sq, dh)
    kh = _split_heads(k, batch, sk, num_head, dh)        # (B*nh, Sk, dh)
    vh = _split_heads(v, batch, sk, num_head, dh)

    # Head-batched scores / context: single dot_generals over the B*nh axis.
    s = jnp.einsum('nqd,nkd->nqk', qh.astype(jnp.bfloat16),
                   kh.astype(jnp.bfloat16),
                   preferred_element_type=jnp.float32)   # (B*nh, Sq, Sk)
    if attn_bias is not None:
        s = s + attn_bias                                # broadcast over B*nh
    # f32 softmax with exact normalization (parity-safe).
    s = s - jnp.max(s, axis=-1, keepdims=True)
    p = jnp.exp(s)
    p = p / jnp.sum(p, axis=-1, keepdims=True)
    ctx = jnp.einsum('nqk,nkd->nqd', p.astype(jnp.bfloat16),
                     vh.astype(jnp.bfloat16),
                     preferred_element_type=jnp.float32)  # (B*nh, Sq, dh)

    ctx = _merge_heads(ctx, batch, num_head)             # (B*Sq, D)
    out = _mm(ctx, w4[3]) + bo                           # single output projection
    # dropout == identity (inference); residual + post-LN in f32.
    return _layernorm(x_q + out, ln_g, ln_b)


def _ffn_block(x, w2stk, b1, b2, ln_g, ln_b):
    """Position-wise FFN (ReLU) + residual + post-LayerNorm.

    w2stk: (2, D, D_FF) bf16 = [W1, W2^T].
    """
    h = jnp.maximum(_mm(x, w2stk[0]) + b1, 0.0)          # (B*S, D_FF)
    y = _mm_t(h, w2stk[1]) + b2                          # contract D_FF -> (B*S, D)
    return _layernorm(x + y, ln_g, ln_b)


def _encdec_kernel(enc_ref, dec_ref,
                   enc_attn_w, enc_ffn_w, enc_vec, enc_b1,
                   dec_attn_w, dec_ffn_w, dec_vec, dec_b1,
                   o_ref, *, num_layer, num_head, batch):
    sd = dec_ref.shape[0] // batch

    # Causal (look-ahead) mask, built once and reused by every decoder layer.
    rix = jax.lax.broadcasted_iota(jnp.int32, (sd, sd), 0)
    cix = jax.lax.broadcasted_iota(jnp.int32, (sd, sd), 1)
    causal = jnp.where(cix <= rix, 0.0, NEG_INF).astype(jnp.float32)

    # ---------------- encoder stack (activations stay VMEM/vreg resident) -----
    x = enc_ref[...]                                     # (B*Se, D) f32
    for l in range(num_layer):  # TODO(synk): layer grid axis / fori at 6+ layers
        x = _mha_block(x, x, enc_attn_w[l],
                       _row(enc_vec, l, 0), _row(enc_vec, l, 1),
                       _row(enc_vec, l, 2), _row(enc_vec, l, 3),
                       _row(enc_vec, l, 4), _row(enc_vec, l, 5),
                       batch=batch, num_head=num_head, attn_bias=None)
        x = _ffn_block(x, enc_ffn_w[l], _row(enc_b1, l, 0),
                       _row(enc_vec, l, 6), _row(enc_vec, l, 7),
                       _row(enc_vec, l, 8))

    # ---------------- decoder stack -------------------------------------------
    y = dec_ref[...]                                     # (B*Sd, D) f32
    for l in range(num_layer):
        y = _mha_block(y, y, dec_attn_w[l, 0],
                       _row(dec_vec, l, 0), _row(dec_vec, l, 1),
                       _row(dec_vec, l, 2), _row(dec_vec, l, 3),
                       _row(dec_vec, l, 4), _row(dec_vec, l, 5),
                       batch=batch, num_head=num_head, attn_bias=causal)
        y = _mha_block(y, x, dec_attn_w[l, 1],
                       _row(dec_vec, l, 6), _row(dec_vec, l, 7),
                       _row(dec_vec, l, 8), _row(dec_vec, l, 9),
                       _row(dec_vec, l, 10), _row(dec_vec, l, 11),
                       batch=batch, num_head=num_head, attn_bias=None)
        y = _ffn_block(y, dec_ffn_w[l], _row(dec_b1, l, 0),
                       _row(dec_vec, l, 12), _row(dec_vec, l, 13),
                       _row(dec_vec, l, 14))

    o_ref[...] = y.astype(o_ref.dtype)


# --- pallas_call wrapper --------------------------------------------------------
def transformer_encoder_decoder(embed_encoder_input, embed_decoder_input, params,
                                padding_mask=None, *, num_head=NUM_HEAD):
    """Fused Pallas forward of the encoder-decoder stack (inference semantics)."""
    if padding_mask is not None:
        # TODO(synk): key-padding mask not wired into the kernel.
        raise NotImplementedError("padding_mask is not supported by this kernel")

    B, Se, D = embed_encoder_input.shape
    Sd = embed_decoder_input.shape[1]
    num_layer = params["enc_attn_w"].shape[0]

    # Fold batch into the matmul M dimension (single-TC v5e/v6e friendly).
    enc2 = embed_encoder_input.reshape(B * Se, D).astype(jnp.float32)
    dec2 = embed_decoder_input.reshape(B * Sd, D).astype(jnp.float32)

    operands = (enc2, dec2,
                params["enc_attn_w"], params["enc_ffn_w"],
                params["enc_vec"], params["enc_b1"],
                params["dec_attn_w"], params["dec_ffn_w"],
                params["dec_vec"], params["dec_b1"])

    kernel = functools.partial(_encdec_kernel, num_layer=num_layer,
                               num_head=num_head, batch=B)
    vmem = pl.BlockSpec(memory_space=pltpu.MemorySpace.VMEM)
    # No grid: whole problem in one invocation, all weight slabs VMEM-resident.
    out = pl.pallas_call(
        kernel,
        out_shape=jax.ShapeDtypeStruct((B * Sd, D), jnp.float32),
        in_specs=[vmem] * len(operands),
        out_specs=vmem,
    )(*operands)
    return out.reshape(B, Sd, D)


# --- parameter construction (deterministic, synthetic, packed slabs) ------------
def init_params(key, num_layer, d_model, d_ff, num_head):
    """Packed parameter slabs.

    Linear layers are applied as y = x @ W + b (W = PyTorch weight transposed).
    The 1/sqrt(d_head) attention scale is folded into Wq host-side.
    """
    dh = d_model // num_head
    scale = 1.0 / float(dh) ** 0.5

    def _attn_w(k):
        ks = jax.random.split(k, 4)
        w = jnp.stack([0.05 * jax.random.normal(kk, (d_model, d_model), jnp.float32)
                       for kk in ks], axis=0)            # [Wq, Wk, Wv, Wo]
        return w.at[0].multiply(scale)                   # fold score scale into Wq

    def _ffn_w(k):
        k1, k2 = jax.random.split(k)
        return jnp.stack(
            [0.05 * jax.random.normal(k1, (d_model, d_ff), jnp.float32),   # W1
             0.05 * jax.random.normal(k2, (d_model, d_ff), jnp.float32)],  # W2^T
            axis=0)

    def _vecs(k, n_rows, gamma_rows):
        v = 0.02 * jax.random.normal(k, (n_rows, d_model), jnp.float32)
        return v.at[jnp.array(gamma_rows)].set(1.0)      # LayerNorm gammas = 1

    enc_attn_w, enc_ffn_w, enc_vec, enc_b1 = [], [], [], []
    dec_attn_w, dec_ffn_w, dec_vec, dec_b1 = [], [], [], []
    for _ in range(num_layer):
        key, ka, kf, kv, kb = jax.random.split(key, 5)
        enc_attn_w.append(_attn_w(ka))
        enc_ffn_w.append(_ffn_w(kf))
        enc_vec.append(_vecs(kv, _ENC_VEC_ROWS, (4, 7)))
        enc_b1.append(0.02 * jax.random.normal(kb, (1, d_ff), jnp.float32))
    for _ in range(num_layer):
        key, ks_, kc, kf, kv, kb = jax.random.split(key, 6)
        dec_attn_w.append(jnp.stack([_attn_w(ks_), _attn_w(kc)], axis=0))
        dec_ffn_w.append(_ffn_w(kf))
        dec_vec.append(_vecs(kv, _DEC_VEC_ROWS, (4, 10, 13)))
        dec_b1.append(0.02 * jax.random.normal(kb, (1, d_ff), jnp.float32))

    stk = lambda xs: jnp.stack(xs, axis=0)
    return {
        "enc_attn_w": stk(enc_attn_w).astype(jnp.bfloat16),   # (L, 4, D, D)
        "enc_ffn_w":  stk(enc_ffn_w).astype(jnp.bfloat16),    # (L, 2, D, D_FF)
        "enc_vec":    stk(enc_vec),                           # (L, 9, D)   f32
        "enc_b1":     stk(enc_b1),                            # (L, 1, D_FF) f32
        "dec_attn_w": stk(dec_attn_w).astype(jnp.bfloat16),   # (L, 2, 4, D, D)
        "dec_ffn_w":  stk(dec_ffn_w).astype(jnp.bfloat16),    # (L, 2, D, D_FF)
        "dec_vec":    stk(dec_vec),                           # (L, 15, D)  f32
        "dec_b1":     stk(dec_b1),                            # (L, 1, D_FF) f32
    }


if __name__ == "__main__":
    key = jax.random.PRNGKey(0)
    k_params, k_enc, k_dec = jax.random.split(key, 3)

    params = init_params(k_params, NUM_LAYER, D_MODEL, D_FF, NUM_HEAD)
    enc_in = jax.random.normal(k_enc, (BATCH, SEQ, D_MODEL), jnp.float32)
    dec_in = jax.random.normal(k_dec, (BATCH, SEQ, D_MODEL), jnp.float32)

    out = transformer_encoder_decoder(enc_in, dec_in, params, num_head=NUM_HEAD)
    out = jax.block_until_ready(out)

    assert out.shape == (BATCH, SEQ, D_MODEL)
    assert bool(jnp.all(jnp.isfinite(out)))
    print("KERNEL_OK")
</pallas_src>

<mosaic_0001>
module attributes {stable_mosaic.version = 11 : i64} {
  func.func @_encdec_kernel(%arg0: memref<16x32xf32, #tpu.memory_space<vmem>>, %arg1: memref<16x32xf32, #tpu.memory_space<vmem>>, %arg2: memref<2x4x32x32xbf16, #tpu.memory_space<vmem>>, %arg3: memref<2x2x32x64xbf16, #tpu.memory_space<vmem>>, %arg4: memref<2x9x32xf32, #tpu.memory_space<vmem>>, %arg5: memref<2x1x64xf32, #tpu.memory_space<vmem>>, %arg6: memref<2x2x4x32x32xbf16, #tpu.memory_space<vmem>>, %arg7: memref<2x2x32x64xbf16, #tpu.memory_space<vmem>>, %arg8: memref<2x15x32xf32, #tpu.memory_space<vmem>>, %arg9: memref<2x1x64xf32, #tpu.memory_space<vmem>>, %arg10: memref<16x32xf32, #tpu.memory_space<vmem>>) attributes {dimension_semantics = [], scalar_prefetch = 0 : i64, scratch_operands = 0 : i64, tpu.core_type = #tpu.core_type<tc>} {
    %0 = tpu.iota {dimensions = array<i32: 0>} : vector<8x8xi32>
    %1 = tpu.iota {dimensions = array<i32: 1>} : vector<8x8xi32>
    %2 = arith.cmpi sle, %1, %0 : vector<8x8xi32>
    %cst = arith.constant 0.000000e+00 : f32
    %cst_0 = arith.constant -1.000000e+30 : f32
    %3 = vector.broadcast %cst : f32 to vector<8x8xf32>
    %4 = vector.broadcast %cst_0 : f32 to vector<8x8xf32>
    %5 = arith.select %2, %3, %4 : vector<8x8xi1>, vector<8x8xf32>
    %c0 = arith.constant 0 : index
    %c0_1 = arith.constant 0 : index
    %6 = vector.load %arg0[%c0, %c0_1] : memref<16x32xf32, #tpu.memory_space<vmem>>, vector<16x32xf32>
    %c0_2 = arith.constant 0 : index
    %c0_3 = arith.constant 0 : index
    %c0_4 = arith.constant 0 : index
    %c0_5 = arith.constant 0 : index
    %7 = vector.load %arg2[%c0_2, %c0_3, %c0_4, %c0_5] : memref<2x4x32x32xbf16, #tpu.memory_space<vmem>>, vector<1x4x32x32xbf16>
    %8 = vector.shape_cast %7 : vector<1x4x32x32xbf16> to vector<4x32x32xbf16>
    %c0_6 = arith.constant 0 : index
    %c0_7 = arith.constant 0 : index
    %c0_8 = arith.constant 0 : index
    %9 = vector.load %arg4[%c0_6, %c0_7, %c0_8] : memref<2x9x32xf32, #tpu.memory_space<vmem>>, vector<1x1x32xf32>
    %10 = vector.shape_cast %9 : vector<1x1x32xf32> to vector<1x32xf32>
    %c0_9 = arith.constant 0 : index
    %c1 = arith.constant 1 : index
    %c0_10 = arith.constant 0 : index
    %11 = vector.load %arg4[%c0_9, %c1, %c0_10] : memref<2x9x32xf32, #tpu.memory_space<vmem>>, vector<1x1x32xf32>
    %12 = vector.shape_cast %11 : vector<1x1x32xf32> to vector<1x32xf32>
    %c0_11 = arith.constant 0 : index
    %c2 = arith.constant 2 : index
    %c0_12 = arith.constant 0 : index
    %13 = vector.load %arg4[%c0_11, %c2, %c0_12] : memref<2x9x32xf32, #tpu.memory_space<vmem>>, vector<1x1x32xf32>
    %14 = vector.shape_cast %13 : vector<1x1x32xf32> to vector<1x32xf32>
    %c0_13 = arith.constant 0 : index
    %c3 = arith.constant 3 : index
    %c0_14 = arith.constant 0 : index
    %15 = vector.load %arg4[%c0_13, %c3, %c0_14] : memref<2x9x32xf32, #tpu.memory_space<vmem>>, vector<1x1x32xf32>
    %16 = vector.shape_cast %15 : vector<1x1x32xf32> to vector<1x32xf32>
    %c0_15 = arith.constant 0 : index
    %c4 = arith.constant 4 : index
    %c0_16 = arith.constant 0 : index
    %17 = vector.load %arg4[%c0_15, %c4, %c0_16] : memref<2x9x32xf32, #tpu.memory_space<vmem>>, vector<1x1x32xf32>
    %18 = vector.shape_cast %17 : vector<1x1x32xf32> to vector<1x32xf32>
    %c0_17 = arith.constant 0 : index
    %c5 = arith.constant 5 : index
    %c0_18 = arith.constant 0 : index
    %19 = vector.load %arg4[%c0_17, %c5, %c0_18] : memref<2x9x32xf32, #tpu.memory_space<vmem>>, vector<1x1x32xf32>
    %20 = vector.shape_cast %19 : vector<1x1x32xf32> to vector<1x32xf32>
    %21 = vector.extract_strided_slice %8 {offsets = [0, 0, 0], sizes = [1, 32, 32], strides = [1, 1, 1]} : vector<4x32x32xbf16> to vector<1x32x32xbf16>
    %22 = vector.shape_cast %21 : vector<1x32x32xbf16> to vector<32x32xbf16>
    %23 = arith.truncf %6 : vector<16x32xf32> to vector<16x32xbf16>
    %cst_19 = arith.constant dense<0.000000e+00> : vector<16x32xf32>
    %24 = tpu.matmul %23, %22, %cst_19 {dimension_numbers = #tpu.dot_dimension_numbers<[1], [0], [0], [1], [0, 0, 1, 1], [], []>} : vector<16x32xbf16>, vector<32x32xbf16>, vector<16x32xf32> -> vector<16x32xf32>
    %25 = vector.broadcast %10 : vector<1x32xf32> to vector<16x32xf32>
    %26 = arith.addf %24, %25 : vector<16x32xf32>
    %27 = vector.extract_strided_slice %8 {offsets = [1, 0, 0], sizes = [1, 32, 32], strides = [1, 1, 1]} : vector<4x32x32xbf16> to vector<1x32x32xbf16>
    %28 = vector.shape_cast %27 : vector<1x32x32xbf16> to vector<32x32xbf16>
    %29 = arith.truncf %6 : vector<16x32xf32> to vector<16x32xbf16>
    %cst_20 = arith.constant dense<0.000000e+00> : vector<16x32xf32>
    %30 = tpu.matmul %29, %28, %cst_20 {dimension_numbers = #tpu.dot_dimension_numbers<[1], [0], [0], [1], [0, 0, 1, 1], [], []>} : vector<16x32xbf16>, vector<32x32xbf16>, vector<16x32xf32> -> vector<16x32xf32>
    %31 = vector.broadcast %12 : vector<1x32xf32> to vector<16x32xf32>
    %32 = arith.addf %30, %31 : vector<16x32xf32>
    %33 = vector.extract_strided_slice %8 {offsets = [2, 0, 0], sizes = [1, 32, 32], strides = [1, 1, 1]} : vector<4x32x32xbf16> to vector<1x32x32xbf16>
    %34 = vector.shape_cast %33 : vector<1x32x32xbf16> to vector<32x32xbf16>
    %35 = arith.truncf %6 : vector<16x32xf32> to vector<16x32xbf16>
    %cst_21 = arith.constant dense<0.000000e+00> : vector<16x32xf32>
    %36 = tpu.matmul %35, %34, %cst_21 {dimension_numbers = #tpu.dot_dimension_numbers<[1], [0], [0], [1], [0, 0, 1, 1], [], []>} : vector<16x32xbf16>, vector<32x32xbf16>, vector<16x32xf32> -> vector<16x32xf32>
    %37 = vector.broadcast %14 : vector<1x32xf32> to vector<16x32xf32>
    %38 = arith.addf %36, %37 : vector<16x32xf32>
    %39 = vector.extract_strided_slice %26 {offsets = [0, 0], sizes = [8, 8], strides = [1, 1]} : vector<16x32xf32> to vector<8x8xf32>
    %40 = vector.extract_strided_slice %26 {offsets = [0, 8], sizes = [8, 8], strides = [1, 1]} : vector<16x32xf32> to vector<8x8xf32>
    %41 = vector.extract_strided_slice %26 {offsets = [0, 16], sizes = [8, 8], strides = [1, 1]} : vector<16x32xf32> to vector<8x8xf32>
    %42 = vector.extract_strided_slice %26 {offsets = [0, 24], sizes = [8, 8], strides = [1, 1]} : vector<16x32xf32> to vector<8x8xf32>
    %43 = vector.extract_strided_slice %26 {offsets = [8, 0], sizes = [8, 8], strides = [1, 1]} : vector<16x32xf32> to vector<8x8xf32>
    %44 = vector.extract_strided_slice %26 {offsets = [8, 8], sizes = [8, 8], strides = [1, 1]} : vector<16x32xf32> to vector<8x8xf32>
    %45 = vector.extract_strided_slice %26 {offsets = [8, 16], sizes = [8, 8], strides = [1, 1]} : vector<16x32xf32> to vector<8x8xf32>
    %46 = vector.extract_strided_slice %26 {offsets = [8, 24], sizes = [8, 8], strides = [1, 1]} : vector<16x32xf32> to vector<8x8xf32>
    %47 = vector.shape_cast %39 : vector<8x8xf32> to vector<1x8x8xf32>
    %48 = vector.shape_cast %40 : vector<8x8xf32> to vector<1x8x8xf32>
    %49 = vector.shape_cast %41 : vector<8x8xf32> to vector<1x8x8xf32>
    %50 = vector.shape_cast %42 : vector<8x8xf32> to vector<1x8x8xf32>
    %51 = vector.shape_cast %43 : vector<8x8xf32> to vector<1x8x8xf32>
    %52 = vector.shape_cast %44 : vector<8x8xf32> to vector<1x8x8xf32>
    %53 = vector.shape_cast %45 : vector<8x8xf32> to vector<1x8x8xf32>
    %54 = vector.shape_cast %46 : vector<8x8xf32> to vector<1x8x8xf32>
    %55 = tpu.concatenate %47, %48, %49, %50, %51, %52, %53, %54 in 0 : vector<1x8x8xf32>, vector<1x8x8xf32>, vector<1x8x8xf32>, vector<1x8x8xf32>, vector<1x8x8xf32>, vector<1x8x8xf32>, vector<1x8x8xf32>, vector<1x8x8xf32> -> vector<8x8x8xf32>
    %56 = vector.extract_strided_slice %32 {offsets = [0, 0], sizes = [8, 8], strides = [1, 1]} : vector<16x32xf32> to vector<8x8xf32>
    %57 = vector.extract_strided_slice %32 {offsets = [0, 8], sizes = [8, 8], strides = [1, 1]} : vector<16x32xf32> to vector<8x8xf32>
    %58 = vector.extract_strided_slice %32 {offsets = [0, 16], sizes = [8, 8], strides = [1, 1]} : vector<16x32xf32> to vector<8x8xf32>
    %59 = vector.extract_strided_slice %32 {offsets = [0, 24], sizes = [8, 8], strides = [1, 1]} : vector<16x32xf32> to vector<8x8xf32>
    %60 = vector.extract_strided_slice %32 {offsets = [8, 0], sizes = [8, 8], strides = [1, 1]} : vector<16x32xf32> to vector<8x8xf32>
    %61 = vector.extract_strided_slice %32 {offsets = [8, 8], sizes = [8, 8], strides = [1, 1]} : vector<16x32xf32> to vector<8x8xf32>
    %62 = vector.extract_strided_slice %32 {offsets = [8, 16], sizes = [8, 8], strides = [1, 1]} : vector<16x32xf32> to vector<8x8xf32>
    %63 = vector.extract_strided_slice %32 {offsets = [8, 24], sizes = [8, 8], strides = [1, 1]} : vector<16x32xf32> to vector<8x8xf32>
    %64 = vector.shape_cast %56 : vector<8x8xf32> to vector<1x8x8xf32>
    %65 = vector.shape_cast %57 : vector<8x8xf32> to vector<1x8x8xf32>
    %66 = vector.shape_cast %58 : vector<8x8xf32> to vector<1x8x8xf32>
    %67 = vector.shape_cast %59 : vector<8x8xf32> to vector<1x8x8xf32>
    %68 = vector.shape_cast %60 : vector<8x8xf32> to vector<1x8x8xf32>
    %69 = vector.shape_cast %61 : vector<8x8xf32> to vector<1x8x8xf32>
    %70 = vector.shape_cast %62 : vector<8x8xf32> to vector<1x8x8xf32>
    %71 = vector.shape_cast %63 : vector<8x8xf32> to vector<1x8x8xf32>
    %72 = tpu.concatenate %64, %65, %66, %67, %68, %69, %70, %71 in 0 : vector<1x8x8xf32>, vector<1x8x8xf32>, vector<1x8x8xf32>, vector<1x8x8xf32>, vector<1x8x8xf32>, vector<1x8x8xf32>, vector<1x8x8xf32>, vector<1x8x8xf32> -> vector<8x8x8xf32>
    %73 = vector.extract_strided_slice %38 {offsets = [0, 0], sizes = [8, 8], strides = [1, 1]} : vector<16x32xf32> to vector<8x8xf32>
    %74 = vector.extract_strided_slice %38 {offsets = [0, 8], sizes = [8, 8], strides = [1, 1]} : vector<16x32xf32> to vector<8x8xf32>
    %75 = vector.extract_strided_slice %38 {offsets = [0, 16], sizes = [8, 8], strides = [1, 1]} : vector<16x32xf32> to vector<8x8xf32>
    %76 = vector.extract_strided_slice %38 {offsets = [0, 24], sizes = [8, 8], strides = [1, 1]} : vector<16x32xf32> to vector<8x8xf32>
    %77 = vector.extract_strided_slice %38 {offsets = [8, 0], sizes = [8, 8], strides = [1, 1]} : vector<16x32xf32> to vector<8x8xf32>
    %78 = vector.extract_strided_slice %38 {offsets = [8, 8], sizes = [8, 8], strides = [1, 1]} : vector<16x32xf32> to vector<8x8xf32>
    %79 = vector.extract_strided_slice %38 {offsets = [8, 16], sizes = [8, 8], strides = [1, 1]} : vector<16x32xf32> to vector<8x8xf32>
    %80 = vector.extract_strided_slice %38 {offsets = [8, 24], sizes = [8, 8], strides = [1, 1]} : vector<16x32xf32> to vector<8x8xf32>
    %81 = vector.shape_cast %73 : vector<8x8xf32> to vector<1x8x8xf32>
    %82 = vector.shape_cast %74 : vector<8x8xf32> to vector<1x8x8xf32>
    %83 = vector.shape_cast %75 : vector<8x8xf32> to vector<1x8x8xf32>
    %84 = vector.shape_cast %76 : vector<8x8xf32> to vector<1x8x8xf32>
    %85 = vector.shape_cast %77 : vector<8x8xf32> to vector<1x8x8xf32>
    %86 = vector.shape_cast %78 : vector<8x8xf32> to vector<1x8x8xf32>
    %87 = vector.shape_cast %79 : vector<8x8xf32> to vector<1x8x8xf32>
    %88 = vector.shape_cast %80 : vector<8x8xf32> to vector<1x8x8xf32>
    %89 = tpu.concatenate %81, %82, %83, %84, %85, %86, %87, %88 in 0 : vector<1x8x8xf32>, vector<1x8x8xf32>, vector<1x8x8xf32>, vector<1x8x8xf32>, vector<1x8x8xf32>, vector<1x8x8xf32>, vector<1x8x8xf32>, vector<1x8x8xf32> -> vector<8x8x8xf32>
    %90 = arith.truncf %55 : vector<8x8x8xf32> to vector<8x8x8xbf16>
    %91 = arith.truncf %72 : vector<8x8x8xf32> to vector<8x8x8xbf16>
    "tpu.trace_start"() <{level = 10 : i32, message = "nqd,nkd->nqk"}> : () -> ()
    %cst_22 = arith.constant dense<0.000000e+00> : vector<8x8x8xf32>
    %92 = tpu.matmul %90, %91, %cst_22 {dimension_numbers = #tpu.dot_dimension_numbers<[2], [2], [1], [1], [0, 0, 0, 1, 1, 1], [0], [0]>} : vector<8x8x8xbf16>, vector<8x8x8xbf16>, vector<8x8x8xf32> -> vector<8x8x8xf32>
    "tpu.trace_stop"() : () -> ()
    %cst_23 = arith.constant dense<0xFF800000> : vector<8x8xf32>
    %93 = vector.multi_reduction <maximumf>, %92, %cst_23 [2] : vector<8x8x8xf32> to vector<8x8xf32>
    %94 = vector.shape_cast %93 : vector<8x8xf32> to vector<8x8x1xf32>
    %95 = vector.broadcast %94 : vector<8x8x1xf32> to vector<8x8x8xf32>
    %96 = arith.subf %92, %95 : vector<8x8x8xf32>
    %97 = math.exp %96 : vector<8x8x8xf32>
    %cst_24 = arith.constant dense<0.000000e+00> : vector<8x8xf32>
    %98 = vector.multi_reduction <add>, %97, %cst_24 [2] : vector<8x8x8xf32> to vector<8x8xf32>
    %99 = vector.shape_cast %98 : vector<8x8xf32> to vector<8x8x1xf32>
    %100 = vector.broadcast %99 : vector<8x8x1xf32> to vector<8x8x8xf32>
    %101 = arith.divf %97, %100 : vector<8x8x8xf32>
    %102 = arith.truncf %101 : vector<8x8x8xf32> to vector<8x8x8xbf16>
    %103 = arith.truncf %89 : vector<8x8x8xf32> to vector<8x8x8xbf16>
    "tpu.trace_start"() <{level = 10 : i32, message = "nqk,nkd->nqd"}> : () -> ()
    %cst_25 = arith.constant dense<0.000000e+00> : vector<8x8x8xf32>
    %104 = tpu.matmul %102, %103, %cst_25 {dimension_numbers = #tpu.dot_dimension_numbers<[2], [1], [1], [2], [0, 0, 0, 1, 1, 2], [0], [0]>} : vector<8x8x8xbf16>, vector<8x8x8xbf16>, vector<8x8x8xf32> -> vector<8x8x8xf32>
    "tpu.trace_stop"() : () -> ()
    %105 = vector.extract_strided_slice %104 {offsets = [0, 0, 0], sizes = [1, 8, 8], strides = [1, 1, 1]} : vector<8x8x8xf32> to vector<1x8x8xf32>
    %106 = vector.shape_cast %105 : vector<1x8x8xf32> to vector<8x8xf32>
    %107 = vector.extract_strided_slice %104 {offsets = [1, 0, 0], sizes = [1, 8, 8], strides = [1, 1, 1]} : vector<8x8x8xf32> to vector<1x8x8xf32>
    %108 = vector.shape_cast %107 : vector<1x8x8xf32> to vector<8x8xf32>
    %109 = vector.extract_strided_slice %104 {offsets = [2, 0, 0], sizes = [1, 8, 8], strides = [1, 1, 1]} : vector<8x8x8xf32> to vector<1x8x8xf32>
    %110 = vector.shape_cast %109 : vector<1x8x8xf32> to vector<8x8xf32>
    %111 = vector.extract_strided_slice %104 {offsets = [3, 0, 0], sizes = [1, 8, 8], strides = [1, 1, 1]} : vector<8x8x8xf32> to vector<1x8x8xf32>
    %112 = vector.shape_cast %111 : vector<1x8x8xf32> to vector<8x8xf32>
    %113 = tpu.concatenate %106, %108, %110, %112 in 1 : vector<8x8xf32>, vector<8x8xf32>, vector<8x8xf32>, vector<8x8xf32> -> vector<8x32xf32>
    %114 = vector.extract_strided_slice %104 {offsets = [4, 0, 0], sizes = [1, 8, 8], strides = [1, 1, 1]} : vector<8x8x8xf32> to vector<1x8x8xf32>
    %115 = vector.shape_cast %114 : vector<1x8x8xf32> to vector<8x8xf32>
    %116 = vector.extract_strided_slice %104 {offsets = [5, 0, 0], sizes = [1, 8, 8], strides = [1, 1, 1]} : vector<8x8x8xf32> to vector<1x8x8xf32>
    %117 = vector.shape_cast %116 : vector<1x8x8xf32> to vector<8x8xf32>
    %118 = vector.extract_strided_slice %104 {offsets = [6, 0, 0], sizes = [1, 8, 8], strides = [1, 1, 1]} : vector<8x8x8xf32> to vector<1x8x8xf32>
    %119 = vector.shape_cast %118 : vector<1x8x8xf32> to vector<8x8xf32>
    %120 = vector.extract_strided_slice %104 {offsets = [7, 0, 0], sizes = [1, 8, 8], strides = [1, 1, 1]} : vector<8x8x8xf32> to vector<1x8x8xf32>
    %121 = vector.shape_cast %120 : vector<1x8x8xf32> to vector<8x8xf32>
    %122 = tpu.concatenate %115, %117, %119, %121 in 1 : vector<8x8xf32>, vector<8x8xf32>, vector<8x8xf32>, vector<8x8xf32> -> vector<8x32xf32>
    %123 = tpu.concatenate %113, %122 in 0 : vector<8x32xf32>, vector<8x32xf32> -> vector<16x32xf32>
    %124 = vector.extract_strided_slice %8 {offsets = [3, 0, 0], sizes = [1, 32, 32], strides = [1, 1, 1]} : vector<4x32x32xbf16> to vector<1x32x32xbf16>
    %125 = vector.shape_cast %124 : vector<1x32x32xbf16> to vector<32x32xbf16>
    %126 = arith.truncf %123 : vector<16x32xf32> to vector<16x32xbf16>
    %cst_26 = arith.constant dense<0.000000e+00> : vector<16x32xf32>
    %127 = tpu.matmul %126, %125, %cst_26 {dimension_numbers = #tpu.dot_dimension_numbers<[1], [0], [0], [1], [0, 0, 1, 1], [], []>} : vector<16x32xbf16>, vector<32x32xbf16>, vector<16x32xf32> -> vector<16x32xf32>
    %128 = vector.broadcast %16 : vector<1x32xf32> to vector<16x32xf32>
    %129 = arith.addf %127, %128 : vector<16x32xf32>
    %130 = arith.addf %6, %129 : vector<16x32xf32>
    %cst_27 = arith.constant dense<0.000000e+00> : vector<16xf32>
    %131 = vector.multi_reduction <add>, %130, %cst_27 [1] : vector<16x32xf32> to vector<16xf32>
    %132 = vector.shape_cast %131 : vector<16xf32> to vector<16x1xf32>
    %cst_28 = arith.constant 3.200000e+01 : f32
    %133 = vector.broadcast %cst_28 : f32 to vector<16x1xf32>
    %134 = arith.divf %132, %133 : vector<16x1xf32>
    %135 = vector.broadcast %134 : vector<16x1xf32> to vector<16x32xf32>
    %136 = arith.subf %130, %135 : vector<16x32xf32>
    %137 = arith.mulf %136, %136 : vector<16x32xf32>
    %cst_29 = arith.constant dense<0.000000e+00> : vector<16xf32>
    %138 = vector.multi_reduction <add>, %137, %cst_29 [1] : vector<16x32xf32> to vector<16xf32>
    %139 = vector.shape_cast %138 : vector<16xf32> to vector<16x1xf32>
    %cst_30 = arith.constant 3.200000e+01 : f32
    %140 = vector.broadcast %cst_30 : f32 to vector<16x1xf32>
    %141 = arith.divf %139, %140 : vector<16x1xf32>
    %142 = vector.broadcast %134 : vector<16x1xf32> to vector<16x32xf32>
    %143 = arith.subf %130, %142 : vector<16x32xf32>
    %cst_31 = arith.constant 9.99999974E-6 : f32
    %144 = vector.broadcast %cst_31 : f32 to vector<16x1xf32>
    %145 = arith.addf %141, %144 : vector<16x1xf32>
    %146 = math.rsqrt %145 : vector<16x1xf32>
    %147 = vector.broadcast %146 : vector<16x1xf32> to vector<16x32xf32>
    %148 = arith.mulf %143, %147 : vector<16x32xf32>
    %149 = vector.broadcast %18 : vector<1x32xf32> to vector<16x32xf32>
    %150 = arith.mulf %148, %149 : vector<16x32xf32>
    %151 = vector.broadcast %20 : vector<1x32xf32> to vector<16x32xf32>
    %152 = arith.addf %150, %151 : vector<16x32xf32>
    %c0_32 = arith.constant 0 : index
    %c0_33 = arith.constant 0 : index
    %c0_34 = arith.constant 0 : index
    %c0_35 = arith.constant 0 : index
    %153 = vector.load %arg3[%c0_32, %c0_33, %c0_34, %c0_35] : memref<2x2x32x64xbf16, #tpu.memory_space<vmem>>, vector<1x2x32x64xbf16>
    %154 = vector.shape_cast %153 : vector<1x2x32x64xbf16> to vector<2x32x64xbf16>
    %c0_36 = arith.constant 0 : index
    %c0_37 = arith.constant 0 : index
    %c0_38 = arith.constant 0 : index
    %155 = vector.load %arg5[%c0_36, %c0_37, %c0_38] : memref<2x1x64xf32, #tpu.memory_space<vmem>>, vector<1x1x64xf32>
    %156 = vector.shape_cast %155 : vector<1x1x64xf32> to vector<1x64xf32>
    %c0_39 = arith.constant 0 : index
    %c6 = arith.constant 6 : index
    %c0_40 = arith.constant 0 : index
    %157 = vector.load %arg4[%c0_39, %c6, %c0_40] : memref<2x9x32xf32, #tpu.memory_space<vmem>>, vector<1x1x32xf32>
    %158 = vector.shape_cast %157 : vector<1x1x32xf32> to vector<1x32xf32>
    %c0_41 = arith.constant 0 : index
    %c7 = arith.constant 7 : index
    %c0_42 = arith.constant 0 : index
    %159 = vector.load %arg4[%c0_41, %c7, %c0_42] : memref<2x9x32xf32, #tpu.memory_space<vmem>>, vector<1x1x32xf32>
    %160 = vector.shape_cast %159 : vector<1x1x32xf32> to vector<1x32xf32>
    %c0_43 = arith.constant 0 : index
    %c8 = arith.constant 8 : index
    %c0_44 = arith.constant 0 : index
    %161 = vector.load %arg4[%c0_43, %c8, %c0_44] : memref<2x9x32xf32, #tpu.memory_space<vmem>>, vector<1x1x32xf32>
    %162 = vector.shape_cast %161 : vector<1x1x32xf32> to vector<1x32xf32>
    %163 = vector.extract_strided_slice %154 {offsets = [0, 0, 0], sizes = [1, 32, 64], strides = [1, 1, 1]} : vector<2x32x64xbf16> to vector<1x32x64xbf16>
    %164 = vector.shape_cast %163 : vector<1x32x64xbf16> to vector<32x64xbf16>
    %165 = arith.truncf %152 : vector<16x32xf32> to vector<16x32xbf16>
    %cst_45 = arith.constant dense<0.000000e+00> : vector<16x64xf32>
    %166 = tpu.matmul %165, %164, %cst_45 {dimension_numbers = #tpu.dot_dimension_numbers<[1], [0], [0], [1], [0, 0, 1, 1], [], []>} : vector<16x32xbf16>, vector<32x64xbf16>, vector<16x64xf32> -> vector<16x64xf32>
    %167 = vector.broadcast %156 : vector<1x64xf32> to vector<16x64xf32>
    %168 = arith.addf %166, %167 : vector<16x64xf32>
    %cst_46 = arith.constant 0.000000e+00 : f32
    %169 = vector.broadcast %cst_46 : f32 to vector<16x64xf32>
    %170 = arith.maximumf %168, %169 : vector<16x64xf32>
    %171 = vector.extract_strided_slice %154 {offsets = [1, 0, 0], sizes = [1, 32, 64], strides = [1, 1, 1]} : vector<2x32x64xbf16> to vector<1x32x64xbf16>
    %172 = vector.shape_cast %171 : vector<1x32x64xbf16> to vector<32x64xbf16>
    %173 = arith.truncf %170 : vector<16x64xf32> to vector<16x64xbf16>
    %cst_47 = arith.constant dense<0.000000e+00> : vector<16x32xf32>
    %174 = tpu.matmul %173, %172, %cst_47 {dimension_numbers = #tpu.dot_dimension_numbers<[1], [1], [0], [0], [0, 0, 1, 0], [], []>} : vector<16x64xbf16>, vector<32x64xbf16>, vector<16x32xf32> -> vector<16x32xf32>
    %175 = vector.broadcast %158 : vector<1x32xf32> to vector<16x32xf32>
    %176 = arith.addf %174, %175 : vector<16x32xf32>
    %177 = arith.addf %152, %176 : vector<16x32xf32>
    %cst_48 = arith.constant dense<0.000000e+00> : vector<16xf32>
    %178 = vector.multi_reduction <add>, %177, %cst_48 [1] : vector<16x32xf32> to vector<16xf32>
    %179 = vector.shape_cast %178 : vector<16xf32> to vector<16x1xf32>
    %cst_49 = arith.constant 3.200000e+01 : f32
    %180 = vector.broadcast %cst_49 : f32 to vector<16x1xf32>
    %181 = arith.divf %179, %180 : vector<16x1xf32>
    %182 = vector.broadcast %181 : vector<16x1xf32> to vector<16x32xf32>
    %183 = arith.subf %177, %182 : vector<16x32xf32>
    %184 = arith.mulf %183, %183 : vector<16x32xf32>
    %cst_50 = arith.constant dense<0.000000e+00> : vector<16xf32>
    %185 = vector.multi_reduction <add>, %184, %cst_50 [1] : vector<16x32xf32> to vector<16xf32>
    %186 = vector.shape_cast %185 : vector<16xf32> to vector<16x1xf32>
    %cst_51 = arith.constant 3.200000e+01 : f32
    %187 = vector.broadcast %cst_51 : f32 to vector<16x1xf32>
    %188 = arith.divf %186, %187 : vector<16x1xf32>
    %189 = vector.broadcast %181 : vector<16x1xf32> to vector<16x32xf32>
    %190 = arith.subf %177, %189 : vector<16x32xf32>
    %cst_52 = arith.constant 9.99999974E-6 : f32
    %191 = vector.broadcast %cst_52 : f32 to vector<16x1xf32>
    %192 = arith.addf %188, %191 : vector<16x1xf32>
    %193 = math.rsqrt %192 : vector<16x1xf32>
    %194 = vector.broadcast %193 : vector<16x1xf32> to vector<16x32xf32>
    %195 = arith.mulf %190, %194 : vector<16x32xf32>
    %196 = vector.broadcast %160 : vector<1x32xf32> to vector<16x32xf32>
    %197 = arith.mulf %195, %196 : vector<16x32xf32>
    %198 = vector.broadcast %162 : vector<1x32xf32> to vector<16x32xf32>
    %199 = arith.addf %197, %198 : vector<16x32xf32>
    %c1_53 = arith.constant 1 : index
    %c0_54 = arith.constant 0 : index
    %c0_55 = arith.constant 0 : index
    %c0_56 = arith.constant 0 : index
    %200 = vector.load %arg2[%c1_53, %c0_54, %c0_55, %c0_56] : memref<2x4x32x32xbf16, #tpu.memory_space<vmem>>, vector<1x4x32x32xbf16>
    %201 = vector.shape_cast %200 : vector<1x4x32x32xbf16> to vector<4x32x32xbf16>
    %c1_57 = arith.constant 1 : index
    %c0_58 = arith.constant 0 : index
    %c0_59 = arith.constant 0 : index
    %202 = vector.load %arg4[%c1_57, %c0_58, %c0_59] : memref<2x9x32xf32, #tpu.memory_space<vmem>>, vector<1x1x32xf32>
    %203 = vector.shape_cast %202 : vector<1x1x32xf32> to vector<1x32xf32>
    %c1_60 = arith.constant 1 : index
    %c1_61 = arith.constant 1 : index
    %c0_62 = arith.constant 0 : index
    %204 = vector.load %arg4[%c1_60, %c1_61, %c0_62] : memref<2x9x32xf32, #tpu.memory_space<vmem>>, vector<1x1x32xf32>
    %205 = vector.shape_cast %204 : vector<1x1x32xf32> to vector<1x32xf32>
    %c1_63 = arith.constant 1 : index
    %c2_64 = arith.constant 2 : index
    %c0_65 = arith.constant 0 : index
    %206 = vector.load %arg4[%c1_63, %c2_64, %c0_65] : memref<2x9x32xf32, #tpu.memory_space<vmem>>, vector<1x1x32xf32>
    %207 = vector.shape_cast %206 : vector<1x1x32xf32> to vector<1x32xf32>
    %c1_66 = arith.constant 1 : index
    %c3_67 = arith.constant 3 : index
    %c0_68 = arith.constant 0 : index
    %208 = vector.load %arg4[%c1_66, %c3_67, %c0_68] : memref<2x9x32xf32, #tpu.memory_space<vmem>>, vector<1x1x32xf32>
    %209 = vector.shape_cast %208 : vector<1x1x32xf32> to vector<1x32xf32>
    %c1_69 = arith.constant 1 : index
    %c4_70 = arith.constant 4 : index
    %c0_71 = arith.constant 0 : index
    %210 = vector.load %arg4[%c1_69, %c4_70, %c0_71] : memref<2x9x32xf32, #tpu.memory_space<vmem>>, vector<1x1x32xf32>
    %211 = vector.shape_cast %210 : vector<1x1x32xf32> to vector<1x32xf32>
    %c1_72 = arith.constant 1 : index
    %c5_73 = arith.constant 5 : index
    %c0_74 = arith.constant 0 : index
    %212 = vector.load %arg4[%c1_72, %c5_73, %c0_74] : memref<2x9x32xf32, #tpu.memory_space<vmem>>, vector<1x1x32xf32>
    %213 = vector.shape_cast %212 : vector<1x1x32xf32> to vector<1x32xf32>
    %214 = vector.extract_strided_slice %201 {offsets = [0, 0, 0], sizes = [1, 32, 32], strides = [1, 1, 1]} : vector<4x32x32xbf16> to vector<1x32x32xbf16>
    %215 = vector.shape_cast %214 : vector<1x32x32xbf16> to vector<32x32xbf16>
    %216 = arith.truncf %199 : vector<16x32xf32> to vector<16x32xbf16>
    %cst_75 = arith.constant dense<0.000000e+00> : vector<16x32xf32>
    %217 = tpu.matmul %216, %215, %cst_75 {dimension_numbers = #tpu.dot_dimension_numbers<[1], [0], [0], [1], [0, 0, 1, 1], [], []>} : vector<16x32xbf16>, vector<32x32xbf16>, vector<16x32xf32> -> vector<16x32xf32>
    %218 = vector.broadcast %203 : vector<1x32xf32> to vector<16x32xf32>
    %219 = arith.addf %217, %218 : vector<16x32xf32>
    %220 = vector.extract_strided_slice %201 {offsets = [1, 0, 0], sizes = [1, 32, 32], strides = [1, 1, 1]} : vector<4x32x32xbf16> to vector<1x32x32xbf16>
    %221 = vector.shape_cast %220 : vector<1x32x32xbf16> to vector<32x32xbf16>
    %222 = arith.truncf %199 : vector<16x32xf32> to vector<16x32xbf16>
    %cst_76 = arith.constant dense<0.000000e+00> : vector<16x32xf32>
    %223 = tpu.matmul %222, %221, %cst_76 {dimension_numbers = #tpu.dot_dimension_numbers<[1], [0], [0], [1], [0, 0, 1, 1], [], []>} : vector<16x32xbf16>, vector<32x32xbf16>, vector<16x32xf32> -> vector<16x32xf32>
    %224 = vector.broadcast %205 : vector<1x32xf32> to vector<16x32xf32>
    %225 = arith.addf %223, %224 : vector<16x32xf32>
    %226 = vector.extract_strided_slice %201 {offsets = [2, 0, 0], sizes = [1, 32, 32], strides = [1, 1, 1]} : vector<4x32x32xbf16> to vector<1x32x32xbf16>
    %227 = vector.shape_cast %226 : vector<1x32x32xbf16> to vector<32x32xbf16>
    %228 = arith.truncf %199 : vector<16x32xf32> to vector<16x32xbf16>
    %cst_77 = arith.constant dense<0.000000e+00> : vector<16x32xf32>
    %229 = tpu.matmul %228, %227, %cst_77 {dimension_numbers = #tpu.dot_dimension_numbers<[1], [0], [0], [1], [0, 0, 1, 1], [], []>} : vector<16x32xbf16>, vector<32x32xbf16>, vector<16x32xf32> -> vector<16x32xf32>
    %230 = vector.broadcast %207 : vector<1x32xf32> to vector<16x32xf32>
    %231 = arith.addf %229, %230 : vector<16x32xf32>
    %232 = vector.extract_strided_slice %219 {offsets = [0, 0], sizes = [8, 8], strides = [1, 1]} : vector<16x32xf32> to vector<8x8xf32>
    %233 = vector.extract_strided_slice %219 {offsets = [0, 8], sizes = [8, 8], strides = [1, 1]} : vector<16x32xf32> to vector<8x8xf32>
    %234 = vector.extract_strided_slice %219 {offsets = [0, 16], sizes = [8, 8], strides = [1, 1]} : vector<16x32xf32> to vector<8x8xf32>
    %235 = vector.extract_strided_slice %219 {offsets = [0, 24], sizes = [8, 8], strides = [1, 1]} : vector<16x32xf32> to vector<8x8xf32>
    %236 = vector.extract_strided_slice %219 {offsets = [8, 0], sizes = [8, 8], strides = [1, 1]} : vector<16x32xf32> to vector<8x8xf32>
    %237 = vector.extract_strided_slice %219 {offsets = [8, 8], sizes = [8, 8], strides = [1, 1]} : vector<16x32xf32> to vector<8x8xf32>
    %238 = vector.extract_strided_slice %219 {offsets = [8, 16], sizes = [8, 8], strides = [1, 1]} : vector<16x32xf32> to vector<8x8xf32>
    %239 = vector.extract_strided_slice %219 {offsets = [8, 24], sizes = [8, 8], strides = [1, 1]} : vector<16x32xf32> to vector<8x8xf32>
    %240 = vector.shape_cast %232 : vector<8x8xf32> to vector<1x8x8xf32>
    %241 = vector.shape_cast %233 : vector<8x8xf32> to vector<1x8x8xf32>
    %242 = vector.shape_cast %234 : vector<8x8xf32> to vector<1x8x8xf32>
    %243 = vector.shape_cast %235 : vector<8x8xf32> to vector<1x8x8xf32>
    %244 = vector.shape_cast %236 : vector<8x8xf32> to vector<1x8x8xf32>
    %245 = vector.shape_cast %237 : vector<8x8xf32> to vector<1x8x8xf32>
    %246 = vector.shape_cast %238 : vector<8x8xf32> to vector<1x8x8xf32>
    %247 = vector.shape_cast %239 : vector<8x8xf32> to vector<1x8x8xf32>
    %248 = tpu.concatenate %240, %241, %242, %243, %244, %245, %246, %247 in 0 : vector<1x8x8xf32>, vector<1x8x8xf32>, vector<1x8x8xf32>, vector<1x8x8xf32>, vector<1x8x8xf32>, vector<1x8x8xf32>, vector<1x8x8xf32>, vector<1x8x8xf32> -> vector<8x8x8xf32>
    %249 = vector.extract_strided_slice %225 {offsets = [0, 0], sizes = [8, 8], strides = [1, 1]} : vector<16x32xf32> to vector<8x8xf32>
    %250 = vector.extract_strided_slice %225 {offsets = [0, 8], sizes = [8, 8], strides = [1, 1]} : vector<16x32xf32> to vector<8x8xf32>
    %251 = vector.extract_strided_slice %225 {offsets = [0, 16], sizes = [8, 8], strides = [1, 1]} : vector<16x32xf32> to vector<8x8xf32>
    %252 = vector.extract_strided_slice %225 {offsets = [0, 24], sizes = [8, 8], strides = [1, 1]} : vector<16x32xf32> to vector<8x8xf32>
    %253 = vector.extract_strided_slice %225 {offsets = [8, 0], sizes = [8, 8], strides = [1, 1]} : vector<16x32xf32> to vector<8x8xf32>
    %254 = vector.extract_strided_slice %225 {offsets = [8, 8], sizes = [8, 8], strides = [1, 1]} : vector<16x32xf32> to vector<8x8xf32>
    %255 = vector.extract_strided_slice %225 {offsets = [8, 16], sizes = [8, 8], strides = [1, 1]} : vector<16x32xf32> to vector<8x8xf32>
    %256 = vector.extract_strided_slice %225 {offsets = [8, 24], sizes = [8, 8], strides = [1, 1]} : vector<16x32xf32> to vector<8x8xf32>
    %257 = vector.shape_cast %249 : vector<8x8xf32> to vector<1x8x8xf32>
    %258 = vector.shape_cast %250 : vector<8x8xf32> to vector<1x8x8xf32>
    %259 = vector.shape_cast %251 : vector<8x8xf32> to vector<1x8x8xf32>
    %260 = vector.shape_cast %252 : vector<8x8xf32> to vector<1x8x8xf32>
    %261 = vector.shape_cast %253 : vector<8x8xf32> to vector<1x8x8xf32>
    %262 = vector.shape_cast %254 : vector<8x8xf32> to vector<1x8x8xf32>
    %263 = vector.shape_cast %255 : vector<8x8xf32> to vector<1x8x8xf32>
    %264 = vector.shape_cast %256 : vector<8x8xf32> to vector<1x8x8xf32>
    %265 = tpu.concatenate %257, %258, %259, %260, %261, %262, %263, %264 in 0 : vector<1x8x8xf32>, vector<1x8x8xf32>, vector<1x8x8xf32>, vector<1x8x8xf32>, vector<1x8x8xf32>, vector<1x8x8xf32>, vector<1x8x8xf32>, vector<1x8x8xf32> -> vector<8x8x8xf32>
    %266 = vector.extract_strided_slice %231 {offsets = [0, 0], sizes = [8, 8], strides = [1, 1]} : vector<16x32xf32> to vector<8x8xf32>
    %267 = vector.extract_strided_slice %231 {offsets = [0, 8], sizes = [8, 8], strides = [1, 1]} : vector<16x32xf32> to vector<8x8xf32>
    %268 = vector.extract_strided_slice %231 {offsets = [0, 16], sizes = [8, 8], strides = [1, 1]} : vector<16x32xf32> to vector<8x8xf32>
    %269 = vector.extract_strided_slice %231 {offsets = [0, 24], sizes = [8, 8], strides = [1, 1]} : vector<16x32xf32> to vector<8x8xf32>
    %270 = vector.extract_strided_slice %231 {offsets = [8, 0], sizes = [8, 8], strides = [1, 1]} : vector<16x32xf32> to vector<8x8xf32>
    %271 = vector.extract_strided_slice %231 {offsets = [8, 8], sizes = [8, 8], strides = [1, 1]} : vector<16x32xf32> to vector<8x8xf32>
    %272 = vector.extract_strided_slice %231 {offsets = [8, 16], sizes = [8, 8], strides = [1, 1]} : vector<16x32xf32> to vector<8x8xf32>
    %273 = vector.extract_strided_slice %231 {offsets = [8, 24], sizes = [8, 8], strides = [1, 1]} : vector<16x32xf32> to vector<8x8xf32>
    %274 = vector.shape_cast %266 : vector<8x8xf32> to vector<1x8x8xf32>
    %275 = vector.shape_cast %267 : vector<8x8xf32> to vector<1x8x8xf32>
    %276 = vector.shape_cast %268 : vector<8x8xf32> to vector<1x8x8xf32>
    %277 = vector.shape_cast %269 : vector<8x8xf32> to vector<1x8x8xf32>
    %278 = vector.shape_cast %270 : vector<8x8xf32> to vector<1x8x8xf32>
    %279 = vector.shape_cast %271 : vector<8x8xf32> to vector<1x8x8xf32>
    %280 = vector.shape_cast %272 : vector<8x8xf32> to vector<1x8x8xf32>
    %281 = vector.shape_cast %273 : vector<8x8xf32> to vector<1x8x8xf32>
    %282 = tpu.concatenate %274, %275, %276, %277, %278, %279, %280, %281 in 0 : vector<1x8x8xf32>, vector<1x8x8xf32>, vector<1x8x8xf32>, vector<1x8x8xf32>, vector<1x8x8xf32>, vector<1x8x8xf32>, vector<1x8x8xf32>, vector<1x8x8xf32> -> vector<8x8x8xf32>
    %283 = arith.truncf %248 : vector<8x8x8xf32> to vector<8x8x8xbf16>
    %284 = arith.truncf %265 : vector<8x8x8xf32> to vector<8x8x8xbf16>
    "tpu.trace_start"() <{level = 10 : i32, message = "nqd,nkd->nqk"}> : () -> ()
    %cst_78 = arith.constant dense<0.000000e+00> : vector<8x8x8xf32>
    %285 = tpu.matmul %283, %284, %cst_78 {dimension_numbers = #tpu.dot_dimension_numbers<[2], [2], [1], [1], [0, 0, 0, 1, 1, 1], [0], [0]>} : vector<8x8x8xbf16>, vector<8x8x8xbf16>, vector<8x8x8xf32> -> vector<8x8x8xf32>
    "tpu.trace_stop"() : () -> ()
    %cst_79 = arith.constant dense<0xFF800000> : vector<8x8xf32>
    %286 = vector.multi_reduction <maximumf>, %285, %cst_79 [2] : vector<8x8x8xf32> to vector<8x8xf32>
    %287 = vector.shape_cast %286 : vector<8x8xf32> to vector<8x8x1xf32>
    %288 = vector.broadcast %287 : vector<8x8x1xf32> to vector<8x8x8xf32>
    %289 = arith.subf %285, %288 : vector<8x8x8xf32>
    %290 = math.exp %289 : vector<8x8x8xf32>
    %cst_80 = arith.constant dense<0.000000e+00> : vector<8x8xf32>
    %291 = vector.multi_reduction <add>, %290, %cst_80 [2] : vector<8x8x8xf32> to vector<8x8xf32>
    %292 = vector.shape_cast %291 : vector<8x8xf32> to vector<8x8x1xf32>
    %293 = vector.broadcast %292 : vector<8x8x1xf32> to vector<8x8x8xf32>
    %294 = arith.divf %290, %293 : vector<8x8x8xf32>
    %295 = arith.truncf %294 : vector<8x8x8xf32> to vector<8x8x8xbf16>
    %296 = arith.truncf %282 : vector<8x8x8xf32> to vector<8x8x8xbf16>
    "tpu.trace_start"() <{level = 10 : i32, message = "nqk,nkd->nqd"}> : () -> ()
    %cst_81 = arith.constant dense<0.000000e+00> : vector<8x8x8xf32>
    %297 = tpu.matmul %295, %296, %cst_81 {dimension_numbers = #tpu.dot_dimension_numbers<[2], [1], [1], [2], [0, 0, 0, 1, 1, 2], [0], [0]>} : vector<8x8x8xbf16>, vector<8x8x8xbf16>, vector<8x8x8xf32> -> vector<8x8x8xf32>
    "tpu.trace_stop"() : () -> ()
    %298 = vector.extract_strided_slice %297 {offsets = [0, 0, 0], sizes = [1, 8, 8], strides = [1, 1, 1]} : vector<8x8x8xf32> to vector<1x8x8xf32>
    %299 = vector.shape_cast %298 : vector<1x8x8xf32> to vector<8x8xf32>
    %300 = vector.extract_strided_slice %297 {offsets = [1, 0, 0], sizes = [1, 8, 8], strides = [1, 1, 1]} : vector<8x8x8xf32> to vector<1x8x8xf32>
    %301 = vector.shape_cast %300 : vector<1x8x8xf32> to vector<8x8xf32>
    %302 = vector.extract_strided_slice %297 {offsets = [2, 0, 0], sizes = [1, 8, 8], strides = [1, 1, 1]} : vector<8x8x8xf32> to vector<1x8x8xf32>
    %303 = vector.shape_cast %302 : vector<1x8x8xf32> to vector<8x8xf32>
    %304 = vector.extract_strided_slice %297 {offsets = [3, 0, 0], sizes = [1, 8, 8], strides = [1, 1, 1]} : vector<8x8x8xf32> to vector<1x8x8xf32>
    %305 = vector.shape_cast %304 : vector<1x8x8xf32> to vector<8x8xf32>
    %306 = tpu.concatenate %299, %301, %303, %305 in 1 : vector<8x8xf32>, vector<8x8xf32>, vector<8x8xf32>, vector<8x8xf32> -> vector<8x32xf32>
    %307 = vector.extract_strided_slice %297 {offsets = [4, 0, 0], sizes = [1, 8, 8], strides = [1, 1, 1]} : vector<8x8x8xf32> to vector<1x8x8xf32>
    %308 = vector.shape_cast %307 : vector<1x8x8xf32> to vector<8x8xf32>
    %309 = vector.extract_strided_slice %297 {offsets = [5, 0, 0], sizes = [1, 8, 8], strides = [1, 1, 1]} : vector<8x8x8xf32> to vector<1x8x8xf32>
    %310 = vector.shape_cast %309 : vector<1x8x8xf32> to vector<8x8xf32>
    %311 = vector.extract_strided_slice %297 {offsets = [6, 0, 0], sizes = [1, 8, 8], strides = [1, 1, 1]} : vector<8x8x8xf32> to vector<1x8x8xf32>
    %312 = vector.shape_cast %311 : vector<1x8x8xf32> to vector<8x8xf32>
    %313 = vector.extract_strided_slice %297 {offsets = [7, 0, 0], sizes = [1, 8, 8], strides = [1, 1, 1]} : vector<8x8x8xf32> to vector<1x8x8xf32>
    %314 = vector.shape_cast %313 : vector<1x8x8xf32> to vector<8x8xf32>
    %315 = tpu.concatenate %308, %310, %312, %314 in 1 : vector<8x8xf32>, vector<8x8xf32>, vector<8x8xf32>, vector<8x8xf32> -> vector<8x32xf32>
    %316 = tpu.concatenate %306, %315 in 0 : vector<8x32xf32>, vector<8x32xf32> -> vector<16x32xf32>
    %317 = vector.extract_strided_slice %201 {offsets = [3, 0, 0], sizes = [1, 32, 32], strides = [1, 1, 1]} : vector<4x32x32xbf16> to vector<1x32x32xbf16>
    %318 = vector.shape_cast %317 : vector<1x32x32xbf16> to vector<32x32xbf16>
    %319 = arith.truncf %316 : vector<16x32xf32> to vector<16x32xbf16>
    %cst_82 = arith.constant dense<0.000000e+00> : vector<16x32xf32>
    %320 = tpu.matmul %319, %318, %cst_82 {dimension_numbers = #tpu.dot_dimension_numbers<[1], [0], [0], [1], [0, 0, 1, 1], [], []>} : vector<16x32xbf16>, vector<32x32xbf16>, vector<16x32xf32> -> vector<16x32xf32>
    %321 = vector.broadcast %209 : vector<1x32xf32> to vector<16x32xf32>
    %322 = arith.addf %320, %321 : vector<16x32xf32>
    %323 = arith.addf %199, %322 : vector<16x32xf32>
    %cst_83 = arith.constant dense<0.000000e+00> : vector<16xf32>
    %324 = vector.multi_reduction <add>, %323, %cst_83 [1] : vector<16x32xf32> to vector<16xf32>
    %325 = vector.shape_cast %324 : vector<16xf32> to vector<16x1xf32>
    %cst_84 = arith.constant 3.200000e+01 : f32
    %326 = vector.broadcast %cst_84 : f32 to vector<16x1xf32>
    %327 = arith.divf %325, %326 : vector<16x1xf32>
    %328 = vector.broadcast %327 : vector<16x1xf32> to vector<16x32xf32>
    %329 = arith.subf %323, %328 : vector<16x32xf32>
    %330 = arith.mulf %329, %329 : vector<16x32xf32>
    %cst_85 = arith.constant dense<0.000000e+00> : vector<16xf32>
    %331 = vector.multi_reduction <add>, %330, %cst_85 [1] : vector<16x32xf32> to vector<16xf32>
    %332 = vector.shape_cast %331 : vector<16xf32> to vector<16x1xf32>
    %cst_86 = arith.constant 3.200000e+01 : f32
    %333 = vector.broadcast %cst_86 : f32 to vector<16x1xf32>
    %334 = arith.divf %332, %333 : vector<16x1xf32>
    %335 = vector.broadcast %327 : vector<16x1xf32> to vector<16x32xf32>
    %336 = arith.subf %323, %335 : vector<16x32xf32>
    %cst_87 = arith.constant 9.99999974E-6 : f32
    %337 = vector.broadcast %cst_87 : f32 to vector<16x1xf32>
    %338 = arith.addf %334, %337 : vector<16x1xf32>
    %339 = math.rsqrt %338 : vector<16x1xf32>
    %340 = vector.broadcast %339 : vector<16x1xf32> to vector<16x32xf32>
    %341 = arith.mulf %336, %340 : vector<16x32xf32>
    %342 = vector.broadcast %211 : vector<1x32xf32> to vector<16x32xf32>
    %343 = arith.mulf %341, %342 : vector<16x32xf32>
    %344 = vector.broadcast %213 : vector<1x32xf32> to vector<16x32xf32>
    %345 = arith.addf %343, %344 : vector<16x32xf32>
    %c1_88 = arith.constant 1 : index
    %c0_89 = arith.constant 0 : index
    %c0_90 = arith.constant 0 : index
    %c0_91 = arith.constant 0 : index
    %346 = vector.load %arg3[%c1_88, %c0_89, %c0_90, %c0_91] : memref<2x2x32x64xbf16, #tpu.memory_space<vmem>>, vector<1x2x32x64xbf16>
    %347 = vector.shape_cast %346 : vector<1x2x32x64xbf16> to vector<2x32x64xbf16>
    %c1_92 = arith.constant 1 : index
    %c0_93 = arith.constant 0 : index
    %c0_94 = arith.constant 0 : index
    %348 = vector.load %arg5[%c1_92, %c0_93, %c0_94] : memref<2x1x64xf32, #tpu.memory_space<vmem>>, vector<1x1x64xf32>
    %349 = vector.shape_cast %348 : vector<1x1x64xf32> to vector<1x64xf32>
    %c1_95 = arith.constant 1 : index
    %c6_96 = arith.constant 6 : index
    %c0_97 = arith.constant 0 : index
    %350 = vector.load %arg4[%c1_95, %c6_96, %c0_97] : memref<2x9x32xf32, #tpu.memory_space<vmem>>, vector<1x1x32xf32>
    %351 = vector.shape_cast %350 : vector<1x1x32xf32> to vector<1x32xf32>
    %c1_98 = arith.constant 1 : index
    %c7_99 = arith.constant 7 : index
    %c0_100 = arith.constant 0 : index
    %352 = vector.load %arg4[%c1_98, %c7_99, %c0_100] : memref<2x9x32xf32, #tpu.memory_space<vmem>>, vector<1x1x32xf32>
    %353 = vector.shape_cast %352 : vector<1x1x32xf32> to vector<1x32xf32>
    %c1_101 = arith.constant 1 : index
    %c8_102 = arith.constant 8 : index
    %c0_103 = arith.constant 0 : index
    %354 = vector.load %arg4[%c1_101, %c8_102, %c0_103] : memref<2x9x32xf32, #tpu.memory_space<vmem>>, vector<1x1x32xf32>
    %355 = vector.shape_cast %354 : vector<1x1x32xf32> to vector<1x32xf32>
    %356 = vector.extract_strided_slice %347 {offsets = [0, 0, 0], sizes = [1, 32, 64], strides = [1, 1, 1]} : vector<2x32x64xbf16> to vector<1x32x64xbf16>
    %357 = vector.shape_cast %356 : vector<1x32x64xbf16> to vector<32x64xbf16>
    %358 = arith.truncf %345 : vector<16x32xf32> to vector<16x32xbf16>
    %cst_104 = arith.constant dense<0.000000e+00> : vector<16x64xf32>
    %359 = tpu.matmul %358, %357, %cst_104 {dimension_numbers = #tpu.dot_dimension_numbers<[1], [0], [0], [1], [0, 0, 1, 1], [], []>} : vector<16x32xbf16>, vector<32x64xbf16>, vector<16x64xf32> -> vector<16x64xf32>
    %360 = vector.broadcast %349 : vector<1x64xf32> to vector<16x64xf32>
    %361 = arith.addf %359, %360 : vector<16x64xf32>
    %cst_105 = arith.constant 0.000000e+00 : f32
    %362 = vector.broadcast %cst_105 : f32 to vector<16x64xf32>
    %363 = arith.maximumf %361, %362 : vector<16x64xf32>
    %364 = vector.extract_strided_slice %347 {offsets = [1, 0, 0], sizes = [1, 32, 64], strides = [1, 1, 1]} : vector<2x32x64xbf16> to vector<1x32x64xbf16>
    %365 = vector.shape_cast %364 : vector<1x32x64xbf16> to vector<32x64xbf16>
    %366 = arith.truncf %363 : vector<16x64xf32> to vector<16x64xbf16>
    %cst_106 = arith.constant dense<0.000000e+00> : vector<16x32xf32>
    %367 = tpu.matmul %366, %365, %cst_106 {dimension_numbers = #tpu.dot_dimension_numbers<[1], [1], [0], [0], [0, 0, 1, 0], [], []>} : vector<16x64xbf16>, vector<32x64xbf16>, vector<16x32xf32> -> vector<16x32xf32>
    %368 = vector.broadcast %351 : vector<1x32xf32> to vector<16x32xf32>
    %369 = arith.addf %367, %368 : vector<16x32xf32>
    %370 = arith.addf %345, %369 : vector<16x32xf32>
    %cst_107 = arith.constant dense<0.000000e+00> : vector<16xf32>
    %371 = vector.multi_reduction <add>, %370, %cst_107 [1] : vector<16x32xf32> to vector<16xf32>
    %372 = vector.shape_cast %371 : vector<16xf32> to vector<16x1xf32>
    %cst_108 = arith.constant 3.200000e+01 : f32
    %373 = vector.broadcast %cst_108 : f32 to vector<16x1xf32>
    %374 = arith.divf %372, %373 : vector<16x1xf32>
    %375 = vector.broadcast %374 : vector<16x1xf32> to vector<16x32xf32>
    %376 = arith.subf %370, %375 : vector<16x32xf32>
    %377 = arith.mulf %376, %376 : vector<16x32xf32>
    %cst_109 = arith.constant dense<0.000000e+00> : vector<16xf32>
    %378 = vector.multi_reduction <add>, %377, %cst_109 [1] : vector<16x32xf32> to vector<16xf32>
    %379 = vector.shape_cast %378 : vector<16xf32> to vector<16x1xf32>
    %cst_110 = arith.constant 3.200000e+01 : f32
    %380 = vector.broadcast %cst_110 : f32 to vector<16x1xf32>
    %381 = arith.divf %379, %380 : vector<16x1xf32>
    %382 = vector.broadcast %374 : vector<16x1xf32> to vector<16x32xf32>
    %383 = arith.subf %370, %382 : vector<16x32xf32>
    %cst_111 = arith.constant 9.99999974E-6 : f32
    %384 = vector.broadcast %cst_111 : f32 to vector<16x1xf32>
    %385 = arith.addf %381, %384 : vector<16x1xf32>
    %386 = math.rsqrt %385 : vector<16x1xf32>
    %387 = vector.broadcast %386 : vector<16x1xf32> to vector<16x32xf32>
    %388 = arith.mulf %383, %387 : vector<16x32xf32>
    %389 = vector.broadcast %353 : vector<1x32xf32> to vector<16x32xf32>
    %390 = arith.mulf %388, %389 : vector<16x32xf32>
    %391 = vector.broadcast %355 : vector<1x32xf32> to vector<16x32xf32>
    %392 = arith.addf %390, %391 : vector<16x32xf32>
    %c0_112 = arith.constant 0 : index
    %c0_113 = arith.constant 0 : index
    %393 = vector.load %arg1[%c0_112, %c0_113] : memref<16x32xf32, #tpu.memory_space<vmem>>, vector<16x32xf32>
    %c0_114 = arith.constant 0 : index
    %c0_115 = arith.constant 0 : index
    %c0_116 = arith.constant 0 : index
    %c0_117 = arith.constant 0 : index
    %c0_118 = arith.constant 0 : index
    %394 = vector.load %arg6[%c0_114, %c0_115, %c0_116, %c0_117, %c0_118] : memref<2x2x4x32x32xbf16, #tpu.memory_space<vmem>>, vector<1x1x4x32x32xbf16>
    %395 = vector.shape_cast %394 : vector<1x1x4x32x32xbf16> to vector<4x32x32xbf16>
    %c0_119 = arith.constant 0 : index
    %c0_120 = arith.constant 0 : index
    %c0_121 = arith.constant 0 : index
    %396 = vector.load %arg8[%c0_119, %c0_120, %c0_121] : memref<2x15x32xf32, #tpu.memory_space<vmem>>, vector<1x1x32xf32>
    %397 = vector.shape_cast %396 : vector<1x1x32xf32> to vector<1x32xf32>
    %c0_122 = arith.constant 0 : index
    %c1_123 = arith.constant 1 : index
    %c0_124 = arith.constant 0 : index
    %398 = vector.load %arg8[%c0_122, %c1_123, %c0_124] : memref<2x15x32xf32, #tpu.memory_space<vmem>>, vector<1x1x32xf32>
    %399 = vector.shape_cast %398 : vector<1x1x32xf32> to vector<1x32xf32>
    %c0_125 = arith.constant 0 : index
    %c2_126 = arith.constant 2 : index
    %c0_127 = arith.constant 0 : index
    %400 = vector.load %arg8[%c0_125, %c2_126, %c0_127] : memref<2x15x32xf32, #tpu.memory_space<vmem>>, vector<1x1x32xf32>
    %401 = vector.shape_cast %400 : vector<1x1x32xf32> to vector<1x32xf32>
    %c0_128 = arith.constant 0 : index
    %c3_129 = arith.constant 3 : index
    %c0_130 = arith.constant 0 : index
    %402 = vector.load %arg8[%c0_128, %c3_129, %c0_130] : memref<2x15x32xf32, #tpu.memory_space<vmem>>, vector<1x1x32xf32>
    %403 = vector.shape_cast %402 : vector<1x1x32xf32> to vector<1x32xf32>
    %c0_131 = arith.constant 0 : index
    %c4_132 = arith.constant 4 : index
    %c0_133 = arith.constant 0 : index
    %404 = vector.load %arg8[%c0_131, %c4_132, %c0_133] : memref<2x15x32xf32, #tpu.memory_space<vmem>>, vector<1x1x32xf32>
    %405 = vector.shape_cast %404 : vector<1x1x32xf32> to vector<1x32xf32>
    %c0_134 = arith.constant 0 : index
    %c5_135 = arith.constant 5 : index
    %c0_136 = arith.constant 0 : index
    %406 = vector.load %arg8[%c0_134, %c5_135, %c0_136] : memref<2x15x32xf32, #tpu.memory_space<vmem>>, vector<1x1x32xf32>
    %407 = vector.shape_cast %406 : vector<1x1x32xf32> to vector<1x32xf32>
    %408 = vector.extract_strided_slice %395 {offsets = [0, 0, 0], sizes = [1, 32, 32], strides = [1, 1, 1]} : vector<4x32x32xbf16> to vector<1x32x32xbf16>
    %409 = vector.shape_cast %408 : vector<1x32x32xbf16> to vector<32x32xbf16>
    %410 = arith.truncf %393 : vector<16x32xf32> to vector<16x32xbf16>
    %cst_137 = arith.constant dense<0.000000e+00> : vector<16x32xf32>
    %411 = tpu.matmul %410, %409, %cst_137 {dimension_numbers = #tpu.dot_dimension_numbers<[1], [0], [0], [1], [0, 0, 1, 1], [], []>} : vector<16x32xbf16>, vector<32x32xbf16>, vector<16x32xf32> -> vector<16x32xf32>
    %412 = vector.broadcast %397 : vector<1x32xf32> to vector<16x32xf32>
    %413 = arith.addf %411, %412 : vector<16x32xf32>
    %414 = vector.extract_strided_slice %395 {offsets = [1, 0, 0], sizes = [1, 32, 32], strides = [1, 1, 1]} : vector<4x32x32xbf16> to vector<1x32x32xbf16>
    %415 = vector.shape_cast %414 : vector<1x32x32xbf16> to vector<32x32xbf16>
    %416 = arith.truncf %393 : vector<16x32xf32> to vector<16x32xbf16>
    %cst_138 = arith.constant dense<0.000000e+00> : vector<16x32xf32>
    %417 = tpu.matmul %416, %415, %cst_138 {dimension_numbers = #tpu.dot_dimension_numbers<[1], [0], [0], [1], [0, 0, 1, 1], [], []>} : vector<16x32xbf16>, vector<32x32xbf16>, vector<16x32xf32> -> vector<16x32xf32>
    %418 = vector.broadcast %399 : vector<1x32xf32> to vector<16x32xf32>
    %419 = arith.addf %417, %418 : vector<16x32xf32>
    %420 = vector.extract_strided_slice %395 {offsets = [2, 0, 0], sizes = [1, 32, 32], strides = [1, 1, 1]} : vector<4x32x32xbf16> to vector<1x32x32xbf16>
    %421 = vector.shape_cast %420 : vector<1x32x32xbf16> to vector<32x32xbf16>
    %422 = arith.truncf %393 : vector<16x32xf32> to vector<16x32xbf16>
    %cst_139 = arith.constant dense<0.000000e+00> : vector<16x32xf32>
    %423 = tpu.matmul %422, %421, %cst_139 {dimension_numbers = #tpu.dot_dimension_numbers<[1], [0], [0], [1], [0, 0, 1, 1], [], []>} : vector<16x32xbf16>, vector<32x32xbf16>, vector<16x32xf32> -> vector<16x32xf32>
    %424 = vector.broadcast %401 : vector<1x32xf32> to vector<16x32xf32>
    %425 = arith.addf %423, %424 : vector<16x32xf32>
    %426 = vector.extract_strided_slice %413 {offsets = [0, 0], sizes = [8, 8], strides = [1, 1]} : vector<16x32xf32> to vector<8x8xf32>
    %427 = vector.extract_strided_slice %413 {offsets = [0, 8], sizes = [8, 8], strides = [1, 1]} : vector<16x32xf32> to vector<8x8xf32>
    %428 = vector.extract_strided_slice %413 {offsets = [0, 16], sizes = [8, 8], strides = [1, 1]} : vector<16x32xf32> to vector<8x8xf32>
    %429 = vector.extract_strided_slice %413 {offsets = [0, 24], sizes = [8, 8], strides = [1, 1]} : vector<16x32xf32> to vector<8x8xf32>
    %430 = vector.extract_strided_slice %413 {offsets = [8, 0], sizes = [8, 8], strides = [1, 1]} : vector<16x32xf32> to vector<8x8xf32>
    %431 = vector.extract_strided_slice %413 {offsets = [8, 8], sizes = [8, 8], strides = [1, 1]} : vector<16x32xf32> to vector<8x8xf32>
    %432 = vector.extract_strided_slice %413 {offsets = [8, 16], sizes = [8, 8], strides = [1, 1]} : vector<16x32xf32> to vector<8x8xf32>
    %433 = vector.extract_strided_slice %413 {offsets = [8, 24], sizes = [8, 8], strides = [1, 1]} : vector<16x32xf32> to vector<8x8xf32>
    %434 = vector.shape_cast %426 : vector<8x8xf32> to vector<1x8x8xf32>
    %435 = vector.shape_cast %427 : vector<8x8xf32> to vector<1x8x8xf32>
    %436 = vector.shape_cast %428 : vector<8x8xf32> to vector<1x8x8xf32>
    %437 = vector.shape_cast %429 : vector<8x8xf32> to vector<1x8x8xf32>
    %438 = vector.shape_cast %430 : vector<8x8xf32> to vector<1x8x8xf32>
    %439 = vector.shape_cast %431 : vector<8x8xf32> to vector<1x8x8xf32>
    %440 = vector.shape_cast %432 : vector<8x8xf32> to vector<1x8x8xf32>
    %441 = vector.shape_cast %433 : vector<8x8xf32> to vector<1x8x8xf32>
    %442 = tpu.concatenate %434, %435, %436, %437, %438, %439, %440, %441 in 0 : vector<1x8x8xf32>, vector<1x8x8xf32>, vector<1x8x8xf32>, vector<1x8x8xf32>, vector<1x8x8xf32>, vector<1x8x8xf32>, vector<1x8x8xf32>, vector<1x8x8xf32> -> vector<8x8x8xf32>
    %443 = vector.extract_strided_slice %419 {offsets = [0, 0], sizes = [8, 8], strides = [1, 1]} : vector<16x32xf32> to vector<8x8xf32>
    %444 = vector.extract_strided_slice %419 {offsets = [0, 8], sizes = [8, 8], strides = [1, 1]} : vector<16x32xf32> to vector<8x8xf32>
    %445 = vector.extract_strided_slice %419 {offsets = [0, 16], sizes = [8, 8], strides = [1, 1]} : vector<16x32xf32> to vector<8x8xf32>
    %446 = vector.extract_strided_slice %419 {offsets = [0, 24], sizes = [8, 8], strides = [1, 1]} : vector<16x32xf32> to vector<8x8xf32>
    %447 = vector.extract_strided_slice %419 {offsets = [8, 0], sizes = [8, 8], strides = [1, 1]} : vector<16x32xf32> to vector<8x8xf32>
    %448 = vector.extract_strided_slice %419 {offsets = [8, 8], sizes = [8, 8], strides = [1, 1]} : vector<16x32xf32> to vector<8x8xf32>
    %449 = vector.extract_strided_slice %419 {offsets = [8, 16], sizes = [8, 8], strides = [1, 1]} : vector<16x32xf32> to vector<8x8xf32>
    %450 = vector.extract_strided_slice %419 {offsets = [8, 24], sizes = [8, 8], strides = [1, 1]} : vector<16x32xf32> to vector<8x8xf32>
    %451 = vector.shape_cast %443 : vector<8x8xf32> to vector<1x8x8xf32>
    %452 = vector.shape_cast %444 : vector<8x8xf32> to vector<1x8x8xf32>
    %453 = vector.shape_cast %445 : vector<8x8xf32> to vector<1x8x8xf32>
    %454 = vector.shape_cast %446 : vector<8x8xf32> to vector<1x8x8xf32>
    %455 = vector.shape_cast %447 : vector<8x8xf32> to vector<1x8x8xf32>
    %456 = vector.shape_cast %448 : vector<8x8xf32> to vector<1x8x8xf32>
    %457 = vector.shape_cast %449 : vector<8x8xf32> to vector<1x8x8xf32>
    %458 = vector.shape_cast %450 : vector<8x8xf32> to vector<1x8x8xf32>
    %459 = tpu.concatenate %451, %452, %453, %454, %455, %456, %457, %458 in 0 : vector<1x8x8xf32>, vector<1x8x8xf32>, vector<1x8x8xf32>, vector<1x8x8xf32>, vector<1x8x8xf32>, vector<1x8x8xf32>, vector<1x8x8xf32>, vector<1x8x8xf32> -> vector<8x8x8xf32>
    %460 = vector.extract_strided_slice %425 {offsets = [0, 0], sizes = [8, 8], strides = [1, 1]} : vector<16x32xf32> to vector<8x8xf32>
    %461 = vector.extract_strided_slice %425 {offsets = [0, 8], sizes = [8, 8], strides = [1, 1]} : vector<16x32xf32> to vector<8x8xf32>
    %462 = vector.extract_strided_slice %425 {offsets = [0, 16], sizes = [8, 8], strides = [1, 1]} : vector<16x32xf32> to vector<8x8xf32>
    %463 = vector.extract_strided_slice %425 {offsets = [0, 24], sizes = [8, 8], strides = [1, 1]} : vector<16x32xf32> to vector<8x8xf32>
    %464 = vector.extract_strided_slice %425 {offsets = [8, 0], sizes = [8, 8], strides = [1, 1]} : vector<16x32xf32> to vector<8x8xf32>
    %465 = vector.extract_strided_slice %425 {offsets = [8, 8], sizes = [8, 8], strides = [1, 1]} : vector<16x32xf32> to vector<8x8xf32>
    %466 = vector.extract_strided_slice %425 {offsets = [8, 16], sizes = [8, 8], strides = [1, 1]} : vector<16x32xf32> to vector<8x8xf32>
    %467 = vector.extract_strided_slice %425 {offsets = [8, 24], sizes = [8, 8], strides = [1, 1]} : vector<16x32xf32> to vector<8x8xf32>
    %468 = vector.shape_cast %460 : vector<8x8xf32> to vector<1x8x8xf32>
    %469 = vector.shape_cast %461 : vector<8x8xf32> to vector<1x8x8xf32>
    %470 = vector.shape_cast %462 : vector<8x8xf32> to vector<1x8x8xf32>
    %471 = vector.shape_cast %463 : vector<8x8xf32> to vector<1x8x8xf32>
    %472 = vector.shape_cast %464 : vector<8x8xf32> to vector<1x8x8xf32>
    %473 = vector.shape_cast %465 : vector<8x8xf32> to vector<1x8x8xf32>
    %474 = vector.shape_cast %466 : vector<8x8xf32> to vector<1x8x8xf32>
    %475 = vector.shape_cast %467 : vector<8x8xf32> to vector<1x8x8xf32>
    %476 = tpu.concatenate %468, %469, %470, %471, %472, %473, %474, %475 in 0 : vector<1x8x8xf32>, vector<1x8x8xf32>, vector<1x8x8xf32>, vector<1x8x8xf32>, vector<1x8x8xf32>, vector<1x8x8xf32>, vector<1x8x8xf32>, vector<1x8x8xf32> -> vector<8x8x8xf32>
    %477 = arith.truncf %442 : vector<8x8x8xf32> to vector<8x8x8xbf16>
    %478 = arith.truncf %459 : vector<8x8x8xf32> to vector<8x8x8xbf16>
    "tpu.trace_start"() <{level = 10 : i32, message = "nqd,nkd->nqk"}> : () -> ()
    %cst_140 = arith.constant dense<0.000000e+00> : vector<8x8x8xf32>
    %479 = tpu.matmul %477, %478, %cst_140 {dimension_numbers = #tpu.dot_dimension_numbers<[2], [2], [1], [1], [0, 0, 0, 1, 1, 1], [0], [0]>} : vector<8x8x8xbf16>, vector<8x8x8xbf16>, vector<8x8x8xf32> -> vector<8x8x8xf32>
    "tpu.trace_stop"() : () -> ()
    %480 = vector.shape_cast %5 : vector<8x8xf32> to vector<1x8x8xf32>
    %481 = vector.broadcast %480 : vector<1x8x8xf32> to vector<8x8x8xf32>
    %482 = arith.addf %479, %481 : vector<8x8x8xf32>
    %cst_141 = arith.constant dense<0xFF800000> : vector<8x8xf32>
    %483 = vector.multi_reduction <maximumf>, %482, %cst_141 [2] : vector<8x8x8xf32> to vector<8x8xf32>
    %484 = vector.shape_cast %483 : vector<8x8xf32> to vector<8x8x1xf32>
    %485 = vector.broadcast %484 : vector<8x8x1xf32> to vector<8x8x8xf32>
    %486 = arith.subf %482, %485 : vector<8x8x8xf32>
    %487 = math.exp %486 : vector<8x8x8xf32>
    %cst_142 = arith.constant dense<0.000000e+00> : vector<8x8xf32>
    %488 = vector.multi_reduction <add>, %487, %cst_142 [2] : vector<8x8x8xf32> to vector<8x8xf32>
    %489 = vector.shape_cast %488 : vector<8x8xf32> to vector<8x8x1xf32>
    %490 = vector.broadcast %489 : vector<8x8x1xf32> to vector<8x8x8xf32>
    %491 = arith.divf %487, %490 : vector<8x8x8xf32>
    %492 = arith.truncf %491 : vector<8x8x8xf32> to vector<8x8x8xbf16>
    %493 = arith.truncf %476 : vector<8x8x8xf32> to vector<8x8x8xbf16>
    "tpu.trace_start"() <{level = 10 : i32, message = "nqk,nkd->nqd"}> : () -> ()
    %cst_143 = arith.constant dense<0.000000e+00> : vector<8x8x8xf32>
    %494 = tpu.matmul %492, %493, %cst_143 {dimension_numbers = #tpu.dot_dimension_numbers<[2], [1], [1], [2], [0, 0, 0, 1, 1, 2], [0], [0]>} : vector<8x8x8xbf16>, vector<8x8x8xbf16>, vector<8x8x8xf32> -> vector<8x8x8xf32>
    "tpu.trace_stop"() : () -> ()
    %495 = vector.extract_strided_slice %494 {offsets = [0, 0, 0], sizes = [1, 8, 8], strides = [1, 1, 1]} : vector<8x8x8xf32> to vector<1x8x8xf32>
    %496 = vector.shape_cast %495 : vector<1x8x8xf32> to vector<8x8xf32>
    %497 = vector.extract_strided_slice %494 {offsets = [1, 0, 0], sizes = [1, 8, 8], strides = [1, 1, 1]} : vector<8x8x8xf32> to vector<1x8x8xf32>
    %498 = vector.shape_cast %497 : vector<1x8x8xf32> to vector<8x8xf32>
    %499 = vector.extract_strided_slice %494 {offsets = [2, 0, 0], sizes = [1, 8, 8], strides = [1, 1, 1]} : vector<8x8x8xf32> to vector<1x8x8xf32>
    %500 = vector.shape_cast %499 : vector<1x8x8xf32> to vector<8x8xf32>
    %501 = vector.extract_strided_slice %494 {offsets = [3, 0, 0], sizes = [1, 8, 8], strides = [1, 1, 1]} : vector<8x8x8xf32> to vector<1x8x8xf32>
    %502 = vector.shape_cast %501 : vector<1x8x8xf32> to vector<8x8xf32>
    %503 = tpu.concatenate %496, %498, %500, %502 in 1 : vector<8x8xf32>, vector<8x8xf32>, vector<8x8xf32>, vector<8x8xf32> -> vector<8x32xf32>
    %504 = vector.extract_strided_slice %494 {offsets = [4, 0, 0], sizes = [1, 8, 8], strides = [1, 1, 1]} : vector<8x8x8xf32> to vector<1x8x8xf32>
    %505 = vector.shape_cast %504 : vector<1x8x8xf32> to vector<8x8xf32>
    %506 = vector.extract_strided_slice %494 {offsets = [5, 0, 0], sizes = [1, 8, 8], strides = [1, 1, 1]} : vector<8x8x8xf32> to vector<1x8x8xf32>
    %507 = vector.shape_cast %506 : vector<1x8x8xf32> to vector<8x8xf32>
    %508 = vector.extract_strided_slice %494 {offsets = [6, 0, 0], sizes = [1, 8, 8], strides = [1, 1, 1]} : vector<8x8x8xf32> to vector<1x8x8xf32>
    %509 = vector.shape_cast %508 : vector<1x8x8xf32> to vector<8x8xf32>
    %510 = vector.extract_strided_slice %494 {offsets = [7, 0, 0], sizes = [1, 8, 8], strides = [1, 1, 1]} : vector<8x8x8xf32> to vector<1x8x8xf32>
    %511 = vector.shape_cast %510 : vector<1x8x8xf32> to vector<8x8xf32>
    %512 = tpu.concatenate %505, %507, %509, %511 in 1 : vector<8x8xf32>, vector<8x8xf32>, vector<8x8xf32>, vector<8x8xf32> -> vector<8x32xf32>
    %513 = tpu.concatenate %503, %512 in 0 : vector<8x32xf32>, vector<8x32xf32> -> vector<16x32xf32>
    %514 = vector.extract_strided_slice %395 {offsets = [3, 0, 0], sizes = [1, 32, 32], strides = [1, 1, 1]} : vector<4x32x32xbf16> to vector<1x32x32xbf16>
    %515 = vector.shape_cast %514 : vector<1x32x32xbf16> to vector<32x32xbf16>
    %516 = arith.truncf %513 : vector<16x32xf32> to vector<16x32xbf16>
    %cst_144 = arith.constant dense<0.000000e+00> : vector<16x32xf32>
    %517 = tpu.matmul %516, %515, %cst_144 {dimension_numbers = #tpu.dot_dimension_numbers<[1], [0], [0], [1], [0, 0, 1, 1], [], []>} : vector<16x32xbf16>, vector<32x32xbf16>, vector<16x32xf32> -> vector<16x32xf32>
    %518 = vector.broadcast %403 : vector<1x32xf32> to vector<16x32xf32>
    %519 = arith.addf %517, %518 : vector<16x32xf32>
    %520 = arith.addf %393, %519 : vector<16x32xf32>
    %cst_145 = arith.constant dense<0.000000e+00> : vector<16xf32>
    %521 = vector.multi_reduction <add>, %520, %cst_145 [1] : vector<16x32xf32> to vector<16xf32>
    %522 = vector.shape_cast %521 : vector<16xf32> to vector<16x1xf32>
    %cst_146 = arith.constant 3.200000e+01 : f32
    %523 = vector.broadcast %cst_146 : f32 to vector<16x1xf32>
    %524 = arith.divf %522, %523 : vector<16x1xf32>
    %525 = vector.broadcast %524 : vector<16x1xf32> to vector<16x32xf32>
    %526 = arith.subf %520, %525 : vector<16x32xf32>
    %527 = arith.mulf %526, %526 : vector<16x32xf32>
    %cst_147 = arith.constant dense<0.000000e+00> : vector<16xf32>
    %528 = vector.multi_reduction <add>, %527, %cst_147 [1] : vector<16x32xf32> to vector<16xf32>
    %529 = vector.shape_cast %528 : vector<16xf32> to vector<16x1xf32>
    %cst_148 = arith.constant 3.200000e+01 : f32
    %530 = vector.broadcast %cst_148 : f32 to vector<16x1xf32>
    %531 = arith.divf %529, %530 : vector<16x1xf32>
    %532 = vector.broadcast %524 : vector<16x1xf32> to vector<16x32xf32>
    %533 = arith.subf %520, %532 : vector<16x32xf32>
    %cst_149 = arith.constant 9.99999974E-6 : f32
    %534 = vector.broadcast %cst_149 : f32 to vector<16x1xf32>
    %535 = arith.addf %531, %534 : vector<16x1xf32>
    %536 = math.rsqrt %535 : vector<16x1xf32>
    %537 = vector.broadcast %536 : vector<16x1xf32> to vector<16x32xf32>
    %538 = arith.mulf %533, %537 : vector<16x32xf32>
    %539 = vector.broadcast %405 : vector<1x32xf32> to vector<16x32xf32>
    %540 = arith.mulf %538, %539 : vector<16x32xf32>
    %541 = vector.broadcast %407 : vector<1x32xf32> to vector<16x32xf32>
    %542 = arith.addf %540, %541 : vector<16x32xf32>
    %c0_150 = arith.constant 0 : index
    %c1_151 = arith.constant 1 : index
    %c0_152 = arith.constant 0 : index
    %c0_153 = arith.constant 0 : index
    %c0_154 = arith.constant 0 : index
    %543 = vector.load %arg6[%c0_150, %c1_151, %c0_152, %c0_153, %c0_154] : memref<2x2x4x32x32xbf16, #tpu.memory_space<vmem>>, vector<1x1x4x32x32xbf16>
    %544 = vector.shape_cast %543 : vector<1x1x4x32x32xbf16> to vector<4x32x32xbf16>
    %c0_155 = arith.constant 0 : index
    %c6_156 = arith.constant 6 : index
    %c0_157 = arith.constant 0 : index
    %545 = vector.load %arg8[%c0_155, %c6_156, %c0_157] : memref<2x15x32xf32, #tpu.memory_space<vmem>>, vector<1x1x32xf32>
    %546 = vector.shape_cast %545 : vector<1x1x32xf32> to vector<1x32xf32>
    %c0_158 = arith.constant 0 : index
    %c7_159 = arith.constant 7 : index
    %c0_160 = arith.constant 0 : index
    %547 = vector.load %arg8[%c0_158, %c7_159, %c0_160] : memref<2x15x32xf32, #tpu.memory_space<vmem>>, vector<1x1x32xf32>
    %548 = vector.shape_cast %547 : vector<1x1x32xf32> to vector<1x32xf32>
    %c0_161 = arith.constant 0 : index
    %c8_162 = arith.constant 8 : index
    %c0_163 = arith.constant 0 : index
    %549 = vector.load %arg8[%c0_161, %c8_162, %c0_163] : memref<2x15x32xf32, #tpu.memory_space<vmem>>, vector<1x1x32xf32>
    %550 = vector.shape_cast %549 : vector<1x1x32xf32> to vector<1x32xf32>
    %c0_164 = arith.constant 0 : index
    %c9 = arith.constant 9 : index
    %c0_165 = arith.constant 0 : index
    %551 = vector.load %arg8[%c0_164, %c9, %c0_165] : memref<2x15x32xf32, #tpu.memory_space<vmem>>, vector<1x1x32xf32>
    %552 = vector.shape_cast %551 : vector<1x1x32xf32> to vector<1x32xf32>
    %c0_166 = arith.constant 0 : index
    %c10 = arith.constant 10 : index
    %c0_167 = arith.constant 0 : index
    %553 = vector.load %arg8[%c0_166, %c10, %c0_167] : memref<2x15x32xf32, #tpu.memory_space<vmem>>, vector<1x1x32xf32>
    %554 = vector.shape_cast %553 : vector<1x1x32xf32> to vector<1x32xf32>
    %c0_168 = arith.constant 0 : index
    %c11 = arith.constant 11 : index
    %c0_169 = arith.constant 0 : index
    %555 = vector.load %arg8[%c0_168, %c11, %c0_169] : memref<2x15x32xf32, #tpu.memory_space<vmem>>, vector<1x1x32xf32>
    %556 = vector.shape_cast %555 : vector<1x1x32xf32> to vector<1x32xf32>
    %557 = vector.extract_strided_slice %544 {offsets = [0, 0, 0], sizes = [1, 32, 32], strides = [1, 1, 1]} : vector<4x32x32xbf16> to vector<1x32x32xbf16>
    %558 = vector.shape_cast %557 : vector<1x32x32xbf16> to vector<32x32xbf16>
    %559 = arith.truncf %542 : vector<16x32xf32> to vector<16x32xbf16>
    %cst_170 = arith.constant dense<0.000000e+00> : vector<16x32xf32>
    %560 = tpu.matmul %559, %558, %cst_170 {dimension_numbers = #tpu.dot_dimension_numbers<[1], [0], [0], [1], [0, 0, 1, 1], [], []>} : vector<16x32xbf16>, vector<32x32xbf16>, vector<16x32xf32> -> vector<16x32xf32>
    %561 = vector.broadcast %546 : vector<1x32xf32> to vector<16x32xf32>
    %562 = arith.addf %560, %561 : vector<16x32xf32>
    %563 = vector.extract_strided_slice %544 {offsets = [1, 0, 0], sizes = [1, 32, 32], strides = [1, 1, 1]} : vector<4x32x32xbf16> to vector<1x32x32xbf16>
    %564 = vector.shape_cast %563 : vector<1x32x32xbf16> to vector<32x32xbf16>
    %565 = arith.truncf %392 : vector<16x32xf32> to vector<16x32xbf16>
    %cst_171 = arith.constant dense<0.000000e+00> : vector<16x32xf32>
    %566 = tpu.matmul %565, %564, %cst_171 {dimension_numbers = #tpu.dot_dimension_numbers<[1], [0], [0], [1], [0, 0, 1, 1], [], []>} : vector<16x32xbf16>, vector<32x32xbf16>, vector<16x32xf32> -> vector<16x32xf32>
    %567 = vector.broadcast %548 : vector<1x32xf32> to vector<16x32xf32>
    %568 = arith.addf %566, %567 : vector<16x32xf32>
    %569 = vector.extract_strided_slice %544 {offsets = [2, 0, 0], sizes = [1, 32, 32], strides = [1, 1, 1]} : vector<4x32x32xbf16> to vector<1x32x32xbf16>
    %570 = vector.shape_cast %569 : vector<1x32x32xbf16> to vector<32x32xbf16>
    %571 = arith.truncf %392 : vector<16x32xf32> to vector<16x32xbf16>
    %cst_172 = arith.constant dense<0.000000e+00> : vector<16x32xf32>
    %572 = tpu.matmul %571, %570, %cst_172 {dimension_numbers = #tpu.dot_dimension_numbers<[1], [0], [0], [1], [0, 0, 1, 1], [], []>} : vector<16x32xbf16>, vector<32x32xbf16>, vector<16x32xf32> -> vector<16x32xf32>
    %573 = vector.broadcast %550 : vector<1x32xf32> to vector<16x32xf32>
    %574 = arith.addf %572, %573 : vector<16x32xf32>
    %575 = vector.extract_strided_slice %562 {offsets = [0, 0], sizes = [8, 8], strides = [1, 1]} : vector<16x32xf32> to vector<8x8xf32>
    %576 = vector.extract_strided_slice %562 {offsets = [0, 8], sizes = [8, 8], strides = [1, 1]} : vector<16x32xf32> to vector<8x8xf32>
    %577 = vector.extract_strided_slice %562 {offsets = [0, 16], sizes = [8, 8], strides = [1, 1]} : vector<16x32xf32> to vector<8x8xf32>
    %578 = vector.extract_strided_slice %562 {offsets = [0, 24], sizes = [8, 8], strides = [1, 1]} : vector<16x32xf32> to vector<8x8xf32>
    %579 = vector.extract_strided_slice %562 {offsets = [8, 0], sizes = [8, 8], strides = [1, 1]} : vector<16x32xf32> to vector<8x8xf32>
    %580 = vector.extract_strided_slice %562 {offsets = [8, 8], sizes = [8, 8], strides = [1, 1]} : vector<16x32xf32> to vector<8x8xf32>
    %581 = vector.extract_strided_slice %562 {offsets = [8, 16], sizes = [8, 8], strides = [1, 1]} : vector<16x32xf32> to vector<8x8xf32>
    %582 = vector.extract_strided_slice %562 {offsets = [8, 24], sizes = [8, 8], strides = [1, 1]} : vector<16x32xf32> to vector<8x8xf32>
    %583 = vector.shape_cast %575 : vector<8x8xf32> to vector<1x8x8xf32>
    %584 = vector.shape_cast %576 : vector<8x8xf32> to vector<1x8x8xf32>
    %585 = vector.shape_cast %577 : vector<8x8xf32> to vector<1x8x8xf32>
    %586 = vector.shape_cast %578 : vector<8x8xf32> to vector<1x8x8xf32>
    %587 = vector.shape_cast %579 : vector<8x8xf32> to vector<1x8x8xf32>
    %588 = vector.shape_cast %580 : vector<8x8xf32> to vector<1x8x8xf32>
    %589 = vector.shape_cast %581 : vector<8x8xf32> to vector<1x8x8xf32>
    %590 = vector.shape_cast %582 : vector<8x8xf32> to vector<1x8x8xf32>
    %591 = tpu.concatenate %583, %584, %585, %586, %587, %588, %589, %590 in 0 : vector<1x8x8xf32>, vector<1x8x8xf32>, vector<1x8x8xf32>, vector<1x8x8xf32>, vector<1x8x8xf32>, vector<1x8x8xf32>, vector<1x8x8xf32>, vector<1x8x8xf32> -> vector<8x8x8xf32>
    %592 = vector.extract_strided_slice %568 {offsets = [0, 0], sizes = [8, 8], strides = [1, 1]} : vector<16x32xf32> to vector<8x8xf32>
    %593 = vector.extract_strided_slice %568 {offsets = [0, 8], sizes = [8, 8], strides = [1, 1]} : vector<16x32xf32> to vector<8x8xf32>
    %594 = vector.extract_strided_slice %568 {offsets = [0, 16], sizes = [8, 8], strides = [1, 1]} : vector<16x32xf32> to vector<8x8xf32>
    %595 = vector.extract_strided_slice %568 {offsets = [0, 24], sizes = [8, 8], strides = [1, 1]} : vector<16x32xf32> to vector<8x8xf32>
    %596 = vector.extract_strided_slice %568 {offsets = [8, 0], sizes = [8, 8], strides = [1, 1]} : vector<16x32xf32> to vector<8x8xf32>
    %597 = vector.extract_strided_slice %568 {offsets = [8, 8], sizes = [8, 8], strides = [1, 1]} : vector<16x32xf32> to vector<8x8xf32>
    %598 = vector.extract_strided_slice %568 {offsets = [8, 16], sizes = [8, 8], strides = [1, 1]} : vector<16x32xf32> to vector<8x8xf32>
    %599 = vector.extract_strided_slice %568 {offsets = [8, 24], sizes = [8, 8], strides = [1, 1]} : vector<16x32xf32> to vector<8x8xf32>
    %600 = vector.shape_cast %592 : vector<8x8xf32> to vector<1x8x8xf32>
    %601 = vector.shape_cast %593 : vector<8x8xf32> to vector<1x8x8xf32>
    %602 = vector.shape_cast %594 : vector<8x8xf32> to vector<1x8x8xf32>
    %603 = vector.shape_cast %595 : vector<8x8xf32> to vector<1x8x8xf32>
    %604 = vector.shape_cast %596 : vector<8x8xf32> to vector<1x8x8xf32>
    %605 = vector.shape_cast %597 : vector<8x8xf32> to vector<1x8x8xf32>
    %606 = vector.shape_cast %598 : vector<8x8xf32> to vector<1x8x8xf32>
    %607 = vector.shape_cast %599 : vector<8x8xf32> to vector<1x8x8xf32>
    %608 = tpu.concatenate %600, %601, %602, %603, %604, %605, %606, %607 in 0 : vector<1x8x8xf32>, vector<1x8x8xf32>, vector<1x8x8xf32>, vector<1x8x8xf32>, vector<1x8x8xf32>, vector<1x8x8xf32>, vector<1x8x8xf32>, vector<1x8x8xf32> -> vector<8x8x8xf32>
    %609 = vector.extract_strided_slice %574 {offsets = [0, 0], sizes = [8, 8], strides = [1, 1]} : vector<16x32xf32> to vector<8x8xf32>
    %610 = vector.extract_strided_slice %574 {offsets = [0, 8], sizes = [8, 8], strides = [1, 1]} : vector<16x32xf32> to vector<8x8xf32>
    %611 = vector.extract_strided_slice %574 {offsets = [0, 16], sizes = [8, 8], strides = [1, 1]} : vector<16x32xf32> to vector<8x8xf32>
    %612 = vector.extract_strided_slice %574 {offsets = [0, 24], sizes = [8, 8], strides = [1, 1]} : vector<16x32xf32> to vector<8x8xf32>
    %613 = vector.extract_strided_slice %574 {offsets = [8, 0], sizes = [8, 8], strides = [1, 1]} : vector<16x32xf32> to vector<8x8xf32>
    %614 = vector.extract_strided_slice %574 {offsets = [8, 8], sizes = [8, 8], strides = [1, 1]} : vector<16x32xf32> to vector<8x8xf32>
    %615 = vector.extract_strided_slice %574 {offsets = [8, 16], sizes = [8, 8], strides = [1, 1]} : vector<16x32xf32> to vector<8x8xf32>
    %616 = vector.extract_strided_slice %574 {offsets = [8, 24], sizes = [8, 8], strides = [1, 1]} : vector<16x32xf32> to vector<8x8xf32>
    %617 = vector.shape_cast %609 : vector<8x8xf32> to vector<1x8x8xf32>
    %618 = vector.shape_cast %610 : vector<8x8xf32> to vector<1x8x8xf32>
    %619 = vector.shape_cast %611 : vector<8x8xf32> to vector<1x8x8xf32>
    %620 = vector.shape_cast %612 : vector<8x8xf32> to vector<1x8x8xf32>
    %621 = vector.shape_cast %613 : vector<8x8xf32> to vector<1x8x8xf32>
    %622 = vector.shape_cast %614 : vector<8x8xf32> to vector<1x8x8xf32>
    %623 = vector.shape_cast %615 : vector<8x8xf32> to vector<1x8x8xf32>
    %624 = vector.shape_cast %616 : vector<8x8xf32> to vector<1x8x8xf32>
    %625 = tpu.concatenate %617, %618, %619, %620, %621, %622, %623, %624 in 0 : vector<1x8x8xf32>, vector<1x8x8xf32>, vector<1x8x8xf32>, vector<1x8x8xf32>, vector<1x8x8xf32>, vector<1x8x8xf32>, vector<1x8x8xf32>, vector<1x8x8xf32> -> vector<8x8x8xf32>
    %626 = arith.truncf %591 : vector<8x8x8xf32> to vector<8x8x8xbf16>
    %627 = arith.truncf %608 : vector<8x8x8xf32> to vector<8x8x8xbf16>
    "tpu.trace_start"() <{level = 10 : i32, message = "nqd,nkd->nqk"}> : () -> ()
    %cst_173 = arith.constant dense<0.000000e+00> : vector<8x8x8xf32>
    %628 = tpu.matmul %626, %627, %cst_173 {dimension_numbers = #tpu.dot_dimension_numbers<[2], [2], [1], [1], [0, 0, 0, 1, 1, 1], [0], [0]>} : vector<8x8x8xbf16>, vector<8x8x8xbf16>, vector<8x8x8xf32> -> vector<8x8x8xf32>
    "tpu.trace_stop"() : () -> ()
    %cst_174 = arith.constant dense<0xFF800000> : vector<8x8xf32>
    %629 = vector.multi_reduction <maximumf>, %628, %cst_174 [2] : vector<8x8x8xf32> to vector<8x8xf32>
    %630 = vector.shape_cast %629 : vector<8x8xf32> to vector<8x8x1xf32>
    %631 = vector.broadcast %630 : vector<8x8x1xf32> to vector<8x8x8xf32>
    %632 = arith.subf %628, %631 : vector<8x8x8xf32>
    %633 = math.exp %632 : vector<8x8x8xf32>
    %cst_175 = arith.constant dense<0.000000e+00> : vector<8x8xf32>
    %634 = vector.multi_reduction <add>, %633, %cst_175 [2] : vector<8x8x8xf32> to vector<8x8xf32>
    %635 = vector.shape_cast %634 : vector<8x8xf32> to vector<8x8x1xf32>
    %636 = vector.broadcast %635 : vector<8x8x1xf32> to vector<8x8x8xf32>
    %637 = arith.divf %633, %636 : vector<8x8x8xf32>
    %638 = arith.truncf %637 : vector<8x8x8xf32> to vector<8x8x8xbf16>
    %639 = arith.truncf %625 : vector<8x8x8xf32> to vector<8x8x8xbf16>
    "tpu.trace_start"() <{level = 10 : i32, message = "nqk,nkd->nqd"}> : () -> ()
    %cst_176 = arith.constant dense<0.000000e+00> : vector<8x8x8xf32>
    %640 = tpu.matmul %638, %639, %cst_176 {dimension_numbers = #tpu.dot_dimension_numbers<[2], [1], [1], [2], [0, 0, 0, 1, 1, 2], [0], [0]>} : vector<8x8x8xbf16>, vector<8x8x8xbf16>, vector<8x8x8xf32> -> vector<8x8x8xf32>
    "tpu.trace_stop"() : () -> ()
    %641 = vector.extract_strided_slice %640 {offsets = [0, 0, 0], sizes = [1, 8, 8], strides = [1, 1, 1]} : vector<8x8x8xf32> to vector<1x8x8xf32>
    %642 = vector.shape_cast %641 : vector<1x8x8xf32> to vector<8x8xf32>
    %643 = vector.extract_strided_slice %640 {offsets = [1, 0, 0], sizes = [1, 8, 8], strides = [1, 1, 1]} : vector<8x8x8xf32> to vector<1x8x8xf32>
    %644 = vector.shape_cast %643 : vector<1x8x8xf32> to vector<8x8xf32>
    %645 = vector.extract_strided_slice %640 {offsets = [2, 0, 0], sizes = [1, 8, 8], strides = [1, 1, 1]} : vector<8x8x8xf32> to vector<1x8x8xf32>
    %646 = vector.shape_cast %645 : vector<1x8x8xf32> to vector<8x8xf32>
    %647 = vector.extract_strided_slice %640 {offsets = [3, 0, 0], sizes = [1, 8, 8], strides = [1, 1, 1]} : vector<8x8x8xf32> to vector<1x8x8xf32>
    %648 = vector.shape_cast %647 : vector<1x8x8xf32> to vector<8x8xf32>
    %649 = tpu.concatenate %642, %644, %646, %648 in 1 : vector<8x8xf32>, vector<8x8xf32>, vector<8x8xf32>, vector<8x8xf32> -> vector<8x32xf32>
    %650 = vector.extract_strided_slice %640 {offsets = [4, 0, 0], sizes = [1, 8, 8], strides = [1, 1, 1]} : vector<8x8x8xf32> to vector<1x8x8xf32>
    %651 = vector.shape_cast %650 : vector<1x8x8xf32> to vector<8x8xf32>
    %652 = vector.extract_strided_slice %640 {offsets = [5, 0, 0], sizes = [1, 8, 8], strides = [1, 1, 1]} : vector<8x8x8xf32> to vector<1x8x8xf32>
    %653 = vector.shape_cast %652 : vector<1x8x8xf32> to vector<8x8xf32>
    %654 = vector.extract_strided_slice %640 {offsets = [6, 0, 0], sizes = [1, 8, 8], strides = [1, 1, 1]} : vector<8x8x8xf32> to vector<1x8x8xf32>
    %655 = vector.shape_cast %654 : vector<1x8x8xf32> to vector<8x8xf32>
    %656 = vector.extract_strided_slice %640 {offsets = [7, 0, 0], sizes = [1, 8, 8], strides = [1, 1, 1]} : vector<8x8x8xf32> to vector<1x8x8xf32>
    %657 = vector.shape_cast %656 : vector<1x8x8xf32> to vector<8x8xf32>
    %658 = tpu.concatenate %651, %653, %655, %657 in 1 : vector<8x8xf32>, vector<8x8xf32>, vector<8x8xf32>, vector<8x8xf32> -> vector<8x32xf32>
    %659 = tpu.concatenate %649, %658 in 0 : vector<8x32xf32>, vector<8x32xf32> -> vector<16x32xf32>
    %660 = vector.extract_strided_slice %544 {offsets = [3, 0, 0], sizes = [1, 32, 32], strides = [1, 1, 1]} : vector<4x32x32xbf16> to vector<1x32x32xbf16>
    %661 = vector.shape_cast %660 : vector<1x32x32xbf16> to vector<32x32xbf16>
    %662 = arith.truncf %659 : vector<16x32xf32> to vector<16x32xbf16>
    %cst_177 = arith.constant dense<0.000000e+00> : vector<16x32xf32>
    %663 = tpu.matmul %662, %661, %cst_177 {dimension_numbers = #tpu.dot_dimension_numbers<[1], [0], [0], [1], [0, 0, 1, 1], [], []>} : vector<16x32xbf16>, vector<32x32xbf16>, vector<16x32xf32> -> vector<16x32xf32>
    %664 = vector.broadcast %552 : vector<1x32xf32> to vector<16x32xf32>
    %665 = arith.addf %663, %664 : vector<16x32xf32>
    %666 = arith.addf %542, %665 : vector<16x32xf32>
    %cst_178 = arith.constant dense<0.000000e+00> : vector<16xf32>
    %667 = vector.multi_reduction <add>, %666, %cst_178 [1] : vector<16x32xf32> to vector<16xf32>
    %668 = vector.shape_cast %667 : vector<16xf32> to vector<16x1xf32>
    %cst_179 = arith.constant 3.200000e+01 : f32
    %669 = vector.broadcast %cst_179 : f32 to vector<16x1xf32>
    %670 = arith.divf %668, %669 : vector<16x1xf32>
    %671 = vector.broadcast %670 : vector<16x1xf32> to vector<16x32xf32>
    %672 = arith.subf %666, %671 : vector<16x32xf32>
    %673 = arith.mulf %672, %672 : vector<16x32xf32>
    %cst_180 = arith.constant dense<0.000000e+00> : vector<16xf32>
    %674 = vector.multi_reduction <add>, %673, %cst_180 [1] : vector<16x32xf32> to vector<16xf32>
    %675 = vector.shape_cast %674 : vector<16xf32> to vector<16x1xf32>
    %cst_181 = arith.constant 3.200000e+01 : f32
    %676 = vector.broadcast %cst_181 : f32 to vector<16x1xf32>
    %677 = arith.divf %675, %676 : vector<16x1xf32>
    %678 = vector.broadcast %670 : vector<16x1xf32> to vector<16x32xf32>
    %679 = arith.subf %666, %678 : vector<16x32xf32>
    %cst_182 = arith.constant 9.99999974E-6 : f32
    %680 = vector.broadcast %cst_182 : f32 to vector<16x1xf32>
    %681 = arith.addf %677, %680 : vector<16x1xf32>
    %682 = math.rsqrt %681 : vector<16x1xf32>
    %683 = vector.broadcast %682 : vector<16x1xf32> to vector<16x32xf32>
    %684 = arith.mulf %679, %683 : vector<16x32xf32>
    %685 = vector.broadcast %554 : vector<1x32xf32> to vector<16x32xf32>
    %686 = arith.mulf %684, %685 : vector<16x32xf32>
    %687 = vector.broadcast %556 : vector<1x32xf32> to vector<16x32xf32>
    %688 = arith.addf %686, %687 : vector<16x32xf32>
    %c0_183 = arith.constant 0 : index
    %c0_184 = arith.constant 0 : index
    %c0_185 = arith.constant 0 : index
    %c0_186 = arith.constant 0 : index
    %689 = vector.load %arg7[%c0_183, %c0_184, %c0_185, %c0_186] : memref<2x2x32x64xbf16, #tpu.memory_space<vmem>>, vector<1x2x32x64xbf16>
    %690 = vector.shape_cast %689 : vector<1x2x32x64xbf16> to vector<2x32x64xbf16>
    %c0_187 = arith.constant 0 : index
    %c0_188 = arith.constant 0 : index
    %c0_189 = arith.constant 0 : index
    %691 = vector.load %arg9[%c0_187, %c0_188, %c0_189] : memref<2x1x64xf32, #tpu.memory_space<vmem>>, vector<1x1x64xf32>
    %692 = vector.shape_cast %691 : vector<1x1x64xf32> to vector<1x64xf32>
    %c0_190 = arith.constant 0 : index
    %c12 = arith.constant 12 : index
    %c0_191 = arith.constant 0 : index
    %693 = vector.load %arg8[%c0_190, %c12, %c0_191] : memref<2x15x32xf32, #tpu.memory_space<vmem>>, vector<1x1x32xf32>
    %694 = vector.shape_cast %693 : vector<1x1x32xf32> to vector<1x32xf32>
    %c0_192 = arith.constant 0 : index
    %c13 = arith.constant 13 : index
    %c0_193 = arith.constant 0 : index
    %695 = vector.load %arg8[%c0_192, %c13, %c0_193] : memref<2x15x32xf32, #tpu.memory_space<vmem>>, vector<1x1x32xf32>
    %696 = vector.shape_cast %695 : vector<1x1x32xf32> to vector<1x32xf32>
    %c0_194 = arith.constant 0 : index
    %c14 = arith.constant 14 : index
    %c0_195 = arith.constant 0 : index
    %697 = vector.load %arg8[%c0_194, %c14, %c0_195] : memref<2x15x32xf32, #tpu.memory_space<vmem>>, vector<1x1x32xf32>
    %698 = vector.shape_cast %697 : vector<1x1x32xf32> to vector<1x32xf32>
    %699 = vector.extract_strided_slice %690 {offsets = [0, 0, 0], sizes = [1, 32, 64], strides = [1, 1, 1]} : vector<2x32x64xbf16> to vector<1x32x64xbf16>
    %700 = vector.shape_cast %699 : vector<1x32x64xbf16> to vector<32x64xbf16>
    %701 = arith.truncf %688 : vector<16x32xf32> to vector<16x32xbf16>
    %cst_196 = arith.constant dense<0.000000e+00> : vector<16x64xf32>
    %702 = tpu.matmul %701, %700, %cst_196 {dimension_numbers = #tpu.dot_dimension_numbers<[1], [0], [0], [1], [0, 0, 1, 1], [], []>} : vector<16x32xbf16>, vector<32x64xbf16>, vector<16x64xf32> -> vector<16x64xf32>
    %703 = vector.broadcast %692 : vector<1x64xf32> to vector<16x64xf32>
    %704 = arith.addf %702, %703 : vector<16x64xf32>
    %cst_197 = arith.constant 0.000000e+00 : f32
    %705 = vector.broadcast %cst_197 : f32 to vector<16x64xf32>
    %706 = arith.maximumf %704, %705 : vector<16x64xf32>
    %707 = vector.extract_strided_slice %690 {offsets = [1, 0, 0], sizes = [1, 32, 64], strides = [1, 1, 1]} : vector<2x32x64xbf16> to vector<1x32x64xbf16>
    %708 = vector.shape_cast %707 : vector<1x32x64xbf16> to vector<32x64xbf16>
    %709 = arith.truncf %706 : vector<16x64xf32> to vector<16x64xbf16>
    %cst_198 = arith.constant dense<0.000000e+00> : vector<16x32xf32>
    %710 = tpu.matmul %709, %708, %cst_198 {dimension_numbers = #tpu.dot_dimension_numbers<[1], [1], [0], [0], [0, 0, 1, 0], [], []>} : vector<16x64xbf16>, vector<32x64xbf16>, vector<16x32xf32> -> vector<16x32xf32>
    %711 = vector.broadcast %694 : vector<1x32xf32> to vector<16x32xf32>
    %712 = arith.addf %710, %711 : vector<16x32xf32>
    %713 = arith.addf %688, %712 : vector<16x32xf32>
    %cst_199 = arith.constant dense<0.000000e+00> : vector<16xf32>
    %714 = vector.multi_reduction <add>, %713, %cst_199 [1] : vector<16x32xf32> to vector<16xf32>
    %715 = vector.shape_cast %714 : vector<16xf32> to vector<16x1xf32>
    %cst_200 = arith.constant 3.200000e+01 : f32
    %716 = vector.broadcast %cst_200 : f32 to vector<16x1xf32>
    %717 = arith.divf %715, %716 : vector<16x1xf32>
    %718 = vector.broadcast %717 : vector<16x1xf32> to vector<16x32xf32>
    %719 = arith.subf %713, %718 : vector<16x32xf32>
    %720 = arith.mulf %719, %719 : vector<16x32xf32>
    %cst_201 = arith.constant dense<0.000000e+00> : vector<16xf32>
    %721 = vector.multi_reduction <add>, %720, %cst_201 [1] : vector<16x32xf32> to vector<16xf32>
    %722 = vector.shape_cast %721 : vector<16xf32> to vector<16x1xf32>
    %cst_202 = arith.constant 3.200000e+01 : f32
    %723 = vector.broadcast %cst_202 : f32 to vector<16x1xf32>
    %724 = arith.divf %722, %723 : vector<16x1xf32>
    %725 = vector.broadcast %717 : vector<16x1xf32> to vector<16x32xf32>
    %726 = arith.subf %713, %725 : vector<16x32xf32>
    %cst_203 = arith.constant 9.99999974E-6 : f32
    %727 = vector.broadcast %cst_203 : f32 to vector<16x1xf32>
    %728 = arith.addf %724, %727 : vector<16x1xf32>
    %729 = math.rsqrt %728 : vector<16x1xf32>
    %730 = vector.broadcast %729 : vector<16x1xf32> to vector<16x32xf32>
    %731 = arith.mulf %726, %730 : vector<16x32xf32>
    %732 = vector.broadcast %696 : vector<1x32xf32> to vector<16x32xf32>
    %733 = arith.mulf %731, %732 : vector<16x32xf32>
    %734 = vector.broadcast %698 : vector<1x32xf32> to vector<16x32xf32>
    %735 = arith.addf %733, %734 : vector<16x32xf32>
    %c1_204 = arith.constant 1 : index
    %c0_205 = arith.constant 0 : index
    %c0_206 = arith.constant 0 : index
    %c0_207 = arith.constant 0 : index
    %c0_208 = arith.constant 0 : index
    %736 = vector.load %arg6[%c1_204, %c0_205, %c0_206, %c0_207, %c0_208] : memref<2x2x4x32x32xbf16, #tpu.memory_space<vmem>>, vector<1x1x4x32x32xbf16>
    %737 = vector.shape_cast %736 : vector<1x1x4x32x32xbf16> to vector<4x32x32xbf16>
    %c1_209 = arith.constant 1 : index
    %c0_210 = arith.constant 0 : index
    %c0_211 = arith.constant 0 : index
    %738 = vector.load %arg8[%c1_209, %c0_210, %c0_211] : memref<2x15x32xf32, #tpu.memory_space<vmem>>, vector<1x1x32xf32>
    %739 = vector.shape_cast %738 : vector<1x1x32xf32> to vector<1x32xf32>
    %c1_212 = arith.constant 1 : index
    %c1_213 = arith.constant 1 : index
    %c0_214 = arith.constant 0 : index
    %740 = vector.load %arg8[%c1_212, %c1_213, %c0_214] : memref<2x15x32xf32, #tpu.memory_space<vmem>>, vector<1x1x32xf32>
    %741 = vector.shape_cast %740 : vector<1x1x32xf32> to vector<1x32xf32>
    %c1_215 = arith.constant 1 : index
    %c2_216 = arith.constant 2 : index
    %c0_217 = arith.constant 0 : index
    %742 = vector.load %arg8[%c1_215, %c2_216, %c0_217] : memref<2x15x32xf32, #tpu.memory_space<vmem>>, vector<1x1x32xf32>
    %743 = vector.shape_cast %742 : vector<1x1x32xf32> to vector<1x32xf32>
    %c1_218 = arith.constant 1 : index
    %c3_219 = arith.constant 3 : index
    %c0_220 = arith.constant 0 : index
    %744 = vector.load %arg8[%c1_218, %c3_219, %c0_220] : memref<2x15x32xf32, #tpu.memory_space<vmem>>, vector<1x1x32xf32>
    %745 = vector.shape_cast %744 : vector<1x1x32xf32> to vector<1x32xf32>
    %c1_221 = arith.constant 1 : index
    %c4_222 = arith.constant 4 : index
    %c0_223 = arith.constant 0 : index
    %746 = vector.load %arg8[%c1_221, %c4_222, %c0_223] : memref<2x15x32xf32, #tpu.memory_space<vmem>>, vector<1x1x32xf32>
    %747 = vector.shape_cast %746 : vector<1x1x32xf32> to vector<1x32xf32>
    %c1_224 = arith.constant 1 : index
    %c5_225 = arith.constant 5 : index
    %c0_226 = arith.constant 0 : index
    %748 = vector.load %arg8[%c1_224, %c5_225, %c0_226] : memref<2x15x32xf32, #tpu.memory_space<vmem>>, vector<1x1x32xf32>
    %749 = vector.shape_cast %748 : vector<1x1x32xf32> to vector<1x32xf32>
    %750 = vector.extract_strided_slice %737 {offsets = [0, 0, 0], sizes = [1, 32, 32], strides = [1, 1, 1]} : vector<4x32x32xbf16> to vector<1x32x32xbf16>
    %751 = vector.shape_cast %750 : vector<1x32x32xbf16> to vector<32x32xbf16>
    %752 = arith.truncf %735 : vector<16x32xf32> to vector<16x32xbf16>
    %cst_227 = arith.constant dense<0.000000e+00> : vector<16x32xf32>
    %753 = tpu.matmul %752, %751, %cst_227 {dimension_numbers = #tpu.dot_dimension_numbers<[1], [0], [0], [1], [0, 0, 1, 1], [], []>} : vector<16x32xbf16>, vector<32x32xbf16>, vector<16x32xf32> -> vector<16x32xf32>
    %754 = vector.broadcast %739 : vector<1x32xf32> to vector<16x32xf32>
    %755 = arith.addf %753, %754 : vector<16x32xf32>
    %756 = vector.extract_strided_slice %737 {offsets = [1, 0, 0], sizes = [1, 32, 32], strides = [1, 1, 1]} : vector<4x32x32xbf16> to vector<1x32x32xbf16>
    %757 = vector.shape_cast %756 : vector<1x32x32xbf16> to vector<32x32xbf16>
    %758 = arith.truncf %735 : vector<16x32xf32> to vector<16x32xbf16>
    %cst_228 = arith.constant dense<0.000000e+00> : vector<16x32xf32>
    %759 = tpu.matmul %758, %757, %cst_228 {dimension_numbers = #tpu.dot_dimension_numbers<[1], [0], [0], [1], [0, 0, 1, 1], [], []>} : vector<16x32xbf16>, vector<32x32xbf16>, vector<16x32xf32> -> vector<16x32xf32>
    %760 = vector.broadcast %741 : vector<1x32xf32> to vector<16x32xf32>
    %761 = arith.addf %759, %760 : vector<16x32xf32>
    %762 = vector.extract_strided_slice %737 {offsets = [2, 0, 0], sizes = [1, 32, 32], strides = [1, 1, 1]} : vector<4x32x32xbf16> to vector<1x32x32xbf16>
    %763 = vector.shape_cast %762 : vector<1x32x32xbf16> to vector<32x32xbf16>
    %764 = arith.truncf %735 : vector<16x32xf32> to vector<16x32xbf16>
    %cst_229 = arith.constant dense<0.000000e+00> : vector<16x32xf32>
    %765 = tpu.matmul %764, %763, %cst_229 {dimension_numbers = #tpu.dot_dimension_numbers<[1], [0], [0], [1], [0, 0, 1, 1], [], []>} : vector<16x32xbf16>, vector<32x32xbf16>, vector<16x32xf32> -> vector<16x32xf32>
    %766 = vector.broadcast %743 : vector<1x32xf32> to vector<16x32xf32>
    %767 = arith.addf %765, %766 : vector<16x32xf32>
    %768 = vector.extract_strided_slice %755 {offsets = [0, 0], sizes = [8, 8], strides = [1, 1]} : vector<16x32xf32> to vector<8x8xf32>
    %769 = vector.extract_strided_slice %755 {offsets = [0, 8], sizes = [8, 8], strides = [1, 1]} : vector<16x32xf32> to vector<8x8xf32>
    %770 = vector.extract_strided_slice %755 {offsets = [0, 16], sizes = [8, 8], strides = [1, 1]} : vector<16x32xf32> to vector<8x8xf32>
    %771 = vector.extract_strided_slice %755 {offsets = [0, 24], sizes = [8, 8], strides = [1, 1]} : vector<16x32xf32> to vector<8x8xf32>
    %772 = vector.extract_strided_slice %755 {offsets = [8, 0], sizes = [8, 8], strides = [1, 1]} : vector<16x32xf32> to vector<8x8xf32>
    %773 = vector.extract_strided_slice %755 {offsets = [8, 8], sizes = [8, 8], strides = [1, 1]} : vector<16x32xf32> to vector<8x8xf32>
    %774 = vector.extract_strided_slice %755 {offsets = [8, 16], sizes = [8, 8], strides = [1, 1]} : vector<16x32xf32> to vector<8x8xf32>
    %775 = vector.extract_strided_slice %755 {offsets = [8, 24], sizes = [8, 8], strides = [1, 1]} : vector<16x32xf32> to vector<8x8xf32>
    %776 = vector.shape_cast %768 : vector<8x8xf32> to vector<1x8x8xf32>
    %777 = vector.shape_cast %769 : vector<8x8xf32> to vector<1x8x8xf32>
    %778 = vector.shape_cast %770 : vector<8x8xf32> to vector<1x8x8xf32>
    %779 = vector.shape_cast %771 : vector<8x8xf32> to vector<1x8x8xf32>
    %780 = vector.shape_cast %772 : vector<8x8xf32> to vector<1x8x8xf32>
    %781 = vector.shape_cast %773 : vector<8x8xf32> to vector<1x8x8xf32>
    %782 = vector.shape_cast %774 : vector<8x8xf32> to vector<1x8x8xf32>
    %783 = vector.shape_cast %775 : vector<8x8xf32> to vector<1x8x8xf32>
    %784 = tpu.concatenate %776, %777, %778, %779, %780, %781, %782, %783 in 0 : vector<1x8x8xf32>, vector<1x8x8xf32>, vector<1x8x8xf32>, vector<1x8x8xf32>, vector<1x8x8xf32>, vector<1x8x8xf32>, vector<1x8x8xf32>, vector<1x8x8xf32> -> vector<8x8x8xf32>
    %785 = vector.extract_strided_slice %761 {offsets = [0, 0], sizes = [8, 8], strides = [1, 1]} : vector<16x32xf32> to vector<8x8xf32>
    %786 = vector.extract_strided_slice %761 {offsets = [0, 8], sizes = [8, 8], strides = [1, 1]} : vector<16x32xf32> to vector<8x8xf32>
    %787 = vector.extract_strided_slice %761 {offsets = [0, 16], sizes = [8, 8], strides = [1, 1]} : vector<16x32xf32> to vector<8x8xf32>
    %788 = vector.extract_strided_slice %761 {offsets = [0, 24], sizes = [8, 8], strides = [1, 1]} : vector<16x32xf32> to vector<8x8xf32>
    %789 = vector.extract_strided_slice %761 {offsets = [8, 0], sizes = [8, 8], strides = [1, 1]} : vector<16x32xf32> to vector<8x8xf32>
    %790 = vector.extract_strided_slice %761 {offsets = [8, 8], sizes = [8, 8], strides = [1, 1]} : vector<16x32xf32> to vector<8x8xf32>
    %791 = vector.extract_strided_slice %761 {offsets = [8, 16], sizes = [8, 8], strides = [1, 1]} : vector<16x32xf32> to vector<8x8xf32>
    %792 = vector.extract_strided_slice %761 {offsets = [8, 24], sizes = [8, 8], strides = [1, 1]} : vector<16x32xf32> to vector<8x8xf32>
    %793 = vector.shape_cast %785 : vector<8x8xf32> to vector<1x8x8xf32>
    %794 = vector.shape_cast %786 : vector<8x8xf32> to vector<1x8x8xf32>
    %795 = vector.shape_cast %787 : vector<8x8xf32> to vector<1x8x8xf32>
    %796 = vector.shape_cast %788 : vector<8x8xf32> to vector<1x8x8xf32>
    %797 = vector.shape_cast %789 : vector<8x8xf32> to vector<1x8x8xf32>
    %798 = vector.shape_cast %790 : vector<8x8xf32> to vector<1x8x8xf32>
    %799 = vector.shape_cast %791 : vector<8x8xf32> to vector<1x8x8xf32>
    %800 = vector.shape_cast %792 : vector<8x8xf32> to vector<1x8x8xf32>
    %801 = tpu.concatenate %793, %794, %795, %796, %797, %798, %799, %800 in 0 : vector<1x8x8xf32>, vector<1x8x8xf32>, vector<1x8x8xf32>, vector<1x8x8xf32>, vector<1x8x8xf32>, vector<1x8x8xf32>, vector<1x8x8xf32>, vector<1x8x8xf32> -> vector<8x8x8xf32>
    %802 = vector.extract_strided_slice %767 {offsets = [0, 0], sizes = [8, 8], strides = [1, 1]} : vector<16x32xf32> to vector<8x8xf32>
    %803 = vector.extract_strided_slice %767 {offsets = [0, 8], sizes = [8, 8], strides = [1, 1]} : vector<16x32xf32> to vector<8x8xf32>
    %804 = vector.extract_strided_slice %767 {offsets = [0, 16], sizes = [8, 8], strides = [1, 1]} : vector<16x32xf32> to vector<8x8xf32>
    %805 = vector.extract_strided_slice %767 {offsets = [0, 24], sizes = [8, 8], strides = [1, 1]} : vector<16x32xf32> to vector<8x8xf32>
    %806 = vector.extract_strided_slice %767 {offsets = [8, 0], sizes = [8, 8], strides = [1, 1]} : vector<16x32xf32> to vector<8x8xf32>
    %807 = vector.extract_strided_slice %767 {offsets = [8, 8], sizes = [8, 8], strides = [1, 1]} : vector<16x32xf32> to vector<8x8xf32>
    %808 = vector.extract_strided_slice %767 {offsets = [8, 16], sizes = [8, 8], strides = [1, 1]} : vector<16x32xf32> to vector<8x8xf32>
    %809 = vector.extract_strided_slice %767 {offsets = [8, 24], sizes = [8, 8], strides = [1, 1]} : vector<16x32xf32> to vector<8x8xf32>
    %810 = vector.shape_cast %802 : vector<8x8xf32> to vector<1x8x8xf32>
    %811 = vector.shape_cast %803 : vector<8x8xf32> to vector<1x8x8xf32>
    %812 = vector.shape_cast %804 : vector<8x8xf32> to vector<1x8x8xf32>
    %813 = vector.shape_cast %805 : vector<8x8xf32> to vector<1x8x8xf32>
    %814 = vector.shape_cast %806 : vector<8x8xf32> to vector<1x8x8xf32>
    %815 = vector.shape_cast %807 : vector<8x8xf32> to vector<1x8x8xf32>
    %816 = vector.shape_cast %808 : vector<8x8xf32> to vector<1x8x8xf32>
    %817 = vector.shape_cast %809 : vector<8x8xf32> to vector<1x8x8xf32>
    %818 = tpu.concatenate %810, %811, %812, %813, %814, %815, %816, %817 in 0 : vector<1x8x8xf32>, vector<1x8x8xf32>, vector<1x8x8xf32>, vector<1x8x8xf32>, vector<1x8x8xf32>, vector<1x8x8xf32>, vector<1x8x8xf32>, vector<1x8x8xf32> -> vector<8x8x8xf32>
    %819 = arith.truncf %784 : vector<8x8x8xf32> to vector<8x8x8xbf16>
    %820 = arith.truncf %801 : vector<8x8x8xf32> to vector<8x8x8xbf16>
    "tpu.trace_start"() <{level = 10 : i32, message = "nqd,nkd->nqk"}> : () -> ()
    %cst_230 = arith.constant dense<0.000000e+00> : vector<8x8x8xf32>
    %821 = tpu.matmul %819, %820, %cst_230 {dimension_numbers = #tpu.dot_dimension_numbers<[2], [2], [1], [1], [0, 0, 0, 1, 1, 1], [0], [0]>} : vector<8x8x8xbf16>, vector<8x8x8xbf16>, vector<8x8x8xf32> -> vector<8x8x8xf32>
    "tpu.trace_stop"() : () -> ()
    %822 = vector.shape_cast %5 : vector<8x8xf32> to vector<1x8x8xf32>
    %823 = vector.broadcast %822 : vector<1x8x8xf32> to vector<8x8x8xf32>
    %824 = arith.addf %821, %823 : vector<8x8x8xf32>
    %cst_231 = arith.constant dense<0xFF800000> : vector<8x8xf32>
    %825 = vector.multi_reduction <maximumf>, %824, %cst_231 [2] : vector<8x8x8xf32> to vector<8x8xf32>
    %826 = vector.shape_cast %825 : vector<8x8xf32> to vector<8x8x1xf32>
    %827 = vector.broadcast %826 : vector<8x8x1xf32> to vector<8x8x8xf32>
    %828 = arith.subf %824, %827 : vector<8x8x8xf32>
    %829 = math.exp %828 : vector<8x8x8xf32>
    %cst_232 = arith.constant dense<0.000000e+00> : vector<8x8xf32>
    %830 = vector.multi_reduction <add>, %829, %cst_232 [2] : vector<8x8x8xf32> to vector<8x8xf32>
    %831 = vector.shape_cast %830 : vector<8x8xf32> to vector<8x8x1xf32>
    %832 = vector.broadcast %831 : vector<8x8x1xf32> to vector<8x8x8xf32>
    %833 = arith.divf %829, %832 : vector<8x8x8xf32>
    %834 = arith.truncf %833 : vector<8x8x8xf32> to vector<8x8x8xbf16>
    %835 = arith.truncf %818 : vector<8x8x8xf32> to vector<8x8x8xbf16>
    "tpu.trace_start"() <{level = 10 : i32, message = "nqk,nkd->nqd"}> : () -> ()
    %cst_233 = arith.constant dense<0.000000e+00> : vector<8x8x8xf32>
    %836 = tpu.matmul %834, %835, %cst_233 {dimension_numbers = #tpu.dot_dimension_numbers<[2], [1], [1], [2], [0, 0, 0, 1, 1, 2], [0], [0]>} : vector<8x8x8xbf16>, vector<8x8x8xbf16>, vector<8x8x8xf32> -> vector<8x8x8xf32>
    "tpu.trace_stop"() : () -> ()
    %837 = vector.extract_strided_slice %836 {offsets = [0, 0, 0], sizes = [1, 8, 8], strides = [1, 1, 1]} : vector<8x8x8xf32> to vector<1x8x8xf32>
    %838 = vector.shape_cast %837 : vector<1x8x8xf32> to vector<8x8xf32>
    %839 = vector.extract_strided_slice %836 {offsets = [1, 0, 0], sizes = [1, 8, 8], strides = [1, 1, 1]} : vector<8x8x8xf32> to vector<1x8x8xf32>
    %840 = vector.shape_cast %839 : vector<1x8x8xf32> to vector<8x8xf32>
    %841 = vector.extract_strided_slice %836 {offsets = [2, 0, 0], sizes = [1, 8, 8], strides = [1, 1, 1]} : vector<8x8x8xf32> to vector<1x8x8xf32>
    %842 = vector.shape_cast %841 : vector<1x8x8xf32> to vector<8x8xf32>
    %843 = vector.extract_strided_slice %836 {offsets = [3, 0, 0], sizes = [1, 8, 8], strides = [1, 1, 1]} : vector<8x8x8xf32> to vector<1x8x8xf32>
    %844 = vector.shape_cast %843 : vector<1x8x8xf32> to vector<8x8xf32>
    %845 = tpu.concatenate %838, %840, %842, %844 in 1 : vector<8x8xf32>, vector<8x8xf32>, vector<8x8xf32>, vector<8x8xf32> -> vector<8x32xf32>
    %846 = vector.extract_strided_slice %836 {offsets = [4, 0, 0], sizes = [1, 8, 8], strides = [1, 1, 1]} : vector<8x8x8xf32> to vector<1x8x8xf32>
    %847 = vector.shape_cast %846 : vector<1x8x8xf32> to vector<8x8xf32>
    %848 = vector.extract_strided_slice %836 {offsets = [5, 0, 0], sizes = [1, 8, 8], strides = [1, 1, 1]} : vector<8x8x8xf32> to vector<1x8x8xf32>
    %849 = vector.shape_cast %848 : vector<1x8x8xf32> to vector<8x8xf32>
    %850 = vector.extract_strided_slice %836 {offsets = [6, 0, 0], sizes = [1, 8, 8], strides = [1, 1, 1]} : vector<8x8x8xf32> to vector<1x8x8xf32>
    %851 = vector.shape_cast %850 : vector<1x8x8xf32> to vector<8x8xf32>
    %852 = vector.extract_strided_slice %836 {offsets = [7, 0, 0], sizes = [1, 8, 8], strides = [1, 1, 1]} : vector<8x8x8xf32> to vector<1x8x8xf32>
    %853 = vector.shape_cast %852 : vector<1x8x8xf32> to vector<8x8xf32>
    %854 = tpu.concatenate %847, %849, %851, %853 in 1 : vector<8x8xf32>, vector<8x8xf32>, vector<8x8xf32>, vector<8x8xf32> -> vector<8x32xf32>
    %855 = tpu.concatenate %845, %854 in 0 : vector<8x32xf32>, vector<8x32xf32> -> vector<16x32xf32>
    %856 = vector.extract_strided_slice %737 {offsets = [3, 0, 0], sizes = [1, 32, 32], strides = [1, 1, 1]} : vector<4x32x32xbf16> to vector<1x32x32xbf16>
    %857 = vector.shape_cast %856 : vector<1x32x32xbf16> to vector<32x32xbf16>
    %858 = arith.truncf %855 : vector<16x32xf32> to vector<16x32xbf16>
    %cst_234 = arith.constant dense<0.000000e+00> : vector<16x32xf32>
    %859 = tpu.matmul %858, %857, %cst_234 {dimension_numbers = #tpu.dot_dimension_numbers<[1], [0], [0], [1], [0, 0, 1, 1], [], []>} : vector<16x32xbf16>, vector<32x32xbf16>, vector<16x32xf32> -> vector<16x32xf32>
    %860 = vector.broadcast %745 : vector<1x32xf32> to vector<16x32xf32>
    %861 = arith.addf %859, %860 : vector<16x32xf32>
    %862 = arith.addf %735, %861 : vector<16x32xf32>
    %cst_235 = arith.constant dense<0.000000e+00> : vector<16xf32>
    %863 = vector.multi_reduction <add>, %862, %cst_235 [1] : vector<16x32xf32> to vector<16xf32>
    %864 = vector.shape_cast %863 : vector<16xf32> to vector<16x1xf32>
    %cst_236 = arith.constant 3.200000e+01 : f32
    %865 = vector.broadcast %cst_236 : f32 to vector<16x1xf32>
    %866 = arith.divf %864, %865 : vector<16x1xf32>
    %867 = vector.broadcast %866 : vector<16x1xf32> to vector<16x32xf32>
    %868 = arith.subf %862, %867 : vector<16x32xf32>
    %869 = arith.mulf %868, %868 : vector<16x32xf32>
    %cst_237 = arith.constant dense<0.000000e+00> : vector<16xf32>
    %870 = vector.multi_reduction <add>, %869, %cst_237 [1] : vector<16x32xf32> to vector<16xf32>
    %871 = vector.shape_cast %870 : vector<16xf32> to vector<16x1xf32>
    %cst_238 = arith.constant 3.200000e+01 : f32
    %872 = vector.broadcast %cst_238 : f32 to vector<16x1xf32>
    %873 = arith.divf %871, %872 : vector<16x1xf32>
    %874 = vector.broadcast %866 : vector<16x1xf32> to vector<16x32xf32>
    %875 = arith.subf %862, %874 : vector<16x32xf32>
    %cst_239 = arith.constant 9.99999974E-6 : f32
    %876 = vector.broadcast %cst_239 : f32 to vector<16x1xf32>
    %877 = arith.addf %873, %876 : vector<16x1xf32>
    %878 = math.rsqrt %877 : vector<16x1xf32>
    %879 = vector.broadcast %878 : vector<16x1xf32> to vector<16x32xf32>
    %880 = arith.mulf %875, %879 : vector<16x32xf32>
    %881 = vector.broadcast %747 : vector<1x32xf32> to vector<16x32xf32>
    %882 = arith.mulf %880, %881 : vector<16x32xf32>
    %883 = vector.broadcast %749 : vector<1x32xf32> to vector<16x32xf32>
    %884 = arith.addf %882, %883 : vector<16x32xf32>
    %c1_240 = arith.constant 1 : index
    %c1_241 = arith.constant 1 : index
    %c0_242 = arith.constant 0 : index
    %c0_243 = arith.constant 0 : index
    %c0_244 = arith.constant 0 : index
    %885 = vector.load %arg6[%c1_240, %c1_241, %c0_242, %c0_243, %c0_244] : memref<2x2x4x32x32xbf16, #tpu.memory_space<vmem>>, vector<1x1x4x32x32xbf16>
    %886 = vector.shape_cast %885 : vector<1x1x4x32x32xbf16> to vector<4x32x32xbf16>
    %c1_245 = arith.constant 1 : index
    %c6_246 = arith.constant 6 : index
    %c0_247 = arith.constant 0 : index
    %887 = vector.load %arg8[%c1_245, %c6_246, %c0_247] : memref<2x15x32xf32, #tpu.memory_space<vmem>>, vector<1x1x32xf32>
    %888 = vector.shape_cast %887 : vector<1x1x32xf32> to vector<1x32xf32>
    %c1_248 = arith.constant 1 : index
    %c7_249 = arith.constant 7 : index
    %c0_250 = arith.constant 0 : index
    %889 = vector.load %arg8[%c1_248, %c7_249, %c0_250] : memref<2x15x32xf32, #tpu.memory_space<vmem>>, vector<1x1x32xf32>
    %890 = vector.shape_cast %889 : vector<1x1x32xf32> to vector<1x32xf32>
    %c1_251 = arith.constant 1 : index
    %c8_252 = arith.constant 8 : index
    %c0_253 = arith.constant 0 : index
    %891 = vector.load %arg8[%c1_251, %c8_252, %c0_253] : memref<2x15x32xf32, #tpu.memory_space<vmem>>, vector<1x1x32xf32>
    %892 = vector.shape_cast %891 : vector<1x1x32xf32> to vector<1x32xf32>
    %c1_254 = arith.constant 1 : index
    %c9_255 = arith.constant 9 : index
    %c0_256 = arith.constant 0 : index
    %893 = vector.load %arg8[%c1_254, %c9_255, %c0_256] : memref<2x15x32xf32, #tpu.memory_space<vmem>>, vector<1x1x32xf32>
    %894 = vector.shape_cast %893 : vector<1x1x32xf32> to vector<1x32xf32>
    %c1_257 = arith.constant 1 : index
    %c10_258 = arith.constant 10 : index
    %c0_259 = arith.constant 0 : index
    %895 = vector.load %arg8[%c1_257, %c10_258, %c0_259] : memref<2x15x32xf32, #tpu.memory_space<vmem>>, vector<1x1x32xf32>
    %896 = vector.shape_cast %895 : vector<1x1x32xf32> to vector<1x32xf32>
    %c1_260 = arith.constant 1 : index
    %c11_261 = arith.constant 11 : index
    %c0_262 = arith.constant 0 : index
    %897 = vector.load %arg8[%c1_260, %c11_261, %c0_262] : memref<2x15x32xf32, #tpu.memory_space<vmem>>, vector<1x1x32xf32>
    %898 = vector.shape_cast %897 : vector<1x1x32xf32> to vector<1x32xf32>
    %899 = vector.extract_strided_slice %886 {offsets = [0, 0, 0], sizes = [1, 32, 32], strides = [1, 1, 1]} : vector<4x32x32xbf16> to vector<1x32x32xbf16>
    %900 = vector.shape_cast %899 : vector<1x32x32xbf16> to vector<32x32xbf16>
    %901 = arith.truncf %884 : vector<16x32xf32> to vector<16x32xbf16>
    %cst_263 = arith.constant dense<0.000000e+00> : vector<16x32xf32>
    %902 = tpu.matmul %901, %900, %cst_263 {dimension_numbers = #tpu.dot_dimension_numbers<[1], [0], [0], [1], [0, 0, 1, 1], [], []>} : vector<16x32xbf16>, vector<32x32xbf16>, vector<16x32xf32> -> vector<16x32xf32>
    %903 = vector.broadcast %888 : vector<1x32xf32> to vector<16x32xf32>
    %904 = arith.addf %902, %903 : vector<16x32xf32>
    %905 = vector.extract_strided_slice %886 {offsets = [1, 0, 0], sizes = [1, 32, 32], strides = [1, 1, 1]} : vector<4x32x32xbf16> to vector<1x32x32xbf16>
    %906 = vector.shape_cast %905 : vector<1x32x32xbf16> to vector<32x32xbf16>
    %907 = arith.truncf %392 : vector<16x32xf32> to vector<16x32xbf16>
    %cst_264 = arith.constant dense<0.000000e+00> : vector<16x32xf32>
    %908 = tpu.matmul %907, %906, %cst_264 {dimension_numbers = #tpu.dot_dimension_numbers<[1], [0], [0], [1], [0, 0, 1, 1], [], []>} : vector<16x32xbf16>, vector<32x32xbf16>, vector<16x32xf32> -> vector<16x32xf32>
    %909 = vector.broadcast %890 : vector<1x32xf32> to vector<16x32xf32>
    %910 = arith.addf %908, %909 : vector<16x32xf32>
    %911 = vector.extract_strided_slice %886 {offsets = [2, 0, 0], sizes = [1, 32, 32], strides = [1, 1, 1]} : vector<4x32x32xbf16> to vector<1x32x32xbf16>
    %912 = vector.shape_cast %911 : vector<1x32x32xbf16> to vector<32x32xbf16>
    %913 = arith.truncf %392 : vector<16x32xf32> to vector<16x32xbf16>
    %cst_265 = arith.constant dense<0.000000e+00> : vector<16x32xf32>
    %914 = tpu.matmul %913, %912, %cst_265 {dimension_numbers = #tpu.dot_dimension_numbers<[1], [0], [0], [1], [0, 0, 1, 1], [], []>} : vector<16x32xbf16>, vector<32x32xbf16>, vector<16x32xf32> -> vector<16x32xf32>
    %915 = vector.broadcast %892 : vector<1x32xf32> to vector<16x32xf32>
    %916 = arith.addf %914, %915 : vector<16x32xf32>
    %917 = vector.extract_strided_slice %904 {offsets = [0, 0], sizes = [8, 8], strides = [1, 1]} : vector<16x32xf32> to vector<8x8xf32>
    %918 = vector.extract_strided_slice %904 {offsets = [0, 8], sizes = [8, 8], strides = [1, 1]} : vector<16x32xf32> to vector<8x8xf32>
    %919 = vector.extract_strided_slice %904 {offsets = [0, 16], sizes = [8, 8], strides = [1, 1]} : vector<16x32xf32> to vector<8x8xf32>
    %920 = vector.extract_strided_slice %904 {offsets = [0, 24], sizes = [8, 8], strides = [1, 1]} : vector<16x32xf32> to vector<8x8xf32>
    %921 = vector.extract_strided_slice %904 {offsets = [8, 0], sizes = [8, 8], strides = [1, 1]} : vector<16x32xf32> to vector<8x8xf32>
    %922 = vector.extract_strided_slice %904 {offsets = [8, 8], sizes = [8, 8], strides = [1, 1]} : vector<16x32xf32> to vector<8x8xf32>
    %923 = vector.extract_strided_slice %904 {offsets = [8, 16], sizes = [8, 8], strides = [1, 1]} : vector<16x32xf32> to vector<8x8xf32>
    %924 = vector.extract_strided_slice %904 {offsets = [8, 24], sizes = [8, 8], strides = [1, 1]} : vector<16x32xf32> to vector<8x8xf32>
    %925 = vector.shape_cast %917 : vector<8x8xf32> to vector<1x8x8xf32>
    %926 = vector.shape_cast %918 : vector<8x8xf32> to vector<1x8x8xf32>
    %927 = vector.shape_cast %919 : vector<8x8xf32> to vector<1x8x8xf32>
    %928 = vector.shape_cast %920 : vector<8x8xf32> to vector<1x8x8xf32>
    %929 = vector.shape_cast %921 : vector<8x8xf32> to vector<1x8x8xf32>
    %930 = vector.shape_cast %922 : vector<8x8xf32> to vector<1x8x8xf32>
    %931 = vector.shape_cast %923 : vector<8x8xf32> to vector<1x8x8xf32>
    %932 = vector.shape_cast %924 : vector<8x8xf32> to vector<1x8x8xf32>
    %933 = tpu.concatenate %925, %926, %927, %928, %929, %930, %931, %932 in 0 : vector<1x8x8xf32>, vector<1x8x8xf32>, vector<1x8x8xf32>, vector<1x8x8xf32>, vector<1x8x8xf32>, vector<1x8x8xf32>, vector<1x8x8xf32>, vector<1x8x8xf32> -> vector<8x8x8xf32>
    %934 = vector.extract_strided_slice %910 {offsets = [0, 0], sizes = [8, 8], strides = [1, 1]} : vector<16x32xf32> to vector<8x8xf32>
    %935 = vector.extract_strided_slice %910 {offsets = [0, 8], sizes = [8, 8], strides = [1, 1]} : vector<16x32xf32> to vector<8x8xf32>
    %936 = vector.extract_strided_slice %910 {offsets = [0, 16], sizes = [8, 8], strides = [1, 1]} : vector<16x32xf32> to vector<8x8xf32>
    %937 = vector.extract_strided_slice %910 {offsets = [0, 24], sizes = [8, 8], strides = [1, 1]} : vector<16x32xf32> to vector<8x8xf32>
    %938 = vector.extract_strided_slice %910 {offsets = [8, 0], sizes = [8, 8], strides = [1, 1]} : vector<16x32xf32> to vector<8x8xf32>
    %939 = vector.extract_strided_slice %910 {offsets = [8, 8], sizes = [8, 8], strides = [1, 1]} : vector<16x32xf32> to vector<8x8xf32>
    %940 = vector.extract_strided_slice %910 {offsets = [8, 16], sizes = [8, 8], strides = [1, 1]} : vector<16x32xf32> to vector<8x8xf32>
    %941 = vector.extract_strided_slice %910 {offsets = [8, 24], sizes = [8, 8], strides = [1, 1]} : vector<16x32xf32> to vector<8x8xf32>
    %942 = vector.shape_cast %934 : vector<8x8xf32> to vector<1x8x8xf32>
    %943 = vector.shape_cast %935 : vector<8x8xf32> to vector<1x8x8xf32>
    %944 = vector.shape_cast %936 : vector<8x8xf32> to vector<1x8x8xf32>
    %945 = vector.shape_cast %937 : vector<8x8xf32> to vector<1x8x8xf32>
    %946 = vector.shape_cast %938 : vector<8x8xf32> to vector<1x8x8xf32>
    %947 = vector.shape_cast %939 : vector<8x8xf32> to vector<1x8x8xf32>
    %948 = vector.shape_cast %940 : vector<8x8xf32> to vector<1x8x8xf32>
    %949 = vector.shape_cast %941 : vector<8x8xf32> to vector<1x8x8xf32>
    %950 = tpu.concatenate %942, %943, %944, %945, %946, %947, %948, %949 in 0 : vector<1x8x8xf32>, vector<1x8x8xf32>, vector<1x8x8xf32>, vector<1x8x8xf32>, vector<1x8x8xf32>, vector<1x8x8xf32>, vector<1x8x8xf32>, vector<1x8x8xf32> -> vector<8x8x8xf32>
    %951 = vector.extract_strided_slice %916 {offsets = [0, 0], sizes = [8, 8], strides = [1, 1]} : vector<16x32xf32> to vector<8x8xf32>
    %952 = vector.extract_strided_slice %916 {offsets = [0, 8], sizes = [8, 8], strides = [1, 1]} : vector<16x32xf32> to vector<8x8xf32>
    %953 = vector.extract_strided_slice %916 {offsets = [0, 16], sizes = [8, 8], strides = [1, 1]} : vector<16x32xf32> to vector<8x8xf32>
    %954 = vector.extract_strided_slice %916 {offsets = [0, 24], sizes = [8, 8], strides = [1, 1]} : vector<16x32xf32> to vector<8x8xf32>
    %955 = vector.extract_strided_slice %916 {offsets = [8, 0], sizes = [8, 8], strides = [1, 1]} : vector<16x32xf32> to vector<8x8xf32>
    %956 = vector.extract_strided_slice %916 {offsets = [8, 8], sizes = [8, 8], strides = [1, 1]} : vector<16x32xf32> to vector<8x8xf32>
    %957 = vector.extract_strided_slice %916 {offsets = [8, 16], sizes = [8, 8], strides = [1, 1]} : vector<16x32xf32> to vector<8x8xf32>
    %958 = vector.extract_strided_slice %916 {offsets = [8, 24], sizes = [8, 8], strides = [1, 1]} : vector<16x32xf32> to vector<8x8xf32>
    %959 = vector.shape_cast %951 : vector<8x8xf32> to vector<1x8x8xf32>
    %960 = vector.shape_cast %952 : vector<8x8xf32> to vector<1x8x8xf32>
    %961 = vector.shape_cast %953 : vector<8x8xf32> to vector<1x8x8xf32>
    %962 = vector.shape_cast %954 : vector<8x8xf32> to vector<1x8x8xf32>
    %963 = vector.shape_cast %955 : vector<8x8xf32> to vector<1x8x8xf32>
    %964 = vector.shape_cast %956 : vector<8x8xf32> to vector<1x8x8xf32>
    %965 = vector.shape_cast %957 : vector<8x8xf32> to vector<1x8x8xf32>
    %966 = vector.shape_cast %958 : vector<8x8xf32> to vector<1x8x8xf32>
    %967 = tpu.concatenate %959, %960, %961, %962, %963, %964, %965, %966 in 0 : vector<1x8x8xf32>, vector<1x8x8xf32>, vector<1x8x8xf32>, vector<1x8x8xf32>, vector<1x8x8xf32>, vector<1x8x8xf32>, vector<1x8x8xf32>, vector<1x8x8xf32> -> vector<8x8x8xf32>
    %968 = arith.truncf %933 : vector<8x8x8xf32> to vector<8x8x8xbf16>
    %969 = arith.truncf %950 : vector<8x8x8xf32> to vector<8x8x8xbf16>
    "tpu.trace_start"() <{level = 10 : i32, message = "nqd,nkd->nqk"}> : () -> ()
    %cst_266 = arith.constant dense<0.000000e+00> : vector<8x8x8xf32>
    %970 = tpu.matmul %968, %969, %cst_266 {dimension_numbers = #tpu.dot_dimension_numbers<[2], [2], [1], [1], [0, 0, 0, 1, 1, 1], [0], [0]>} : vector<8x8x8xbf16>, vector<8x8x8xbf16>, vector<8x8x8xf32> -> vector<8x8x8xf32>
    "tpu.trace_stop"() : () -> ()
    %cst_267 = arith.constant dense<0xFF800000> : vector<8x8xf32>
    %971 = vector.multi_reduction <maximumf>, %970, %cst_267 [2] : vector<8x8x8xf32> to vector<8x8xf32>
    %972 = vector.shape_cast %971 : vector<8x8xf32> to vector<8x8x1xf32>
    %973 = vector.broadcast %972 : vector<8x8x1xf32> to vector<8x8x8xf32>
    %974 = arith.subf %970, %973 : vector<8x8x8xf32>
    %975 = math.exp %974 : vector<8x8x8xf32>
    %cst_268 = arith.constant dense<0.000000e+00> : vector<8x8xf32>
    %976 = vector.multi_reduction <add>, %975, %cst_268 [2] : vector<8x8x8xf32> to vector<8x8xf32>
    %977 = vector.shape_cast %976 : vector<8x8xf32> to vector<8x8x1xf32>
    %978 = vector.broadcast %977 : vector<8x8x1xf32> to vector<8x8x8xf32>
    %979 = arith.divf %975, %978 : vector<8x8x8xf32>
    %980 = arith.truncf %979 : vector<8x8x8xf32> to vector<8x8x8xbf16>
    %981 = arith.truncf %967 : vector<8x8x8xf32> to vector<8x8x8xbf16>
    "tpu.trace_start"() <{level = 10 : i32, message = "nqk,nkd->nqd"}> : () -> ()
    %cst_269 = arith.constant dense<0.000000e+00> : vector<8x8x8xf32>
    %982 = tpu.matmul %980, %981, %cst_269 {dimension_numbers = #tpu.dot_dimension_numbers<[2], [1], [1], [2], [0, 0, 0, 1, 1, 2], [0], [0]>} : vector<8x8x8xbf16>, vector<8x8x8xbf16>, vector<8x8x8xf32> -> vector<8x8x8xf32>
    "tpu.trace_stop"() : () -> ()
    %983 = vector.extract_strided_slice %982 {offsets = [0, 0, 0], sizes = [1, 8, 8], strides = [1, 1, 1]} : vector<8x8x8xf32> to vector<1x8x8xf32>
    %984 = vector.shape_cast %983 : vector<1x8x8xf32> to vector<8x8xf32>
    %985 = vector.extract_strided_slice %982 {offsets = [1, 0, 0], sizes = [1, 8, 8], strides = [1, 1, 1]} : vector<8x8x8xf32> to vector<1x8x8xf32>
    %986 = vector.shape_cast %985 : vector<1x8x8xf32> to vector<8x8xf32>
    %987 = vector.extract_strided_slice %982 {offsets = [2, 0, 0], sizes = [1, 8, 8], strides = [1, 1, 1]} : vector<8x8x8xf32> to vector<1x8x8xf32>
    %988 = vector.shape_cast %987 : vector<1x8x8xf32> to vector<8x8xf32>
    %989 = vector.extract_strided_slice %982 {offsets = [3, 0, 0], sizes = [1, 8, 8], strides = [1, 1, 1]} : vector<8x8x8xf32> to vector<1x8x8xf32>
    %990 = vector.shape_cast %989 : vector<1x8x8xf32> to vector<8x8xf32>
    %991 = tpu.concatenate %984, %986, %988, %990 in 1 : vector<8x8xf32>, vector<8x8xf32>, vector<8x8xf32>, vector<8x8xf32> -> vector<8x32xf32>
    %992 = vector.extract_strided_slice %982 {offsets = [4, 0, 0], sizes = [1, 8, 8], strides = [1, 1, 1]} : vector<8x8x8xf32> to vector<1x8x8xf32>
    %993 = vector.shape_cast %992 : vector<1x8x8xf32> to vector<8x8xf32>
    %994 = vector.extract_strided_slice %982 {offsets = [5, 0, 0], sizes = [1, 8, 8], strides = [1, 1, 1]} : vector<8x8x8xf32> to vector<1x8x8xf32>
    %995 = vector.shape_cast %994 : vector<1x8x8xf32> to vector<8x8xf32>
    %996 = vector.extract_strided_slice %982 {offsets = [6, 0, 0], sizes = [1, 8, 8], strides = [1, 1, 1]} : vector<8x8x8xf32> to vector<1x8x8xf32>
    %997 = vector.shape_cast %996 : vector<1x8x8xf32> to vector<8x8xf32>
    %998 = vector.extract_strided_slice %982 {offsets = [7, 0, 0], sizes = [1, 8, 8], strides = [1, 1, 1]} : vector<8x8x8xf32> to vector<1x8x8xf32>
    %999 = vector.shape_cast %998 : vector<1x8x8xf32> to vector<8x8xf32>
    %1000 = tpu.concatenate %993, %995, %997, %999 in 1 : vector<8x8xf32>, vector<8x8xf32>, vector<8x8xf32>, vector<8x8xf32> -> vector<8x32xf32>
    %1001 = tpu.concatenate %991, %1000 in 0 : vector<8x32xf32>, vector<8x32xf32> -> vector<16x32xf32>
    %1002 = vector.extract_strided_slice %886 {offsets = [3, 0, 0], sizes = [1, 32, 32], strides = [1, 1, 1]} : vector<4x32x32xbf16> to vector<1x32x32xbf16>
    %1003 = vector.shape_cast %1002 : vector<1x32x32xbf16> to vector<32x32xbf16>
    %1004 = arith.truncf %1001 : vector<16x32xf32> to vector<16x32xbf16>
    %cst_270 = arith.constant dense<0.000000e+00> : vector<16x32xf32>
    %1005 = tpu.matmul %1004, %1003, %cst_270 {dimension_numbers = #tpu.dot_dimension_numbers<[1], [0], [0], [1], [0, 0, 1, 1], [], []>} : vector<16x32xbf16>, vector<32x32xbf16>, vector<16x32xf32> -> vector<16x32xf32>
    %1006 = vector.broadcast %894 : vector<1x32xf32> to vector<16x32xf32>
    %1007 = arith.addf %1005, %1006 : vector<16x32xf32>
    %1008 = arith.addf %884, %1007 : vector<16x32xf32>
    %cst_271 = arith.constant dense<0.000000e+00> : vector<16xf32>
    %1009 = vector.multi_reduction <add>, %1008, %cst_271 [1] : vector<16x32xf32> to vector<16xf32>
    %1010 = vector.shape_cast %1009 : vector<16xf32> to vector<16x1xf32>
    %cst_272 = arith.constant 3.200000e+01 : f32
    %1011 = vector.broadcast %cst_272 : f32 to vector<16x1xf32>
    %1012 = arith.divf %1010, %1011 : vector<16x1xf32>
    %1013 = vector.broadcast %1012 : vector<16x1xf32> to vector<16x32xf32>
    %1014 = arith.subf %1008, %1013 : vector<16x32xf32>
    %1015 = arith.mulf %1014, %1014 : vector<16x32xf32>
    %cst_273 = arith.constant dense<0.000000e+00> : vector<16xf32>
    %1016 = vector.multi_reduction <add>, %1015, %cst_273 [1] : vector<16x32xf32> to vector<16xf32>
    %1017 = vector.shape_cast %1016 : vector<16xf32> to vector<16x1xf32>
    %cst_274 = arith.constant 3.200000e+01 : f32
    %1018 = vector.broadcast %cst_274 : f32 to vector<16x1xf32>
    %1019 = arith.divf %1017, %1018 : vector<16x1xf32>
    %1020 = vector.broadcast %1012 : vector<16x1xf32> to vector<16x32xf32>
    %1021 = arith.subf %1008, %1020 : vector<16x32xf32>
    %cst_275 = arith.constant 9.99999974E-6 : f32
    %1022 = vector.broadcast %cst_275 : f32 to vector<16x1xf32>
    %1023 = arith.addf %1019, %1022 : vector<16x1xf32>
    %1024 = math.rsqrt %1023 : vector<16x1xf32>
    %1025 = vector.broadcast %1024 : vector<16x1xf32> to vector<16x32xf32>
    %1026 = arith.mulf %1021, %1025 : vector<16x32xf32>
    %1027 = vector.broadcast %896 : vector<1x32xf32> to vector<16x32xf32>
    %1028 = arith.mulf %1026, %1027 : vector<16x32xf32>
    %1029 = vector.broadcast %898 : vector<1x32xf32> to vector<16x32xf32>
    %1030 = arith.addf %1028, %1029 : vector<16x32xf32>
    %c1_276 = arith.constant 1 : index
    %c0_277 = arith.constant 0 : index
    %c0_278 = arith.constant 0 : index
    %c0_279 = arith.constant 0 : index
    %1031 = vector.load %arg7[%c1_276, %c0_277, %c0_278, %c0_279] : memref<2x2x32x64xbf16, #tpu.memory_space<vmem>>, vector<1x2x32x64xbf16>
    %1032 = vector.shape_cast %1031 : vector<1x2x32x64xbf16> to vector<2x32x64xbf16>
    %c1_280 = arith.constant 1 : index
    %c0_281 = arith.constant 0 : index
    %c0_282 = arith.constant 0 : index
    %1033 = vector.load %arg9[%c1_280, %c0_281, %c0_282] : memref<2x1x64xf32, #tpu.memory_space<vmem>>, vector<1x1x64xf32>
    %1034 = vector.shape_cast %1033 : vector<1x1x64xf32> to vector<1x64xf32>
    %c1_283 = arith.constant 1 : index
    %c12_284 = arith.constant 12 : index
    %c0_285 = arith.constant 0 : index
    %1035 = vector.load %arg8[%c1_283, %c12_284, %c0_285] : memref<2x15x32xf32, #tpu.memory_space<vmem>>, vector<1x1x32xf32>
    %1036 = vector.shape_cast %1035 : vector<1x1x32xf32> to vector<1x32xf32>
    %c1_286 = arith.constant 1 : index
    %c13_287 = arith.constant 13 : index
    %c0_288 = arith.constant 0 : index
    %1037 = vector.load %arg8[%c1_286, %c13_287, %c0_288] : memref<2x15x32xf32, #tpu.memory_space<vmem>>, vector<1x1x32xf32>
    %1038 = vector.shape_cast %1037 : vector<1x1x32xf32> to vector<1x32xf32>
    %c1_289 = arith.constant 1 : index
    %c14_290 = arith.constant 14 : index
    %c0_291 = arith.constant 0 : index
    %1039 = vector.load %arg8[%c1_289, %c14_290, %c0_291] : memref<2x15x32xf32, #tpu.memory_space<vmem>>, vector<1x1x32xf32>
    %1040 = vector.shape_cast %1039 : vector<1x1x32xf32> to vector<1x32xf32>
    %1041 = vector.extract_strided_slice %1032 {offsets = [0, 0, 0], sizes = [1, 32, 64], strides = [1, 1, 1]} : vector<2x32x64xbf16> to vector<1x32x64xbf16>
    %1042 = vector.shape_cast %1041 : vector<1x32x64xbf16> to vector<32x64xbf16>
    %1043 = arith.truncf %1030 : vector<16x32xf32> to vector<16x32xbf16>
    %cst_292 = arith.constant dense<0.000000e+00> : vector<16x64xf32>
    %1044 = tpu.matmul %1043, %1042, %cst_292 {dimension_numbers = #tpu.dot_dimension_numbers<[1], [0], [0], [1], [0, 0, 1, 1], [], []>} : vector<16x32xbf16>, vector<32x64xbf16>, vector<16x64xf32> -> vector<16x64xf32>
    %1045 = vector.broadcast %1034 : vector<1x64xf32> to vector<16x64xf32>
    %1046 = arith.addf %1044, %1045 : vector<16x64xf32>
    %cst_293 = arith.constant 0.000000e+00 : f32
    %1047 = vector.broadcast %cst_293 : f32 to vector<16x64xf32>
    %1048 = arith.maximumf %1046, %1047 : vector<16x64xf32>
    %1049 = vector.extract_strided_slice %1032 {offsets = [1, 0, 0], sizes = [1, 32, 64], strides = [1, 1, 1]} : vector<2x32x64xbf16> to vector<1x32x64xbf16>
    %1050 = vector.shape_cast %1049 : vector<1x32x64xbf16> to vector<32x64xbf16>
    %1051 = arith.truncf %1048 : vector<16x64xf32> to vector<16x64xbf16>
    %cst_294 = arith.constant dense<0.000000e+00> : vector<16x32xf32>
    %1052 = tpu.matmul %1051, %1050, %cst_294 {dimension_numbers = #tpu.dot_dimension_numbers<[1], [1], [0], [0], [0, 0, 1, 0], [], []>} : vector<16x64xbf16>, vector<32x64xbf16>, vector<16x32xf32> -> vector<16x32xf32>
    %1053 = vector.broadcast %1036 : vector<1x32xf32> to vector<16x32xf32>
    %1054 = arith.addf %1052, %1053 : vector<16x32xf32>
    %1055 = arith.addf %1030, %1054 : vector<16x32xf32>
    %cst_295 = arith.constant dense<0.000000e+00> : vector<16xf32>
    %1056 = vector.multi_reduction <add>, %1055, %cst_295 [1] : vector<16x32xf32> to vector<16xf32>
    %1057 = vector.shape_cast %1056 : vector<16xf32> to vector<16x1xf32>
    %cst_296 = arith.constant 3.200000e+01 : f32
    %1058 = vector.broadcast %cst_296 : f32 to vector<16x1xf32>
    %1059 = arith.divf %1057, %1058 : vector<16x1xf32>
    %1060 = vector.broadcast %1059 : vector<16x1xf32> to vector<16x32xf32>
    %1061 = arith.subf %1055, %1060 : vector<16x32xf32>
    %1062 = arith.mulf %1061, %1061 : vector<16x32xf32>
    %cst_297 = arith.constant dense<0.000000e+00> : vector<16xf32>
    %1063 = vector.multi_reduction <add>, %1062, %cst_297 [1] : vector<16x32xf32> to vector<16xf32>
    %1064 = vector.shape_cast %1063 : vector<16xf32> to vector<16x1xf32>
    %cst_298 = arith.constant 3.200000e+01 : f32
    %1065 = vector.broadcast %cst_298 : f32 to vector<16x1xf32>
    %1066 = arith.divf %1064, %1065 : vector<16x1xf32>
    %1067 = vector.broadcast %1059 : vector<16x1xf32> to vector<16x32xf32>
    %1068 = arith.subf %1055, %1067 : vector<16x32xf32>
    %cst_299 = arith.constant 9.99999974E-6 : f32
    %1069 = vector.broadcast %cst_299 : f32 to vector<16x1xf32>
    %1070 = arith.addf %1066, %1069 : vector<16x1xf32>
    %1071 = math.rsqrt %1070 : vector<16x1xf32>
    %1072 = vector.broadcast %1071 : vector<16x1xf32> to vector<16x32xf32>
    %1073 = arith.mulf %1068, %1072 : vector<16x32xf32>
    %1074 = vector.broadcast %1038 : vector<1x32xf32> to vector<16x32xf32>
    %1075 = arith.mulf %1073, %1074 : vector<16x32xf32>
    %1076 = vector.broadcast %1040 : vector<1x32xf32> to vector<16x32xf32>
    %1077 = arith.addf %1075, %1076 : vector<16x32xf32>
    %c0_300 = arith.constant 0 : index
    %c0_301 = arith.constant 0 : index
    %1078 = vector.load %arg10[%c0_300, %c0_301] : memref<16x32xf32, #tpu.memory_space<vmem>>, vector<16x32xf32>
    tpu.vector_store %arg10[%c0_300, %c0_301], %1077 {strides = array<i32>} : memref<16x32xf32, #tpu.memory_space<vmem>>, vector<16x32xf32>,
    return
  }
}

</mosaic_0001>

<llo_original>
// kernel: tpu_custom_call.1
$region0: #{tpu_custom_call.1}
  #allocation0 [shape = 'u32[]', space=smem, size = 0x4, offset = 0x4, fixed_abs, tag = 'smem constant byte address 0x4 - core index']
  #allocation1 [shape = 'u32[144,128]{1,0:T(1,128)}', space=vmem, size = 0x12000, scoped, tag = 'internal scratch']
  %s0 = inlined_call_operand.hbm [shape: f32[16,32], index: 0, kind: input, shape index: {}]
  %s1 = inlined_call_operand.hbm [shape: f32[16,32], index: 1, kind: input, shape index: {}]
  %s2 = inlined_call_operand.hbm [shape: bf16[2,4,32,32], index: 2, kind: input, shape index: {}]
  %s3 = inlined_call_operand.vmem [shape: bf16[2,2,32,64], index: 3, kind: input, shape index: {}]
  %s4 = inlined_call_operand.vmem [shape: f32[2,9,32], index: 4, kind: input, shape index: {}]
  %s5 = inlined_call_operand.vmem [shape: f32[2,1,64], index: 5, kind: input, shape index: {}]
  %s6 = inlined_call_operand.hbm [shape: bf16[2,2,4,32,32], index: 6, kind: input, shape index: {}]
  %s7 = inlined_call_operand.vmem [shape: bf16[2,2,32,64], index: 7, kind: input, shape index: {}]
  %s8 = inlined_call_operand.vmem [shape: f32[2,15,32], index: 8, kind: input, shape index: {}]
  %s9 = inlined_call_operand.vmem [shape: f32[2,1,64], index: 9, kind: input, shape index: {}]
  %s10 = inlined_call_operand.hbm [shape: f32[16,32], index: 10, kind: output, shape index: {}]
  %s11 = sld [smem:[#allocation0]]
  $region66: #{tpu_custom_call.1} parent=0
    _
  %s13 = ssub.s32 1, %s11
  %s14 = scalar_select 0, %s13, %s11
  $region1: #{tpu_custom_call.1} parent=0
    #allocation2 [shape = 'u8[8192]{0}', space=vmem, size = 0x2000, scoped, tag = 'input window, operand 0, single buffered']
    #allocation3 [shape = 's32[1]{0}', space=sflag, size = 0x4, scoped, tag = 'scoped memory for tpu_custom_call.1']
    #allocation4 [shape = 's32[1]{0}', space=sflag, size = 0x4, scoped, tag = 'scoped memory for tpu_custom_call.1']
    #allocation5 [shape = 'u8[8192]{0}', space=vmem, size = 0x2000, scoped, tag = 'input window, operand 1, single buffered']
    #allocation6 [shape = 's32[1]{0}', space=sflag, size = 0x4, scoped, tag = 'scoped memory for tpu_custom_call.1']
    #allocation7 [shape = 'u8[65536]{0}', space=vmem, size = 0x10000, scoped, tag = 'input window, operand 2, single buffered']
    #allocation8 [shape = 'u8[131072]{0}', space=vmem, size = 0x20000, scoped, tag = 'input window, operand 6, single buffered']
    #allocation9 [shape = 's32[1]{0}', space=sflag, size = 0x4, scoped, tag = 'scoped memory for tpu_custom_call.1']
    #allocation10 [shape = 'u8[8192]{0}', space=vmem, size = 0x2000, scoped, tag = 'output window, operand 0, single buffered']
    %15 = vsyncpa [#allocation3], 0
    %16 = vsyncpa [#allocation6], 0
    %17 = vsyncpa [#allocation9], 0
    %18 = vsyncpa [#allocation4], 0
    // Predicated region
    $region2: #{tpu_custom_call.1} parent=1 // pred_check
      _
    $region3: #{tpu_custom_call.1} parent=1 // pred_check_branch
      %20 = sbr.rel (0) target = $region5
    $region4: #{tpu_custom_call.1} parent=1 // pred_region
      %s22 = ssub.s32 256, 256
      %23 = vsyncadd [#allocation3], %s22
      %s24 = sshll.u32 [#allocation2], 4
      %s25 = int_to_ptr.vmem [resolvable:$true] %s24
      %30 = dma.hbm_to_vmem [thread:$0]  %s0, 256, %s25, [#allocation3], 128, 128, 8
    $region5: #{tpu_custom_call.1} parent=1 // pred_fallthru
      _
    // Predicated region
    $region6: #{tpu_custom_call.1} parent=1 // pred_check
      _
    $region7: #{tpu_custom_call.1} parent=1 // pred_check_branch
      %32 = sbr.rel (0) target = $region9
    $region8: #{tpu_custom_call.1} parent=1 // pred_region
      %s34 = ssub.s32 256, 256
      %35 = vsyncadd [#allocation6], %s34
      %s36 = sshll.u32 [#allocation5], 4
      %s37 = int_to_ptr.vmem [resolvable:$true] %s36
      %42 = dma.hbm_to_vmem [thread:$0]  %s1, 256, %s37, [#allocation6], 128, 128, 8
    $region9: #{tpu_custom_call.1} parent=1 // pred_fallthru
      _
    // Predicated region
    $region10: #{tpu_custom_call.1} parent=1 // pred_check
      _
    $region11: #{tpu_custom_call.1} parent=1 // pred_check_branch
      %44 = sbr.rel (0) target = $region13
    $region12: #{tpu_custom_call.1} parent=1 // pred_region
      %s46 = ssub.s32 2048, 2048
      %47 = vsyncadd [#allocation6], %s46
      %s48 = sshll.u32 [#allocation7], 4
      %s49 = int_to_ptr.vmem [resolvable:$true] %s48
      %54 = dma.hbm_to_vmem [thread:$0]  %s2, 2048, %s49, [#allocation6], 64, 64, 4
    $region13: #{tpu_custom_call.1} parent=1 // pred_fallthru
      _
    // Predicated region
    $region14: #{tpu_custom_call.1} parent=1 // pred_check
      _
    $region15: #{tpu_custom_call.1} parent=1 // pred_check_branch
      %56 = sbr.rel (0) target = $region17
    $region16: #{tpu_custom_call.1} parent=1 // pred_region
      _
    $region17: #{tpu_custom_call.1} parent=1 // pred_fallthru
      _
    // Predicated region
    $region18: #{tpu_custom_call.1} parent=1 // pred_check
      _
    $region19: #{tpu_custom_call.1} parent=1 // pred_check_branch
      %58 = sbr.rel (0) target = $region21
    $region20: #{tpu_custom_call.1} parent=1 // pred_region
      _
    $region21: #{tpu_custom_call.1} parent=1 // pred_fallthru
      _
    // Predicated region
    $region22: #{tpu_custom_call.1} parent=1 // pred_check
      _
    $region23: #{tpu_custom_call.1} parent=1 // pred_check_branch
      %60 = sbr.rel (0) target = $region25
    $region24: #{tpu_custom_call.1} parent=1 // pred_region
      _
    $region25: #{tpu_custom_call.1} parent=1 // pred_fallthru
      _
    // Predicated region
    $region26: #{tpu_custom_call.1} parent=1 // pred_check
      _
    $region27: #{tpu_custom_call.1} parent=1 // pred_check_branch
      %62 = sbr.rel (0) target = $region29
    $region28: #{tpu_custom_call.1} parent=1 // pred_region
      %s64 = ssub.s32 4096, 4096
      %65 = vsyncadd [#allocation9], %s64
      %s66 = sshll.u32 [#allocation8], 4
      %s67 = int_to_ptr.vmem [resolvable:$true] %s66
      %72 = dma.hbm_to_vmem [thread:$0]  %s6, 4096, %s67, [#allocation9], 64, 64, 4
    $region29: #{tpu_custom_call.1} parent=1 // pred_fallthru
      _
    // Predicated region
    $region30: #{tpu_custom_call.1} parent=1 // pred_check
      _
    $region31: #{tpu_custom_call.1} parent=1 // pred_check_branch
      %74 = sbr.rel (0) target = $region33
    $region32: #{tpu_custom_call.1} parent=1 // pred_region
      _
    $region33: #{tpu_custom_call.1} parent=1 // pred_fallthru
      _
    // Predicated region
    $region34: #{tpu_custom_call.1} parent=1 // pred_check
      _
    $region35: #{tpu_custom_call.1} parent=1 // pred_check_branch
      %76 = sbr.rel (0) target = $region37
    $region36: #{tpu_custom_call.1} parent=1 // pred_region
      _
    $region37: #{tpu_custom_call.1} parent=1 // pred_fallthru
      _
    // Predicated region
    $region38: #{tpu_custom_call.1} parent=1 // pred_check
      _
    $region39: #{tpu_custom_call.1} parent=1 // pred_check_branch
      %78 = sbr.rel (0) target = $region41
    $region40: #{tpu_custom_call.1} parent=1 // pred_region
      _
    $region41: #{tpu_custom_call.1} parent=1 // pred_fallthru
      _
    // Predicated region
    $region42: #{tpu_custom_call.1} parent=1 // pred_check
      _
    $region43: #{tpu_custom_call.1} parent=1 // pred_check_branch
      %80 = sbr.rel (0) target = $region45
    $region44: #{tpu_custom_call.1} parent=1 // pred_region
      %81 = dma.done [#allocation3], 256
    $region45: #{tpu_custom_call.1} parent=1 // pred_fallthru
      _
    // Predicated region
    $region46: #{tpu_custom_call.1} parent=1 // pred_check
      _
    $region47: #{tpu_custom_call.1} parent=1 // pred_check_branch
      %83 = sbr.rel (0) target = $region49
    $region48: #{tpu_custom_call.1} parent=1 // pred_region
      %84 = dma.done [#allocation6], 256
    $region49: #{tpu_custom_call.1} parent=1 // pred_fallthru
      _
    // Predicated region
    $region50: #{tpu_custom_call.1} parent=1 // pred_check
      _
    $region51: #{tpu_custom_call.1} parent=1 // pred_check_branch
      %86 = sbr.rel (0) target = $region53
    $region52: #{tpu_custom_call.1} parent=1 // pred_region
      %87 = dma.done [#allocation6], 2048
    $region53: #{tpu_custom_call.1} parent=1 // pred_fallthru
      _
    // Predicated region
    $region54: #{tpu_custom_call.1} parent=1 // pred_check
      _
    $region55: #{tpu_custom_call.1} parent=1 // pred_check_branch
      %89 = sbr.rel (0) target = $region57
    $region56: #{tpu_custom_call.1} parent=1 // pred_region
      %90 = dma.done [#allocation9], 4096
    $region57: #{tpu_custom_call.1} parent=1 // pred_fallthru
      _
    %v92 = vlaneseq
    %v93 = vshrl.u32 %v92, 7
    %v94 = vlaneseq
    %v95 = vand.u32 %v94, 127
    %vm96 = vcmp.le.s32.totalorder %v95, %v93
    %v97 = vsel %vm96, 0.0, -1e+30
    %v98 = vld [vmem:[#allocation2] sm:$0xff]
    %v99 = vld [vmem:[#allocation2 + $0x8] sm:$0xff]
    %v100 = vld [vmem:[#allocation7] sm:$0xf]
    %v101 = vld [vmem:[#allocation7 + $0x4] sm:$0xf]
    %v102 = vld [vmem:[#allocation7 + $0x8] sm:$0xf]
    %v103 = vld [vmem:[#allocation7 + $0xc] sm:$0xf]
    %v104 = vld [vmem:[#allocation7 + $0x10] sm:$0xf]
    %v105 = vld [vmem:[#allocation7 + $0x14] sm:$0xf]
    %v106 = vld [vmem:[#allocation7 + $0x18] sm:$0xf]
    %v107 = vld [vmem:[#allocation7 + $0x1c] sm:$0xf]
    %v108 = vld [vmem:[#allocation7 + $0x20] sm:$0xf]
    %v109 = vld [vmem:[#allocation7 + $0x24] sm:$0xf]
    %v110 = vld [vmem:[#allocation7 + $0x28] sm:$0xf]
    %v111 = vld [vmem:[#allocation7 + $0x2c] sm:$0xf]
    %v112 = vld [vmem:[#allocation7 + $0x30] sm:$0xf]
    %v113 = vld [vmem:[#allocation7 + $0x34] sm:$0xf]
    %v114 = vld [vmem:[#allocation7 + $0x38] sm:$0xf]
    %v115 = vld [vmem:[#allocation7 + $0x3c] sm:$0xf]
    %v116 = vld [vmem:[%s4] sm:$0x1]
    %v117 = vld [vmem:[%s4 + $0x1] sm:$0x1]
    %v118 = vld [vmem:[%s4 + $0x2] sm:$0x1]
    %v119 = vld [vmem:[%s4 + $0x3] sm:$0x1]
    %v120 = vld [vmem:[%s4 + $0x4] sm:$0x1]
    %v121 = vld [vmem:[%s4 + $0x5] sm:$0x1]
    %v122 = vpack.c.bf16 %v99, %v98
    %v123 = vlaneseq
    %v124 = vshrl.u32 %v123, 7
    %v125 = vsub.s32 0, %v124
    %v126 = vrot.slane %v116, %v125
    %v131 = vunpack.c.l.b16 %v100
    %v132 = vunpack.c.l.b16 %v101
    %v133 = vunpack.c.l.b16 %v102
    %v134 = vunpack.c.l.b16 %v103
    %v135 = vpack.c.b16 %v132, %v131
    %v136 = vpack.c.b16 %v134, %v133
    %vm139 = vcmask 261120
    %v141 = vsel %vm139, %v122, 0
    %143 = vmatprep.subr.bf16.mxu0 0
    %144 = vmatpush1.bf16.msra.mxu0 %v135
    %145 = vmatprep.subr.bf16.mxu0 0
    %146 = vmatpush1.bf16.msra.mxu0 %v136
    %147 = vmatprep.subr.bf16.mxu0 0
    %148 = vmatpush1.bf16.msra.mxu0 0
    %149 = vmatprep.subr.bf16.mxu0 0
    %150 = vmatpush1.bf16.msra.mxu0 0
    %151 = vmatprep.subr.bf16.mxu0 0
    %152 = vmatpush1.bf16.msra.mxu0 0
    %153 = vmatprep.subr.bf16.mxu0 0
    %154 = vmatpush1.bf16.msra.mxu0 0
    %155 = vmatprep.subr.bf16.mxu0 0
    %156 = vmatpush1.bf16.msra.mxu0 0
    %157 = vmatprep.subr.bf16.mxu0 0
    %158 = vmatpush1.bf16.msra.mxu0 0
    %159 = vmatprep.subr.bf16.mxu0 0
    %160 = vmatpush1.bf16.msra.mxu0 0
    %161 = vmatprep.subr.bf16.mxu0 0
    %162 = vmatpush1.bf16.msra.mxu0 0
    %163 = vmatprep.subr.bf16.mxu0 0
    %164 = vmatpush1.bf16.msra.mxu0 0
    %165 = vmatprep.subr.bf16.mxu0 0
    %166 = vmatpush1.bf16.msra.mxu0 0
    %167 = vmatprep.subr.bf16.mxu0 0
    %168 = vmatpush1.bf16.msra.mxu0 0
    %169 = vmatprep.subr.bf16.mxu0 0
    %170 = vmatpush1.bf16.msra.mxu0 0
    %171 = vmatprep.subr.bf16.mxu0 0
    %172 = vmatpush1.bf16.msra.mxu0 0
    %173 = vmatprep.subr.bf16.mxu0 0
    %174 = vmatpush1.bf16.msra.mxu0 0
    %175 = vmatprep.mubr.bf16.mxu0 0
    %176 = vmatmul.mubr.bf16.gmra.mrb[0].mxu0 %v141
    %v177 = vpop.f32.mrb[0].mxu0
    %v178 = vadd.f32 %v126, %v177
    %v179 = vpop.f32.mrb[0].mxu0
    %v180 = vpop.f32.mrb[0].mxu0
    %v181 = vadd.f32 %v126, %v180
    %v182 = vpop.f32.mrb[0].mxu0
    %183 = vdwg.mxu0
    %v184 = vlaneseq
    %v185 = vshrl.u32 %v184, 7
    %v186 = vsub.s32 0, %v185
    %v187 = vrot.slane %v117, %v186
    %v192 = vunpack.c.l.b16 %v104
    %v193 = vunpack.c.l.b16 %v105
    %v194 = vunpack.c.l.b16 %v106
    %v195 = vunpack.c.l.b16 %v107
    %v196 = vpack.c.b16 %v193, %v192
    %v197 = vpack.c.b16 %v195, %v194
    %200 = vmatprep.subr.bf16.mxu0 0
    %201 = vmatpush1.bf16.msra.mxu0 %v196
    %202 = vmatprep.subr.bf16.mxu0 0
    %203 = vmatpush1.bf16.msra.mxu0 %v197
    %204 = vmatprep.subr.bf16.mxu0 0
    %205 = vmatpush1.bf16.msra.mxu0 0
    %206 = vmatprep.subr.bf16.mxu0 0
    %207 = vmatpush1.bf16.msra.mxu0 0
    %208 = vmatprep.subr.bf16.mxu0 0
    %209 = vmatpush1.bf16.msra.mxu0 0
    %210 = vmatprep.subr.bf16.mxu0 0
    %211 = vmatpush1.bf16.msra.mxu0 0
    %212 = vmatprep.subr.bf16.mxu0 0
    %213 = vmatpush1.bf16.msra.mxu0 0
    %214 = vmatprep.subr.bf16.mxu0 0
    %215 = vmatpush1.bf16.msra.mxu0 0
    %216 = vmatprep.subr.bf16.mxu0 0
    %217 = vmatpush1.bf16.msra.mxu0 0
    %218 = vmatprep.subr.bf16.mxu0 0
    %219 = vmatpush1.bf16.msra.mxu0 0
    %220 = vmatprep.subr.bf16.mxu0 0
    %221 = vmatpush1.bf16.msra.mxu0 0
    %222 = vmatprep.subr.bf16.mxu0 0
    %223 = vmatpush1.bf16.msra.mxu0 0
    %224 = vmatprep.subr.bf16.mxu0 0
    %225 = vmatpush1.bf16.msra.mxu0 0
    %226 = vmatprep.subr.bf16.mxu0 0
    %227 = vmatpush1.bf16.msra.mxu0 0
    %228 = vmatprep.subr.bf16.mxu0 0
    %229 = vmatpush1.bf16.msra.mxu0 0
    %230 = vmatprep.subr.bf16.mxu0 0
    %231 = vmatpush1.bf16.msra.mxu0 0
    %232 = vmatprep.mubr.bf16.mxu0 0
    %233 = vmatmul.mubr.bf16.gmra.mrb[0].mxu0 %v141
    %v234 = vpop.f32.mrb[0].mxu0
    %v235 = vadd.f32 %v187, %v234
    %v236 = vpop.f32.mrb[0].mxu0
    %v237 = vpop.f32.mrb[0].mxu0
    %v238 = vadd.f32 %v187, %v237
    %v239 = vpop.f32.mrb[0].mxu0
    %240 = vdwg.mxu0
    %v241 = vlaneseq
    %v242 = vshrl.u32 %v241, 7
    %v243 = vsub.s32 0, %v242
    %v244 = vrot.slane %v118, %v243
    %v249 = vunpack.c.l.b16 %v108
    %v250 = vunpack.c.l.b16 %v109
    %v251 = vunpack.c.l.b16 %v110
    %v252 = vunpack.c.l.b16 %v111
    %v253 = vpack.c.b16 %v250, %v249
    %v254 = vpack.c.b16 %v252, %v251
    %257 = vmatprep.subr.bf16.mxu0 0
    %258 = vmatpush1.bf16.msra.mxu0 %v253
    %259 = vmatprep.subr.bf16.mxu0 0
    %260 = vmatpush1.bf16.msra.mxu0 %v254
    %261 = vmatprep.subr.bf16.mxu0 0
    %262 = vmatpush1.bf16.msra.mxu0 0
    %263 = vmatprep.subr.bf16.mxu0 0
    %264 = vmatpush1.bf16.msra.mxu0 0
    %265 = vmatprep.subr.bf16.mxu0 0
    %266 = vmatpush1.bf16.msra.mxu0 0
    %267 = vmatprep.subr.bf16.mxu0 0
    %268 = vmatpush1.bf16.msra.mxu0 0
    %269 = vmatprep.subr.bf16.mxu0 0
    %270 = vmatpush1.bf16.msra.mxu0 0
    %271 = vmatprep.subr.bf16.mxu0 0
    %272 = vmatpush1.bf16.msra.mxu0 0
    %273 = vmatprep.subr.bf16.mxu0 0
    %274 = vmatpush1.bf16.msra.mxu0 0
    %275 = vmatprep.subr.bf16.mxu0 0
    %276 = vmatpush1.bf16.msra.mxu0 0
    %277 = vmatprep.subr.bf16.mxu0 0
    %278 = vmatpush1.bf16.msra.mxu0 0
    %279 = vmatprep.subr.bf16.mxu0 0
    %280 = vmatpush1.bf16.msra.mxu0 0
    %281 = vmatprep.subr.bf16.mxu0 0
    %282 = vmatpush1.bf16.msra.mxu0 0
    %283 = vmatprep.subr.bf16.mxu0 0
    %284 = vmatpush1.bf16.msra.mxu0 0
    %285 = vmatprep.subr.bf16.mxu0 0
    %286 = vmatpush1.bf16.msra.mxu0 0
    %287 = vmatprep.subr.bf16.mxu0 0
    %288 = vmatpush1.bf16.msra.mxu0 0
    %289 = vmatprep.mubr.bf16.mxu0 0
    %290 = vmatmul.mubr.bf16.gmra.mrb[0].mxu0 %v141
    %v291 = vpop.f32.mrb[0].mxu0
    %v292 = vadd.f32 %v244, %v291
    %v293 = vpop.f32.mrb[0].mxu0
    %v294 = vpop.f32.mrb[0].mxu0
    %v295 = vadd.f32 %v244, %v294
    %v296 = vpop.f32.mrb[0].mxu0
    %297 = vdwg.mxu0
    %299 = vrot.lane.b32.xlu0 %v178, 120
    %v300 = vpop.permute.xlu0 %299
    %302 = vrot.lane.b32.xlu0 %v178, 112
    %v303 = vpop.permute.xlu0 %302
    %305 = vrot.lane.b32.xlu0 %v178, 104
    %v306 = vpop.permute.xlu0 %305
    %309 = vrot.lane.b32.xlu0 %v181, 120
    %v310 = vpop.permute.xlu0 %309
    %312 = vrot.lane.b32.xlu0 %v181, 112
    %v313 = vpop.permute.xlu0 %312
    %315 = vrot.lane.b32.xlu0 %v181, 104
    %v316 = vpop.permute.xlu0 %315
    %319 = vrot.lane.b32.xlu0 %v235, 120
    %v320 = vpop.permute.xlu0 %319
    %322 = vrot.lane.b32.xlu0 %v235, 112
    %v323 = vpop.permute.xlu0 %322
    %325 = vrot.lane.b32.xlu0 %v235, 104
    %v326 = vpop.permute.xlu0 %325
    %329 = vrot.lane.b32.xlu0 %v238, 120
    %v330 = vpop.permute.xlu0 %329
    %332 = vrot.lane.b32.xlu0 %v238, 112
    %v333 = vpop.permute.xlu0 %332
    %335 = vrot.lane.b32.xlu0 %v238, 104
    %v336 = vpop.permute.xlu0 %335
    %339 = vrot.lane.b32.xlu0 %v292, 120
    %v340 = vpop.permute.xlu0 %339
    %342 = vrot.lane.b32.xlu0 %v292, 112
    %v343 = vpop.permute.xlu0 %342
    %345 = vrot.lane.b32.xlu0 %v292, 104
    %v346 = vpop.permute.xlu0 %345
    %349 = vrot.lane.b32.xlu0 %v295, 120
    %v350 = vpop.permute.xlu0 %349
    %352 = vrot.lane.b32.xlu0 %v295, 112
    %v353 = vpop.permute.xlu0 %352
    %355 = vrot.lane.b32.xlu0 %v295, 104
    %v356 = vpop.permute.xlu0 %355
    %v358 = vpack.c.bf16 %v178, %v178
    %v359 = vpack.c.bf16 %v300, %v300
    %v360 = vpack.c.bf16 %v303, %v303
    %v361 = vpack.c.bf16 %v306, %v306
    %v362 = vpack.c.bf16 %v181, %v181
    %v363 = vpack.c.bf16 %v310, %v310
    %v364 = vpack.c.bf16 %v313, %v313
    %v365 = vpack.c.bf16 %v316, %v316
    %v366 = vpack.c.bf16 %v235, %v235
    %v367 = vpack.c.bf16 %v320, %v320
    %v368 = vpack.c.bf16 %v323, %v323
    %v369 = vpack.c.bf16 %v326, %v326
    %v370 = vpack.c.bf16 %v238, %v238
    %v371 = vpack.c.bf16 %v330, %v330
    %v372 = vpack.c.bf16 %v333, %v333
    %v373 = vpack.c.bf16 %v336, %v336
    %vm374 = vcmask 64512
    %v376 = vsel %vm374, %v358, 0
    %v379 = vsel %vm374, %v366, 0
    %381 = vmatprep.subr.bf16.mxu0 0
    %382 = vmatpush1.bf16.xpose.msra.mxu0 %v379
    %383 = vmatprep.subr.bf16.mxu0 0
    %384 = vmatpush1.bf16.xpose.msra.mxu0 0
    %385 = vmatprep.subr.bf16.mxu0 0
    %386 = vmatpush1.bf16.xpose.msra.mxu0 0
    %387 = vmatprep.subr.bf16.mxu0 0
    %388 = vmatpush1.bf16.xpose.msra.mxu0 0
    %389 = vmatprep.subr.bf16.mxu0 0
    %390 = vmatpush1.bf16.xpose.msra.mxu0 0
    %391 = vmatprep.subr.bf16.mxu0 0
    %392 = vmatpush1.bf16.xpose.msra.mxu0 0
    %393 = vmatprep.subr.bf16.mxu0 0
    %394 = vmatpush1.bf16.xpose.msra.mxu0 0
    %395 = vmatprep.subr.bf16.mxu0 0
    %396 = vmatpush1.bf16.xpose.msra.mxu0 0
    %397 = vmatprep.subr.bf16.mxu0 0
    %398 = vmatpush1.bf16.xpose.msra.mxu0 0
    %399 = vmatprep.subr.bf16.mxu0 0
    %400 = vmatpush1.bf16.xpose.msra.mxu0 0
    %401 = vmatprep.subr.bf16.mxu0 0
    %402 = vmatpush1.bf16.xpose.msra.mxu0 0
    %403 = vmatprep.subr.bf16.mxu0 0
    %404 = vmatpush1.bf16.xpose.msra.mxu0 0
    %405 = vmatprep.subr.bf16.mxu0 0
    %406 = vmatpush1.bf16.xpose.msra.mxu0 0
    %407 = vmatprep.subr.bf16.mxu0 0
    %408 = vmatpush1.bf16.xpose.msra.mxu0 0
    %409 = vmatprep.subr.bf16.mxu0 0
    %410 = vmatpush1.bf16.xpose.msra.mxu0 0
    %411 = vmatprep.subr.bf16.mxu0 0
    %412 = vmatpush1.bf16.xpose.msra.mxu0 0
    %413 = vmatprep.mubr.bf16.mxu0 0
    %414 = vmatmul.mubr.bf16.gmra.mrb[0].mxu0 %v376
    %v415 = vpop.f32.mrb[0].mxu0
    %v416 = vadd.f32 0.0, %v415
    %v417 = vpop.f32.mrb[0].mxu0
    %v418 = vpop.f32.mrb[0].mxu0
    %v419 = vpop.f32.mrb[0].mxu0
    %420 = vdwg.mxu0
    %v422 = vsel %vm374, %v359, 0
    %v425 = vsel %vm374, %v367, 0
    %427 = vmatprep.subr.bf16.mxu0 0
    %428 = vmatpush1.bf16.xpose.msra.mxu0 %v425
    %429 = vmatprep.subr.bf16.mxu0 0
    %430 = vmatpush1.bf16.xpose.msra.mxu0 0
    %431 = vmatprep.subr.bf16.mxu0 0
    %432 = vmatpush1.bf16.xpose.msra.mxu0 0
    %433 = vmatprep.subr.bf16.mxu0 0
    %434 = vmatpush1.bf16.xpose.msra.mxu0 0
    %435 = vmatprep.subr.bf16.mxu0 0
    %436 = vmatpush1.bf16.xpose.msra.mxu0 0
    %437 = vmatprep.subr.bf16.mxu0 0
    %438 = vmatpush1.bf16.xpose.msra.mxu0 0
    %439 = vmatprep.subr.bf16.mxu0 0
    %440 = vmatpush1.bf16.xpose.msra.mxu0 0
    %441 = vmatprep.subr.bf16.mxu0 0
    %442 = vmatpush1.bf16.xpose.msra.mxu0 0
    %443 = vmatprep.subr.bf16.mxu0 0
    %444 = vmatpush1.bf16.xpose.msra.mxu0 0
    %445 = vmatprep.subr.bf16.mxu0 0
    %446 = vmatpush1.bf16.xpose.msra.mxu0 0
    %447 = vmatprep.subr.bf16.mxu0 0
    %448 = vmatpush1.bf16.xpose.msra.mxu0 0
    %449 = vmatprep.subr.bf16.mxu0 0
    %450 = vmatpush1.bf16.xpose.msra.mxu0 0
    %451 = vmatprep.subr.bf16.mxu0 0
    %452 = vmatpush1.bf16.xpose.msra.mxu0 0
    %453 = vmatprep.subr.bf16.mxu0 0
    %454 = vmatpush1.bf16.xpose.msra.mxu0 0
    %455 = vmatprep.subr.bf16.mxu0 0
    %456 = vmatpush1.bf16.xpose.msra.mxu0 0
    %457 = vmatprep.subr.bf16.mxu0 0
    %458 = vmatpush1.bf16.xpose.msra.mxu0 0
    %459 = vmatprep.mubr.bf16.mxu0 0
    %460 = vmatmul.mubr.bf16.gmra.mrb[0].mxu0 %v422
    %v461 = vpop.f32.mrb[0].mxu0
    %v462 = vadd.f32 0.0, %v461
    %v463 = vpop.f32.mrb[0].mxu0
    %v464 = vpop.f32.mrb[0].mxu0
    %v465 = vpop.f32.mrb[0].mxu0
    %466 = vdwg.mxu0
    %v468 = vsel %vm374, %v360, 0
    %v471 = vsel %vm374, %v368, 0
    %473 = vmatprep.subr.bf16.mxu0 0
    %474 = vmatpush1.bf16.xpose.msra.mxu0 %v471
    %475 = vmatprep.subr.bf16.mxu0 0
    %476 = vmatpush1.bf16.xpose.msra.mxu0 0
    %477 = vmatprep.subr.bf16.mxu0 0
    %478 = vmatpush1.bf16.xpose.msra.mxu0 0
    %479 = vmatprep.subr.bf16.mxu0 0
    %480 = vmatpush1.bf16.xpose.msra.mxu0 0
    %481 = vmatprep.subr.bf16.mxu0 0
    %482 = vmatpush1.bf16.xpose.msra.mxu0 0
    %483 = vmatprep.subr.bf16.mxu0 0
    %484 = vmatpush1.bf16.xpose.msra.mxu0 0
    %485 = vmatprep.subr.bf16.mxu0 0
    %486 = vmatpush1.bf16.xpose.msra.mxu0 0
    %487 = vmatprep.subr.bf16.mxu0 0
    %488 = vmatpush1.bf16.xpose.msra.mxu0 0
    %489 = vmatprep.subr.bf16.mxu0 0
    %490 = vmatpush1.bf16.xpose.msra.mxu0 0
    %491 = vmatprep.subr.bf16.mxu0 0
    %492 = vmatpush1.bf16.xpose.msra.mxu0 0
    %493 = vmatprep.subr.bf16.mxu0 0
    %494 = vmatpush1.bf16.xpose.msra.mxu0 0
    %495 = vmatprep.subr.bf16.mxu0 0
    %496 = vmatpush1.bf16.xpose.msra.mxu0 0
    %497 = vmatprep.subr.bf16.mxu0 0
    %498 = vmatpush1.bf16.xpose.msra.mxu0 0
    %499 = vmatprep.subr.bf16.mxu0 0
    %500 = vmatpush1.bf16.xpose.msra.mxu0 0
    %501 = vmatprep.subr.bf16.mxu0 0
    %502 = vmatpush1.bf16.xpose.msra.mxu0 0
    %503 = vmatprep.subr.bf16.mxu0 0
    %504 = vmatpush1.bf16.xpose.msra.mxu0 0
    %505 = vmatprep.mubr.bf16.mxu0 0
    %506 = vmatmul.mubr.bf16.gmra.mrb[0].mxu0 %v468
    %v507 = vpop.f32.mrb[0].mxu0
    %v508 = vadd.f32 0.0, %v507
    %v509 = vpop.f32.mrb[0].mxu0
    %v510 = vpop.f32.mrb[0].mxu0
    %v511 = vpop.f32.mrb[0].mxu0
    %512 = vdwg.mxu0
    %v514 = vsel %vm374, %v361, 0
    %v517 = vsel %vm374, %v369, 0
    %519 = vmatprep.subr.bf16.mxu0 0
    %520 = vmatpush1.bf16.xpose.msra.mxu0 %v517
    %521 = vmatprep.subr.bf16.mxu0 0
    %522 = vmatpush1.bf16.xpose.msra.mxu0 0
    %523 = vmatprep.subr.bf16.mxu0 0
    %524 = vmatpush1.bf16.xpose.msra.mxu0 0
    %525 = vmatprep.subr.bf16.mxu0 0
    %526 = vmatpush1.bf16.xpose.msra.mxu0 0
    %527 = vmatprep.subr.bf16.mxu0 0
    %528 = vmatpush1.bf16.xpose.msra.mxu0 0
    %529 = vmatprep.subr.bf16.mxu0 0
    %530 = vmatpush1.bf16.xpose.msra.mxu0 0
    %531 = vmatprep.subr.bf16.mxu0 0
    %532 = vmatpush1.bf16.xpose.msra.mxu0 0
    %533 = vmatprep.subr.bf16.mxu0 0
    %534 = vmatpush1.bf16.xpose.msra.mxu0 0
    %535 = vmatprep.subr.bf16.mxu0 0
    %536 = vmatpush1.bf16.xpose.msra.mxu0 0
    %537 = vmatprep.subr.bf16.mxu0 0
    %538 = vmatpush1.bf16.xpose.msra.mxu0 0
    %539 = vmatprep.subr.bf16.mxu0 0
    %540 = vmatpush1.bf16.xpose.msra.mxu0 0
    %541 = vmatprep.subr.bf16.mxu0 0
    %542 = vmatpush1.bf16.xpose.msra.mxu0 0
    %543 = vmatprep.subr.bf16.mxu0 0
    %544 = vmatpush1.bf16.xpose.msra.mxu0 0
    %545 = vmatprep.subr.bf16.mxu0 0
    %546 = vmatpush1.bf16.xpose.msra.mxu0 0
    %547 = vmatprep.subr.bf16.mxu0 0
    %548 = vmatpush1.bf16.xpose.msra.mxu0 0
    %549 = vmatprep.subr.bf16.mxu0 0
    %550 = vmatpush1.bf16.xpose.msra.mxu0 0
    %551 = vmatprep.mubr.bf16.mxu0 0
    %552 = vmatmul.mubr.bf16.gmra.mrb[0].mxu0 %v514
    %v553 = vpop.f32.mrb[0].mxu0
    %v554 = vadd.f32 0.0, %v553
    %v555 = vpop.f32.mrb[0].mxu0
    %v556 = vpop.f32.mrb[0].mxu0
    %v557 = vpop.f32.mrb[0].mxu0
    %558 = vdwg.mxu0
    %v560 = vsel %vm374, %v362, 0
    %v563 = vsel %vm374, %v370, 0
    %565 = vmatprep.subr.bf16.mxu0 0
    %566 = vmatpush1.bf16.xpose.msra.mxu0 %v563
    %567 = vmatprep.subr.bf16.mxu0 0
    %568 = vmatpush1.bf16.xpose.msra.mxu0 0
    %569 = vmatprep.subr.bf16.mxu0 0
    %570 = vmatpush1.bf16.xpose.msra.mxu0 0
    %571 = vmatprep.subr.bf16.mxu0 0
    %572 = vmatpush1.bf16.xpose.msra.mxu0 0
    %573 = vmatprep.subr.bf16.mxu0 0
    %574 = vmatpush1.bf16.xpose.msra.mxu0 0
    %575 = vmatprep.subr.bf16.mxu0 0
    %576 = vmatpush1.bf16.xpose.msra.mxu0 0
    %577 = vmatprep.subr.bf16.mxu0 0
    %578 = vmatpush1.bf16.xpose.msra.mxu0 0
    %579 = vmatprep.subr.bf16.mxu0 0
    %580 = vmatpush1.bf16.xpose.msra.mxu0 0
    %581 = vmatprep.subr.bf16.mxu0 0
    %582 = vmatpush1.bf16.xpose.msra.mxu0 0
    %583 = vmatprep.subr.bf16.mxu0 0
    %584 = vmatpush1.bf16.xpose.msra.mxu0 0
    %585 = vmatprep.subr.bf16.mxu0 0
    %586 = vmatpush1.bf16.xpose.msra.mxu0 0
    %587 = vmatprep.subr.bf16.mxu0 0
    %588 = vmatpush1.bf16.xpose.msra.mxu0 0
    %589 = vmatprep.subr.bf16.mxu0 0
    %590 = vmatpush1.bf16.xpose.msra.mxu0 0
    %591 = vmatprep.subr.bf16.mxu0 0
    %592 = vmatpush1.bf16.xpose.msra.mxu0 0
    %593 = vmatprep.subr.bf16.mxu0 0
    %594 = vmatpush1.bf16.xpose.msra.mxu0 0
    %595 = vmatprep.subr.bf16.mxu0 0
    %596 = vmatpush1.bf16.xpose.msra.mxu0 0
    %597 = vmatprep.mubr.bf16.mxu0 0
    %598 = vmatmul.mubr.bf16.gmra.mrb[0].mxu0 %v560
    %v599 = vpop.f32.mrb[0].mxu0
    %v600 = vadd.f32 0.0, %v599
    %v601 = vpop.f32.mrb[0].mxu0
    %v602 = vpop.f32.mrb[0].mxu0
    %v603 = vpop.f32.mrb[0].mxu0
    %604 = vdwg.mxu0
    %v606 = vsel %vm374, %v363, 0
    %v609 = vsel %vm374, %v371, 0
    %611 = vmatprep.subr.bf16.mxu0 0
    %612 = vmatpush1.bf16.xpose.msra.mxu0 %v609
    %613 = vmatprep.subr.bf16.mxu0 0
    %614 = vmatpush1.bf16.xpose.msra.mxu0 0
    %615 = vmatprep.subr.bf16.mxu0 0
    %616 = vmatpush1.bf16.xpose.msra.mxu0 0
    %617 = vmatprep.subr.bf16.mxu0 0
    %618 = vmatpush1.bf16.xpose.msra.mxu0 0
    %619 = vmatprep.subr.bf16.mxu0 0
    %620 = vmatpush1.bf16.xpose.msra.mxu0 0
    %621 = vmatprep.subr.bf16.mxu0 0
    %622 = vmatpush1.bf16.xpose.msra.mxu0 0
    %623 = vmatprep.subr.bf16.mxu0 0
    %624 = vmatpush1.bf16.xpose.msra.mxu0 0
    %625 = vmatprep.subr.bf16.mxu0 0
    %626 = vmatpush1.bf16.xpose.msra.mxu0 0
    %627 = vmatprep.subr.bf16.mxu0 0
    %628 = vmatpush1.bf16.xpose.msra.mxu0 0
    %629 = vmatprep.subr.bf16.mxu0 0
    %630 = vmatpush1.bf16.xpose.msra.mxu0 0
    %631 = vmatprep.subr.bf16.mxu0 0
    %632 = vmatpush1.bf16.xpose.msra.mxu0 0
    %633 = vmatprep.subr.bf16.mxu0 0
    %634 = vmatpush1.bf16.xpose.msra.mxu0 0
    %635 = vmatprep.subr.bf16.mxu0 0
    %636 = vmatpush1.bf16.xpose.msra.mxu0 0
    %637 = vmatprep.subr.bf16.mxu0 0
    %638 = vmatpush1.bf16.xpose.msra.mxu0 0
    %639 = vmatprep.subr.bf16.mxu0 0
    %640 = vmatpush1.bf16.xpose.msra.mxu0 0
    %641 = vmatprep.subr.bf16.mxu0 0
    %642 = vmatpush1.bf16.xpose.msra.mxu0 0
    %643 = vmatprep.mubr.bf16.mxu0 0
    %644 = vmatmul.mubr.bf16.gmra.mrb[0].mxu0 %v606
    %v645 = vpop.f32.mrb[0].mxu0
    %v646 = vadd.f32 0.0, %v645
    %v647 = vpop.f32.mrb[0].mxu0
    %v648 = vpop.f32.mrb[0].mxu0
    %v649 = vpop.f32.mrb[0].mxu0
    %650 = vdwg.mxu0
    %v652 = vsel %vm374, %v364, 0
    %v655 = vsel %vm374, %v372, 0
    %657 = vmatprep.subr.bf16.mxu0 0
    %658 = vmatpush1.bf16.xpose.msra.mxu0 %v655
    %659 = vmatprep.subr.bf16.mxu0 0
    %660 = vmatpush1.bf16.xpose.msra.mxu0 0
    %661 = vmatprep.subr.bf16.mxu0 0
    %662 = vmatpush1.bf16.xpose.msra.mxu0 0
    %663 = vmatprep.subr.bf16.mxu0 0
    %664 = vmatpush1.bf16.xpose.msra.mxu0 0
    %665 = vmatprep.subr.bf16.mxu0 0
    %666 = vmatpush1.bf16.xpose.msra.mxu0 0
    %667 = vmatprep.subr.bf16.mxu0 0
    %668 = vmatpush1.bf16.xpose.msra.mxu0 0
    %669 = vmatprep.subr.bf16.mxu0 0
    %670 = vmatpush1.bf16.xpose.msra.mxu0 0
    %671 = vmatprep.subr.bf16.mxu0 0
    %672 = vmatpush1.bf16.xpose.msra.mxu0 0
    %673 = vmatprep.subr.bf16.mxu0 0
    %674 = vmatpush1.bf16.xpose.msra.mxu0 0
    %675 = vmatprep.subr.bf16.mxu0 0
    %676 = vmatpush1.bf16.xpose.msra.mxu0 0
    %677 = vmatprep.subr.bf16.mxu0 0
    %678 = vmatpush1.bf16.xpose.msra.mxu0 0
    %679 = vmatprep.subr.bf16.mxu0 0
    %680 = vmatpush1.bf16.xpose.msra.mxu0 0
    %681 = vmatprep.subr.bf16.mxu0 0
    %682 = vmatpush1.bf16.xpose.msra.mxu0 0
    %683 = vmatprep.subr.bf16.mxu0 0
    %684 = vmatpush1.bf16.xpose.msra.mxu0 0
    %685 = vmatprep.subr.bf16.mxu0 0
    %686 = vmatpush1.bf16.xpose.msra.mxu0 0
    %687 = vmatprep.subr.bf16.mxu0 0
    %688 = vmatpush1.bf16.xpose.msra.mxu0 0
    %689 = vmatprep.mubr.bf16.mxu0 0
    %690 = vmatmul.mubr.bf16.gmra.mrb[0].mxu0 %v652
    %v691 = vpop.f32.mrb[0].mxu0
    %v692 = vadd.f32 0.0, %v691
    %v693 = vpop.f32.mrb[0].mxu0
    %v694 = vpop.f32.mrb[0].mxu0
    %v695 = vpop.f32.mrb[0].mxu0
    %696 = vdwg.mxu0
    %v698 = vsel %vm374, %v365, 0
    %v701 = vsel %vm374, %v373, 0
    %703 = vmatprep.subr.bf16.mxu0 0
    %704 = vmatpush1.bf16.xpose.msra.mxu0 %v701
    %705 = vmatprep.subr.bf16.mxu0 0
    %706 = vmatpush1.bf16.xpose.msra.mxu0 0
    %707 = vmatprep.subr.bf16.mxu0 0
    %708 = vmatpush1.bf16.xpose.msra.mxu0 0
    %709 = vmatprep.subr.bf16.mxu0 0
    %710 = vmatpush1.bf16.xpose.msra.mxu0 0
    %711 = vmatprep.subr.bf16.mxu0 0
    %712 = vmatpush1.bf16.xpose.msra.mxu0 0
    %713 = vmatprep.subr.bf16.mxu0 0
    %714 = vmatpush1.bf16.xpose.msra.mxu0 0
    %715 = vmatprep.subr.bf16.mxu0 0
    %716 = vmatpush1.bf16.xpose.msra.mxu0 0
    %717 = vmatprep.subr.bf16.mxu0 0
    %718 = vmatpush1.bf16.xpose.msra.mxu0 0
    %719 = vmatprep.subr.bf16.mxu0 0
    %720 = vmatpush1.bf16.xpose.msra.mxu0 0
    %721 = vmatprep.subr.bf16.mxu0 0
    %722 = vmatpush1.bf16.xpose.msra.mxu0 0
    %723 = vmatprep.subr.bf16.mxu0 0
    %724 = vmatpush1.bf16.xpose.msra.mxu0 0
    %725 = vmatprep.subr.bf16.mxu0 0
    %726 = vmatpush1.bf16.xpose.msra.mxu0 0
    %727 = vmatprep.subr.bf16.mxu0 0
    %728 = vmatpush1.bf16.xpose.msra.mxu0 0
    %729 = vmatprep.subr.bf16.mxu0 0
    %730 = vmatpush1.bf16.xpose.msra.mxu0 0
    %731 = vmatprep.subr.bf16.mxu0 0
    %732 = vmatpush1.bf16.xpose.msra.mxu0 0
    %733 = vmatprep.subr.bf16.mxu0 0
    %734 = vmatpush1.bf16.xpose.msra.mxu0 0
    %735 = vmatprep.mubr.bf16.mxu0 0
    %736 = vmatmul.mubr.bf16.gmra.mrb[0].mxu0 %v698
    %v737 = vpop.f32.mrb[0].mxu0
    %v738 = vadd.f32 0.0, %v737
    %v739 = vpop.f32.mrb[0].mxu0
    %v740 = vpop.f32.mrb[0].mxu0
    %v741 = vpop.f32.mrb[0].mxu0
    %742 = vdwg.mxu0
    %v743 = vsel %vm374, %v416, -inf
    %744 = vmax.xlane.f32.xlu0 %v743
    %v745 = vpop.xlane.xlu0 %744
    %v746 = vsel %vm374, %v462, -inf
    %747 = vmax.xlane.f32.xlu0 %v746
    %v748 = vpop.xlane.xlu0 %747
    %v749 = vsel %vm374, %v508, -inf
    %750 = vmax.xlane.f32.xlu0 %v749
    %v751 = vpop.xlane.xlu0 %750
    %v752 = vsel %vm374, %v554, -inf
    %753 = vmax.xlane.f32.xlu0 %v752
    %v754 = vpop.xlane.xlu0 %753
    %v755 = vsel %vm374, %v600, -inf
    %756 = vmax.xlane.f32.xlu0 %v755
    %v757 = vpop.xlane.xlu0 %756
    %v758 = vsel %vm374, %v646, -inf
    %759 = vmax.xlane.f32.xlu0 %v758
    %v760 = vpop.xlane.xlu0 %759
    %v761 = vsel %vm374, %v692, -inf
    %762 = vmax.xlane.f32.xlu0 %v761
    %v763 = vpop.xlane.xlu0 %762
    %v764 = vsel %vm374, %v738, -inf
    %765 = vmax.xlane.f32.xlu0 %v764
    %v766 = vpop.xlane.xlu0 %765
    %v767 = vsub.f32 %v416, %v745
    %v768 = vsub.f32 %v462, %v748
    %v769 = vsub.f32 %v508, %v751
    %v770 = vsub.f32 %v554, %v754
    %v771 = vsub.f32 %v600, %v757
    %v772 = vsub.f32 %v646, %v760
    %v773 = vsub.f32 %v692, %v763
    %v774 = vsub.f32 %v738, %v766
    %v775 = vmul.f32 %v767, 1.442695
    %v776 = vpow.pop %v775
    %v777 = vmul.f32 %v768, 1.442695
    %v778 = vpow.pop %v777
    %v779 = vmul.f32 %v769, 1.442695
    %v780 = vpow.pop %v779
    %v781 = vmul.f32 %v770, 1.442695
    %v782 = vpow.pop %v781
    %v783 = vmul.f32 %v771, 1.442695
    %v784 = vpow.pop %v783
    %v785 = vmul.f32 %v772, 1.442695
    %v786 = vpow.pop %v785
    %v787 = vmul.f32 %v773, 1.442695
    %v788 = vpow.pop %v787
    %v789 = vmul.f32 %v774, 1.442695
    %v790 = vpow.pop %v789
    %v791 = vsel %vm374, %v776, 0.0
    %792 = vadd.xlane.f32.xlu0 %v791
    %v793 = vpop.xlane.xlu0 %792
    %v794 = vsel %vm374, %v778, 0.0
    %795 = vadd.xlane.f32.xlu0 %v794
    %v796 = vpop.xlane.xlu0 %795
    %v797 = vsel %vm374, %v780, 0.0
    %798 = vadd.xlane.f32.xlu0 %v797
    %v799 = vpop.xlane.xlu0 %798
    %v800 = vsel %vm374, %v782, 0.0
    %801 = vadd.xlane.f32.xlu0 %v800
    %v802 = vpop.xlane.xlu0 %801
    %v803 = vsel %vm374, %v784, 0.0
    %804 = vadd.xlane.f32.xlu0 %v803
    %v805 = vpop.xlane.xlu0 %804
    %v806 = vsel %vm374, %v786, 0.0
    %807 = vadd.xlane.f32.xlu0 %v806
    %v808 = vpop.xlane.xlu0 %807
    %v809 = vsel %vm374, %v788, 0.0
    %810 = vadd.xlane.f32.xlu0 %v809
    %v811 = vpop.xlane.xlu0 %810
    %v812 = vsel %vm374, %v790, 0.0
    %813 = vadd.xlane.f32.xlu0 %v812
    %v814 = vpop.xlane.xlu0 %813
    %v815 = vrcp.pop %v793
    %v816 = vmul.f32 %v776, %v815
    %v817 = vrcp.pop %v796
    %v818 = vmul.f32 %v778, %v817
    %v819 = vrcp.pop %v799
    %v820 = vmul.f32 %v780, %v819
    %v821 = vrcp.pop %v802
    %v822 = vmul.f32 %v782, %v821
    %v823 = vrcp.pop %v805
    %v824 = vmul.f32 %v784, %v823
    %v825 = vrcp.pop %v808
    %v826 = vmul.f32 %v786, %v825
    %v827 = vrcp.pop %v811
    %v828 = vmul.f32 %v788, %v827
    %v829 = vrcp.pop %v814
    %v830 = vmul.f32 %v790, %v829
    %v831 = vpack.c.bf16 %v816, %v816
    %v832 = vpack.c.bf16 %v818, %v818
    %v833 = vpack.c.bf16 %v820, %v820
    %v834 = vpack.c.bf16 %v822, %v822
    %v835 = vpack.c.bf16 %v824, %v824
    %v836 = vpack.c.bf16 %v826, %v826
    %v837 = vpack.c.bf16 %v828, %v828
    %v838 = vpack.c.bf16 %v830, %v830
    %v839 = vpack.c.bf16 %v292, %v292
    %v840 = vpack.c.bf16 %v340, %v340
    %v841 = vpack.c.bf16 %v343, %v343
    %v842 = vpack.c.bf16 %v346, %v346
    %v843 = vpack.c.bf16 %v295, %v295
    %v844 = vpack.c.bf16 %v350, %v350
    %v845 = vpack.c.bf16 %v353, %v353
    %v846 = vpack.c.bf16 %v356, %v356
    %v848 = vsel %vm374, %v831, 0
    %vm850 = vcmask 1043456
    %v852 = vsel %vm850, %v839, 0
    %854 = vmatprep.subr.bf16.mxu0 0
    %855 = vmatpush1.bf16.msra.mxu0 %v852
    %856 = vmatprep.subr.bf16.mxu0 0
    %857 = vmatpush1.bf16.msra.mxu0 0
    %858 = vmatprep.subr.bf16.mxu0 0
    %859 = vmatpush1.bf16.msra.mxu0 0
    %860 = vmatprep.subr.bf16.mxu0 0
    %861 = vmatpush1.bf16.msra.mxu0 0
    %862 = vmatprep.subr.bf16.mxu0 0
    %863 = vmatpush1.bf16.msra.mxu0 0
    %864 = vmatprep.subr.bf16.mxu0 0
    %865 = vmatpush1.bf16.msra.mxu0 0
    %866 = vmatprep.subr.bf16.mxu0 0
    %867 = vmatpush1.bf16.msra.mxu0 0
    %868 = vmatprep.subr.bf16.mxu0 0
    %869 = vmatpush1.bf16.msra.mxu0 0
    %870 = vmatprep.subr.bf16.mxu0 0
    %871 = vmatpush1.bf16.msra.mxu0 0
    %872 = vmatprep.subr.bf16.mxu0 0
    %873 = vmatpush1.bf16.msra.mxu0 0
    %874 = vmatprep.subr.bf16.mxu0 0
    %875 = vmatpush1.bf16.msra.mxu0 0
    %876 = vmatprep.subr.bf16.mxu0 0
    %877 = vmatpush1.bf16.msra.mxu0 0
    %878 = vmatprep.subr.bf16.mxu0 0
    %879 = vmatpush1.bf16.msra.mxu0 0
    %880 = vmatprep.subr.bf16.mxu0 0
    %881 = vmatpush1.bf16.msra.mxu0 0
    %882 = vmatprep.subr.bf16.mxu0 0
    %883 = vmatpush1.bf16.msra.mxu0 0
    %884 = vmatprep.subr.bf16.mxu0 0
    %885 = vmatpush1.bf16.msra.mxu0 0
    %886 = vmatprep.mubr.bf16.mxu0 0
    %887 = vmatmul.mubr.bf16.gmra.mrb[0].mxu0 %v848
    %v888 = vpop.f32.mrb[0].mxu0
    %v889 = vadd.f32 0.0, %v888
    %v890 = vpop.f32.mrb[0].mxu0
    %v891 = vpop.f32.mrb[0].mxu0
    %v892 = vpop.f32.mrb[0].mxu0
    %893 = vdwg.mxu0
    %v895 = vsel %vm374, %v832, 0
    %v898 = vsel %vm850, %v840, 0
    %900 = vmatprep.subr.bf16.mxu0 0
    %901 = vmatpush1.bf16.msra.mxu0 %v898
    %902 = vmatprep.subr.bf16.mxu0 0
    %903 = vmatpush1.bf16.msra.mxu0 0
    %904 = vmatprep.subr.bf16.mxu0 0
    %905 = vmatpush1.bf16.msra.mxu0 0
    %906 = vmatprep.subr.bf16.mxu0 0
    %907 = vmatpush1.bf16.msra.mxu0 0
    %908 = vmatprep.subr.bf16.mxu0 0
    %909 = vmatpush1.bf16.msra.mxu0 0
    %910 = vmatprep.subr.bf16.mxu0 0
    %911 = vmatpush1.bf16.msra.mxu0 0
    %912 = vmatprep.subr.bf16.mxu0 0
    %913 = vmatpush1.bf16.msra.mxu0 0
    %914 = vmatprep.subr.bf16.mxu0 0
    %915 = vmatpush1.bf16.msra.mxu0 0
    %916 = vmatprep.subr.bf16.mxu0 0
    %917 = vmatpush1.bf16.msra.mxu0 0
    %918 = vmatprep.subr.bf16.mxu0 0
    %919 = vmatpush1.bf16.msra.mxu0 0
    %920 = vmatprep.subr.bf16.mxu0 0
    %921 = vmatpush1.bf16.msra.mxu0 0
    %922 = vmatprep.subr.bf16.mxu0 0
    %923 = vmatpush1.bf16.msra.mxu0 0
    %924 = vmatprep.subr.bf16.mxu0 0
    %925 = vmatpush1.bf16.msra.mxu0 0
    %926 = vmatprep.subr.bf16.mxu0 0
    %927 = vmatpush1.bf16.msra.mxu0 0
    %928 = vmatprep.subr.bf16.mxu0 0
    %929 = vmatpush1.bf16.msra.mxu0 0
    %930 = vmatprep.subr.bf16.mxu0 0
    %931 = vmatpush1.bf16.msra.mxu0 0
    %932 = vmatprep.mubr.bf16.mxu0 0
    %933 = vmatmul.mubr.bf16.gmra.mrb[0].mxu0 %v895
    %v934 = vpop.f32.mrb[0].mxu0
    %v935 = vadd.f32 0.0, %v934
    %v936 = vpop.f32.mrb[0].mxu0
    %v937 = vpop.f32.mrb[0].mxu0
    %v938 = vpop.f32.mrb[0].mxu0
    %939 = vdwg.mxu0
    %v941 = vsel %vm374, %v833, 0
    %v944 = vsel %vm850, %v841, 0
    %946 = vmatprep.subr.bf16.mxu0 0
    %947 = vmatpush1.bf16.msra.mxu0 %v944
    %948 = vmatprep.subr.bf16.mxu0 0
    %949 = vmatpush1.bf16.msra.mxu0 0
    %950 = vmatprep.subr.bf16.mxu0 0
    %951 = vmatpush1.bf16.msra.mxu0 0
    %952 = vmatprep.subr.bf16.mxu0 0
    %953 = vmatpush1.bf16.msra.mxu0 0
    %954 = vmatprep.subr.bf16.mxu0 0
    %955 = vmatpush1.bf16.msra.mxu0 0
    %956 = vmatprep.subr.bf16.mxu0 0
    %957 = vmatpush1.bf16.msra.mxu0 0
    %958 = vmatprep.subr.bf16.mxu0 0
    %959 = vmatpush1.bf16.msra.mxu0 0
    %960 = vmatprep.subr.bf16.mxu0 0
    %961 = vmatpush1.bf16.msra.mxu0 0
    %962 = vmatprep.subr.bf16.mxu0 0
    %963 = vmatpush1.bf16.msra.mxu0 0
    %964 = vmatprep.subr.bf16.mxu0 0
    %965 = vmatpush1.bf16.msra.mxu0 0
    %966 = vmatprep.subr.bf16.mxu0 0
    %967 = vmatpush1.bf16.msra.mxu0 0
    %968 = vmatprep.subr.bf16.mxu0 0
    %969 = vmatpush1.bf16.msra.mxu0 0
    %970 = vmatprep.subr.bf16.mxu0 0
    %971 = vmatpush1.bf16.msra.mxu0 0
    %972 = vmatprep.subr.bf16.mxu0 0
    %973 = vmatpush1.bf16.msra.mxu0 0
    %974 = vmatprep.subr.bf16.mxu0 0
    %975 = vmatpush1.bf16.msra.mxu0 0
    %976 = vmatprep.subr.bf16.mxu0 0
    %977 = vmatpush1.bf16.msra.mxu0 0
    %978 = vmatprep.mubr.bf16.mxu0 0
    %979 = vmatmul.mubr.bf16.gmra.mrb[0].mxu0 %v941
    %v980 = vpop.f32.mrb[0].mxu0
    %v981 = vadd.f32 0.0, %v980
    %v982 = vpop.f32.mrb[0].mxu0
    %v983 = vpop.f32.mrb[0].mxu0
    %v984 = vpop.f32.mrb[0].mxu0
    %985 = vdwg.mxu0
    %v987 = vsel %vm374, %v834, 0
    %v990 = vsel %vm850, %v842, 0
    %992 = vmatprep.subr.bf16.mxu0 0
    %993 = vmatpush1.bf16.msra.mxu0 %v990
    %994 = vmatprep.subr.bf16.mxu0 0
    %995 = vmatpush1.bf16.msra.mxu0 0
    %996 = vmatprep.subr.bf16.mxu0 0
    %997 = vmatpush1.bf16.msra.mxu0 0
    %998 = vmatprep.subr.bf16.mxu0 0
    %999 = vmatpush1.bf16.msra.mxu0 0
    %1000 = vmatprep.subr.bf16.mxu0 0
    %1001 = vmatpush1.bf16.msra.mxu0 0
    %1002 = vmatprep.subr.bf16.mxu0 0
    %1003 = vmatpush1.bf16.msra.mxu0 0
    %1004 = vmatprep.subr.bf16.mxu0 0
    %1005 = vmatpush1.bf16.msra.mxu0 0
    %1006 = vmatprep.subr.bf16.mxu0 0
    %1007 = vmatpush1.bf16.msra.mxu0 0
    %1008 = vmatprep.subr.bf16.mxu0 0
    %1009 = vmatpush1.bf16.msra.mxu0 0
    %1010 = vmatprep.subr.bf16.mxu0 0
    %1011 = vmatpush1.bf16.msra.mxu0 0
    %1012 = vmatprep.subr.bf16.mxu0 0
    %1013 = vmatpush1.bf16.msra.mxu0 0
    %1014 = vmatprep.subr.bf16.mxu0 0
    %1015 = vmatpush1.bf16.msra.mxu0 0
    %1016 = vmatprep.subr.bf16.mxu0 0
    %1017 = vmatpush1.bf16.msra.mxu0 0
    %1018 = vmatprep.subr.bf16.mxu0 0
    %1019 = vmatpush1.bf16.msra.mxu0 0
    %1020 = vmatprep.subr.bf16.mxu0 0
    %1021 = vmatpush1.bf16.msra.mxu0 0
    %1022 = vmatprep.subr.bf16.mxu0 0
    %1023 = vmatpush1.bf16.msra.mxu0 0
    %1024 = vmatprep.mubr.bf16.mxu0 0
    %1025 = vmatmul.mubr.bf16.gmra.mrb[0].mxu0 %v987
    %v1026 = vpop.f32.mrb[0].mxu0
    %v1027 = vadd.f32 0.0, %v1026
    %v1028 = vpop.f32.mrb[0].mxu0
    %v1029 = vpop.f32.mrb[0].mxu0
    %v1030 = vpop.f32.mrb[0].mxu0
    %1031 = vdwg.mxu0
    %v1033 = vsel %vm374, %v835, 0
    %v1036 = vsel %vm850, %v843, 0
    %1038 = vmatprep.subr.bf16.mxu0 0
    %1039 = vmatpush1.bf16.msra.mxu0 %v1036
    %1040 = vmatprep.subr.bf16.mxu0 0
    %1041 = vmatpush1.bf16.msra.mxu0 0
    %1042 = vmatprep.subr.bf16.mxu0 0
    %1043 = vmatpush1.bf16.msra.mxu0 0
    %1044 = vmatprep.subr.bf16.mxu0 0
    %1045 = vmatpush1.bf16.msra.mxu0 0
    %1046 = vmatprep.subr.bf16.mxu0 0
    %1047 = vmatpush1.bf16.msra.mxu0 0
    %1048 = vmatprep.subr.bf16.mxu0 0
    %1049 = vmatpush1.bf16.msra.mxu0 0
    %1050 = vmatprep.subr.bf16.mxu0 0
    %1051 = vmatpush1.bf16.msra.mxu0 0
    %1052 = vmatprep.subr.bf16.mxu0 0
    %1053 = vmatpush1.bf16.msra.mxu0 0
    %1054 = vmatprep.subr.bf16.mxu0 0
    %1055 = vmatpush1.bf16.msra.mxu0 0
    %1056 = vmatprep.subr.bf16.mxu0 0
    %1057 = vmatpush1.bf16.msra.mxu0 0
    %1058 = vmatprep.subr.bf16.mxu0 0
    %1059 = vmatpush1.bf16.msra.mxu0 0
    %1060 = vmatprep.subr.bf16.mxu0 0
    %1061 = vmatpush1.bf16.msra.mxu0 0
    %1062 = vmatprep.subr.bf16.mxu0 0
    %1063 = vmatpush1.bf16.msra.mxu0 0
    %1064 = vmatprep.subr.bf16.mxu0 0
    %1065 = vmatpush1.bf16.msra.mxu0 0
    %1066 = vmatprep.subr.bf16.mxu0 0
    %1067 = vmatpush1.bf16.msra.mxu0 0
    %1068 = vmatprep.subr.bf16.mxu0 0
    %1069 = vmatpush1.bf16.msra.mxu0 0
    %1070 = vmatprep.mubr.bf16.mxu0 0
    %1071 = vmatmul.mubr.bf16.gmra.mrb[0].mxu0 %v1033
    %v1072 = vpop.f32.mrb[0].mxu0
    %v1073 = vadd.f32 0.0, %v1072
    %v1074 = vpop.f32.mrb[0].mxu0
    %v1075 = vpop.f32.mrb[0].mxu0
    %v1076 = vpop.f32.mrb[0].mxu0
    %1077 = vdwg.mxu0
    %v1079 = vsel %vm374, %v836, 0
    %v1082 = vsel %vm850, %v844, 0
    %1084 = vmatprep.subr.bf16.mxu0 0
    %1085 = vmatpush1.bf16.msra.mxu0 %v1082
    %1086 = vmatprep.subr.bf16.mxu0 0
    %1087 = vmatpush1.bf16.msra.mxu0 0
    %1088 = vmatprep.subr.bf16.mxu0 0
    %1089 = vmatpush1.bf16.msra.mxu0 0
    %1090 = vmatprep.subr.bf16.mxu0 0
    %1091 = vmatpush1.bf16.msra.mxu0 0
    %1092 = vmatprep.subr.bf16.mxu0 0
    %1093 = vmatpush1.bf16.msra.mxu0 0
    %1094 = vmatprep.subr.bf16.mxu0 0
    %1095 = vmatpush1.bf16.msra.mxu0 0
    %1096 = vmatprep.subr.bf16.mxu0 0
    %1097 = vmatpush1.bf16.msra.mxu0 0
    %1098 = vmatprep.subr.bf16.mxu0 0
    %1099 = vmatpush1.bf16.msra.mxu0 0
    %1100 = vmatprep.subr.bf16.mxu0 0
    %1101 = vmatpush1.bf16.msra.mxu0 0
    %1102 = vmatprep.subr.bf16.mxu0 0
    %1103 = vmatpush1.bf16.msra.mxu0 0
    %1104 = vmatprep.subr.bf16.mxu0 0
    %1105 = vmatpush1.bf16.msra.mxu0 0
    %1106 = vmatprep.subr.bf16.mxu0 0
    %1107 = vmatpush1.bf16.msra.mxu0 0
    %1108 = vmatprep.subr.bf16.mxu0 0
    %1109 = vmatpush1.bf16.msra.mxu0 0
    %1110 = vmatprep.subr.bf16.mxu0 0
    %1111 = vmatpush1.bf16.msra.mxu0 0
    %1112 = vmatprep.subr.bf16.mxu0 0
    %1113 = vmatpush1.bf16.msra.mxu0 0
    %1114 = vmatprep.subr.bf16.mxu0 0
    %1115 = vmatpush1.bf16.msra.mxu0 0
    %1116 = vmatprep.mubr.bf16.mxu0 0
    %1117 = vmatmul.mubr.bf16.gmra.mrb[0].mxu0 %v1079
    %v1118 = vpop.f32.mrb[0].mxu0
    %v1119 = vadd.f32 0.0, %v1118
    %v1120 = vpop.f32.mrb[0].mxu0
    %v1121 = vpop.f32.mrb[0].mxu0
    %v1122 = vpop.f32.mrb[0].mxu0
    %1123 = vdwg.mxu0
    %v1125 = vsel %vm374, %v837, 0
    %v1128 = vsel %vm850, %v845, 0
    %1130 = vmatprep.subr.bf16.mxu0 0
    %1131 = vmatpush1.bf16.msra.mxu0 %v1128
    %1132 = vmatprep.subr.bf16.mxu0 0
    %1133 = vmatpush1.bf16.msra.mxu0 0
    %1134 = vmatprep.subr.bf16.mxu0 0
    %1135 = vmatpush1.bf16.msra.mxu0 0
    %1136 = vmatprep.subr.bf16.mxu0 0
    %1137 = vmatpush1.bf16.msra.mxu0 0
    %1138 = vmatprep.subr.bf16.mxu0 0
    %1139 = vmatpush1.bf16.msra.mxu0 0
    %1140 = vmatprep.subr.bf16.mxu0 0
    %1141 = vmatpush1.bf16.msra.mxu0 0
    %1142 = vmatprep.subr.bf16.mxu0 0
    %1143 = vmatpush1.bf16.msra.mxu0 0
    %1144 = vmatprep.subr.bf16.mxu0 0
    %1145 = vmatpush1.bf16.msra.mxu0 0
    %1146 = vmatprep.subr.bf16.mxu0 0
    %1147 = vmatpush1.bf16.msra.mxu0 0
    %1148 = vmatprep.subr.bf16.mxu0 0
    %1149 = vmatpush1.bf16.msra.mxu0 0
    %1150 = vmatprep.subr.bf16.mxu0 0
    %1151 = vmatpush1.bf16.msra.mxu0 0
    %1152 = vmatprep.subr.bf16.mxu0 0
    %1153 = vmatpush1.bf16.msra.mxu0 0
    %1154 = vmatprep.subr.bf16.mxu0 0
    %1155 = vmatpush1.bf16.msra.mxu0 0
    %1156 = vmatprep.subr.bf16.mxu0 0
    %1157 = vmatpush1.bf16.msra.mxu0 0
    %1158 = vmatprep.subr.bf16.mxu0 0
    %1159 = vmatpush1.bf16.msra.mxu0 0
    %1160 = vmatprep.subr.bf16.mxu0 0
    %1161 = vmatpush1.bf16.msra.mxu0 0
    %1162 = vmatprep.mubr.bf16.mxu0 0
    %1163 = vmatmul.mubr.bf16.gmra.mrb[0].mxu0 %v1125
    %v1164 = vpop.f32.mrb[0].mxu0
    %v1165 = vadd.f32 0.0, %v1164
    %v1166 = vpop.f32.mrb[0].mxu0
    %v1167 = vpop.f32.mrb[0].mxu0
    %v1168 = vpop.f32.mrb[0].mxu0
    %1169 = vdwg.mxu0
    %v1171 = vsel %vm374, %v838, 0
    %v1174 = vsel %vm850, %v846, 0
    %1176 = vmatprep.subr.bf16.mxu0 0
    %1177 = vmatpush1.bf16.msra.mxu0 %v1174
    %1178 = vmatprep.subr.bf16.mxu0 0
    %1179 = vmatpush1.bf16.msra.mxu0 0
    %1180 = vmatprep.subr.bf16.mxu0 0
    %1181 = vmatpush1.bf16.msra.mxu0 0
    %1182 = vmatprep.subr.bf16.mxu0 0
    %1183 = vmatpush1.bf16.msra.mxu0 0
    %1184 = vmatprep.subr.bf16.mxu0 0
    %1185 = vmatpush1.bf16.msra.mxu0 0
    %1186 = vmatprep.subr.bf16.mxu0 0
    %1187 = vmatpush1.bf16.msra.mxu0 0
    %1188 = vmatprep.subr.bf16.mxu0 0
    %1189 = vmatpush1.bf16.msra.mxu0 0
    %1190 = vmatprep.subr.bf16.mxu0 0
    %1191 = vmatpush1.bf16.msra.mxu0 0
    %1192 = vmatprep.subr.bf16.mxu0 0
    %1193 = vmatpush1.bf16.msra.mxu0 0
    %1194 = vmatprep.subr.bf16.mxu0 0
    %1195 = vmatpush1.bf16.msra.mxu0 0
    %1196 = vmatprep.subr.bf16.mxu0 0
    %1197 = vmatpush1.bf16.msra.mxu0 0
    %1198 = vmatprep.subr.bf16.mxu0 0
    %1199 = vmatpush1.bf16.msra.mxu0 0
    %1200 = vmatprep.subr.bf16.mxu0 0
    %1201 = vmatpush1.bf16.msra.mxu0 0
    %1202 = vmatprep.subr.bf16.mxu0 0
    %1203 = vmatpush1.bf16.msra.mxu0 0
    %1204 = vmatprep.subr.bf16.mxu0 0
    %1205 = vmatpush1.bf16.msra.mxu0 0
    %1206 = vmatprep.subr.bf16.mxu0 0
    %1207 = vmatpush1.bf16.msra.mxu0 0
    %1208 = vmatprep.mubr.bf16.mxu0 0
    %1209 = vmatmul.mubr.bf16.gmra.mrb[0].mxu0 %v1171
    %v1210 = vpop.f32.mrb[0].mxu0
    %v1211 = vadd.f32 0.0, %v1210
    %v1212 = vpop.f32.mrb[0].mxu0
    %v1213 = vpop.f32.mrb[0].mxu0
    %v1214 = vpop.f32.mrb[0].mxu0
    %1215 = vdwg.mxu0
    %1217 = vrot.lane.b32.xlu0 %v935, 8
    %v1218 = vpop.permute.xlu0 %1217
    %1221 = vrot.lane.b32.xlu0 %v981, 16
    %v1222 = vpop.permute.xlu0 %1221
    %1225 = vrot.lane.b32.xlu0 %v1027, 24
    %v1226 = vpop.permute.xlu0 %1225
    %v1228 = vsel %vm374, %v889, %v1218
    %vm1229 = vcmask 130048
    %v1230 = vsel %vm1229, %v1228, %v1222
    %vm1231 = vcmask 195584
    %v1232 = vsel %vm1231, %v1230, %v1226
    %1234 = vrot.lane.b32.xlu0 %v1119, 8
    %v1235 = vpop.permute.xlu0 %1234
    %1238 = vrot.lane.b32.xlu0 %v1165, 16
    %v1239 = vpop.permute.xlu0 %1238
    %1242 = vrot.lane.b32.xlu0 %v1211, 24
    %v1243 = vpop.permute.xlu0 %1242
    %v1245 = vsel %vm374, %v1073, %v1235
    %v1246 = vsel %vm1229, %v1245, %v1239
    %v1247 = vsel %vm1231, %v1246, %v1243
    %v1248 = vpack.c.bf16 %v1247, %v1232
    %v1249 = vlaneseq
    %v1250 = vshrl.u32 %v1249, 7
    %v1251 = vsub.s32 0, %v1250
    %v1252 = vrot.slane %v119, %v1251
    %v1257 = vunpack.c.l.b16 %v112
    %v1258 = vunpack.c.l.b16 %v113
    %v1259 = vunpack.c.l.b16 %v114
    %v1260 = vunpack.c.l.b16 %v115
    %v1261 = vpack.c.b16 %v1258, %v1257
    %v1262 = vpack.c.b16 %v1260, %v1259
    %v1266 = vsel %vm139, %v1248, 0
    %1268 = vmatprep.subr.bf16.mxu0 0
    %1269 = vmatpush1.bf16.msra.mxu0 %v1261
    %1270 = vmatprep.subr.bf16.mxu0 0
    %1271 = vmatpush1.bf16.msra.mxu0 %v1262
    %1272 = vmatprep.subr.bf16.mxu0 0
    %1273 = vmatpush1.bf16.msra.mxu0 0
    %1274 = vmatprep.subr.bf16.mxu0 0
    %1275 = vmatpush1.bf16.msra.mxu0 0
    %1276 = vmatprep.subr.bf16.mxu0 0
    %1277 = vmatpush1.bf16.msra.mxu0 0
    %1278 = vmatprep.subr.bf16.mxu0 0
    %1279 = vmatpush1.bf16.msra.mxu0 0
    %1280 = vmatprep.subr.bf16.mxu0 0
    %1281 = vmatpush1.bf16.msra.mxu0 0
    %1282 = vmatprep.subr.bf16.mxu0 0
    %1283 = vmatpush1.bf16.msra.mxu0 0
    %1284 = vmatprep.subr.bf16.mxu0 0
    %1285 = vmatpush1.bf16.msra.mxu0 0
    %1286 = vmatprep.subr.bf16.mxu0 0
    %1287 = vmatpush1.bf16.msra.mxu0 0
    %1288 = vmatprep.subr.bf16.mxu0 0
    %1289 = vmatpush1.bf16.msra.mxu0 0
    %1290 = vmatprep.subr.bf16.mxu0 0
    %1291 = vmatpush1.bf16.msra.mxu0 0
    %1292 = vmatprep.subr.bf16.mxu0 0
    %1293 = vmatpush1.bf16.msra.mxu0 0
    %1294 = vmatprep.subr.bf16.mxu0 0
    %1295 = vmatpush1.bf16.msra.mxu0 0
    %1296 = vmatprep.subr.bf16.mxu0 0
    %1297 = vmatpush1.bf16.msra.mxu0 0
    %1298 = vmatprep.subr.bf16.mxu0 0
    %1299 = vmatpush1.bf16.msra.mxu0 0
    %1300 = vmatprep.mubr.bf16.mxu0 0
    %1301 = vmatmul.mubr.bf16.gmra.mrb[0].mxu0 %v1266
    %v1302 = vpop.f32.mrb[0].mxu0
    %v1303 = vadd.f32 %v1252, %v1302
    %v1304 = vpop.f32.mrb[0].mxu0
    %v1305 = vpop.f32.mrb[0].mxu0
    %v1306 = vadd.f32 %v1252, %v1305
    %v1307 = vpop.f32.mrb[0].mxu0
    %1308 = vdwg.mxu0
    %v1309 = vadd.f32 %v98, %v1303
    %v1310 = vadd.f32 %v99, %v1306
    %v1311 = vsel %vm139, %v1309, 0.0
    %1312 = vadd.xlane.f32.xlu0 %v1311
    %v1313 = vpop.xlane.xlu0 %1312
    %v1314 = vsel %vm139, %v1310, 0.0
    %1315 = vadd.xlane.f32.xlu0 %v1314
    %v1316 = vpop.xlane.xlu0 %1315
    %v1317 = vrcp.pop 32.0
    %v1318 = vmul.f32 %v1313, %v1317
    %v1319 = vmul.f32 %v1316, %v1317
    %v1320 = vsub.f32 %v1309, %v1318
    %v1321 = vsub.f32 %v1310, %v1319
    %v1322 = vmul.f32 %v1320, %v1320
    %v1323 = vmul.f32 %v1321, %v1321
    %v1324 = vsel %vm139, %v1322, 0.0
    %1325 = vadd.xlane.f32.xlu0 %v1324
    %v1326 = vpop.xlane.xlu0 %1325
    %v1327 = vsel %vm139, %v1323, 0.0
    %1328 = vadd.xlane.f32.xlu0 %v1327
    %v1329 = vpop.xlane.xlu0 %1328
    %v1330 = vmul.f32 %v1326, %v1317
    %v1331 = vmul.f32 %v1329, %v1317
    %v1332 = vadd.f32 %v1330, 1e-05
    %v1333 = vadd.f32 %v1331, 1e-05
    %v1334 = vrsqrt.pop %v1332
    %v1335 = vrsqrt.pop %v1333
    %v1336 = vmul.f32 %v1320, %v1334
    %v1337 = vmul.f32 %v1321, %v1335
    %v1338 = vlaneseq
    %v1339 = vshrl.u32 %v1338, 7
    %v1340 = vsub.s32 0, %v1339
    %v1341 = vrot.slane %v120, %v1340
    %v1342 = vmul.f32 %v1336, %v1341
    %v1343 = vmul.f32 %v1337, %v1341
    %v1344 = vlaneseq
    %v1345 = vshrl.u32 %v1344, 7
    %v1346 = vsub.s32 0, %v1345
    %v1347 = vrot.slane %v121, %v1346
    %v1348 = vadd.f32 %v1342, %v1347
    %v1349 = vadd.f32 %v1343, %v1347
    %v1350 = vld [vmem:[%s3] sm:$0xf]
    %v1351 = vld [vmem:[%s3 + $0x4] sm:$0xf]
    %v1352 = vld [vmem:[%s3 + $0x8] sm:$0xf]
    %v1353 = vld [vmem:[%s3 + $0xc] sm:$0xf]
    %v1354 = vld [vmem:[%s3 + $0x10] sm:$0xf]
    %v1355 = vld [vmem:[%s3 + $0x14] sm:$0xf]
    %v1356 = vld [vmem:[%s3 + $0x18] sm:$0xf]
    %v1357 = vld [vmem:[%s3 + $0x1c] sm:$0xf]
    %v1358 = vld [vmem:[%s5] sm:$0x1]
    %v1359 = vld [vmem:[%s4 + $0x6] sm:$0x1]
    %v1360 = vld [vmem:[%s4 + $0x7] sm:$0x1]
    %v1361 = vld [vmem:[%s4 + $0x8] sm:$0x1]
    %v1362 = vpack.c.bf16 %v1349, %v1348
    %v1364 = vlaneseq
    %v1365 = vshrl.u32 %v1364, 7
    %v1366 = vsub.s32 0, %v1365
    %v1367 = vrot.slane %v1358, %v1366
    %v1373 = vunpack.c.l.b16 %v1350
    %v1374 = vunpack.c.l.b16 %v1351
    %v1375 = vunpack.c.l.b16 %v1352
    %v1376 = vunpack.c.l.b16 %v1353
    %v1377 = vpack.c.b16 %v1374, %v1373
    %v1378 = vpack.c.b16 %v1376, %v1375
    %v1382 = vsel %vm139, %v1362, 0
    %1384 = vmatprep.subr.bf16.mxu0 0
    %1385 = vmatpush1.bf16.msra.mxu0 %v1377
    %1386 = vmatprep.subr.bf16.mxu0 0
    %1387 = vmatpush1.bf16.msra.mxu0 %v1378
    %1388 = vmatprep.subr.bf16.mxu0 0
    %1389 = vmatpush1.bf16.msra.mxu0 0
    %1390 = vmatprep.subr.bf16.mxu0 0
    %1391 = vmatpush1.bf16.msra.mxu0 0
    %1392 = vmatprep.subr.bf16.mxu0 0
    %1393 = vmatpush1.bf16.msra.mxu0 0
    %1394 = vmatprep.subr.bf16.mxu0 0
    %1395 = vmatpush1.bf16.msra.mxu0 0
    %1396 = vmatprep.subr.bf16.mxu0 0
    %1397 = vmatpush1.bf16.msra.mxu0 0
    %1398 = vmatprep.subr.bf16.mxu0 0
    %1399 = vmatpush1.bf16.msra.mxu0 0
    %1400 = vmatprep.subr.bf16.mxu0 0
    %1401 = vmatpush1.bf16.msra.mxu0 0
    %1402 = vmatprep.subr.bf16.mxu0 0
    %1403 = vmatpush1.bf16.msra.mxu0 0
    %1404 = vmatprep.subr.bf16.mxu0 0
    %1405 = vmatpush1.bf16.msra.mxu0 0
    %1406 = vmatprep.subr.bf16.mxu0 0
    %1407 = vmatpush1.bf16.msra.mxu0 0
    %1408 = vmatprep.subr.bf16.mxu0 0
    %1409 = vmatpush1.bf16.msra.mxu0 0
    %1410 = vmatprep.subr.bf16.mxu0 0
    %1411 = vmatpush1.bf16.msra.mxu0 0
    %1412 = vmatprep.subr.bf16.mxu0 0
    %1413 = vmatpush1.bf16.msra.mxu0 0
    %1414 = vmatprep.subr.bf16.mxu0 0
    %1415 = vmatpush1.bf16.msra.mxu0 0
    %1416 = vmatprep.mubr.bf16.mxu0 0
    %1417 = vmatmul.mubr.bf16.gmra.mrb[0].mxu0 %v1382
    %v1418 = vpop.f32.mrb[0].mxu0
    %v1419 = vadd.f32 %v1367, %v1418
    %v1420 = vpop.f32.mrb[0].mxu0
    %v1421 = vpop.f32.mrb[0].mxu0
    %v1422 = vadd.f32 %v1367, %v1421
    %v1423 = vpop.f32.mrb[0].mxu0
    %1424 = vdwg.mxu0
    %v1425 = vmax.f32 %v1419, 0.0
    %v1426 = vmax.f32 %v1422, 0.0
    %v1427 = vpack.c.bf16 %v1426, %v1425
    %v1428 = vlaneseq
    %v1429 = vshrl.u32 %v1428, 7
    %v1430 = vsub.s32 0, %v1429
    %v1431 = vrot.slane %v1359, %v1430
    %v1436 = vunpack.c.l.b16 %v1354
    %v1437 = vunpack.c.l.b16 %v1355
    %v1438 = vunpack.c.l.b16 %v1356
    %v1439 = vunpack.c.l.b16 %v1357
    %v1440 = vpack.c.b16 %v1437, %v1436
    %v1441 = vpack.c.b16 %v1439, %v1438
    %vm1442 = vcmask 523264
    %v1444 = vsel %vm1442, %v1427, 0
    %v1447 = vsel %vm1442, %v1440, 0
    %v1450 = vsel %vm1442, %v1441, 0
    %1452 = vmatprep.subr.bf16.mxu0 0
    %1453 = vmatpush1.bf16.xpose.msra.mxu0 %v1447
    %1454 = vmatprep.subr.bf16.mxu0 0
    %1455 = vmatpush1.bf16.xpose.msra.mxu0 %v1450
    %1456 = vmatprep.subr.bf16.mxu0 0
    %1457 = vmatpush1.bf16.xpose.msra.mxu0 0
    %1458 = vmatprep.subr.bf16.mxu0 0
    %1459 = vmatpush1.bf16.xpose.msra.mxu0 0
    %1460 = vmatprep.subr.bf16.mxu0 0
    %1461 = vmatpush1.bf16.xpose.msra.mxu0 0
    %1462 = vmatprep.subr.bf16.mxu0 0
    %1463 = vmatpush1.bf16.xpose.msra.mxu0 0
    %1464 = vmatprep.subr.bf16.mxu0 0
    %1465 = vmatpush1.bf16.xpose.msra.mxu0 0
    %1466 = vmatprep.subr.bf16.mxu0 0
    %1467 = vmatpush1.bf16.xpose.msra.mxu0 0
    %1468 = vmatprep.subr.bf16.mxu0 0
    %1469 = vmatpush1.bf16.xpose.msra.mxu0 0
    %1470 = vmatprep.subr.bf16.mxu0 0
    %1471 = vmatpush1.bf16.xpose.msra.mxu0 0
    %1472 = vmatprep.subr.bf16.mxu0 0
    %1473 = vmatpush1.bf16.xpose.msra.mxu0 0
    %1474 = vmatprep.subr.bf16.mxu0 0
    %1475 = vmatpush1.bf16.xpose.msra.mxu0 0
    %1476 = vmatprep.subr.bf16.mxu0 0
    %1477 = vmatpush1.bf16.xpose.msra.mxu0 0
    %1478 = vmatprep.subr.bf16.mxu0 0
    %1479 = vmatpush1.bf16.xpose.msra.mxu0 0
    %1480 = vmatprep.subr.bf16.mxu0 0
    %1481 = vmatpush1.bf16.xpose.msra.mxu0 0
    %1482 = vmatprep.subr.bf16.mxu0 0
    %1483 = vmatpush1.bf16.xpose.msra.mxu0 0
    %1484 = vmatprep.mubr.bf16.mxu0 0
    %1485 = vmatmul.mubr.bf16.gmra.mrb[0].mxu0 %v1444
    %v1486 = vpop.f32.mrb[0].mxu0
    %v1487 = vadd.f32 %v1431, %v1486
    %v1488 = vpop.f32.mrb[0].mxu0
    %v1489 = vpop.f32.mrb[0].mxu0
    %v1490 = vadd.f32 %v1431, %v1489
    %v1491 = vpop.f32.mrb[0].mxu0
    %1492 = vdwg.mxu0
    %v1493 = vadd.f32 %v1348, %v1487
    %v1494 = vadd.f32 %v1349, %v1490
    %v1495 = vsel %vm139, %v1493, 0.0
    %1496 = vadd.xlane.f32.xlu0 %v1495
    %v1497 = vpop.xlane.xlu0 %1496
    %v1498 = vsel %vm139, %v1494, 0.0
    %1499 = vadd.xlane.f32.xlu0 %v1498
    %v1500 = vpop.xlane.xlu0 %1499
    %v1501 = vmul.f32 %v1497, %v1317
    %v1502 = vmul.f32 %v1500, %v1317
    %v1503 = vsub.f32 %v1493, %v1501
    %v1504 = vsub.f32 %v1494, %v1502
    %v1505 = vmul.f32 %v1503, %v1503
    %v1506 = vmul.f32 %v1504, %v1504
    %v1507 = vsel %vm139, %v1505, 0.0
    %1508 = vadd.xlane.f32.xlu0 %v1507
    %v1509 = vpop.xlane.xlu0 %1508
    %v1510 = vsel %vm139, %v1506, 0.0
    %1511 = vadd.xlane.f32.xlu0 %v1510
    %v1512 = vpop.xlane.xlu0 %1511
    %v1513 = vmul.f32 %v1509, %v1317
    %v1514 = vmul.f32 %v1512, %v1317
    %v1515 = vadd.f32 %v1513, 1e-05
    %v1516 = vadd.f32 %v1514, 1e-05
    %v1517 = vrsqrt.pop %v1515
    %v1518 = vrsqrt.pop %v1516
    %v1519 = vmul.f32 %v1503, %v1517
    %v1520 = vmul.f32 %v1504, %v1518
    %v1521 = vlaneseq
    %v1522 = vshrl.u32 %v1521, 7
    %v1523 = vsub.s32 0, %v1522
    %v1524 = vrot.slane %v1360, %v1523
    %v1525 = vmul.f32 %v1519, %v1524
    %v1526 = vmul.f32 %v1520, %v1524
    %v1527 = vlaneseq
    %v1528 = vshrl.u32 %v1527, 7
    %v1529 = vsub.s32 0, %v1528
    %v1530 = vrot.slane %v1361, %v1529
    %v1531 = vadd.f32 %v1525, %v1530
    %v1532 = vadd.f32 %v1526, %v1530
    %s1533 = scalar_lea.vmem [#allocation7], 64
    %v1534 = vld [vmem:[%s1533] sm:$0xf]
    %v1535 = vld [vmem:[%s1533 + $0x4] sm:$0xf]
    %v1536 = vld [vmem:[%s1533 + $0x8] sm:$0xf]
    %v1537 = vld [vmem:[%s1533 + $0xc] sm:$0xf]
    %v1538 = vld [vmem:[%s1533 + $0x10] sm:$0xf]
    %v1539 = vld [vmem:[%s1533 + $0x14] sm:$0xf]
    %v1540 = vld [vmem:[%s1533 + $0x18] sm:$0xf]
    %v1541 = vld [vmem:[%s1533 + $0x1c] sm:$0xf]
    %v1542 = vld [vmem:[%s1533 + $0x20] sm:$0xf]
    %v1543 = vld [vmem:[%s1533 + $0x24] sm:$0xf]
    %v1544 = vld [vmem:[%s1533 + $0x28] sm:$0xf]
    %v1545 = vld [vmem:[%s1533 + $0x2c] sm:$0xf]
    %v1546 = vld [vmem:[%s1533 + $0x30] sm:$0xf]
    %v1547 = vld [vmem:[%s1533 + $0x34] sm:$0xf]
    %v1548 = vld [vmem:[%s1533 + $0x38] sm:$0xf]
    %v1549 = vld [vmem:[%s1533 + $0x3c] sm:$0xf]
    %s1550 = scalar_lea.vmem %s4, 16
    %v1551 = vld [vmem:[%s1550] sm:$0x1]
    %v1552 = vld [vmem:[%s1550 + $0x1] sm:$0x1]
    %v1553 = vld [vmem:[%s1550 + $0x2] sm:$0x1]
    %v1554 = vld [vmem:[%s1550 + $0x3] sm:$0x1]
    %v1555 = vld [vmem:[%s1550 + $0x4] sm:$0x1]
    %v1556 = vld [vmem:[%s1550 + $0x5] sm:$0x1]
    %v1557 = vpack.c.bf16 %v1532, %v1531
    %v1558 = vlaneseq
    %v1559 = vshrl.u32 %v1558, 7
    %v1560 = vsub.s32 0, %v1559
    %v1561 = vrot.slane %v1551, %v1560
    %v1566 = vunpack.c.l.b16 %v1534
    %v1567 = vunpack.c.l.b16 %v1535
    %v1568 = vunpack.c.l.b16 %v1536
    %v1569 = vunpack.c.l.b16 %v1537
    %v1570 = vpack.c.b16 %v1567, %v1566
    %v1571 = vpack.c.b16 %v1569, %v1568
    %v1575 = vsel %vm139, %v1557, 0
    %1577 = vmatprep.subr.bf16.mxu0 0
    %1578 = vmatpush1.bf16.msra.mxu0 %v1570
    %1579 = vmatprep.subr.bf16.mxu0 0
    %1580 = vmatpush1.bf16.msra.mxu0 %v1571
    %1581 = vmatprep.subr.bf16.mxu0 0
    %1582 = vmatpush1.bf16.msra.mxu0 0
    %1583 = vmatprep.subr.bf16.mxu0 0
    %1584 = vmatpush1.bf16.msra.mxu0 0
    %1585 = vmatprep.subr.bf16.mxu0 0
    %1586 = vmatpush1.bf16.msra.mxu0 0
    %1587 = vmatprep.subr.bf16.mxu0 0
    %1588 = vmatpush1.bf16.msra.mxu0 0
    %1589 = vmatprep.subr.bf16.mxu0 0
    %1590 = vmatpush1.bf16.msra.mxu0 0
    %1591 = vmatprep.subr.bf16.mxu0 0
    %1592 = vmatpush1.bf16.msra.mxu0 0
    %1593 = vmatprep.subr.bf16.mxu0 0
    %1594 = vmatpush1.bf16.msra.mxu0 0
    %1595 = vmatprep.subr.bf16.mxu0 0
    %1596 = vmatpush1.bf16.msra.mxu0 0
    %1597 = vmatprep.subr.bf16.mxu0 0
    %1598 = vmatpush1.bf16.msra.mxu0 0
    %1599 = vmatprep.subr.bf16.mxu0 0
    %1600 = vmatpush1.bf16.msra.mxu0 0
    %1601 = vmatprep.subr.bf16.mxu0 0
    %1602 = vmatpush1.bf16.msra.mxu0 0
    %1603 = vmatprep.subr.bf16.mxu0 0
    %1604 = vmatpush1.bf16.msra.mxu0 0
    %1605 = vmatprep.subr.bf16.mxu0 0
    %1606 = vmatpush1.bf16.msra.mxu0 0
    %1607 = vmatprep.subr.bf16.mxu0 0
    %1608 = vmatpush1.bf16.msra.mxu0 0
    %1609 = vmatprep.mubr.bf16.mxu0 0
    %1610 = vmatmul.mubr.bf16.gmra.mrb[0].mxu0 %v1575
    %v1611 = vpop.f32.mrb[0].mxu0
    %v1612 = vadd.f32 %v1561, %v1611
    %v1613 = vpop.f32.mrb[0].mxu0
    %v1614 = vpop.f32.mrb[0].mxu0
    %v1615 = vadd.f32 %v1561, %v1614
    %v1616 = vpop.f32.mrb[0].mxu0
    %1617 = vdwg.mxu0
    %v1618 = vlaneseq
    %v1619 = vshrl.u32 %v1618, 7
    %v1620 = vsub.s32 0, %v1619
    %v1621 = vrot.slane %v1552, %v1620
    %v1626 = vunpack.c.l.b16 %v1538
    %v1627 = vunpack.c.l.b16 %v1539
    %v1628 = vunpack.c.l.b16 %v1540
    %v1629 = vunpack.c.l.b16 %v1541
    %v1630 = vpack.c.b16 %v1627, %v1626
    %v1631 = vpack.c.b16 %v1629, %v1628
    %1634 = vmatprep.subr.bf16.mxu0 0
    %1635 = vmatpush1.bf16.msra.mxu0 %v1630
    %1636 = vmatprep.subr.bf16.mxu0 0
    %1637 = vmatpush1.bf16.msra.mxu0 %v1631
    %1638 = vmatprep.subr.bf16.mxu0 0
    %1639 = vmatpush1.bf16.msra.mxu0 0
    %1640 = vmatprep.subr.bf16.mxu0 0
    %1641 = vmatpush1.bf16.msra.mxu0 0
    %1642 = vmatprep.subr.bf16.mxu0 0
    %1643 = vmatpush1.bf16.msra.mxu0 0
    %1644 = vmatprep.subr.bf16.mxu0 0
    %1645 = vmatpush1.bf16.msra.mxu0 0
    %1646 = vmatprep.subr.bf16.mxu0 0
    %1647 = vmatpush1.bf16.msra.mxu0 0
    %1648 = vmatprep.subr.bf16.mxu0 0
    %1649 = vmatpush1.bf16.msra.mxu0 0
    %1650 = vmatprep.subr.bf16.mxu0 0
    %1651 = vmatpush1.bf16.msra.mxu0 0
    %1652 = vmatprep.subr.bf16.mxu0 0
    %1653 = vmatpush1.bf16.msra.mxu0 0
    %1654 = vmatprep.subr.bf16.mxu0 0
    %1655 = vmatpush1.bf16.msra.mxu0 0
    %1656 = vmatprep.subr.bf16.mxu0 0
    %1657 = vmatpush1.bf16.msra.mxu0 0
    %1658 = vmatprep.subr.bf16.mxu0 0
    %1659 = vmatpush1.bf16.msra.mxu0 0
    %1660 = vmatprep.subr.bf16.mxu0 0
    %1661 = vmatpush1.bf16.msra.mxu0 0
    %1662 = vmatprep.subr.bf16.mxu0 0
    %1663 = vmatpush1.bf16.msra.mxu0 0
    %1664 = vmatprep.subr.bf16.mxu0 0
    %1665 = vmatpush1.bf16.msra.mxu0 0
    %1666 = vmatprep.mubr.bf16.mxu0 0
    %1667 = vmatmul.mubr.bf16.gmra.mrb[0].mxu0 %v1575
    %v1668 = vpop.f32.mrb[0].mxu0
    %v1669 = vadd.f32 %v1621, %v1668
    %v1670 = vpop.f32.mrb[0].mxu0
    %v1671 = vpop.f32.mrb[0].mxu0
    %v1672 = vadd.f32 %v1621, %v1671
    %v1673 = vpop.f32.mrb[0].mxu0
    %1674 = vdwg.mxu0
    %v1675 = vlaneseq
    %v1676 = vshrl.u32 %v1675, 7
    %v1677 = vsub.s32 0, %v1676
    %v1678 = vrot.slane %v1553, %v1677
    %v1683 = vunpack.c.l.b16 %v1542
    %v1684 = vunpack.c.l.b16 %v1543
    %v1685 = vunpack.c.l.b16 %v1544
    %v1686 = vunpack.c.l.b16 %v1545
    %v1687 = vpack.c.b16 %v1684, %v1683
    %v1688 = vpack.c.b16 %v1686, %v1685
    %1691 = vmatprep.subr.bf16.mxu0 0
    %1692 = vmatpush1.bf16.msra.mxu0 %v1687
    %1693 = vmatprep.subr.bf16.mxu0 0
    %1694 = vmatpush1.bf16.msra.mxu0 %v1688
    %1695 = vmatprep.subr.bf16.mxu0 0
    %1696 = vmatpush1.bf16.msra.mxu0 0
    %1697 = vmatprep.subr.bf16.mxu0 0
    %1698 = vmatpush1.bf16.msra.mxu0 0
    %1699 = vmatprep.subr.bf16.mxu0 0
    %1700 = vmatpush1.bf16.msra.mxu0 0
    %1701 = vmatprep.subr.bf16.mxu0 0
    %1702 = vmatpush1.bf16.msra.mxu0 0
    %1703 = vmatprep.subr.bf16.mxu0 0
    %1704 = vmatpush1.bf16.msra.mxu0 0
    %1705 = vmatprep.subr.bf16.mxu0 0
    %1706 = vmatpush1.bf16.msra.mxu0 0
    %1707 = vmatprep.subr.bf16.mxu0 0
    %1708 = vmatpush1.bf16.msra.mxu0 0
    %1709 = vmatprep.subr.bf16.mxu0 0
    %1710 = vmatpush1.bf16.msra.mxu0 0
    %1711 = vmatprep.subr.bf16.mxu0 0
    %1712 = vmatpush1.bf16.msra.mxu0 0
    %1713 = vmatprep.subr.bf16.mxu0 0
    %1714 = vmatpush1.bf16.msra.mxu0 0
    %1715 = vmatprep.subr.bf16.mxu0 0
    %1716 = vmatpush1.bf16.msra.mxu0 0
    %1717 = vmatprep.subr.bf16.mxu0 0
    %1718 = vmatpush1.bf16.msra.mxu0 0
    %1719 = vmatprep.subr.bf16.mxu0 0
    %1720 = vmatpush1.bf16.msra.mxu0 0
    %1721 = vmatprep.subr.bf16.mxu0 0
    %1722 = vmatpush1.bf16.msra.mxu0 0
    %1723 = vmatprep.mubr.bf16.mxu0 0
    %1724 = vmatmul.mubr.bf16.gmra.mrb[0].mxu0 %v1575
    %v1725 = vpop.f32.mrb[0].mxu0
    %v1726 = vadd.f32 %v1678, %v1725
    %v1727 = vpop.f32.mrb[0].mxu0
    %v1728 = vpop.f32.mrb[0].mxu0
    %v1729 = vadd.f32 %v1678, %v1728
    %v1730 = vpop.f32.mrb[0].mxu0
    %1731 = vdwg.mxu0
    %1733 = vrot.lane.b32.xlu0 %v1612, 120
    %v1734 = vpop.permute.xlu0 %1733
    %1736 = vrot.lane.b32.xlu0 %v1612, 112
    %v1737 = vpop.permute.xlu0 %1736
    %1739 = vrot.lane.b32.xlu0 %v1612, 104
    %v1740 = vpop.permute.xlu0 %1739
    %1743 = vrot.lane.b32.xlu0 %v1615, 120
    %v1744 = vpop.permute.xlu0 %1743
    %1746 = vrot.lane.b32.xlu0 %v1615, 112
    %v1747 = vpop.permute.xlu0 %1746
    %1749 = vrot.lane.b32.xlu0 %v1615, 104
    %v1750 = vpop.permute.xlu0 %1749
    %1753 = vrot.lane.b32.xlu0 %v1669, 120
    %v1754 = vpop.permute.xlu0 %1753
    %1756 = vrot.lane.b32.xlu0 %v1669, 112
    %v1757 = vpop.permute.xlu0 %1756
    %1759 = vrot.lane.b32.xlu0 %v1669, 104
    %v1760 = vpop.permute.xlu0 %1759
    %1763 = vrot.lane.b32.xlu0 %v1672, 120
    %v1764 = vpop.permute.xlu0 %1763
    %1766 = vrot.lane.b32.xlu0 %v1672, 112
    %v1767 = vpop.permute.xlu0 %1766
    %1769 = vrot.lane.b32.xlu0 %v1672, 104
    %v1770 = vpop.permute.xlu0 %1769
    %1773 = vrot.lane.b32.xlu0 %v1726, 120
    %v1774 = vpop.permute.xlu0 %1773
    %1776 = vrot.lane.b32.xlu0 %v1726, 112
    %v1777 = vpop.permute.xlu0 %1776
    %1779 = vrot.lane.b32.xlu0 %v1726, 104
    %v1780 = vpop.permute.xlu0 %1779
    %1783 = vrot.lane.b32.xlu0 %v1729, 120
    %v1784 = vpop.permute.xlu0 %1783
    %1786 = vrot.lane.b32.xlu0 %v1729, 112
    %v1787 = vpop.permute.xlu0 %1786
    %1789 = vrot.lane.b32.xlu0 %v1729, 104
    %v1790 = vpop.permute.xlu0 %1789
    %v1792 = vpack.c.bf16 %v1612, %v1612
    %v1793 = vpack.c.bf16 %v1734, %v1734
    %v1794 = vpack.c.bf16 %v1737, %v1737
    %v1795 = vpack.c.bf16 %v1740, %v1740
    %v1796 = vpack.c.bf16 %v1615, %v1615
    %v1797 = vpack.c.bf16 %v1744, %v1744
    %v1798 = vpack.c.bf16 %v1747, %v1747
    %v1799 = vpack.c.bf16 %v1750, %v1750
    %v1800 = vpack.c.bf16 %v1669, %v1669
    %v1801 = vpack.c.bf16 %v1754, %v1754
    %v1802 = vpack.c.bf16 %v1757, %v1757
    %v1803 = vpack.c.bf16 %v1760, %v1760
    %v1804 = vpack.c.bf16 %v1672, %v1672
    %v1805 = vpack.c.bf16 %v1764, %v1764
    %v1806 = vpack.c.bf16 %v1767, %v1767
    %v1807 = vpack.c.bf16 %v1770, %v1770
    %v1809 = vsel %vm374, %v1792, 0
    %v1812 = vsel %vm374, %v1800, 0
    %1814 = vmatprep.subr.bf16.mxu0 0
    %1815 = vmatpush1.bf16.xpose.msra.mxu0 %v1812
    %1816 = vmatprep.subr.bf16.mxu0 0
    %1817 = vmatpush1.bf16.xpose.msra.mxu0 0
    %1818 = vmatprep.subr.bf16.mxu0 0
    %1819 = vmatpush1.bf16.xpose.msra.mxu0 0
    %1820 = vmatprep.subr.bf16.mxu0 0
    %1821 = vmatpush1.bf16.xpose.msra.mxu0 0
    %1822 = vmatprep.subr.bf16.mxu0 0
    %1823 = vmatpush1.bf16.xpose.msra.mxu0 0
    %1824 = vmatprep.subr.bf16.mxu0 0
    %1825 = vmatpush1.bf16.xpose.msra.mxu0 0
    %1826 = vmatprep.subr.bf16.mxu0 0
    %1827 = vmatpush1.bf16.xpose.msra.mxu0 0
    %1828 = vmatprep.subr.bf16.mxu0 0
    %1829 = vmatpush1.bf16.xpose.msra.mxu0 0
    %1830 = vmatprep.subr.bf16.mxu0 0
    %1831 = vmatpush1.bf16.xpose.msra.mxu0 0
    %1832 = vmatprep.subr.bf16.mxu0 0
    %1833 = vmatpush1.bf16.xpose.msra.mxu0 0
    %1834 = vmatprep.subr.bf16.mxu0 0
    %1835 = vmatpush1.bf16.xpose.msra.mxu0 0
    %1836 = vmatprep.subr.bf16.mxu0 0
    %1837 = vmatpush1.bf16.xpose.msra.mxu0 0
    %1838 = vmatprep.subr.bf16.mxu0 0
    %1839 = vmatpush1.bf16.xpose.msra.mxu0 0
    %1840 = vmatprep.subr.bf16.mxu0 0
    %1841 = vmatpush1.bf16.xpose.msra.mxu0 0
    %1842 = vmatprep.subr.bf16.mxu0 0
    %1843 = vmatpush1.bf16.xpose.msra.mxu0 0
    %1844 = vmatprep.subr.bf16.mxu0 0
    %1845 = vmatpush1.bf16.xpose.msra.mxu0 0
    %1846 = vmatprep.mubr.bf16.mxu0 0
    %1847 = vmatmul.mubr.bf16.gmra.mrb[0].mxu0 %v1809
    %v1848 = vpop.f32.mrb[0].mxu0
    %v1849 = vadd.f32 0.0, %v1848
    %v1850 = vpop.f32.mrb[0].mxu0
    %v1851 = vpop.f32.mrb[0].mxu0
    %v1852 = vpop.f32.mrb[0].mxu0
    %1853 = vdwg.mxu0
    %v1855 = vsel %vm374, %v1793, 0
    %v1858 = vsel %vm374, %v1801, 0
    %1860 = vmatprep.subr.bf16.mxu0 0
    %1861 = vmatpush1.bf16.xpose.msra.mxu0 %v1858
    %1862 = vmatprep.subr.bf16.mxu0 0
    %1863 = vmatpush1.bf16.xpose.msra.mxu0 0
    %1864 = vmatprep.subr.bf16.mxu0 0
    %1865 = vmatpush1.bf16.xpose.msra.mxu0 0
    %1866 = vmatprep.subr.bf16.mxu0 0
    %1867 = vmatpush1.bf16.xpose.msra.mxu0 0
    %1868 = vmatprep.subr.bf16.mxu0 0
    %1869 = vmatpush1.bf16.xpose.msra.mxu0 0
    %1870 = vmatprep.subr.bf16.mxu0 0
    %1871 = vmatpush1.bf16.xpose.msra.mxu0 0
    %1872 = vmatprep.subr.bf16.mxu0 0
    %1873 = vmatpush1.bf16.xpose.msra.mxu0 0
    %1874 = vmatprep.subr.bf16.mxu0 0
    %1875 = vmatpush1.bf16.xpose.msra.mxu0 0
    %1876 = vmatprep.subr.bf16.mxu0 0
    %1877 = vmatpush1.bf16.xpose.msra.mxu0 0
    %1878 = vmatprep.subr.bf16.mxu0 0
    %1879 = vmatpush1.bf16.xpose.msra.mxu0 0
    %1880 = vmatprep.subr.bf16.mxu0 0
    %1881 = vmatpush1.bf16.xpose.msra.mxu0 0
    %1882 = vmatprep.subr.bf16.mxu0 0
    %1883 = vmatpush1.bf16.xpose.msra.mxu0 0
    %1884 = vmatprep.subr.bf16.mxu0 0
    %1885 = vmatpush1.bf16.xpose.msra.mxu0 0
    %1886 = vmatprep.subr.bf16.mxu0 0
    %1887 = vmatpush1.bf16.xpose.msra.mxu0 0
    %1888 = vmatprep.subr.bf16.mxu0 0
    %1889 = vmatpush1.bf16.xpose.msra.mxu0 0
    %1890 = vmatprep.subr.bf16.mxu0 0
    %1891 = vmatpush1.bf16.xpose.msra.mxu0 0
    %1892 = vmatprep.mubr.bf16.mxu0 0
    %1893 = vmatmul.mubr.bf16.gmra.mrb[0].mxu0 %v1855
    %v1894 = vpop.f32.mrb[0].mxu0
    %v1895 = vadd.f32 0.0, %v1894
    %v1896 = vpop.f32.mrb[0].mxu0
    %v1897 = vpop.f32.mrb[0].mxu0
    %v1898 = vpop.f32.mrb[0].mxu0
    %1899 = vdwg.mxu0
    %v1901 = vsel %vm374, %v1794, 0
    %v1904 = vsel %vm374, %v1802, 0
    %1906 = vmatprep.subr.bf16.mxu0 0
    %1907 = vmatpush1.bf16.xpose.msra.mxu0 %v1904
    %1908 = vmatprep.subr.bf16.mxu0 0
    %1909 = vmatpush1.bf16.xpose.msra.mxu0 0
    %1910 = vmatprep.subr.bf16.mxu0 0
    %1911 = vmatpush1.bf16.xpose.msra.mxu0 0
    %1912 = vmatprep.subr.bf16.mxu0 0
    %1913 = vmatpush1.bf16.xpose.msra.mxu0 0
    %1914 = vmatprep.subr.bf16.mxu0 0
    %1915 = vmatpush1.bf16.xpose.msra.mxu0 0
    %1916 = vmatprep.subr.bf16.mxu0 0
    %1917 = vmatpush1.bf16.xpose.msra.mxu0 0
    %1918 = vmatprep.subr.bf16.mxu0 0
    %1919 = vmatpush1.bf16.xpose.msra.mxu0 0
    %1920 = vmatprep.subr.bf16.mxu0 0
    %1921 = vmatpush1.bf16.xpose.msra.mxu0 0
    %1922 = vmatprep.subr.bf16.mxu0 0
    %1923 = vmatpush1.bf16.xpose.msra.mxu0 0
    %1924 = vmatprep.subr.bf16.mxu0 0
    %1925 = vmatpush1.bf16.xpose.msra.mxu0 0
    %1926 = vmatprep.subr.bf16.mxu0 0
    %1927 = vmatpush1.bf16.xpose.msra.mxu0 0
    %1928 = vmatprep.subr.bf16.mxu0 0
    %1929 = vmatpush1.bf16.xpose.msra.mxu0 0
    %1930 = vmatprep.subr.bf16.mxu0 0
    %1931 = vmatpush1.bf16.xpose.msra.mxu0 0
    %1932 = vmatprep.subr.bf16.mxu0 0
    %1933 = vmatpush1.bf16.xpose.msra.mxu0 0
    %1934 = vmatprep.subr.bf16.mxu0 0
    %1935 = vmatpush1.bf16.xpose.msra.mxu0 0
    %1936 = vmatprep.subr.bf16.mxu0 0
    %1937 = vmatpush1.bf16.xpose.msra.mxu0 0
    %1938 = vmatprep.mubr.bf16.mxu0 0
    %1939 = vmatmul.mubr.bf16.gmra.mrb[0].mxu0 %v1901
    %v1940 = vpop.f32.mrb[0].mxu0
    %v1941 = vadd.f32 0.0, %v1940
    %v1942 = vpop.f32.mrb[0].mxu0
    %v1943 = vpop.f32.mrb[0].mxu0
    %v1944 = vpop.f32.mrb[0].mxu0
    %1945 = vdwg.mxu0
    %v1947 = vsel %vm374, %v1795, 0
    %v1950 = vsel %vm374, %v1803, 0
    %1952 = vmatprep.subr.bf16.mxu0 0
    %1953 = vmatpush1.bf16.xpose.msra.mxu0 %v1950
    %1954 = vmatprep.subr.bf16.mxu0 0
    %1955 = vmatpush1.bf16.xpose.msra.mxu0 0
    %1956 = vmatprep.subr.bf16.mxu0 0
    %1957 = vmatpush1.bf16.xpose.msra.mxu0 0
    %1958 = vmatprep.subr.bf16.mxu0 0
    %1959 = vmatpush1.bf16.xpose.msra.mxu0 0
    %1960 = vmatprep.subr.bf16.mxu0 0
    %1961 = vmatpush1.bf16.xpose.msra.mxu0 0
    %1962 = vmatprep.subr.bf16.mxu0 0
    %1963 = vmatpush1.bf16.xpose.msra.mxu0 0
    %1964 = vmatprep.subr.bf16.mxu0 0
    %1965 = vmatpush1.bf16.xpose.msra.mxu0 0
    %1966 = vmatprep.subr.bf16.mxu0 0
    %1967 = vmatpush1.bf16.xpose.msra.mxu0 0
    %1968 = vmatprep.subr.bf16.mxu0 0
    %1969 = vmatpush1.bf16.xpose.msra.mxu0 0
    %1970 = vmatprep.subr.bf16.mxu0 0
    %1971 = vmatpush1.bf16.xpose.msra.mxu0 0
    %1972 = vmatprep.subr.bf16.mxu0 0
    %1973 = vmatpush1.bf16.xpose.msra.mxu0 0
    %1974 = vmatprep.subr.bf16.mxu0 0
    %1975 = vmatpush1.bf16.xpose.msra.mxu0 0
    %1976 = vmatprep.subr.bf16.mxu0 0
    %1977 = vmatpush1.bf16.xpose.msra.mxu0 0
    %1978 = vmatprep.subr.bf16.mxu0 0
    %1979 = vmatpush1.bf16.xpose.msra.mxu0 0
    %1980 = vmatprep.subr.bf16.mxu0 0
    %1981 = vmatpush1.bf16.xpose.msra.mxu0 0
    %1982 = vmatprep.subr.bf16.mxu0 0
    %1983 = vmatpush1.bf16.xpose.msra.mxu0 0
    %1984 = vmatprep.mubr.bf16.mxu0 0
    %1985 = vmatmul.mubr.bf16.gmra.mrb[0].mxu0 %v1947
    %v1986 = vpop.f32.mrb[0].mxu0
    %v1987 = vadd.f32 0.0, %v1986
    %v1988 = vpop.f32.mrb[0].mxu0
    %v1989 = vpop.f32.mrb[0].mxu0
    %v1990 = vpop.f32.mrb[0].mxu0
    %1991 = vdwg.mxu0
    %v1993 = vsel %vm374, %v1796, 0
    %v1996 = vsel %vm374, %v1804, 0
    %1998 = vmatprep.subr.bf16.mxu0 0
    %1999 = vmatpush1.bf16.xpose.msra.mxu0 %v1996
    %2000 = vmatprep.subr.bf16.mxu0 0
    %2001 = vmatpush1.bf16.xpose.msra.mxu0 0
    %2002 = vmatprep.subr.bf16.mxu0 0
    %2003 = vmatpush1.bf16.xpose.msra.mxu0 0
    %2004 = vmatprep.subr.bf16.mxu0 0
    %2005 = vmatpush1.bf16.xpose.msra.mxu0 0
    %2006 = vmatprep.subr.bf16.mxu0 0
    %2007 = vmatpush1.bf16.xpose.msra.mxu0 0
    %2008 = vmatprep.subr.bf16.mxu0 0
    %2009 = vmatpush1.bf16.xpose.msra.mxu0 0
    %2010 = vmatprep.subr.bf16.mxu0 0
    %2011 = vmatpush1.bf16.xpose.msra.mxu0 0
    %2012 = vmatprep.subr.bf16.mxu0 0
    %2013 = vmatpush1.bf16.xpose.msra.mxu0 0
    %2014 = vmatprep.subr.bf16.mxu0 0
    %2015 = vmatpush1.bf16.xpose.msra.mxu0 0
    %2016 = vmatprep.subr.bf16.mxu0 0
    %2017 = vmatpush1.bf16.xpose.msra.mxu0 0
    %2018 = vmatprep.subr.bf16.mxu0 0
    %2019 = vmatpush1.bf16.xpose.msra.mxu0 0
    %2020 = vmatprep.subr.bf16.mxu0 0
    %2021 = vmatpush1.bf16.xpose.msra.mxu0 0
    %2022 = vmatprep.subr.bf16.mxu0 0
    %2023 = vmatpush1.bf16.xpose.msra.mxu0 0
    %2024 = vmatprep.subr.bf16.mxu0 0
    %2025 = vmatpush1.bf16.xpose.msra.mxu0 0
    %2026 = vmatprep.subr.bf16.mxu0 0
    %2027 = vmatpush1.bf16.xpose.msra.mxu0 0
    %2028 = vmatprep.subr.bf16.mxu0 0
    %2029 = vmatpush1.bf16.xpose.msra.mxu0 0
    %2030 = vmatprep.mubr.bf16.mxu0 0
    %2031 = vmatmul.mubr.bf16.gmra.mrb[0].mxu0 %v1993
    %v2032 = vpop.f32.mrb[0].mxu0
    %v2033 = vadd.f32 0.0, %v2032
    %v2034 = vpop.f32.mrb[0].mxu0
    %v2035 = vpop.f32.mrb[0].mxu0
    %v2036 = vpop.f32.mrb[0].mxu0
    %2037 = vdwg.mxu0
    %v2039 = vsel %vm374, %v1797, 0
    %v2042 = vsel %vm374, %v1805, 0
    %2044 = vmatprep.subr.bf16.mxu0 0
    %2045 = vmatpush1.bf16.xpose.msra.mxu0 %v2042
    %2046 = vmatprep.subr.bf16.mxu0 0
    %2047 = vmatpush1.bf16.xpose.msra.mxu0 0
    %2048 = vmatprep.subr.bf16.mxu0 0
    %2049 = vmatpush1.bf16.xpose.msra.mxu0 0
    %2050 = vmatprep.subr.bf16.mxu0 0
    %2051 = vmatpush1.bf16.xpose.msra.mxu0 0
    %2052 = vmatprep.subr.bf16.mxu0 0
    %2053 = vmatpush1.bf16.xpose.msra.mxu0 0
    %2054 = vmatprep.subr.bf16.mxu0 0
    %2055 = vmatpush1.bf16.xpose.msra.mxu0 0
    %2056 = vmatprep.subr.bf16.mxu0 0
    %2057 = vmatpush1.bf16.xpose.msra.mxu0 0
    %2058 = vmatprep.subr.bf16.mxu0 0
    %2059 = vmatpush1.bf16.xpose.msra.mxu0 0
    %2060 = vmatprep.subr.bf16.mxu0 0
    %2061 = vmatpush1.bf16.xpose.msra.mxu0 0
    %2062 = vmatprep.subr.bf16.mxu0 0
    %2063 = vmatpush1.bf16.xpose.msra.mxu0 0
    %2064 = vmatprep.subr.bf16.mxu0 0
    %2065 = vmatpush1.bf16.xpose.msra.mxu0 0
    %2066 = vmatprep.subr.bf16.mxu0 0
    %2067 = vmatpush1.bf16.xpose.msra.mxu0 0
    %2068 = vmatprep.subr.bf16.mxu0 0
    %2069 = vmatpush1.bf16.xpose.msra.mxu0 0
    %2070 = vmatprep.subr.bf16.mxu0 0
    %2071 = vmatpush1.bf16.xpose.msra.mxu0 0
    %2072 = vmatprep.subr.bf16.mxu0 0
    %2073 = vmatpush1.bf16.xpose.msra.mxu0 0
    %2074 = vmatprep.subr.bf16.mxu0 0
    %2075 = vmatpush1.bf16.xpose.msra.mxu0 0
    %2076 = vmatprep.mubr.bf16.mxu0 0
    %2077 = vmatmul.mubr.bf16.gmra.mrb[0].mxu0 %v2039
    %v2078 = vpop.f32.mrb[0].mxu0
    %v2079 = vadd.f32 0.0, %v2078
    %v2080 = vpop.f32.mrb[0].mxu0
    %v2081 = vpop.f32.mrb[0].mxu0
    %v2082 = vpop.f32.mrb[0].mxu0
    %2083 = vdwg.mxu0
    %v2085 = vsel %vm374, %v1798, 0
    %v2088 = vsel %vm374, %v1806, 0
    %2090 = vmatprep.subr.bf16.mxu0 0
    %2091 = vmatpush1.bf16.xpose.msra.mxu0 %v2088
    %2092 = vmatprep.subr.bf16.mxu0 0
    %2093 = vmatpush1.bf16.xpose.msra.mxu0 0
    %2094 = vmatprep.subr.bf16.mxu0 0
    %2095 = vmatpush1.bf16.xpose.msra.mxu0 0
    %2096 = vmatprep.subr.bf16.mxu0 0
    %2097 = vmatpush1.bf16.xpose.msra.mxu0 0
    %2098 = vmatprep.subr.bf16.mxu0 0
    %2099 = vmatpush1.bf16.xpose.msra.mxu0 0
    %2100 = vmatprep.subr.bf16.mxu0 0
    %2101 = vmatpush1.bf16.xpose.msra.mxu0 0
    %2102 = vmatprep.subr.bf16.mxu0 0
    %2103 = vmatpush1.bf16.xpose.msra.mxu0 0
    %2104 = vmatprep.subr.bf16.mxu0 0
    %2105 = vmatpush1.bf16.xpose.msra.mxu0 0
    %2106 = vmatprep.subr.bf16.mxu0 0
    %2107 = vmatpush1.bf16.xpose.msra.mxu0 0
    %2108 = vmatprep.subr.bf16.mxu0 0
    %2109 = vmatpush1.bf16.xpose.msra.mxu0 0
    %2110 = vmatprep.subr.bf16.mxu0 0
    %2111 = vmatpush1.bf16.xpose.msra.mxu0 0
    %2112 = vmatprep.subr.bf16.mxu0 0
    %2113 = vmatpush1.bf16.xpose.msra.mxu0 0
    %2114 = vmatprep.subr.bf16.mxu0 0
    %2115 = vmatpush1.bf16.xpose.msra.mxu0 0
    %2116 = vmatprep.subr.bf16.mxu0 0
    %2117 = vmatpush1.bf16.xpose.msra.mxu0 0
    %2118 = vmatprep.subr.bf16.mxu0 0
    %2119 = vmatpush1.bf16.xpose.msra.mxu0 0
    %2120 = vmatprep.subr.bf16.mxu0 0
    %2121 = vmatpush1.bf16.xpose.msra.mxu0 0
    %2122 = vmatprep.mubr.bf16.mxu0 0
    %2123 = vmatmul.mubr.bf16.gmra.mrb[0].mxu0 %v2085
    %v2124 = vpop.f32.mrb[0].mxu0
    %v2125 = vadd.f32 0.0, %v2124
    %v2126 = vpop.f32.mrb[0].mxu0
    %v2127 = vpop.f32.mrb[0].mxu0
    %v2128 = vpop.f32.mrb[0].mxu0
    %2129 = vdwg.mxu0
    %v2131 = vsel %vm374, %v1799, 0
    %v2134 = vsel %vm374, %v1807, 0
    %2136 = vmatprep.subr.bf16.mxu0 0
    %2137 = vmatpush1.bf16.xpose.msra.mxu0 %v2134
    %2138 = vmatprep.subr.bf16.mxu0 0
    %2139 = vmatpush1.bf16.xpose.msra.mxu0 0
    %2140 = vmatprep.subr.bf16.mxu0 0
    %2141 = vmatpush1.bf16.xpose.msra.mxu0 0
    %2142 = vmatprep.subr.bf16.mxu0 0
    %2143 = vmatpush1.bf16.xpose.msra.mxu0 0
    %2144 = vmatprep.subr.bf16.mxu0 0
    %2145 = vmatpush1.bf16.xpose.msra.mxu0 0
    %2146 = vmatprep.subr.bf16.mxu0 0
    %2147 = vmatpush1.bf16.xpose.msra.mxu0 0
    %2148 = vmatprep.subr.bf16.mxu0 0
    %2149 = vmatpush1.bf16.xpose.msra.mxu0 0
    %2150 = vmatprep.subr.bf16.mxu0 0
    %2151 = vmatpush1.bf16.xpose.msra.mxu0 0
    %2152 = vmatprep.subr.bf16.mxu0 0
    %2153 = vmatpush1.bf16.xpose.msra.mxu0 0
    %2154 = vmatprep.subr.bf16.mxu0 0
    %2155 = vmatpush1.bf16.xpose.msra.mxu0 0
    %2156 = vmatprep.subr.bf16.mxu0 0
    %2157 = vmatpush1.bf16.xpose.msra.mxu0 0
    %2158 = vmatprep.subr.bf16.mxu0 0
    %2159 = vmatpush1.bf16.xpose.msra.mxu0 0
    %2160 = vmatprep.subr.bf16.mxu0 0
    %2161 = vmatpush1.bf16.xpose.msra.mxu0 0
    %2162 = vmatprep.subr.bf16.mxu0 0
    %2163 = vmatpush1.bf16.xpose.msra.mxu0 0
    %2164 = vmatprep.subr.bf16.mxu0 0
    %2165 = vmatpush1.bf16.xpose.msra.mxu0 0
    %2166 = vmatprep.subr.bf16.mxu0 0
    %2167 = vmatpush1.bf16.xpose.msra.mxu0 0
    %2168 = vmatprep.mubr.bf16.mxu0 0
    %2169 = vmatmul.mubr.bf16.gmra.mrb[0].mxu0 %v2131
    %v2170 = vpop.f32.mrb[0].mxu0
    %v2171 = vadd.f32 0.0, %v2170
    %v2172 = vpop.f32.mrb[0].mxu0
    %v2173 = vpop.f32.mrb[0].mxu0
    %v2174 = vpop.f32.mrb[0].mxu0
    %2175 = vdwg.mxu0
    %v2176 = vsel %vm374, %v1849, -inf
    %2177 = vmax.xlane.f32.xlu0 %v2176
    %v2178 = vpop.xlane.xlu0 %2177
    %v2179 = vsel %vm374, %v1895, -inf
    %2180 = vmax.xlane.f32.xlu0 %v2179
    %v2181 = vpop.xlane.xlu0 %2180
    %v2182 = vsel %vm374, %v1941, -inf
    %2183 = vmax.xlane.f32.xlu0 %v2182
    %v2184 = vpop.xlane.xlu0 %2183
    %v2185 = vsel %vm374, %v1987, -inf
    %2186 = vmax.xlane.f32.xlu0 %v2185
    %v2187 = vpop.xlane.xlu0 %2186
    %v2188 = vsel %vm374, %v2033, -inf
    %2189 = vmax.xlane.f32.xlu0 %v2188
    %v2190 = vpop.xlane.xlu0 %2189
    %v2191 = vsel %vm374, %v2079, -inf
    %2192 = vmax.xlane.f32.xlu0 %v2191
    %v2193 = vpop.xlane.xlu0 %2192
    %v2194 = vsel %vm374, %v2125, -inf
    %2195 = vmax.xlane.f32.xlu0 %v2194
    %v2196 = vpop.xlane.xlu0 %2195
    %v2197 = vsel %vm374, %v2171, -inf
    %2198 = vmax.xlane.f32.xlu0 %v2197
    %v2199 = vpop.xlane.xlu0 %2198
    %v2200 = vsub.f32 %v1849, %v2178
    %v2201 = vsub.f32 %v1895, %v2181
    %v2202 = vsub.f32 %v1941, %v2184
    %v2203 = vsub.f32 %v1987, %v2187
    %v2204 = vsub.f32 %v2033, %v2190
    %v2205 = vsub.f32 %v2079, %v2193
    %v2206 = vsub.f32 %v2125, %v2196
    %v2207 = vsub.f32 %v2171, %v2199
    %v2208 = vmul.f32 %v2200, 1.442695
    %v2209 = vpow.pop %v2208
    %v2210 = vmul.f32 %v2201, 1.442695
    %v2211 = vpow.pop %v2210
    %v2212 = vmul.f32 %v2202, 1.442695
    %v2213 = vpow.pop %v2212
    %v2214 = vmul.f32 %v2203, 1.442695
    %v2215 = vpow.pop %v2214
    %v2216 = vmul.f32 %v2204, 1.442695
    %v2217 = vpow.pop %v2216
    %v2218 = vmul.f32 %v2205, 1.442695
    %v2219 = vpow.pop %v2218
    %v2220 = vmul.f32 %v2206, 1.442695
    %v2221 = vpow.pop %v2220
    %v2222 = vmul.f32 %v2207, 1.442695
    %v2223 = vpow.pop %v2222
    %v2224 = vsel %vm374, %v2209, 0.0
    %2225 = vadd.xlane.f32.xlu0 %v2224
    %v2226 = vpop.xlane.xlu0 %2225
    %v2227 = vsel %vm374, %v2211, 0.0
    %2228 = vadd.xlane.f32.xlu0 %v2227
    %v2229 = vpop.xlane.xlu0 %2228
    %v2230 = vsel %vm374, %v2213, 0.0
    %2231 = vadd.xlane.f32.xlu0 %v2230
    %v2232 = vpop.xlane.xlu0 %2231
    %v2233 = vsel %vm374, %v2215, 0.0
    %2234 = vadd.xlane.f32.xlu0 %v2233
    %v2235 = vpop.xlane.xlu0 %2234
    %v2236 = vsel %vm374, %v2217, 0.0
    %2237 = vadd.xlane.f32.xlu0 %v2236
    %v2238 = vpop.xlane.xlu0 %2237
    %v2239 = vsel %vm374, %v2219, 0.0
    %2240 = vadd.xlane.f32.xlu0 %v2239
    %v2241 = vpop.xlane.xlu0 %2240
    %v2242 = vsel %vm374, %v2221, 0.0
    %2243 = vadd.xlane.f32.xlu0 %v2242
    %v2244 = vpop.xlane.xlu0 %2243
    %v2245 = vsel %vm374, %v2223, 0.0
    %2246 = vadd.xlane.f32.xlu0 %v2245
    %v2247 = vpop.xlane.xlu0 %2246
    %v2248 = vrcp.pop %v2226
    %v2249 = vmul.f32 %v2209, %v2248
    %v2250 = vrcp.pop %v2229
    %v2251 = vmul.f32 %v2211, %v2250
    %v2252 = vrcp.pop %v2232
    %v2253 = vmul.f32 %v2213, %v2252
    %v2254 = vrcp.pop %v2235
    %v2255 = vmul.f32 %v2215, %v2254
    %v2256 = vrcp.pop %v2238
    %v2257 = vmul.f32 %v2217, %v2256
    %v2258 = vrcp.pop %v2241
    %v2259 = vmul.f32 %v2219, %v2258
    %v2260 = vrcp.pop %v2244
    %v2261 = vmul.f32 %v2221, %v2260
    %v2262 = vrcp.pop %v2247
    %v2263 = vmul.f32 %v2223, %v2262
    %v2264 = vpack.c.bf16 %v2249, %v2249
    %v2265 = vpack.c.bf16 %v2251, %v2251
    %v2266 = vpack.c.bf16 %v2253, %v2253
    %v2267 = vpack.c.bf16 %v2255, %v2255
    %v2268 = vpack.c.bf16 %v2257, %v2257
    %v2269 = vpack.c.bf16 %v2259, %v2259
    %v2270 = vpack.c.bf16 %v2261, %v2261
    %v2271 = vpack.c.bf16 %v2263, %v2263
    %v2272 = vpack.c.bf16 %v1726, %v1726
    %v2273 = vpack.c.bf16 %v1774, %v1774
    %v2274 = vpack.c.bf16 %v1777, %v1777
    %v2275 = vpack.c.bf16 %v1780, %v1780
    %v2276 = vpack.c.bf16 %v1729, %v1729
    %v2277 = vpack.c.bf16 %v1784, %v1784
    %v2278 = vpack.c.bf16 %v1787, %v1787
    %v2279 = vpack.c.bf16 %v1790, %v1790
    %v2281 = vsel %vm374, %v2264, 0
    %v2284 = vsel %vm850, %v2272, 0
    %2286 = vmatprep.subr.bf16.mxu0 0
    %2287 = vmatpush1.bf16.msra.mxu0 %v2284
    %2288 = vmatprep.subr.bf16.mxu0 0
    %2289 = vmatpush1.bf16.msra.mxu0 0
    %2290 = vmatprep.subr.bf16.mxu0 0
    %2291 = vmatpush1.bf16.msra.mxu0 0
    %2292 = vmatprep.subr.bf16.mxu0 0
    %2293 = vmatpush1.bf16.msra.mxu0 0
    %2294 = vmatprep.subr.bf16.mxu0 0
    %2295 = vmatpush1.bf16.msra.mxu0 0
    %2296 = vmatprep.subr.bf16.mxu0 0
    %2297 = vmatpush1.bf16.msra.mxu0 0
    %2298 = vmatprep.subr.bf16.mxu0 0
    %2299 = vmatpush1.bf16.msra.mxu0 0
    %2300 = vmatprep.subr.bf16.mxu0 0
    %2301 = vmatpush1.bf16.msra.mxu0 0
    %2302 = vmatprep.subr.bf16.mxu0 0
    %2303 = vmatpush1.bf16.msra.mxu0 0
    %2304 = vmatprep.subr.bf16.mxu0 0
    %2305 = vmatpush1.bf16.msra.mxu0 0
    %2306 = vmatprep.subr.bf16.mxu0 0
    %2307 = vmatpush1.bf16.msra.mxu0 0
    %2308 = vmatprep.subr.bf16.mxu0 0
    %2309 = vmatpush1.bf16.msra.mxu0 0
    %2310 = vmatprep.subr.bf16.mxu0 0
    %2311 = vmatpush1.bf16.msra.mxu0 0
    %2312 = vmatprep.subr.bf16.mxu0 0
    %2313 = vmatpush1.bf16.msra.mxu0 0
    %2314 = vmatprep.subr.bf16.mxu0 0
    %2315 = vmatpush1.bf16.msra.mxu0 0
    %2316 = vmatprep.subr.bf16.mxu0 0
    %2317 = vmatpush1.bf16.msra.mxu0 0
    %2318 = vmatprep.mubr.bf16.mxu0 0
    %2319 = vmatmul.mubr.bf16.gmra.mrb[0].mxu0 %v2281
    %v2320 = vpop.f32.mrb[0].mxu0
    %v2321 = vadd.f32 0.0, %v2320
    %v2322 = vpop.f32.mrb[0].mxu0
    %v2323 = vpop.f32.mrb[0].mxu0
    %v2324 = vpop.f32.mrb[0].mxu0
    %2325 = vdwg.mxu0
    %v2327 = vsel %vm374, %v2265, 0
    %v2330 = vsel %vm850, %v2273, 0
    %2332 = vmatprep.subr.bf16.mxu0 0
    %2333 = vmatpush1.bf16.msra.mxu0 %v2330
    %2334 = vmatprep.subr.bf16.mxu0 0
    %2335 = vmatpush1.bf16.msra.mxu0 0
    %2336 = vmatprep.subr.bf16.mxu0 0
    %2337 = vmatpush1.bf16.msra.mxu0 0
    %2338 = vmatprep.subr.bf16.mxu0 0
    %2339 = vmatpush1.bf16.msra.mxu0 0
    %2340 = vmatprep.subr.bf16.mxu0 0
    %2341 = vmatpush1.bf16.msra.mxu0 0
    %2342 = vmatprep.subr.bf16.mxu0 0
    %2343 = vmatpush1.bf16.msra.mxu0 0
    %2344 = vmatprep.subr.bf16.mxu0 0
    %2345 = vmatpush1.bf16.msra.mxu0 0
    %2346 = vmatprep.subr.bf16.mxu0 0
    %2347 = vmatpush1.bf16.msra.mxu0 0
    %2348 = vmatprep.subr.bf16.mxu0 0
    %2349 = vmatpush1.bf16.msra.mxu0 0
    %2350 = vmatprep.subr.bf16.mxu0 0
    %2351 = vmatpush1.bf16.msra.mxu0 0
    %2352 = vmatprep.subr.bf16.mxu0 0
    %2353 = vmatpush1.bf16.msra.mxu0 0
    %2354 = vmatprep.subr.bf16.mxu0 0
    %2355 = vmatpush1.bf16.msra.mxu0 0
    %2356 = vmatprep.subr.bf16.mxu0 0
    %2357 = vmatpush1.bf16.msra.mxu0 0
    %2358 = vmatprep.subr.bf16.mxu0 0
    %2359 = vmatpush1.bf16.msra.mxu0 0
    %2360 = vmatprep.subr.bf16.mxu0 0
    %2361 = vmatpush1.bf16.msra.mxu0 0
    %2362 = vmatprep.subr.bf16.mxu0 0
    %2363 = vmatpush1.bf16.msra.mxu0 0
    %2364 = vmatprep.mubr.bf16.mxu0 0
    %2365 = vmatmul.mubr.bf16.gmra.mrb[0].mxu0 %v2327
    %v2366 = vpop.f32.mrb[0].mxu0
    %v2367 = vadd.f32 0.0, %v2366
    %v2368 = vpop.f32.mrb[0].mxu0
    %v2369 = vpop.f32.mrb[0].mxu0
    %v2370 = vpop.f32.mrb[0].mxu0
    %2371 = vdwg.mxu0
    %v2373 = vsel %vm374, %v2266, 0
    %v2376 = vsel %vm850, %v2274, 0
    %2378 = vmatprep.subr.bf16.mxu0 0
    %2379 = vmatpush1.bf16.msra.mxu0 %v2376
    %2380 = vmatprep.subr.bf16.mxu0 0
    %2381 = vmatpush1.bf16.msra.mxu0 0
    %2382 = vmatprep.subr.bf16.mxu0 0
    %2383 = vmatpush1.bf16.msra.mxu0 0
    %2384 = vmatprep.subr.bf16.mxu0 0
    %2385 = vmatpush1.bf16.msra.mxu0 0
    %2386 = vmatprep.subr.bf16.mxu0 0
    %2387 = vmatpush1.bf16.msra.mxu0 0
    %2388 = vmatprep.subr.bf16.mxu0 0
    %2389 = vmatpush1.bf16.msra.mxu0 0
    %2390 = vmatprep.subr.bf16.mxu0 0
    %2391 = vmatpush1.bf16.msra.mxu0 0
    %2392 = vmatprep.subr.bf16.mxu0 0
    %2393 = vmatpush1.bf16.msra.mxu0 0
    %2394 = vmatprep.subr.bf16.mxu0 0
    %2395 = vmatpush1.bf16.msra.mxu0 0
    %2396 = vmatprep.subr.bf16.mxu0 0
    %2397 = vmatpush1.bf16.msra.mxu0 0
    %2398 = vmatprep.subr.bf16.mxu0 0
    %2399 = vmatpush1.bf16.msra.mxu0 0
    %2400 = vmatprep.subr.bf16.mxu0 0
    %2401 = vmatpush1.bf16.msra.mxu0 0
    %2402 = vmatprep.subr.bf16.mxu0 0
    %2403 = vmatpush1.bf16.msra.mxu0 0
    %2404 = vmatprep.subr.bf16.mxu0 0
    %2405 = vmatpush1.bf16.msra.mxu0 0
    %2406 = vmatprep.subr.bf16.mxu0 0
    %2407 = vmatpush1.bf16.msra.mxu0 0
    %2408 = vmatprep.subr.bf16.mxu0 0
    %2409 = vmatpush1.bf16.msra.mxu0 0
    %2410 = vmatprep.mubr.bf16.mxu0 0
    %2411 = vmatmul.mubr.bf16.gmra.mrb[0].mxu0 %v2373
    %v2412 = vpop.f32.mrb[0].mxu0
    %v2413 = vadd.f32 0.0, %v2412
    %v2414 = vpop.f32.mrb[0].mxu0
    %v2415 = vpop.f32.mrb[0].mxu0
    %v2416 = vpop.f32.mrb[0].mxu0
    %2417 = vdwg.mxu0
    %v2419 = vsel %vm374, %v2267, 0
    %v2422 = vsel %vm850, %v2275, 0
    %2424 = vmatprep.subr.bf16.mxu0 0
    %2425 = vmatpush1.bf16.msra.mxu0 %v2422
    %2426 = vmatprep.subr.bf16.mxu0 0
    %2427 = vmatpush1.bf16.msra.mxu0 0
    %2428 = vmatprep.subr.bf16.mxu0 0
    %2429 = vmatpush1.bf16.msra.mxu0 0
    %2430 = vmatprep.subr.bf16.mxu0 0
    %2431 = vmatpush1.bf16.msra.mxu0 0
    %2432 = vmatprep.subr.bf16.mxu0 0
    %2433 = vmatpush1.bf16.msra.mxu0 0
    %2434 = vmatprep.subr.bf16.mxu0 0
    %2435 = vmatpush1.bf16.msra.mxu0 0
    %2436 = vmatprep.subr.bf16.mxu0 0
    %2437 = vmatpush1.bf16.msra.mxu0 0
    %2438 = vmatprep.subr.bf16.mxu0 0
    %2439 = vmatpush1.bf16.msra.mxu0 0
    %2440 = vmatprep.subr.bf16.mxu0 0
    %2441 = vmatpush1.bf16.msra.mxu0 0
    %2442 = vmatprep.subr.bf16.mxu0 0
    %2443 = vmatpush1.bf16.msra.mxu0 0
    %2444 = vmatprep.subr.bf16.mxu0 0
    %2445 = vmatpush1.bf16.msra.mxu0 0
    %2446 = vmatprep.subr.bf16.mxu0 0
    %2447 = vmatpush1.bf16.msra.mxu0 0
    %2448 = vmatprep.subr.bf16.mxu0 0
    %2449 = vmatpush1.bf16.msra.mxu0 0
    %2450 = vmatprep.subr.bf16.mxu0 0
    %2451 = vmatpush1.bf16.msra.mxu0 0
    %2452 = vmatprep.subr.bf16.mxu0 0
    %2453 = vmatpush1.bf16.msra.mxu0 0
    %2454 = vmatprep.subr.bf16.mxu0 0
    %2455 = vmatpush1.bf16.msra.mxu0 0
    %2456 = vmatprep.mubr.bf16.mxu0 0
    %2457 = vmatmul.mubr.bf16.gmra.mrb[0].mxu0 %v2419
    %v2458 = vpop.f32.mrb[0].mxu0
    %v2459 = vadd.f32 0.0, %v2458
    %v2460 = vpop.f32.mrb[0].mxu0
    %v2461 = vpop.f32.mrb[0].mxu0
    %v2462 = vpop.f32.mrb[0].mxu0
    %2463 = vdwg.mxu0
    %v2465 = vsel %vm374, %v2268, 0
    %v2468 = vsel %vm850, %v2276, 0
    %2470 = vmatprep.subr.bf16.mxu0 0
    %2471 = vmatpush1.bf16.msra.mxu0 %v2468
    %2472 = vmatprep.subr.bf16.mxu0 0
    %2473 = vmatpush1.bf16.msra.mxu0 0
    %2474 = vmatprep.subr.bf16.mxu0 0
    %2475 = vmatpush1.bf16.msra.mxu0 0
    %2476 = vmatprep.subr.bf16.mxu0 0
    %2477 = vmatpush1.bf16.msra.mxu0 0
    %2478 = vmatprep.subr.bf16.mxu0 0
    %2479 = vmatpush1.bf16.msra.mxu0 0
    %2480 = vmatprep.subr.bf16.mxu0 0
    %2481 = vmatpush1.bf16.msra.mxu0 0
    %2482 = vmatprep.subr.bf16.mxu0 0
    %2483 = vmatpush1.bf16.msra.mxu0 0
    %2484 = vmatprep.subr.bf16.mxu0 0
    %2485 = vmatpush1.bf16.msra.mxu0 0
    %2486 = vmatprep.subr.bf16.mxu0 0
    %2487 = vmatpush1.bf16.msra.mxu0 0
    %2488 = vmatprep.subr.bf16.mxu0 0
    %2489 = vmatpush1.bf16.msra.mxu0 0
    %2490 = vmatprep.subr.bf16.mxu0 0
    %2491 = vmatpush1.bf16.msra.mxu0 0
    %2492 = vmatprep.subr.bf16.mxu0 0
    %2493 = vmatpush1.bf16.msra.mxu0 0
    %2494 = vmatprep.subr.bf16.mxu0 0
    %2495 = vmatpush1.bf16.msra.mxu0 0
    %2496 = vmatprep.subr.bf16.mxu0 0
    %2497 = vmatpush1.bf16.msra.mxu0 0
    %2498 = vmatprep.subr.bf16.mxu0 0
    %2499 = vmatpush1.bf16.msra.mxu0 0
    %2500 = vmatprep.subr.bf16.mxu0 0
    %2501 = vmatpush1.bf16.msra.mxu0 0
    %2502 = vmatprep.mubr.bf16.mxu0 0
    %2503 = vmatmul.mubr.bf16.gmra.mrb[0].mxu0 %v2465
    %v2504 = vpop.f32.mrb[0].mxu0
    %v2505 = vadd.f32 0.0, %v2504
    %v2506 = vpop.f32.mrb[0].mxu0
    %v2507 = vpop.f32.mrb[0].mxu0
    %v2508 = vpop.f32.mrb[0].mxu0
    %2509 = vdwg.mxu0
    %v2511 = vsel %vm374, %v2269, 0
    %v2514 = vsel %vm850, %v2277, 0
    %2516 = vmatprep.subr.bf16.mxu0 0
    %2517 = vmatpush1.bf16.msra.mxu0 %v2514
    %2518 = vmatprep.subr.bf16.mxu0 0
    %2519 = vmatpush1.bf16.msra.mxu0 0
    %2520 = vmatprep.subr.bf16.mxu0 0
    %2521 = vmatpush1.bf16.msra.mxu0 0
    %2522 = vmatprep.subr.bf16.mxu0 0
    %2523 = vmatpush1.bf16.msra.mxu0 0
    %2524 = vmatprep.subr.bf16.mxu0 0
    %2525 = vmatpush1.bf16.msra.mxu0 0
    %2526 = vmatprep.subr.bf16.mxu0 0
    %2527 = vmatpush1.bf16.msra.mxu0 0
    %2528 = vmatprep.subr.bf16.mxu0 0
    %2529 = vmatpush1.bf16.msra.mxu0 0
    %2530 = vmatprep.subr.bf16.mxu0 0
    %2531 = vmatpush1.bf16.msra.mxu0 0
    %2532 = vmatprep.subr.bf16.mxu0 0
    %2533 = vmatpush1.bf16.msra.mxu0 0
    %2534 = vmatprep.subr.bf16.mxu0 0
    %2535 = vmatpush1.bf16.msra.mxu0 0
    %2536 = vmatprep.subr.bf16.mxu0 0
    %2537 = vmatpush1.bf16.msra.mxu0 0
    %2538 = vmatprep.subr.bf16.mxu0 0
    %2539 = vmatpush1.bf16.msra.mxu0 0
    %2540 = vmatprep.subr.bf16.mxu0 0
    %2541 = vmatpush1.bf16.msra.mxu0 0
    %2542 = vmatprep.subr.bf16.mxu0 0
    %2543 = vmatpush1.bf16.msra.mxu0 0
    %2544 = vmatprep.subr.bf16.mxu0 0
    %2545 = vmatpush1.bf16.msra.mxu0 0
    %2546 = vmatprep.subr.bf16.mxu0 0
    %2547 = vmatpush1.bf16.msra.mxu0 0
    %2548 = vmatprep.mubr.bf16.mxu0 0
    %2549 = vmatmul.mubr.bf16.gmra.mrb[0].mxu0 %v2511
    %v2550 = vpop.f32.mrb[0].mxu0
    %v2551 = vadd.f32 0.0, %v2550
    %v2552 = vpop.f32.mrb[0].mxu0
    %v2553 = vpop.f32.mrb[0].mxu0
    %v2554 = vpop.f32.mrb[0].mxu0
    %2555 = vdwg.mxu0
    %v2557 = vsel %vm374, %v2270, 0
    %v2560 = vsel %vm850, %v2278, 0
    %2562 = vmatprep.subr.bf16.mxu0 0
    %2563 = vmatpush1.bf16.msra.mxu0 %v2560
    %2564 = vmatprep.subr.bf16.mxu0 0
    %2565 = vmatpush1.bf16.msra.mxu0 0
    %2566 = vmatprep.subr.bf16.mxu0 0
    %2567 = vmatpush1.bf16.msra.mxu0 0
    %2568 = vmatprep.subr.bf16.mxu0 0
    %2569 = vmatpush1.bf16.msra.mxu0 0
    %2570 = vmatprep.subr.bf16.mxu0 0
    %2571 = vmatpush1.bf16.msra.mxu0 0
    %2572 = vmatprep.subr.bf16.mxu0 0
    %2573 = vmatpush1.bf16.msra.mxu0 0
    %2574 = vmatprep.subr.bf16.mxu0 0
    %2575 = vmatpush1.bf16.msra.mxu0 0
    %2576 = vmatprep.subr.bf16.mxu0 0
    %2577 = vmatpush1.bf16.msra.mxu0 0
    %2578 = vmatprep.subr.bf16.mxu0 0
    %2579 = vmatpush1.bf16.msra.mxu0 0
    %2580 = vmatprep.subr.bf16.mxu0 0
    %2581 = vmatpush1.bf16.msra.mxu0 0
    %2582 = vmatprep.subr.bf16.mxu0 0
    %2583 = vmatpush1.bf16.msra.mxu0 0
    %2584 = vmatprep.subr.bf16.mxu0 0
    %2585 = vmatpush1.bf16.msra.mxu0 0
    %2586 = vmatprep.subr.bf16.mxu0 0
    %2587 = vmatpush1.bf16.msra.mxu0 0
    %2588 = vmatprep.subr.bf16.mxu0 0
    %2589 = vmatpush1.bf16.msra.mxu0 0
    %2590 = vmatprep.subr.bf16.mxu0 0
    %2591 = vmatpush1.bf16.msra.mxu0 0
    %2592 = vmatprep.subr.bf16.mxu0 0
    %2593 = vmatpush1.bf16.msra.mxu0 0
    %2594 = vmatprep.mubr.bf16.mxu0 0
    %2595 = vmatmul.mubr.bf16.gmra.mrb[0].mxu0 %v2557
    %v2596 = vpop.f32.mrb[0].mxu0
    %v2597 = vadd.f32 0.0, %v2596
    %v2598 = vpop.f32.mrb[0].mxu0
    %v2599 = vpop.f32.mrb[0].mxu0
    %v2600 = vpop.f32.mrb[0].mxu0
    %2601 = vdwg.mxu0
    %v2603 = vsel %vm374, %v2271, 0
    %v2606 = vsel %vm850, %v2279, 0
    %2608 = vmatprep.subr.bf16.mxu0 0
    %2609 = vmatpush1.bf16.msra.mxu0 %v2606
    %2610 = vmatprep.subr.bf16.mxu0 0
    %2611 = vmatpush1.bf16.msra.mxu0 0
    %2612 = vmatprep.subr.bf16.mxu0 0
    %2613 = vmatpush1.bf16.msra.mxu0 0
    %2614 = vmatprep.subr.bf16.mxu0 0
    %2615 = vmatpush1.bf16.msra.mxu0 0
    %2616 = vmatprep.subr.bf16.mxu0 0
    %2617 = vmatpush1.bf16.msra.mxu0 0
    %2618 = vmatprep.subr.bf16.mxu0 0
    %2619 = vmatpush1.bf16.msra.mxu0 0
    %2620 = vmatprep.subr.bf16.mxu0 0
    %2621 = vmatpush1.bf16.msra.mxu0 0
    %2622 = vmatprep.subr.bf16.mxu0 0
    %2623 = vmatpush1.bf16.msra.mxu0 0
    %2624 = vmatprep.subr.bf16.mxu0 0
    %2625 = vmatpush1.bf16.msra.mxu0 0
    %2626 = vmatprep.subr.bf16.mxu0 0
    %2627 = vmatpush1.bf16.msra.mxu0 0
    %2628 = vmatprep.subr.bf16.mxu0 0
    %2629 = vmatpush1.bf16.msra.mxu0 0
    %2630 = vmatprep.subr.bf16.mxu0 0
    %2631 = vmatpush1.bf16.msra.mxu0 0
    %2632 = vmatprep.subr.bf16.mxu0 0
    %2633 = vmatpush1.bf16.msra.mxu0 0
    %2634 = vmatprep.subr.bf16.mxu0 0
    %2635 = vmatpush1.bf16.msra.mxu0 0
    %2636 = vmatprep.subr.bf16.mxu0 0
    %2637 = vmatpush1.bf16.msra.mxu0 0
    %2638 = vmatprep.subr.bf16.mxu0 0
    %2639 = vmatpush1.bf16.msra.mxu0 0
    %2640 = vmatprep.mubr.bf16.mxu0 0
    %2641 = vmatmul.mubr.bf16.gmra.mrb[0].mxu0 %v2603
    %v2642 = vpop.f32.mrb[0].mxu0
    %v2643 = vadd.f32 0.0, %v2642
    %v2644 = vpop.f32.mrb[0].mxu0
    %v2645 = vpop.f32.mrb[0].mxu0
    %v2646 = vpop.f32.mrb[0].mxu0
    %2647 = vdwg.mxu0
    %2649 = vrot.lane.b32.xlu0 %v2367, 8
    %v2650 = vpop.permute.xlu0 %2649
    %2653 = vrot.lane.b32.xlu0 %v2413, 16
    %v2654 = vpop.permute.xlu0 %2653
    %2657 = vrot.lane.b32.xlu0 %v2459, 24
    %v2658 = vpop.permute.xlu0 %2657
    %v2660 = vsel %vm374, %v2321, %v2650
    %v2661 = vsel %vm1229, %v2660, %v2654
    %v2662 = vsel %vm1231, %v2661, %v2658
    %2664 = vrot.lane.b32.xlu0 %v2551, 8
    %v2665 = vpop.permute.xlu0 %2664
    %2668 = vrot.lane.b32.xlu0 %v2597, 16
    %v2669 = vpop.permute.xlu0 %2668
    %2672 = vrot.lane.b32.xlu0 %v2643, 24
    %v2673 = vpop.permute.xlu0 %2672
    %v2675 = vsel %vm374, %v2505, %v2665
    %v2676 = vsel %vm1229, %v2675, %v2669
    %v2677 = vsel %vm1231, %v2676, %v2673
    %v2678 = vpack.c.bf16 %v2677, %v2662
    %v2679 = vlaneseq
    %v2680 = vshrl.u32 %v2679, 7
    %v2681 = vsub.s32 0, %v2680
    %v2682 = vrot.slane %v1554, %v2681
    %v2687 = vunpack.c.l.b16 %v1546
    %v2688 = vunpack.c.l.b16 %v1547
    %v2689 = vunpack.c.l.b16 %v1548
    %v2690 = vunpack.c.l.b16 %v1549
    %v2691 = vpack.c.b16 %v2688, %v2687
    %v2692 = vpack.c.b16 %v2690, %v2689
    %v2696 = vsel %vm139, %v2678, 0
    %2698 = vmatprep.subr.bf16.mxu0 0
    %2699 = vmatpush1.bf16.msra.mxu0 %v2691
    %2700 = vmatprep.subr.bf16.mxu0 0
    %2701 = vmatpush1.bf16.msra.mxu0 %v2692
    %2702 = vmatprep.subr.bf16.mxu0 0
    %2703 = vmatpush1.bf16.msra.mxu0 0
    %2704 = vmatprep.subr.bf16.mxu0 0
    %2705 = vmatpush1.bf16.msra.mxu0 0
    %2706 = vmatprep.subr.bf16.mxu0 0
    %2707 = vmatpush1.bf16.msra.mxu0 0
    %2708 = vmatprep.subr.bf16.mxu0 0
    %2709 = vmatpush1.bf16.msra.mxu0 0
    %2710 = vmatprep.subr.bf16.mxu0 0
    %2711 = vmatpush1.bf16.msra.mxu0 0
    %2712 = vmatprep.subr.bf16.mxu0 0
    %2713 = vmatpush1.bf16.msra.mxu0 0
    %2714 = vmatprep.subr.bf16.mxu0 0
    %2715 = vmatpush1.bf16.msra.mxu0 0
    %2716 = vmatprep.subr.bf16.mxu0 0
    %2717 = vmatpush1.bf16.msra.mxu0 0
    %2718 = vmatprep.subr.bf16.mxu0 0
    %2719 = vmatpush1.bf16.msra.mxu0 0
    %2720 = vmatprep.subr.bf16.mxu0 0
    %2721 = vmatpush1.bf16.msra.mxu0 0
    %2722 = vmatprep.subr.bf16.mxu0 0
    %2723 = vmatpush1.bf16.msra.mxu0 0
    %2724 = vmatprep.subr.bf16.mxu0 0
    %2725 = vmatpush1.bf16.msra.mxu0 0
    %2726 = vmatprep.subr.bf16.mxu0 0
    %2727 = vmatpush1.bf16.msra.mxu0 0
    %2728 = vmatprep.subr.bf16.mxu0 0
    %2729 = vmatpush1.bf16.msra.mxu0 0
    %2730 = vmatprep.mubr.bf16.mxu0 0
    %2731 = vmatmul.mubr.bf16.gmra.mrb[0].mxu0 %v2696
    %v2732 = vpop.f32.mrb[0].mxu0
    %v2733 = vadd.f32 %v2682, %v2732
    %v2734 = vpop.f32.mrb[0].mxu0
    %v2735 = vpop.f32.mrb[0].mxu0
    %v2736 = vadd.f32 %v2682, %v2735
    %v2737 = vpop.f32.mrb[0].mxu0
    %2738 = vdwg.mxu0
    %v2739 = vadd.f32 %v1531, %v2733
    %v2740 = vadd.f32 %v1532, %v2736
    %v2741 = vsel %vm139, %v2739, 0.0
    %2742 = vadd.xlane.f32.xlu0 %v2741
    %v2743 = vpop.xlane.xlu0 %2742
    %v2744 = vsel %vm139, %v2740, 0.0
    %2745 = vadd.xlane.f32.xlu0 %v2744
    %v2746 = vpop.xlane.xlu0 %2745
    %v2747 = vmul.f32 %v2743, %v1317
    %v2748 = vmul.f32 %v2746, %v1317
    %v2749 = vsub.f32 %v2739, %v2747
    %v2750 = vsub.f32 %v2740, %v2748
    %v2751 = vmul.f32 %v2749, %v2749
    %v2752 = vmul.f32 %v2750, %v2750
    %v2753 = vsel %vm139, %v2751, 0.0
    %2754 = vadd.xlane.f32.xlu0 %v2753
    %v2755 = vpop.xlane.xlu0 %2754
    %v2756 = vsel %vm139, %v2752, 0.0
    %2757 = vadd.xlane.f32.xlu0 %v2756
    %v2758 = vpop.xlane.xlu0 %2757
    %v2759 = vmul.f32 %v2755, %v1317
    %v2760 = vmul.f32 %v2758, %v1317
    %v2761 = vadd.f32 %v2759, 1e-05
    %v2762 = vadd.f32 %v2760, 1e-05
    %v2763 = vrsqrt.pop %v2761
    %v2764 = vrsqrt.pop %v2762
    %v2765 = vmul.f32 %v2749, %v2763
    %v2766 = vmul.f32 %v2750, %v2764
    %v2767 = vlaneseq
    %v2768 = vshrl.u32 %v2767, 7
    %v2769 = vsub.s32 0, %v2768
    %v2770 = vrot.slane %v1555, %v2769
    %v2771 = vmul.f32 %v2765, %v2770
    %v2772 = vmul.f32 %v2766, %v2770
    %v2773 = vlaneseq
    %v2774 = vshrl.u32 %v2773, 7
    %v2775 = vsub.s32 0, %v2774
    %v2776 = vrot.slane %v1556, %v2775
    %v2777 = vadd.f32 %v2771, %v2776
    %v2778 = vadd.f32 %v2772, %v2776
    %s2779 = scalar_lea.vmem %s3, 32
    %v2780 = vld [vmem:[%s2779] sm:$0xf]
    %v2781 = vld [vmem:[%s2779 + $0x4] sm:$0xf]
    %v2782 = vld [vmem:[%s2779 + $0x8] sm:$0xf]
    %v2783 = vld [vmem:[%s2779 + $0xc] sm:$0xf]
    %v2784 = vld [vmem:[%s2779 + $0x10] sm:$0xf]
    %v2785 = vld [vmem:[%s2779 + $0x14] sm:$0xf]
    %v2786 = vld [vmem:[%s2779 + $0x18] sm:$0xf]
    %v2787 = vld [vmem:[%s2779 + $0x1c] sm:$0xf]
    %s2788 = scalar_lea.vmem %s5, 1
    %v2789 = vld [vmem:[%s2788] sm:$0x1]
    %v2790 = vld [vmem:[%s1550 + $0x6] sm:$0x1]
    %v2791 = vld [vmem:[%s1550 + $0x7] sm:$0x1]
    %v2792 = vld [vmem:[%s1550 + $0x8] sm:$0x1]
    %v2793 = vpack.c.bf16 %v2778, %v2777
    %v2795 = vlaneseq
    %v2796 = vshrl.u32 %v2795, 7
    %v2797 = vsub.s32 0, %v2796
    %v2798 = vrot.slane %v2789, %v2797
    %v2804 = vunpack.c.l.b16 %v2780
    %v2805 = vunpack.c.l.b16 %v2781
    %v2806 = vunpack.c.l.b16 %v2782
    %v2807 = vunpack.c.l.b16 %v2783
    %v2808 = vpack.c.b16 %v2805, %v2804
    %v2809 = vpack.c.b16 %v2807, %v2806
    %v2813 = vsel %vm139, %v2793, 0
    %2815 = vmatprep.subr.bf16.mxu0 0
    %2816 = vmatpush1.bf16.msra.mxu0 %v2808
    %2817 = vmatprep.subr.bf16.mxu0 0
    %2818 = vmatpush1.bf16.msra.mxu0 %v2809
    %2819 = vmatprep.subr.bf16.mxu0 0
    %2820 = vmatpush1.bf16.msra.mxu0 0
    %2821 = vmatprep.subr.bf16.mxu0 0
    %2822 = vmatpush1.bf16.msra.mxu0 0
    %2823 = vmatprep.subr.bf16.mxu0 0
    %2824 = vmatpush1.bf16.msra.mxu0 0
    %2825 = vmatprep.subr.bf16.mxu0 0
    %2826 = vmatpush1.bf16.msra.mxu0 0
    %2827 = vmatprep.subr.bf16.mxu0 0
    %2828 = vmatpush1.bf16.msra.mxu0 0
    %2829 = vmatprep.subr.bf16.mxu0 0
    %2830 = vmatpush1.bf16.msra.mxu0 0
    %2831 = vmatprep.subr.bf16.mxu0 0
    %2832 = vmatpush1.bf16.msra.mxu0 0
    %2833 = vmatprep.subr.bf16.mxu0 0
    %2834 = vmatpush1.bf16.msra.mxu0 0
    %2835 = vmatprep.subr.bf16.mxu0 0
    %2836 = vmatpush1.bf16.msra.mxu0 0
    %2837 = vmatprep.subr.bf16.mxu0 0
    %2838 = vmatpush1.bf16.msra.mxu0 0
    %2839 = vmatprep.subr.bf16.mxu0 0
    %2840 = vmatpush1.bf16.msra.mxu0 0
    %2841 = vmatprep.subr.bf16.mxu0 0
    %2842 = vmatpush1.bf16.msra.mxu0 0
    %2843 = vmatprep.subr.bf16.mxu0 0
    %2844 = vmatpush1.bf16.msra.mxu0 0
    %2845 = vmatprep.subr.bf16.mxu0 0
    %2846 = vmatpush1.bf16.msra.mxu0 0
    %2847 = vmatprep.mubr.bf16.mxu0 0
    %2848 = vmatmul.mubr.bf16.gmra.mrb[0].mxu0 %v2813
    %v2849 = vpop.f32.mrb[0].mxu0
    %v2850 = vadd.f32 %v2798, %v2849
    %v2851 = vpop.f32.mrb[0].mxu0
    %v2852 = vpop.f32.mrb[0].mxu0
    %v2853 = vadd.f32 %v2798, %v2852
    %v2854 = vpop.f32.mrb[0].mxu0
    %2855 = vdwg.mxu0
    %v2856 = vmax.f32 %v2850, 0.0
    %v2857 = vmax.f32 %v2853, 0.0
    %v2858 = vpack.c.bf16 %v2857, %v2856
    %v2859 = vlaneseq
    %v2860 = vshrl.u32 %v2859, 7
    %v2861 = vsub.s32 0, %v2860
    %v2862 = vrot.slane %v2790, %v2861
    %v2867 = vunpack.c.l.b16 %v2784
    %v2868 = vunpack.c.l.b16 %v2785
    %v2869 = vunpack.c.l.b16 %v2786
    %v2870 = vunpack.c.l.b16 %v2787
    %v2871 = vpack.c.b16 %v2868, %v2867
    %v2872 = vpack.c.b16 %v2870, %v2869
    %v2874 = vsel %vm1442, %v2858, 0
    %v2877 = vsel %vm1442, %v2871, 0
    %v2880 = vsel %vm1442, %v2872, 0
    %2882 = vmatprep.subr.bf16.mxu0 0
    %2883 = vmatpush1.bf16.xpose.msra.mxu0 %v2877
    %2884 = vmatprep.subr.bf16.mxu0 0
    %2885 = vmatpush1.bf16.xpose.msra.mxu0 %v2880
    %2886 = vmatprep.subr.bf16.mxu0 0
    %2887 = vmatpush1.bf16.xpose.msra.mxu0 0
    %2888 = vmatprep.subr.bf16.mxu0 0
    %2889 = vmatpush1.bf16.xpose.msra.mxu0 0
    %2890 = vmatprep.subr.bf16.mxu0 0
    %2891 = vmatpush1.bf16.xpose.msra.mxu0 0
    %2892 = vmatprep.subr.bf16.mxu0 0
    %2893 = vmatpush1.bf16.xpose.msra.mxu0 0
    %2894 = vmatprep.subr.bf16.mxu0 0
    %2895 = vmatpush1.bf16.xpose.msra.mxu0 0
    %2896 = vmatprep.subr.bf16.mxu0 0
    %2897 = vmatpush1.bf16.xpose.msra.mxu0 0
    %2898 = vmatprep.subr.bf16.mxu0 0
    %2899 = vmatpush1.bf16.xpose.msra.mxu0 0
    %2900 = vmatprep.subr.bf16.mxu0 0
    %2901 = vmatpush1.bf16.xpose.msra.mxu0 0
    %2902 = vmatprep.subr.bf16.mxu0 0
    %2903 = vmatpush1.bf16.xpose.msra.mxu0 0
    %2904 = vmatprep.subr.bf16.mxu0 0
    %2905 = vmatpush1.bf16.xpose.msra.mxu0 0
    %2906 = vmatprep.subr.bf16.mxu0 0
    %2907 = vmatpush1.bf16.xpose.msra.mxu0 0
    %2908 = vmatprep.subr.bf16.mxu0 0
    %2909 = vmatpush1.bf16.xpose.msra.mxu0 0
    %2910 = vmatprep.subr.bf16.mxu0 0
    %2911 = vmatpush1.bf16.xpose.msra.mxu0 0
    %2912 = vmatprep.subr.bf16.mxu0 0
    %2913 = vmatpush1.bf16.xpose.msra.mxu0 0
    %2914 = vmatprep.mubr.bf16.mxu0 0
    %2915 = vmatmul.mubr.bf16.gmra.mrb[0].mxu0 %v2874
    %v2916 = vpop.f32.mrb[0].mxu0
    %v2917 = vadd.f32 %v2862, %v2916
    %v2918 = vpop.f32.mrb[0].mxu0
    %v2919 = vpop.f32.mrb[0].mxu0
    %v2920 = vadd.f32 %v2862, %v2919
    %v2921 = vpop.f32.mrb[0].mxu0
    %2922 = vdwg.mxu0
    %v2923 = vadd.f32 %v2777, %v2917
    %v2924 = vadd.f32 %v2778, %v2920
    %v2925 = vsel %vm139, %v2923, 0.0
    %2926 = vadd.xlane.f32.xlu0 %v2925
    %v2927 = vpop.xlane.xlu0 %2926
    %v2928 = vsel %vm139, %v2924, 0.0
    %2929 = vadd.xlane.f32.xlu0 %v2928
    %v2930 = vpop.xlane.xlu0 %2929
    %v2931 = vmul.f32 %v2927, %v1317
    %v2932 = vmul.f32 %v2930, %v1317
    %v2933 = vsub.f32 %v2923, %v2931
    %v2934 = vsub.f32 %v2924, %v2932
    %v2935 = vmul.f32 %v2933, %v2933
    %v2936 = vmul.f32 %v2934, %v2934
    %v2937 = vsel %vm139, %v2935, 0.0
    %2938 = vadd.xlane.f32.xlu0 %v2937
    %v2939 = vpop.xlane.xlu0 %2938
    %v2940 = vsel %vm139, %v2936, 0.0
    %2941 = vadd.xlane.f32.xlu0 %v2940
    %v2942 = vpop.xlane.xlu0 %2941
    %v2943 = vmul.f32 %v2939, %v1317
    %v2944 = vmul.f32 %v2942, %v1317
    %v2945 = vadd.f32 %v2943, 1e-05
    %v2946 = vadd.f32 %v2944, 1e-05
    %v2947 = vrsqrt.pop %v2945
    %v2948 = vrsqrt.pop %v2946
    %v2949 = vmul.f32 %v2933, %v2947
    %v2950 = vmul.f32 %v2934, %v2948
    %v2951 = vlaneseq
    %v2952 = vshrl.u32 %v2951, 7
    %v2953 = vsub.s32 0, %v2952
    %v2954 = vrot.slane %v2791, %v2953
    %v2955 = vmul.f32 %v2949, %v2954
    %v2956 = vmul.f32 %v2950, %v2954
    %v2957 = vlaneseq
    %v2958 = vshrl.u32 %v2957, 7
    %v2959 = vsub.s32 0, %v2958
    %v2960 = vrot.slane %v2792, %v2959
    %v2961 = vadd.f32 %v2955, %v2960
    %v2962 = vadd.f32 %v2956, %v2960
    %v2963 = vld [vmem:[#allocation5] sm:$0xff]
    %v2964 = vld [vmem:[#allocation5 + $0x8] sm:$0xff]
    %v2965 = vld [vmem:[#allocation8] sm:$0xf]
    %v2966 = vld [vmem:[#allocation8 + $0x4] sm:$0xf]
    %v2967 = vld [vmem:[#allocation8 + $0x8] sm:$0xf]
    %v2968 = vld [vmem:[#allocation8 + $0xc] sm:$0xf]
    %v2969 = vld [vmem:[#allocation8 + $0x10] sm:$0xf]
    %v2970 = vld [vmem:[#allocation8 + $0x14] sm:$0xf]
    %v2971 = vld [vmem:[#allocation8 + $0x18] sm:$0xf]
    %v2972 = vld [vmem:[#allocation8 + $0x1c] sm:$0xf]
    %v2973 = vld [vmem:[#allocation8 + $0x20] sm:$0xf]
    %v2974 = vld [vmem:[#allocation8 + $0x24] sm:$0xf]
    %v2975 = vld [vmem:[#allocation8 + $0x28] sm:$0xf]
    %v2976 = vld [vmem:[#allocation8 + $0x2c] sm:$0xf]
    %v2977 = vld [vmem:[#allocation8 + $0x30] sm:$0xf]
    %v2978 = vld [vmem:[#allocation8 + $0x34] sm:$0xf]
    %v2979 = vld [vmem:[#allocation8 + $0x38] sm:$0xf]
    %v2980 = vld [vmem:[#allocation8 + $0x3c] sm:$0xf]
    %v2981 = vld [vmem:[%s8] sm:$0x1]
    %v2982 = vld [vmem:[%s8 + $0x1] sm:$0x1]
    %v2983 = vld [vmem:[%s8 + $0x2] sm:$0x1]
    %v2984 = vld [vmem:[%s8 + $0x3] sm:$0x1]
    %v2985 = vld [vmem:[%s8 + $0x4] sm:$0x1]
    %v2986 = vld [vmem:[%s8 + $0x5] sm:$0x1]
    %v2987 = vpack.c.bf16 %v2964, %v2963
    %v2988 = vlaneseq
    %v2989 = vshrl.u32 %v2988, 7
    %v2990 = vsub.s32 0, %v2989
    %v2991 = vrot.slane %v2981, %v2990
    %v2996 = vunpack.c.l.b16 %v2965
    %v2997 = vunpack.c.l.b16 %v2966
    %v2998 = vunpack.c.l.b16 %v2967
    %v2999 = vunpack.c.l.b16 %v2968
    %v3000 = vpack.c.b16 %v2997, %v2996
    %v3001 = vpack.c.b16 %v2999, %v2998
    %v3005 = vsel %vm139, %v2987, 0
    %3007 = vmatprep.subr.bf16.mxu0 0
    %3008 = vmatpush1.bf16.msra.mxu0 %v3000
    %3009 = vmatprep.subr.bf16.mxu0 0
    %3010 = vmatpush1.bf16.msra.mxu0 %v3001
    %3011 = vmatprep.subr.bf16.mxu0 0
    %3012 = vmatpush1.bf16.msra.mxu0 0
    %3013 = vmatprep.subr.bf16.mxu0 0
    %3014 = vmatpush1.bf16.msra.mxu0 0
    %3015 = vmatprep.subr.bf16.mxu0 0
    %3016 = vmatpush1.bf16.msra.mxu0 0
    %3017 = vmatprep.subr.bf16.mxu0 0
    %3018 = vmatpush1.bf16.msra.mxu0 0
    %3019 = vmatprep.subr.bf16.mxu0 0
    %3020 = vmatpush1.bf16.msra.mxu0 0
    %3021 = vmatprep.subr.bf16.mxu0 0
    %3022 = vmatpush1.bf16.msra.mxu0 0
    %3023 = vmatprep.subr.bf16.mxu0 0
    %3024 = vmatpush1.bf16.msra.mxu0 0
    %3025 = vmatprep.subr.bf16.mxu0 0
    %3026 = vmatpush1.bf16.msra.mxu0 0
    %3027 = vmatprep.subr.bf16.mxu0 0
    %3028 = vmatpush1.bf16.msra.mxu0 0
    %3029 = vmatprep.subr.bf16.mxu0 0
    %3030 = vmatpush1.bf16.msra.mxu0 0
    %3031 = vmatprep.subr.bf16.mxu0 0
    %3032 = vmatpush1.bf16.msra.mxu0 0
    %3033 = vmatprep.subr.bf16.mxu0 0
    %3034 = vmatpush1.bf16.msra.mxu0 0
    %3035 = vmatprep.subr.bf16.mxu0 0
    %3036 = vmatpush1.bf16.msra.mxu0 0
    %3037 = vmatprep.subr.bf16.mxu0 0
    %3038 = vmatpush1.bf16.msra.mxu0 0
    %3039 = vmatprep.mubr.bf16.mxu0 0
    %3040 = vmatmul.mubr.bf16.gmra.mrb[0].mxu0 %v3005
    %v3041 = vpop.f32.mrb[0].mxu0
    %v3042 = vadd.f32 %v2991, %v3041
    %v3043 = vpop.f32.mrb[0].mxu0
    %v3044 = vpop.f32.mrb[0].mxu0
    %v3045 = vadd.f32 %v2991, %v3044
    %v3046 = vpop.f32.mrb[0].mxu0
    %3047 = vdwg.mxu0
    %v3048 = vlaneseq
    %v3049 = vshrl.u32 %v3048, 7
    %v3050 = vsub.s32 0, %v3049
    %v3051 = vrot.slane %v2982, %v3050
    %v3056 = vunpack.c.l.b16 %v2969
    %v3057 = vunpack.c.l.b16 %v2970
    %v3058 = vunpack.c.l.b16 %v2971
    %v3059 = vunpack.c.l.b16 %v2972
    %v3060 = vpack.c.b16 %v3057, %v3056
    %v3061 = vpack.c.b16 %v3059, %v3058
    %3064 = vmatprep.subr.bf16.mxu0 0
    %3065 = vmatpush1.bf16.msra.mxu0 %v3060
    %3066 = vmatprep.subr.bf16.mxu0 0
    %3067 = vmatpush1.bf16.msra.mxu0 %v3061
    %3068 = vmatprep.subr.bf16.mxu0 0
    %3069 = vmatpush1.bf16.msra.mxu0 0
    %3070 = vmatprep.subr.bf16.mxu0 0
    %3071 = vmatpush1.bf16.msra.mxu0 0
    %3072 = vmatprep.subr.bf16.mxu0 0
    %3073 = vmatpush1.bf16.msra.mxu0 0
    %3074 = vmatprep.subr.bf16.mxu0 0
    %3075 = vmatpush1.bf16.msra.mxu0 0
    %3076 = vmatprep.subr.bf16.mxu0 0
    %3077 = vmatpush1.bf16.msra.mxu0 0
    %3078 = vmatprep.subr.bf16.mxu0 0
    %3079 = vmatpush1.bf16.msra.mxu0 0
    %3080 = vmatprep.subr.bf16.mxu0 0
    %3081 = vmatpush1.bf16.msra.mxu0 0
    %3082 = vmatprep.subr.bf16.mxu0 0
    %3083 = vmatpush1.bf16.msra.mxu0 0
    %3084 = vmatprep.subr.bf16.mxu0 0
    %3085 = vmatpush1.bf16.msra.mxu0 0
    %3086 = vmatprep.subr.bf16.mxu0 0
    %3087 = vmatpush1.bf16.msra.mxu0 0
    %3088 = vmatprep.subr.bf16.mxu0 0
    %3089 = vmatpush1.bf16.msra.mxu0 0
    %3090 = vmatprep.subr.bf16.mxu0 0
    %3091 = vmatpush1.bf16.msra.mxu0 0
    %3092 = vmatprep.subr.bf16.mxu0 0
    %3093 = vmatpush1.bf16.msra.mxu0 0
    %3094 = vmatprep.subr.bf16.mxu0 0
    %3095 = vmatpush1.bf16.msra.mxu0 0
    %3096 = vmatprep.mubr.bf16.mxu0 0
    %3097 = vmatmul.mubr.bf16.gmra.mrb[0].mxu0 %v3005
    %v3098 = vpop.f32.mrb[0].mxu0
    %v3099 = vadd.f32 %v3051, %v3098
    %v3100 = vpop.f32.mrb[0].mxu0
    %v3101 = vpop.f32.mrb[0].mxu0
    %v3102 = vadd.f32 %v3051, %v3101
    %v3103 = vpop.f32.mrb[0].mxu0
    %3104 = vdwg.mxu0
    %v3105 = vlaneseq
    %v3106 = vshrl.u32 %v3105, 7
    %v3107 = vsub.s32 0, %v3106
    %v3108 = vrot.slane %v2983, %v3107
    %v3113 = vunpack.c.l.b16 %v2973
    %v3114 = vunpack.c.l.b16 %v2974
    %v3115 = vunpack.c.l.b16 %v2975
    %v3116 = vunpack.c.l.b16 %v2976
    %v3117 = vpack.c.b16 %v3114, %v3113
    %v3118 = vpack.c.b16 %v3116, %v3115
    %3121 = vmatprep.subr.bf16.mxu0 0
    %3122 = vmatpush1.bf16.msra.mxu0 %v3117
    %3123 = vmatprep.subr.bf16.mxu0 0
    %3124 = vmatpush1.bf16.msra.mxu0 %v3118
    %3125 = vmatprep.subr.bf16.mxu0 0
    %3126 = vmatpush1.bf16.msra.mxu0 0
    %3127 = vmatprep.subr.bf16.mxu0 0
    %3128 = vmatpush1.bf16.msra.mxu0 0
    %3129 = vmatprep.subr.bf16.mxu0 0
    %3130 = vmatpush1.bf16.msra.mxu0 0
    %3131 = vmatprep.subr.bf16.mxu0 0
    %3132 = vmatpush1.bf16.msra.mxu0 0
    %3133 = vmatprep.subr.bf16.mxu0 0
    %3134 = vmatpush1.bf16.msra.mxu0 0
    %3135 = vmatprep.subr.bf16.mxu0 0
    %3136 = vmatpush1.bf16.msra.mxu0 0
    %3137 = vmatprep.subr.bf16.mxu0 0
    %3138 = vmatpush1.bf16.msra.mxu0 0
    %3139 = vmatprep.subr.bf16.mxu0 0
    %3140 = vmatpush1.bf16.msra.mxu0 0
    %3141 = vmatprep.subr.bf16.mxu0 0
    %3142 = vmatpush1.bf16.msra.mxu0 0
    %3143 = vmatprep.subr.bf16.mxu0 0
    %3144 = vmatpush1.bf16.msra.mxu0 0
    %3145 = vmatprep.subr.bf16.mxu0 0
    %3146 = vmatpush1.bf16.msra.mxu0 0
    %3147 = vmatprep.subr.bf16.mxu0 0
    %3148 = vmatpush1.bf16.msra.mxu0 0
    %3149 = vmatprep.subr.bf16.mxu0 0
    %3150 = vmatpush1.bf16.msra.mxu0 0
    %3151 = vmatprep.subr.bf16.mxu0 0
    %3152 = vmatpush1.bf16.msra.mxu0 0
    %3153 = vmatprep.mubr.bf16.mxu0 0
    %3154 = vmatmul.mubr.bf16.gmra.mrb[0].mxu0 %v3005
    %v3155 = vpop.f32.mrb[0].mxu0
    %v3156 = vadd.f32 %v3108, %v3155
    %v3157 = vpop.f32.mrb[0].mxu0
    %v3158 = vpop.f32.mrb[0].mxu0
    %v3159 = vadd.f32 %v3108, %v3158
    %v3160 = vpop.f32.mrb[0].mxu0
    %3161 = vdwg.mxu0
    %3163 = vrot.lane.b32.xlu0 %v3042, 120
    %v3164 = vpop.permute.xlu0 %3163
    %3166 = vrot.lane.b32.xlu0 %v3042, 112
    %v3167 = vpop.permute.xlu0 %3166
    %3169 = vrot.lane.b32.xlu0 %v3042, 104
    %v3170 = vpop.permute.xlu0 %3169
    %3173 = vrot.lane.b32.xlu0 %v3045, 120
    %v3174 = vpop.permute.xlu0 %3173
    %3176 = vrot.lane.b32.xlu0 %v3045, 112
    %v3177 = vpop.permute.xlu0 %3176
    %3179 = vrot.lane.b32.xlu0 %v3045, 104
    %v3180 = vpop.permute.xlu0 %3179
    %3183 = vrot.lane.b32.xlu0 %v3099, 120
    %v3184 = vpop.permute.xlu0 %3183
    %3186 = vrot.lane.b32.xlu0 %v3099, 112
    %v3187 = vpop.permute.xlu0 %3186
    %3189 = vrot.lane.b32.xlu0 %v3099, 104
    %v3190 = vpop.permute.xlu0 %3189
    %3193 = vrot.lane.b32.xlu0 %v3102, 120
    %v3194 = vpop.permute.xlu0 %3193
    %3196 = vrot.lane.b32.xlu0 %v3102, 112
    %v3197 = vpop.permute.xlu0 %3196
    %3199 = vrot.lane.b32.xlu0 %v3102, 104
    %v3200 = vpop.permute.xlu0 %3199
    %3203 = vrot.lane.b32.xlu0 %v3156, 120
    %v3204 = vpop.permute.xlu0 %3203
    %3206 = vrot.lane.b32.xlu0 %v3156, 112
    %v3207 = vpop.permute.xlu0 %3206
    %3209 = vrot.lane.b32.xlu0 %v3156, 104
    %v3210 = vpop.permute.xlu0 %3209
    %3213 = vrot.lane.b32.xlu0 %v3159, 120
    %v3214 = vpop.permute.xlu0 %3213
    %3216 = vrot.lane.b32.xlu0 %v3159, 112
    %v3217 = vpop.permute.xlu0 %3216
    %3219 = vrot.lane.b32.xlu0 %v3159, 104
    %v3220 = vpop.permute.xlu0 %3219
    %v3222 = vpack.c.bf16 %v3042, %v3042
    %v3223 = vpack.c.bf16 %v3164, %v3164
    %v3224 = vpack.c.bf16 %v3167, %v3167
    %v3225 = vpack.c.bf16 %v3170, %v3170
    %v3226 = vpack.c.bf16 %v3045, %v3045
    %v3227 = vpack.c.bf16 %v3174, %v3174
    %v3228 = vpack.c.bf16 %v3177, %v3177
    %v3229 = vpack.c.bf16 %v3180, %v3180
    %v3230 = vpack.c.bf16 %v3099, %v3099
    %v3231 = vpack.c.bf16 %v3184, %v3184
    %v3232 = vpack.c.bf16 %v3187, %v3187
    %v3233 = vpack.c.bf16 %v3190, %v3190
    %v3234 = vpack.c.bf16 %v3102, %v3102
    %v3235 = vpack.c.bf16 %v3194, %v3194
    %v3236 = vpack.c.bf16 %v3197, %v3197
    %v3237 = vpack.c.bf16 %v3200, %v3200
    %v3239 = vsel %vm374, %v3222, 0
    %v3242 = vsel %vm374, %v3230, 0
    %3244 = vmatprep.subr.bf16.mxu0 0
    %3245 = vmatpush1.bf16.xpose.msra.mxu0 %v3242
    %3246 = vmatprep.subr.bf16.mxu0 0
    %3247 = vmatpush1.bf16.xpose.msra.mxu0 0
    %3248 = vmatprep.subr.bf16.mxu0 0
    %3249 = vmatpush1.bf16.xpose.msra.mxu0 0
    %3250 = vmatprep.subr.bf16.mxu0 0
    %3251 = vmatpush1.bf16.xpose.msra.mxu0 0
    %3252 = vmatprep.subr.bf16.mxu0 0
    %3253 = vmatpush1.bf16.xpose.msra.mxu0 0
    %3254 = vmatprep.subr.bf16.mxu0 0
    %3255 = vmatpush1.bf16.xpose.msra.mxu0 0
    %3256 = vmatprep.subr.bf16.mxu0 0
    %3257 = vmatpush1.bf16.xpose.msra.mxu0 0
    %3258 = vmatprep.subr.bf16.mxu0 0
    %3259 = vmatpush1.bf16.xpose.msra.mxu0 0
    %3260 = vmatprep.subr.bf16.mxu0 0
    %3261 = vmatpush1.bf16.xpose.msra.mxu0 0
    %3262 = vmatprep.subr.bf16.mxu0 0
    %3263 = vmatpush1.bf16.xpose.msra.mxu0 0
    %3264 = vmatprep.subr.bf16.mxu0 0
    %3265 = vmatpush1.bf16.xpose.msra.mxu0 0
    %3266 = vmatprep.subr.bf16.mxu0 0
    %3267 = vmatpush1.bf16.xpose.msra.mxu0 0
    %3268 = vmatprep.subr.bf16.mxu0 0
    %3269 = vmatpush1.bf16.xpose.msra.mxu0 0
    %3270 = vmatprep.subr.bf16.mxu0 0
    %3271 = vmatpush1.bf16.xpose.msra.mxu0 0
    %3272 = vmatprep.subr.bf16.mxu0 0
    %3273 = vmatpush1.bf16.xpose.msra.mxu0 0
    %3274 = vmatprep.subr.bf16.mxu0 0
    %3275 = vmatpush1.bf16.xpose.msra.mxu0 0
    %3276 = vmatprep.mubr.bf16.mxu0 0
    %3277 = vmatmul.mubr.bf16.gmra.mrb[0].mxu0 %v3239
    %v3278 = vpop.f32.mrb[0].mxu0
    %v3279 = vadd.f32 %v97, %v3278
    %v3280 = vpop.f32.mrb[0].mxu0
    %v3281 = vpop.f32.mrb[0].mxu0
    %v3282 = vpop.f32.mrb[0].mxu0
    %3283 = vdwg.mxu0
    %v3285 = vsel %vm374, %v3223, 0
    %v3288 = vsel %vm374, %v3231, 0
    %3290 = vmatprep.subr.bf16.mxu0 0
    %3291 = vmatpush1.bf16.xpose.msra.mxu0 %v3288
    %3292 = vmatprep.subr.bf16.mxu0 0
    %3293 = vmatpush1.bf16.xpose.msra.mxu0 0
    %3294 = vmatprep.subr.bf16.mxu0 0
    %3295 = vmatpush1.bf16.xpose.msra.mxu0 0
    %3296 = vmatprep.subr.bf16.mxu0 0
    %3297 = vmatpush1.bf16.xpose.msra.mxu0 0
    %3298 = vmatprep.subr.bf16.mxu0 0
    %3299 = vmatpush1.bf16.xpose.msra.mxu0 0
    %3300 = vmatprep.subr.bf16.mxu0 0
    %3301 = vmatpush1.bf16.xpose.msra.mxu0 0
    %3302 = vmatprep.subr.bf16.mxu0 0
    %3303 = vmatpush1.bf16.xpose.msra.mxu0 0
    %3304 = vmatprep.subr.bf16.mxu0 0
    %3305 = vmatpush1.bf16.xpose.msra.mxu0 0
    %3306 = vmatprep.subr.bf16.mxu0 0
    %3307 = vmatpush1.bf16.xpose.msra.mxu0 0
    %3308 = vmatprep.subr.bf16.mxu0 0
    %3309 = vmatpush1.bf16.xpose.msra.mxu0 0
    %3310 = vmatprep.subr.bf16.mxu0 0
    %3311 = vmatpush1.bf16.xpose.msra.mxu0 0
    %3312 = vmatprep.subr.bf16.mxu0 0
    %3313 = vmatpush1.bf16.xpose.msra.mxu0 0
    %3314 = vmatprep.subr.bf16.mxu0 0
    %3315 = vmatpush1.bf16.xpose.msra.mxu0 0
    %3316 = vmatprep.subr.bf16.mxu0 0
    %3317 = vmatpush1.bf16.xpose.msra.mxu0 0
    %3318 = vmatprep.subr.bf16.mxu0 0
    %3319 = vmatpush1.bf16.xpose.msra.mxu0 0
    %3320 = vmatprep.subr.bf16.mxu0 0
    %3321 = vmatpush1.bf16.xpose.msra.mxu0 0
    %3322 = vmatprep.mubr.bf16.mxu0 0
    %3323 = vmatmul.mubr.bf16.gmra.mrb[0].mxu0 %v3285
    %v3324 = vpop.f32.mrb[0].mxu0
    %v3325 = vadd.f32 %v97, %v3324
    %v3326 = vpop.f32.mrb[0].mxu0
    %v3327 = vpop.f32.mrb[0].mxu0
    %v3328 = vpop.f32.mrb[0].mxu0
    %3329 = vdwg.mxu0
    %v3331 = vsel %vm374, %v3224, 0
    %v3334 = vsel %vm374, %v3232, 0
    %3336 = vmatprep.subr.bf16.mxu0 0
    %3337 = vmatpush1.bf16.xpose.msra.mxu0 %v3334
    %3338 = vmatprep.subr.bf16.mxu0 0
    %3339 = vmatpush1.bf16.xpose.msra.mxu0 0
    %3340 = vmatprep.subr.bf16.mxu0 0
    %3341 = vmatpush1.bf16.xpose.msra.mxu0 0
    %3342 = vmatprep.subr.bf16.mxu0 0
    %3343 = vmatpush1.bf16.xpose.msra.mxu0 0
    %3344 = vmatprep.subr.bf16.mxu0 0
    %3345 = vmatpush1.bf16.xpose.msra.mxu0 0
    %3346 = vmatprep.subr.bf16.mxu0 0
    %3347 = vmatpush1.bf16.xpose.msra.mxu0 0
    %3348 = vmatprep.subr.bf16.mxu0 0
    %3349 = vmatpush1.bf16.xpose.msra.mxu0 0
    %3350 = vmatprep.subr.bf16.mxu0 0
    %3351 = vmatpush1.bf16.xpose.msra.mxu0 0
    %3352 = vmatprep.subr.bf16.mxu0 0
    %3353 = vmatpush1.bf16.xpose.msra.mxu0 0
    %3354 = vmatprep.subr.bf16.mxu0 0
    %3355 = vmatpush1.bf16.xpose.msra.mxu0 0
    %3356 = vmatprep.subr.bf16.mxu0 0
    %3357 = vmatpush1.bf16.xpose.msra.mxu0 0
    %3358 = vmatprep.subr.bf16.mxu0 0
    %3359 = vmatpush1.bf16.xpose.msra.mxu0 0
    %3360 = vmatprep.subr.bf16.mxu0 0
    %3361 = vmatpush1.bf16.xpose.msra.mxu0 0
    %3362 = vmatprep.subr.bf16.mxu0 0
    %3363 = vmatpush1.bf16.xpose.msra.mxu0 0
    %3364 = vmatprep.subr.bf16.mxu0 0
    %3365 = vmatpush1.bf16.xpose.msra.mxu0 0
    %3366 = vmatprep.subr.bf16.mxu0 0
    %3367 = vmatpush1.bf16.xpose.msra.mxu0 0
    %3368 = vmatprep.mubr.bf16.mxu0 0
    %3369 = vmatmul.mubr.bf16.gmra.mrb[0].mxu0 %v3331
    %v3370 = vpop.f32.mrb[0].mxu0
    %v3371 = vadd.f32 %v97, %v3370
    %v3372 = vpop.f32.mrb[0].mxu0
    %v3373 = vpop.f32.mrb[0].mxu0
    %v3374 = vpop.f32.mrb[0].mxu0
    %3375 = vdwg.mxu0
    %v3377 = vsel %vm374, %v3225, 0
    %v3380 = vsel %vm374, %v3233, 0
    %3382 = vmatprep.subr.bf16.mxu0 0
    %3383 = vmatpush1.bf16.xpose.msra.mxu0 %v3380
    %3384 = vmatprep.subr.bf16.mxu0 0
    %3385 = vmatpush1.bf16.xpose.msra.mxu0 0
    %3386 = vmatprep.subr.bf16.mxu0 0
    %3387 = vmatpush1.bf16.xpose.msra.mxu0 0
    %3388 = vmatprep.subr.bf16.mxu0 0
    %3389 = vmatpush1.bf16.xpose.msra.mxu0 0
    %3390 = vmatprep.subr.bf16.mxu0 0
    %3391 = vmatpush1.bf16.xpose.msra.mxu0 0
    %3392 = vmatprep.subr.bf16.mxu0 0
    %3393 = vmatpush1.bf16.xpose.msra.mxu0 0
    %3394 = vmatprep.subr.bf16.mxu0 0
    %3395 = vmatpush1.bf16.xpose.msra.mxu0 0
    %3396 = vmatprep.subr.bf16.mxu0 0
    %3397 = vmatpush1.bf16.xpose.msra.mxu0 0
    %3398 = vmatprep.subr.bf16.mxu0 0
    %3399 = vmatpush1.bf16.xpose.msra.mxu0 0
    %3400 = vmatprep.subr.bf16.mxu0 0
    %3401 = vmatpush1.bf16.xpose.msra.mxu0 0
    %3402 = vmatprep.subr.bf16.mxu0 0
    %3403 = vmatpush1.bf16.xpose.msra.mxu0 0
    %3404 = vmatprep.subr.bf16.mxu0 0
    %3405 = vmatpush1.bf16.xpose.msra.mxu0 0
    %3406 = vmatprep.subr.bf16.mxu0 0
    %3407 = vmatpush1.bf16.xpose.msra.mxu0 0
    %3408 = vmatprep.subr.bf16.mxu0 0
    %3409 = vmatpush1.bf16.xpose.msra.mxu0 0
    %3410 = vmatprep.subr.bf16.mxu0 0
    %3411 = vmatpush1.bf16.xpose.msra.mxu0 0
    %3412 = vmatprep.subr.bf16.mxu0 0
    %3413 = vmatpush1.bf16.xpose.msra.mxu0 0
    %3414 = vmatprep.mubr.bf16.mxu0 0
    %3415 = vmatmul.mubr.bf16.gmra.mrb[0].mxu0 %v3377
    %v3416 = vpop.f32.mrb[0].mxu0
    %v3417 = vadd.f32 %v97, %v3416
    %v3418 = vpop.f32.mrb[0].mxu0
    %v3419 = vpop.f32.mrb[0].mxu0
    %v3420 = vpop.f32.mrb[0].mxu0
    %3421 = vdwg.mxu0
    %v3423 = vsel %vm374, %v3226, 0
    %v3426 = vsel %vm374, %v3234, 0
    %3428 = vmatprep.subr.bf16.mxu0 0
    %3429 = vmatpush1.bf16.xpose.msra.mxu0 %v3426
    %3430 = vmatprep.subr.bf16.mxu0 0
    %3431 = vmatpush1.bf16.xpose.msra.mxu0 0
    %3432 = vmatprep.subr.bf16.mxu0 0
    %3433 = vmatpush1.bf16.xpose.msra.mxu0 0
    %3434 = vmatprep.subr.bf16.mxu0 0
    %3435 = vmatpush1.bf16.xpose.msra.mxu0 0
    %3436 = vmatprep.subr.bf16.mxu0 0
    %3437 = vmatpush1.bf16.xpose.msra.mxu0 0
    %3438 = vmatprep.subr.bf16.mxu0 0
    %3439 = vmatpush1.bf16.xpose.msra.mxu0 0
    %3440 = vmatprep.subr.bf16.mxu0 0
    %3441 = vmatpush1.bf16.xpose.msra.mxu0 0
    %3442 = vmatprep.subr.bf16.mxu0 0
    %3443 = vmatpush1.bf16.xpose.msra.mxu0 0
    %3444 = vmatprep.subr.bf16.mxu0 0
    %3445 = vmatpush1.bf16.xpose.msra.mxu0 0
    %3446 = vmatprep.subr.bf16.mxu0 0
    %3447 = vmatpush1.bf16.xpose.msra.mxu0 0
    %3448 = vmatprep.subr.bf16.mxu0 0
    %3449 = vmatpush1.bf16.xpose.msra.mxu0 0
    %3450 = vmatprep.subr.bf16.mxu0 0
    %3451 = vmatpush1.bf16.xpose.msra.mxu0 0
    %3452 = vmatprep.subr.bf16.mxu0 0
    %3453 = vmatpush1.bf16.xpose.msra.mxu0 0
    %3454 = vmatprep.subr.bf16.mxu0 0
    %3455 = vmatpush1.bf16.xpose.msra.mxu0 0
    %3456 = vmatprep.subr.bf16.mxu0 0
    %3457 = vmatpush1.bf16.xpose.msra.mxu0 0
    %3458 = vmatprep.subr.bf16.mxu0 0
    %3459 = vmatpush1.bf16.xpose.msra.mxu0 0
    %3460 = vmatprep.mubr.bf16.mxu0 0
    %3461 = vmatmul.mubr.bf16.gmra.mrb[0].mxu0 %v3423
    %v3462 = vpop.f32.mrb[0].mxu0
    %v3463 = vadd.f32 %v97, %v3462
    %v3464 = vpop.f32.mrb[0].mxu0
    %v3465 = vpop.f32.mrb[0].mxu0
    %v3466 = vpop.f32.mrb[0].mxu0
    %3467 = vdwg.mxu0
    %v3469 = vsel %vm374, %v3227, 0
    %v3472 = vsel %vm374, %v3235, 0
    %3474 = vmatprep.subr.bf16.mxu0 0
    %3475 = vmatpush1.bf16.xpose.msra.mxu0 %v3472
    %3476 = vmatprep.subr.bf16.mxu0 0
    %3477 = vmatpush1.bf16.xpose.msra.mxu0 0
    %3478 = vmatprep.subr.bf16.mxu0 0
    %3479 = vmatpush1.bf16.xpose.msra.mxu0 0
    %3480 = vmatprep.subr.bf16.mxu0 0
    %3481 = vmatpush1.bf16.xpose.msra.mxu0 0
    %3482 = vmatprep.subr.bf16.mxu0 0
    %3483 = vmatpush1.bf16.xpose.msra.mxu0 0
    %3484 = vmatprep.subr.bf16.mxu0 0
    %3485 = vmatpush1.bf16.xpose.msra.mxu0 0
    %3486 = vmatprep.subr.bf16.mxu0 0
    %3487 = vmatpush1.bf16.xpose.msra.mxu0 0
    %3488 = vmatprep.subr.bf16.mxu0 0
    %3489 = vmatpush1.bf16.xpose.msra.mxu0 0
    %3490 = vmatprep.subr.bf16.mxu0 0
    %3491 = vmatpush1.bf16.xpose.msra.mxu0 0
    %3492 = vmatprep.subr.bf16.mxu0 0
    %3493 = vmatpush1.bf16.xpose.msra.mxu0 0
    %3494 = vmatprep.subr.bf16.mxu0 0
    %3495 = vmatpush1.bf16.xpose.msra.mxu0 0
    %3496 = vmatprep.subr.bf16.mxu0 0
    %3497 = vmatpush1.bf16.xpose.msra.mxu0 0
    %3498 = vmatprep.subr.bf16.mxu0 0
    %3499 = vmatpush1.bf16.xpose.msra.mxu0 0
    %3500 = vmatprep.subr.bf16.mxu0 0
    %3501 = vmatpush1.bf16.xpose.msra.mxu0 0
    %3502 = vmatprep.subr.bf16.mxu0 0
    %3503 = vmatpush1.bf16.xpose.msra.mxu0 0
    %3504 = vmatprep.subr.bf16.mxu0 0
    %3505 = vmatpush1.bf16.xpose.msra.mxu0 0
    %3506 = vmatprep.mubr.bf16.mxu0 0
    %3507 = vmatmul.mubr.bf16.gmra.mrb[0].mxu0 %v3469
    %v3508 = vpop.f32.mrb[0].mxu0
    %v3509 = vadd.f32 %v97, %v3508
    %v3510 = vpop.f32.mrb[0].mxu0
    %v3511 = vpop.f32.mrb[0].mxu0
    %v3512 = vpop.f32.mrb[0].mxu0
    %3513 = vdwg.mxu0
    %v3515 = vsel %vm374, %v3228, 0
    %v3518 = vsel %vm374, %v3236, 0
    %3520 = vmatprep.subr.bf16.mxu0 0
    %3521 = vmatpush1.bf16.xpose.msra.mxu0 %v3518
    %3522 = vmatprep.subr.bf16.mxu0 0
    %3523 = vmatpush1.bf16.xpose.msra.mxu0 0
    %3524 = vmatprep.subr.bf16.mxu0 0
    %3525 = vmatpush1.bf16.xpose.msra.mxu0 0
    %3526 = vmatprep.subr.bf16.mxu0 0
    %3527 = vmatpush1.bf16.xpose.msra.mxu0 0
    %3528 = vmatprep.subr.bf16.mxu0 0
    %3529 = vmatpush1.bf16.xpose.msra.mxu0 0
    %3530 = vmatprep.subr.bf16.mxu0 0
    %3531 = vmatpush1.bf16.xpose.msra.mxu0 0
    %3532 = vmatprep.subr.bf16.mxu0 0
    %3533 = vmatpush1.bf16.xpose.msra.mxu0 0
    %3534 = vmatprep.subr.bf16.mxu0 0
    %3535 = vmatpush1.bf16.xpose.msra.mxu0 0
    %3536 = vmatprep.subr.bf16.mxu0 0
    %3537 = vmatpush1.bf16.xpose.msra.mxu0 0
    %3538 = vmatprep.subr.bf16.mxu0 0
    %3539 = vmatpush1.bf16.xpose.msra.mxu0 0
    %3540 = vmatprep.subr.bf16.mxu0 0
    %3541 = vmatpush1.bf16.xpose.msra.mxu0 0
    %3542 = vmatprep.subr.bf16.mxu0 0
    %3543 = vmatpush1.bf16.xpose.msra.mxu0 0
    %3544 = vmatprep.subr.bf16.mxu0 0
    %3545 = vmatpush1.bf16.xpose.msra.mxu0 0
    %3546 = vmatprep.subr.bf16.mxu0 0
    %3547 = vmatpush1.bf16.xpose.msra.mxu0 0
    %3548 = vmatprep.subr.bf16.mxu0 0
    %3549 = vmatpush1.bf16.xpose.msra.mxu0 0
    %3550 = vmatprep.subr.bf16.mxu0 0
    %3551 = vmatpush1.bf16.xpose.msra.mxu0 0
    %3552 = vmatprep.mubr.bf16.mxu0 0
    %3553 = vmatmul.mubr.bf16.gmra.mrb[0].mxu0 %v3515
    %v3554 = vpop.f32.mrb[0].mxu0
    %v3555 = vadd.f32 %v97, %v3554
    %v3556 = vpop.f32.mrb[0].mxu0
    %v3557 = vpop.f32.mrb[0].mxu0
    %v3558 = vpop.f32.mrb[0].mxu0
    %3559 = vdwg.mxu0
    %v3561 = vsel %vm374, %v3229, 0
    %v3564 = vsel %vm374, %v3237, 0
    %3566 = vmatprep.subr.bf16.mxu0 0
    %3567 = vmatpush1.bf16.xpose.msra.mxu0 %v3564
    %3568 = vmatprep.subr.bf16.mxu0 0
    %3569 = vmatpush1.bf16.xpose.msra.mxu0 0
    %3570 = vmatprep.subr.bf16.mxu0 0
    %3571 = vmatpush1.bf16.xpose.msra.mxu0 0
    %3572 = vmatprep.subr.bf16.mxu0 0
    %3573 = vmatpush1.bf16.xpose.msra.mxu0 0
    %3574 = vmatprep.subr.bf16.mxu0 0
    %3575 = vmatpush1.bf16.xpose.msra.mxu0 0
    %3576 = vmatprep.subr.bf16.mxu0 0
    %3577 = vmatpush1.bf16.xpose.msra.mxu0 0
    %3578 = vmatprep.subr.bf16.mxu0 0
    %3579 = vmatpush1.bf16.xpose.msra.mxu0 0
    %3580 = vmatprep.subr.bf16.mxu0 0
    %3581 = vmatpush1.bf16.xpose.msra.mxu0 0
    %3582 = vmatprep.subr.bf16.mxu0 0
    %3583 = vmatpush1.bf16.xpose.msra.mxu0 0
    %3584 = vmatprep.subr.bf16.mxu0 0
    %3585 = vmatpush1.bf16.xpose.msra.mxu0 0
    %3586 = vmatprep.subr.bf16.mxu0 0
    %3587 = vmatpush1.bf16.xpose.msra.mxu0 0
    %3588 = vmatprep.subr.bf16.mxu0 0
    %3589 = vmatpush1.bf16.xpose.msra.mxu0 0
    %3590 = vmatprep.subr.bf16.mxu0 0
    %3591 = vmatpush1.bf16.xpose.msra.mxu0 0
    %3592 = vmatprep.subr.bf16.mxu0 0
    %3593 = vmatpush1.bf16.xpose.msra.mxu0 0
    %3594 = vmatprep.subr.bf16.mxu0 0
    %3595 = vmatpush1.bf16.xpose.msra.mxu0 0
    %3596 = vmatprep.subr.bf16.mxu0 0
    %3597 = vmatpush1.bf16.xpose.msra.mxu0 0
    %3598 = vmatprep.mubr.bf16.mxu0 0
    %3599 = vmatmul.mubr.bf16.gmra.mrb[0].mxu0 %v3561
    %v3600 = vpop.f32.mrb[0].mxu0
    %v3601 = vadd.f32 %v97, %v3600
    %v3602 = vpop.f32.mrb[0].mxu0
    %v3603 = vpop.f32.mrb[0].mxu0
    %v3604 = vpop.f32.mrb[0].mxu0
    %3605 = vdwg.mxu0
    %v3606 = vsel %vm374, %v3279, -inf
    %3607 = vmax.xlane.f32.xlu0 %v3606
    %v3608 = vpop.xlane.xlu0 %3607
    %v3609 = vsel %vm374, %v3325, -inf
    %3610 = vmax.xlane.f32.xlu0 %v3609
    %v3611 = vpop.xlane.xlu0 %3610
    %v3612 = vsel %vm374, %v3371, -inf
    %3613 = vmax.xlane.f32.xlu0 %v3612
    %v3614 = vpop.xlane.xlu0 %3613
    %v3615 = vsel %vm374, %v3417, -inf
    %3616 = vmax.xlane.f32.xlu0 %v3615
    %v3617 = vpop.xlane.xlu0 %3616
    %v3618 = vsel %vm374, %v3463, -inf
    %3619 = vmax.xlane.f32.xlu0 %v3618
    %v3620 = vpop.xlane.xlu0 %3619
    %v3621 = vsel %vm374, %v3509, -inf
    %3622 = vmax.xlane.f32.xlu0 %v3621
    %v3623 = vpop.xlane.xlu0 %3622
    %v3624 = vsel %vm374, %v3555, -inf
    %3625 = vmax.xlane.f32.xlu0 %v3624
    %v3626 = vpop.xlane.xlu0 %3625
    %v3627 = vsel %vm374, %v3601, -inf
    %3628 = vmax.xlane.f32.xlu0 %v3627
    %v3629 = vpop.xlane.xlu0 %3628
    %v3630 = vsub.f32 %v3279, %v3608
    %v3631 = vsub.f32 %v3325, %v3611
    %v3632 = vsub.f32 %v3371, %v3614
    %v3633 = vsub.f32 %v3417, %v3617
    %v3634 = vsub.f32 %v3463, %v3620
    %v3635 = vsub.f32 %v3509, %v3623
    %v3636 = vsub.f32 %v3555, %v3626
    %v3637 = vsub.f32 %v3601, %v3629
    %v3638 = vmul.f32 %v3630, 1.442695
    %v3639 = vpow.pop %v3638
    %v3640 = vmul.f32 %v3631, 1.442695
    %v3641 = vpow.pop %v3640
    %v3642 = vmul.f32 %v3632, 1.442695
    %v3643 = vpow.pop %v3642
    %v3644 = vmul.f32 %v3633, 1.442695
    %v3645 = vpow.pop %v3644
    %v3646 = vmul.f32 %v3634, 1.442695
    %v3647 = vpow.pop %v3646
    %v3648 = vmul.f32 %v3635, 1.442695
    %v3649 = vpow.pop %v3648
    %v3650 = vmul.f32 %v3636, 1.442695
    %v3651 = vpow.pop %v3650
    %v3652 = vmul.f32 %v3637, 1.442695
    %v3653 = vpow.pop %v3652
    %v3654 = vsel %vm374, %v3639, 0.0
    %3655 = vadd.xlane.f32.xlu0 %v3654
    %v3656 = vpop.xlane.xlu0 %3655
    %v3657 = vsel %vm374, %v3641, 0.0
    %3658 = vadd.xlane.f32.xlu0 %v3657
    %v3659 = vpop.xlane.xlu0 %3658
    %v3660 = vsel %vm374, %v3643, 0.0
    %3661 = vadd.xlane.f32.xlu0 %v3660
    %v3662 = vpop.xlane.xlu0 %3661
    %v3663 = vsel %vm374, %v3645, 0.0
    %3664 = vadd.xlane.f32.xlu0 %v3663
    %v3665 = vpop.xlane.xlu0 %3664
    %v3666 = vsel %vm374, %v3647, 0.0
    %3667 = vadd.xlane.f32.xlu0 %v3666
    %v3668 = vpop.xlane.xlu0 %3667
    %v3669 = vsel %vm374, %v3649, 0.0
    %3670 = vadd.xlane.f32.xlu0 %v3669
    %v3671 = vpop.xlane.xlu0 %3670
    %v3672 = vsel %vm374, %v3651, 0.0
    %3673 = vadd.xlane.f32.xlu0 %v3672
    %v3674 = vpop.xlane.xlu0 %3673
    %v3675 = vsel %vm374, %v3653, 0.0
    %3676 = vadd.xlane.f32.xlu0 %v3675
    %v3677 = vpop.xlane.xlu0 %3676
    %v3678 = vrcp.pop %v3656
    %v3679 = vmul.f32 %v3639, %v3678
    %v3680 = vrcp.pop %v3659
    %v3681 = vmul.f32 %v3641, %v3680
    %v3682 = vrcp.pop %v3662
    %v3683 = vmul.f32 %v3643, %v3682
    %v3684 = vrcp.pop %v3665
    %v3685 = vmul.f32 %v3645, %v3684
    %v3686 = vrcp.pop %v3668
    %v3687 = vmul.f32 %v3647, %v3686
    %v3688 = vrcp.pop %v3671
    %v3689 = vmul.f32 %v3649, %v3688
    %v3690 = vrcp.pop %v3674
    %v3691 = vmul.f32 %v3651, %v3690
    %v3692 = vrcp.pop %v3677
    %v3693 = vmul.f32 %v3653, %v3692
    %v3694 = vpack.c.bf16 %v3679, %v3679
    %v3695 = vpack.c.bf16 %v3681, %v3681
    %v3696 = vpack.c.bf16 %v3683, %v3683
    %v3697 = vpack.c.bf16 %v3685, %v3685
    %v3698 = vpack.c.bf16 %v3687, %v3687
    %v3699 = vpack.c.bf16 %v3689, %v3689
    %v3700 = vpack.c.bf16 %v3691, %v3691
    %v3701 = vpack.c.bf16 %v3693, %v3693
    %v3702 = vpack.c.bf16 %v3156, %v3156
    %v3703 = vpack.c.bf16 %v3204, %v3204
    %v3704 = vpack.c.bf16 %v3207, %v3207
    %v3705 = vpack.c.bf16 %v3210, %v3210
    %v3706 = vpack.c.bf16 %v3159, %v3159
    %v3707 = vpack.c.bf16 %v3214, %v3214
    %v3708 = vpack.c.bf16 %v3217, %v3217
    %v3709 = vpack.c.bf16 %v3220, %v3220
    %v3711 = vsel %vm374, %v3694, 0
    %v3714 = vsel %vm850, %v3702, 0
    %3716 = vmatprep.subr.bf16.mxu0 0
    %3717 = vmatpush1.bf16.msra.mxu0 %v3714
    %3718 = vmatprep.subr.bf16.mxu0 0
    %3719 = vmatpush1.bf16.msra.mxu0 0
    %3720 = vmatprep.subr.bf16.mxu0 0
    %3721 = vmatpush1.bf16.msra.mxu0 0
    %3722 = vmatprep.subr.bf16.mxu0 0
    %3723 = vmatpush1.bf16.msra.mxu0 0
    %3724 = vmatprep.subr.bf16.mxu0 0
    %3725 = vmatpush1.bf16.msra.mxu0 0
    %3726 = vmatprep.subr.bf16.mxu0 0
    %3727 = vmatpush1.bf16.msra.mxu0 0
    %3728 = vmatprep.subr.bf16.mxu0 0
    %3729 = vmatpush1.bf16.msra.mxu0 0
    %3730 = vmatprep.subr.bf16.mxu0 0
    %3731 = vmatpush1.bf16.msra.mxu0 0
    %3732 = vmatprep.subr.bf16.mxu0 0
    %3733 = vmatpush1.bf16.msra.mxu0 0
    %3734 = vmatprep.subr.bf16.mxu0 0
    %3735 = vmatpush1.bf16.msra.mxu0 0
    %3736 = vmatprep.subr.bf16.mxu0 0
    %3737 = vmatpush1.bf16.msra.mxu0 0
    %3738 = vmatprep.subr.bf16.mxu0 0
    %3739 = vmatpush1.bf16.msra.mxu0 0
    %3740 = vmatprep.subr.bf16.mxu0 0
    %3741 = vmatpush1.bf16.msra.mxu0 0
    %3742 = vmatprep.subr.bf16.mxu0 0
    %3743 = vmatpush1.bf16.msra.mxu0 0
    %3744 = vmatprep.subr.bf16.mxu0 0
    %3745 = vmatpush1.bf16.msra.mxu0 0
    %3746 = vmatprep.subr.bf16.mxu0 0
    %3747 = vmatpush1.bf16.msra.mxu0 0
    %3748 = vmatprep.mubr.bf16.mxu0 0
    %3749 = vmatmul.mubr.bf16.gmra.mrb[0].mxu0 %v3711
    %v3750 = vpop.f32.mrb[0].mxu0
    %v3751 = vadd.f32 0.0, %v3750
    %v3752 = vpop.f32.mrb[0].mxu0
    %v3753 = vpop.f32.mrb[0].mxu0
    %v3754 = vpop.f32.mrb[0].mxu0
    %3755 = vdwg.mxu0
    %v3757 = vsel %vm374, %v3695, 0
    %v3760 = vsel %vm850, %v3703, 0
    %3762 = vmatprep.subr.bf16.mxu0 0
    %3763 = vmatpush1.bf16.msra.mxu0 %v3760
    %3764 = vmatprep.subr.bf16.mxu0 0
    %3765 = vmatpush1.bf16.msra.mxu0 0
    %3766 = vmatprep.subr.bf16.mxu0 0
    %3767 = vmatpush1.bf16.msra.mxu0 0
    %3768 = vmatprep.subr.bf16.mxu0 0
    %3769 = vmatpush1.bf16.msra.mxu0 0
    %3770 = vmatprep.subr.bf16.mxu0 0
    %3771 = vmatpush1.bf16.msra.mxu0 0
    %3772 = vmatprep.subr.bf16.mxu0 0
    %3773 = vmatpush1.bf16.msra.mxu0 0
    %3774 = vmatprep.subr.bf16.mxu0 0
    %3775 = vmatpush1.bf16.msra.mxu0 0
    %3776 = vmatprep.subr.bf16.mxu0 0
    %3777 = vmatpush1.bf16.msra.mxu0 0
    %3778 = vmatprep.subr.bf16.mxu0 0
    %3779 = vmatpush1.bf16.msra.mxu0 0
    %3780 = vmatprep.subr.bf16.mxu0 0
    %3781 = vmatpush1.bf16.msra.mxu0 0
    %3782 = vmatprep.subr.bf16.mxu0 0
    %3783 = vmatpush1.bf16.msra.mxu0 0
    %3784 = vmatprep.subr.bf16.mxu0 0
    %3785 = vmatpush1.bf16.msra.mxu0 0
    %3786 = vmatprep.subr.bf16.mxu0 0
    %3787 = vmatpush1.bf16.msra.mxu0 0
    %3788 = vmatprep.subr.bf16.mxu0 0
    %3789 = vmatpush1.bf16.msra.mxu0 0
    %3790 = vmatprep.subr.bf16.mxu0 0
    %3791 = vmatpush1.bf16.msra.mxu0 0
    %3792 = vmatprep.subr.bf16.mxu0 0
    %3793 = vmatpush1.bf16.msra.mxu0 0
    %3794 = vmatprep.mubr.bf16.mxu0 0
    %3795 = vmatmul.mubr.bf16.gmra.mrb[0].mxu0 %v3757
    %v3796 = vpop.f32.mrb[0].mxu0
    %v3797 = vadd.f32 0.0, %v3796
    %v3798 = vpop.f32.mrb[0].mxu0
    %v3799 = vpop.f32.mrb[0].mxu0
    %v3800 = vpop.f32.mrb[0].mxu0
    %3801 = vdwg.mxu0
    %v3803 = vsel %vm374, %v3696, 0
    %v3806 = vsel %vm850, %v3704, 0
    %3808 = vmatprep.subr.bf16.mxu0 0
    %3809 = vmatpush1.bf16.msra.mxu0 %v3806
    %3810 = vmatprep.subr.bf16.mxu0 0
    %3811 = vmatpush1.bf16.msra.mxu0 0
    %3812 = vmatprep.subr.bf16.mxu0 0
    %3813 = vmatpush1.bf16.msra.mxu0 0
    %3814 = vmatprep.subr.bf16.mxu0 0
    %3815 = vmatpush1.bf16.msra.mxu0 0
    %3816 = vmatprep.subr.bf16.mxu0 0
    %3817 = vmatpush1.bf16.msra.mxu0 0
    %3818 = vmatprep.subr.bf16.mxu0 0
    %3819 = vmatpush1.bf16.msra.mxu0 0
    %3820 = vmatprep.subr.bf16.mxu0 0
    %3821 = vmatpush1.bf16.msra.mxu0 0
    %3822 = vmatprep.subr.bf16.mxu0 0
    %3823 = vmatpush1.bf16.msra.mxu0 0
    %3824 = vmatprep.subr.bf16.mxu0 0
    %3825 = vmatpush1.bf16.msra.mxu0 0
    %3826 = vmatprep.subr.bf16.mxu0 0
    %3827 = vmatpush1.bf16.msra.mxu0 0
    %3828 = vmatprep.subr.bf16.mxu0 0
    %3829 = vmatpush1.bf16.msra.mxu0 0
    %3830 = vmatprep.subr.bf16.mxu0 0
    %3831 = vmatpush1.bf16.msra.mxu0 0
    %3832 = vmatprep.subr.bf16.mxu0 0
    %3833 = vmatpush1.bf16.msra.mxu0 0
    %3834 = vmatprep.subr.bf16.mxu0 0
    %3835 = vmatpush1.bf16.msra.mxu0 0
    %3836 = vmatprep.subr.bf16.mxu0 0
    %3837 = vmatpush1.bf16.msra.mxu0 0
    %3838 = vmatprep.subr.bf16.mxu0 0
    %3839 = vmatpush1.bf16.msra.mxu0 0
    %3840 = vmatprep.mubr.bf16.mxu0 0
    %3841 = vmatmul.mubr.bf16.gmra.mrb[0].mxu0 %v3803
    %v3842 = vpop.f32.mrb[0].mxu0
    %v3843 = vadd.f32 0.0, %v3842
    %v3844 = vpop.f32.mrb[0].mxu0
    %v3845 = vpop.f32.mrb[0].mxu0
    %v3846 = vpop.f32.mrb[0].mxu0
    %3847 = vdwg.mxu0
    %v3849 = vsel %vm374, %v3697, 0
    %v3852 = vsel %vm850, %v3705, 0
    %3854 = vmatprep.subr.bf16.mxu0 0
    %3855 = vmatpush1.bf16.msra.mxu0 %v3852
    %3856 = vmatprep.subr.bf16.mxu0 0
    %3857 = vmatpush1.bf16.msra.mxu0 0
    %3858 = vmatprep.subr.bf16.mxu0 0
    %3859 = vmatpush1.bf16.msra.mxu0 0
    %3860 = vmatprep.subr.bf16.mxu0 0
    %3861 = vmatpush1.bf16.msra.mxu0 0
    %3862 = vmatprep.subr.bf16.mxu0 0
    %3863 = vmatpush1.bf16.msra.mxu0 0
    %3864 = vmatprep.subr.bf16.mxu0 0
    %3865 = vmatpush1.bf16.msra.mxu0 0
    %3866 = vmatprep.subr.bf16.mxu0 0
    %3867 = vmatpush1.bf16.msra.mxu0 0
    %3868 = vmatprep.subr.bf16.mxu0 0
    %3869 = vmatpush1.bf16.msra.mxu0 0
    %3870 = vmatprep.subr.bf16.mxu0 0
    %3871 = vmatpush1.bf16.msra.mxu0 0
    %3872 = vmatprep.subr.bf16.mxu0 0
    %3873 = vmatpush1.bf16.msra.mxu0 0
    %3874 = vmatprep.subr.bf16.mxu0 0
    %3875 = vmatpush1.bf16.msra.mxu0 0
    %3876 = vmatprep.subr.bf16.mxu0 0
    %3877 = vmatpush1.bf16.msra.mxu0 0
    %3878 = vmatprep.subr.bf16.mxu0 0
    %3879 = vmatpush1.bf16.msra.mxu0 0
    %3880 = vmatprep.subr.bf16.mxu0 0
    %3881 = vmatpush1.bf16.msra.mxu0 0
    %3882 = vmatprep.subr.bf16.mxu0 0
    %3883 = vmatpush1.bf16.msra.mxu0 0
    %3884 = vmatprep.subr.bf16.mxu0 0
    %3885 = vmatpush1.bf16.msra.mxu0 0
    %3886 = vmatprep.mubr.bf16.mxu0 0
    %3887 = vmatmul.mubr.bf16.gmra.mrb[0].mxu0 %v3849
    %v3888 = vpop.f32.mrb[0].mxu0
    %v3889 = vadd.f32 0.0, %v3888
    %v3890 = vpop.f32.mrb[0].mxu0
    %v3891 = vpop.f32.mrb[0].mxu0
    %v3892 = vpop.f32.mrb[0].mxu0
    %3893 = vdwg.mxu0
    %v3895 = vsel %vm374, %v3698, 0
    %v3898 = vsel %vm850, %v3706, 0
    %3900 = vmatprep.subr.bf16.mxu0 0
    %3901 = vmatpush1.bf16.msra.mxu0 %v3898
    %3902 = vmatprep.subr.bf16.mxu0 0
    %3903 = vmatpush1.bf16.msra.mxu0 0
    %3904 = vmatprep.subr.bf16.mxu0 0
    %3905 = vmatpush1.bf16.msra.mxu0 0
    %3906 = vmatprep.subr.bf16.mxu0 0
    %3907 = vmatpush1.bf16.msra.mxu0 0
    %3908 = vmatprep.subr.bf16.mxu0 0
    %3909 = vmatpush1.bf16.msra.mxu0 0
    %3910 = vmatprep.subr.bf16.mxu0 0
    %3911 = vmatpush1.bf16.msra.mxu0 0
    %3912 = vmatprep.subr.bf16.mxu0 0
    %3913 = vmatpush1.bf16.msra.mxu0 0
    %3914 = vmatprep.subr.bf16.mxu0 0
    %3915 = vmatpush1.bf16.msra.mxu0 0
    %3916 = vmatprep.subr.bf16.mxu0 0
    %3917 = vmatpush1.bf16.msra.mxu0 0
    %3918 = vmatprep.subr.bf16.mxu0 0
    %3919 = vmatpush1.bf16.msra.mxu0 0
    %3920 = vmatprep.subr.bf16.mxu0 0
    %3921 = vmatpush1.bf16.msra.mxu0 0
    %3922 = vmatprep.subr.bf16.mxu0 0
    %3923 = vmatpush1.bf16.msra.mxu0 0
    %3924 = vmatprep.subr.bf16.mxu0 0
    %3925 = vmatpush1.bf16.msra.mxu0 0
    %3926 = vmatprep.subr.bf16.mxu0 0
    %3927 = vmatpush1.bf16.msra.mxu0 0
    %3928 = vmatprep.subr.bf16.mxu0 0
    %3929 = vmatpush1.bf16.msra.mxu0 0
    %3930 = vmatprep.subr.bf16.mxu0 0
    %3931 = vmatpush1.bf16.msra.mxu0 0
    %3932 = vmatprep.mubr.bf16.mxu0 0
    %3933 = vmatmul.mubr.bf16.gmra.mrb[0].mxu0 %v3895
    %v3934 = vpop.f32.mrb[0].mxu0
    %v3935 = vadd.f32 0.0, %v3934
    %v3936 = vpop.f32.mrb[0].mxu0
    %v3937 = vpop.f32.mrb[0].mxu0
    %v3938 = vpop.f32.mrb[0].mxu0
    %3939 = vdwg.mxu0
    %v3941 = vsel %vm374, %v3699, 0
    %v3944 = vsel %vm850, %v3707, 0
    %3946 = vmatprep.subr.bf16.mxu0 0
    %3947 = vmatpush1.bf16.msra.mxu0 %v3944
    %3948 = vmatprep.subr.bf16.mxu0 0
    %3949 = vmatpush1.bf16.msra.mxu0 0
    %3950 = vmatprep.subr.bf16.mxu0 0
    %3951 = vmatpush1.bf16.msra.mxu0 0
    %3952 = vmatprep.subr.bf16.mxu0 0
    %3953 = vmatpush1.bf16.msra.mxu0 0
    %3954 = vmatprep.subr.bf16.mxu0 0
    %3955 = vmatpush1.bf16.msra.mxu0 0
    %3956 = vmatprep.subr.bf16.mxu0 0
    %3957 = vmatpush1.bf16.msra.mxu0 0
    %3958 = vmatprep.subr.bf16.mxu0 0
    %3959 = vmatpush1.bf16.msra.mxu0 0
    %3960 = vmatprep.subr.bf16.mxu0 0
    %3961 = vmatpush1.bf16.msra.mxu0 0
    %3962 = vmatprep.subr.bf16.mxu0 0
    %3963 = vmatpush1.bf16.msra.mxu0 0
    %3964 = vmatprep.subr.bf16.mxu0 0
    %3965 = vmatpush1.bf16.msra.mxu0 0
    %3966 = vmatprep.subr.bf16.mxu0 0
    %3967 = vmatpush1.bf16.msra.mxu0 0
    %3968 = vmatprep.subr.bf16.mxu0 0
    %3969 = vmatpush1.bf16.msra.mxu0 0
    %3970 = vmatprep.subr.bf16.mxu0 0
    %3971 = vmatpush1.bf16.msra.mxu0 0
    %3972 = vmatprep.subr.bf16.mxu0 0
    %3973 = vmatpush1.bf16.msra.mxu0 0
    %3974 = vmatprep.subr.bf16.mxu0 0
    %3975 = vmatpush1.bf16.msra.mxu0 0
    %3976 = vmatprep.subr.bf16.mxu0 0
    %3977 = vmatpush1.bf16.msra.mxu0 0
    %3978 = vmatprep.mubr.bf16.mxu0 0
    %3979 = vmatmul.mubr.bf16.gmra.mrb[0].mxu0 %v3941
    %v3980 = vpop.f32.mrb[0].mxu0
    %v3981 = vadd.f32 0.0, %v3980
    %v3982 = vpop.f32.mrb[0].mxu0
    %v3983 = vpop.f32.mrb[0].mxu0
    %v3984 = vpop.f32.mrb[0].mxu0
    %3985 = vdwg.mxu0
    %v3987 = vsel %vm374, %v3700, 0
    %v3990 = vsel %vm850, %v3708, 0
    %3992 = vmatprep.subr.bf16.mxu0 0
    %3993 = vmatpush1.bf16.msra.mxu0 %v3990
    %3994 = vmatprep.subr.bf16.mxu0 0
    %3995 = vmatpush1.bf16.msra.mxu0 0
    %3996 = vmatprep.subr.bf16.mxu0 0
    %3997 = vmatpush1.bf16.msra.mxu0 0
    %3998 = vmatprep.subr.bf16.mxu0 0
    %3999 = vmatpush1.bf16.msra.mxu0 0
    %4000 = vmatprep.subr.bf16.mxu0 0
    %4001 = vmatpush1.bf16.msra.mxu0 0
    %4002 = vmatprep.subr.bf16.mxu0 0
    %4003 = vmatpush1.bf16.msra.mxu0 0
    %4004 = vmatprep.subr.bf16.mxu0 0
    %4005 = vmatpush1.bf16.msra.mxu0 0
    %4006 = vmatprep.subr.bf16.mxu0 0
    %4007 = vmatpush1.bf16.msra.mxu0 0
    %4008 = vmatprep.subr.bf16.mxu0 0
    %4009 = vmatpush1.bf16.msra.mxu0 0
    %4010 = vmatprep.subr.bf16.mxu0 0
    %4011 = vmatpush1.bf16.msra.mxu0 0
    %4012 = vmatprep.subr.bf16.mxu0 0
    %4013 = vmatpush1.bf16.msra.mxu0 0
    %4014 = vmatprep.subr.bf16.mxu0 0
    %4015 = vmatpush1.bf16.msra.mxu0 0
    %4016 = vmatprep.subr.bf16.mxu0 0
    %4017 = vmatpush1.bf16.msra.mxu0 0
    %4018 = vmatprep.subr.bf16.mxu0 0
    %4019 = vmatpush1.bf16.msra.mxu0 0
    %4020 = vmatprep.subr.bf16.mxu0 0
    %4021 = vmatpush1.bf16.msra.mxu0 0
    %4022 = vmatprep.subr.bf16.mxu0 0
    %4023 = vmatpush1.bf16.msra.mxu0 0
    %4024 = vmatprep.mubr.bf16.mxu0 0
    %4025 = vmatmul.mubr.bf16.gmra.mrb[0].mxu0 %v3987
    %v4026 = vpop.f32.mrb[0].mxu0
    %v4027 = vadd.f32 0.0, %v4026
    %v4028 = vpop.f32.mrb[0].mxu0
    %v4029 = vpop.f32.mrb[0].mxu0
    %v4030 = vpop.f32.mrb[0].mxu0
    %4031 = vdwg.mxu0
    %v4033 = vsel %vm374, %v3701, 0
    %v4036 = vsel %vm850, %v3709, 0
    %4038 = vmatprep.subr.bf16.mxu0 0
    %4039 = vmatpush1.bf16.msra.mxu0 %v4036
    %4040 = vmatprep.subr.bf16.mxu0 0
    %4041 = vmatpush1.bf16.msra.mxu0 0
    %4042 = vmatprep.subr.bf16.mxu0 0
    %4043 = vmatpush1.bf16.msra.mxu0 0
    %4044 = vmatprep.subr.bf16.mxu0 0
    %4045 = vmatpush1.bf16.msra.mxu0 0
    %4046 = vmatprep.subr.bf16.mxu0 0
    %4047 = vmatpush1.bf16.msra.mxu0 0
    %4048 = vmatprep.subr.bf16.mxu0 0
    %4049 = vmatpush1.bf16.msra.mxu0 0
    %4050 = vmatprep.subr.bf16.mxu0 0
    %4051 = vmatpush1.bf16.msra.mxu0 0
    %4052 = vmatprep.subr.bf16.mxu0 0
    %4053 = vmatpush1.bf16.msra.mxu0 0
    %4054 = vmatprep.subr.bf16.mxu0 0
    %4055 = vmatpush1.bf16.msra.mxu0 0
    %4056 = vmatprep.subr.bf16.mxu0 0
    %4057 = vmatpush1.bf16.msra.mxu0 0
    %4058 = vmatprep.subr.bf16.mxu0 0
    %4059 = vmatpush1.bf16.msra.mxu0 0
    %4060 = vmatprep.subr.bf16.mxu0 0
    %4061 = vmatpush1.bf16.msra.mxu0 0
    %4062 = vmatprep.subr.bf16.mxu0 0
    %4063 = vmatpush1.bf16.msra.mxu0 0
    %4064 = vmatprep.subr.bf16.mxu0 0
    %4065 = vmatpush1.bf16.msra.mxu0 0
    %4066 = vmatprep.subr.bf16.mxu0 0
    %4067 = vmatpush1.bf16.msra.mxu0 0
    %4068 = vmatprep.subr.bf16.mxu0 0
    %4069 = vmatpush1.bf16.msra.mxu0 0
    %4070 = vmatprep.mubr.bf16.mxu0 0
    %4071 = vmatmul.mubr.bf16.gmra.mrb[0].mxu0 %v4033
    %v4072 = vpop.f32.mrb[0].mxu0
    %v4073 = vadd.f32 0.0, %v4072
    %v4074 = vpop.f32.mrb[0].mxu0
    %v4075 = vpop.f32.mrb[0].mxu0
    %v4076 = vpop.f32.mrb[0].mxu0
    %4077 = vdwg.mxu0
    %4079 = vrot.lane.b32.xlu0 %v3797, 8
    %v4080 = vpop.permute.xlu0 %4079
    %4083 = vrot.lane.b32.xlu0 %v3843, 16
    %v4084 = vpop.permute.xlu0 %4083
    %4087 = vrot.lane.b32.xlu0 %v3889, 24
    %v4088 = vpop.permute.xlu0 %4087
    %v4090 = vsel %vm374, %v3751, %v4080
    %v4091 = vsel %vm1229, %v4090, %v4084
    %v4092 = vsel %vm1231, %v4091, %v4088
    %4094 = vrot.lane.b32.xlu0 %v3981, 8
    %v4095 = vpop.permute.xlu0 %4094
    %4098 = vrot.lane.b32.xlu0 %v4027, 16
    %v4099 = vpop.permute.xlu0 %4098
    %4102 = vrot.lane.b32.xlu0 %v4073, 24
    %v4103 = vpop.permute.xlu0 %4102
    %v4105 = vsel %vm374, %v3935, %v4095
    %v4106 = vsel %vm1229, %v4105, %v4099
    %v4107 = vsel %vm1231, %v4106, %v4103
    %v4108 = vpack.c.bf16 %v4107, %v4092
    %v4109 = vlaneseq
    %v4110 = vshrl.u32 %v4109, 7
    %v4111 = vsub.s32 0, %v4110
    %v4112 = vrot.slane %v2984, %v4111
    %v4117 = vunpack.c.l.b16 %v2977
    %v4118 = vunpack.c.l.b16 %v2978
    %v4119 = vunpack.c.l.b16 %v2979
    %v4120 = vunpack.c.l.b16 %v2980
    %v4121 = vpack.c.b16 %v4118, %v4117
    %v4122 = vpack.c.b16 %v4120, %v4119
    %v4126 = vsel %vm139, %v4108, 0
    %4128 = vmatprep.subr.bf16.mxu0 0
    %4129 = vmatpush1.bf16.msra.mxu0 %v4121
    %4130 = vmatprep.subr.bf16.mxu0 0
    %4131 = vmatpush1.bf16.msra.mxu0 %v4122
    %4132 = vmatprep.subr.bf16.mxu0 0
    %4133 = vmatpush1.bf16.msra.mxu0 0
    %4134 = vmatprep.subr.bf16.mxu0 0
    %4135 = vmatpush1.bf16.msra.mxu0 0
    %4136 = vmatprep.subr.bf16.mxu0 0
    %4137 = vmatpush1.bf16.msra.mxu0 0
    %4138 = vmatprep.subr.bf16.mxu0 0
    %4139 = vmatpush1.bf16.msra.mxu0 0
    %4140 = vmatprep.subr.bf16.mxu0 0
    %4141 = vmatpush1.bf16.msra.mxu0 0
    %4142 = vmatprep.subr.bf16.mxu0 0
    %4143 = vmatpush1.bf16.msra.mxu0 0
    %4144 = vmatprep.subr.bf16.mxu0 0
    %4145 = vmatpush1.bf16.msra.mxu0 0
    %4146 = vmatprep.subr.bf16.mxu0 0
    %4147 = vmatpush1.bf16.msra.mxu0 0
    %4148 = vmatprep.subr.bf16.mxu0 0
    %4149 = vmatpush1.bf16.msra.mxu0 0
    %4150 = vmatprep.subr.bf16.mxu0 0
    %4151 = vmatpush1.bf16.msra.mxu0 0
    %4152 = vmatprep.subr.bf16.mxu0 0
    %4153 = vmatpush1.bf16.msra.mxu0 0
    %4154 = vmatprep.subr.bf16.mxu0 0
    %4155 = vmatpush1.bf16.msra.mxu0 0
    %4156 = vmatprep.subr.bf16.mxu0 0
    %4157 = vmatpush1.bf16.msra.mxu0 0
    %4158 = vmatprep.subr.bf16.mxu0 0
    %4159 = vmatpush1.bf16.msra.mxu0 0
    %4160 = vmatprep.mubr.bf16.mxu0 0
    %4161 = vmatmul.mubr.bf16.gmra.mrb[0].mxu0 %v4126
    %v4162 = vpop.f32.mrb[0].mxu0
    %v4163 = vadd.f32 %v4112, %v4162
    %v4164 = vpop.f32.mrb[0].mxu0
    %v4165 = vpop.f32.mrb[0].mxu0
    %v4166 = vadd.f32 %v4112, %v4165
    %v4167 = vpop.f32.mrb[0].mxu0
    %4168 = vdwg.mxu0
    %v4169 = vadd.f32 %v2963, %v4163
    %v4170 = vadd.f32 %v2964, %v4166
    %v4171 = vsel %vm139, %v4169, 0.0
    %4172 = vadd.xlane.f32.xlu0 %v4171
    %v4173 = vpop.xlane.xlu0 %4172
    %v4174 = vsel %vm139, %v4170, 0.0
    %4175 = vadd.xlane.f32.xlu0 %v4174
    %v4176 = vpop.xlane.xlu0 %4175
    %v4177 = vmul.f32 %v4173, %v1317
    %v4178 = vmul.f32 %v4176, %v1317
    %v4179 = vsub.f32 %v4169, %v4177
    %v4180 = vsub.f32 %v4170, %v4178
    %v4181 = vmul.f32 %v4179, %v4179
    %v4182 = vmul.f32 %v4180, %v4180
    %v4183 = vsel %vm139, %v4181, 0.0
    %4184 = vadd.xlane.f32.xlu0 %v4183
    %v4185 = vpop.xlane.xlu0 %4184
    %v4186 = vsel %vm139, %v4182, 0.0
    %4187 = vadd.xlane.f32.xlu0 %v4186
    %v4188 = vpop.xlane.xlu0 %4187
    %v4189 = vmul.f32 %v4185, %v1317
    %v4190 = vmul.f32 %v4188, %v1317
    %v4191 = vadd.f32 %v4189, 1e-05
    %v4192 = vadd.f32 %v4190, 1e-05
    %v4193 = vrsqrt.pop %v4191
    %v4194 = vrsqrt.pop %v4192
    %v4195 = vmul.f32 %v4179, %v4193
    %v4196 = vmul.f32 %v4180, %v4194
    %v4197 = vlaneseq
    %v4198 = vshrl.u32 %v4197, 7
    %v4199 = vsub.s32 0, %v4198
    %v4200 = vrot.slane %v2985, %v4199
    %v4201 = vmul.f32 %v4195, %v4200
    %v4202 = vmul.f32 %v4196, %v4200
    %v4203 = vlaneseq
    %v4204 = vshrl.u32 %v4203, 7
    %v4205 = vsub.s32 0, %v4204
    %v4206 = vrot.slane %v2986, %v4205
    %v4207 = vadd.f32 %v4201, %v4206
    %v4208 = vadd.f32 %v4202, %v4206
    %s4209 = scalar_lea.vmem [#allocation8], 64
    %v4210 = vld [vmem:[%s4209] sm:$0xf]
    %v4211 = vld [vmem:[%s4209 + $0x4] sm:$0xf]
    %v4212 = vld [vmem:[%s4209 + $0x8] sm:$0xf]
    %v4213 = vld [vmem:[%s4209 + $0xc] sm:$0xf]
    %v4214 = vld [vmem:[%s4209 + $0x10] sm:$0xf]
    %v4215 = vld [vmem:[%s4209 + $0x14] sm:$0xf]
    %v4216 = vld [vmem:[%s4209 + $0x18] sm:$0xf]
    %v4217 = vld [vmem:[%s4209 + $0x1c] sm:$0xf]
    %v4218 = vld [vmem:[%s4209 + $0x20] sm:$0xf]
    %v4219 = vld [vmem:[%s4209 + $0x24] sm:$0xf]
    %v4220 = vld [vmem:[%s4209 + $0x28] sm:$0xf]
    %v4221 = vld [vmem:[%s4209 + $0x2c] sm:$0xf]
    %v4222 = vld [vmem:[%s4209 + $0x30] sm:$0xf]
    %v4223 = vld [vmem:[%s4209 + $0x34] sm:$0xf]
    %v4224 = vld [vmem:[%s4209 + $0x38] sm:$0xf]
    %v4225 = vld [vmem:[%s4209 + $0x3c] sm:$0xf]
    %v4226 = vld [vmem:[%s8 + $0x6] sm:$0x1]
    %v4227 = vld [vmem:[%s8 + $0x7] sm:$0x1]
    %v4228 = vld [vmem:[%s8 + $0x8] sm:$0x1]
    %v4229 = vld [vmem:[%s8 + $0x9] sm:$0x1]
    %v4230 = vld [vmem:[%s8 + $0xa] sm:$0x1]
    %v4231 = vld [vmem:[%s8 + $0xb] sm:$0x1]
    %v4232 = vpack.c.bf16 %v4208, %v4207
    %v4233 = vlaneseq
    %v4234 = vshrl.u32 %v4233, 7
    %v4235 = vsub.s32 0, %v4234
    %v4236 = vrot.slane %v4226, %v4235
    %v4241 = vunpack.c.l.b16 %v4210
    %v4242 = vunpack.c.l.b16 %v4211
    %v4243 = vunpack.c.l.b16 %v4212
    %v4244 = vunpack.c.l.b16 %v4213
    %v4245 = vpack.c.b16 %v4242, %v4241
    %v4246 = vpack.c.b16 %v4244, %v4243
    %v4250 = vsel %vm139, %v4232, 0
    %4252 = vmatprep.subr.bf16.mxu0 0
    %4253 = vmatpush1.bf16.msra.mxu0 %v4245
    %4254 = vmatprep.subr.bf16.mxu0 0
    %4255 = vmatpush1.bf16.msra.mxu0 %v4246
    %4256 = vmatprep.subr.bf16.mxu0 0
    %4257 = vmatpush1.bf16.msra.mxu0 0
    %4258 = vmatprep.subr.bf16.mxu0 0
    %4259 = vmatpush1.bf16.msra.mxu0 0
    %4260 = vmatprep.subr.bf16.mxu0 0
    %4261 = vmatpush1.bf16.msra.mxu0 0
    %4262 = vmatprep.subr.bf16.mxu0 0
    %4263 = vmatpush1.bf16.msra.mxu0 0
    %4264 = vmatprep.subr.bf16.mxu0 0
    %4265 = vmatpush1.bf16.msra.mxu0 0
    %4266 = vmatprep.subr.bf16.mxu0 0
    %4267 = vmatpush1.bf16.msra.mxu0 0
    %4268 = vmatprep.subr.bf16.mxu0 0
    %4269 = vmatpush1.bf16.msra.mxu0 0
    %4270 = vmatprep.subr.bf16.mxu0 0
    %4271 = vmatpush1.bf16.msra.mxu0 0
    %4272 = vmatprep.subr.bf16.mxu0 0
    %4273 = vmatpush1.bf16.msra.mxu0 0
    %4274 = vmatprep.subr.bf16.mxu0 0
    %4275 = vmatpush1.bf16.msra.mxu0 0
    %4276 = vmatprep.subr.bf16.mxu0 0
    %4277 = vmatpush1.bf16.msra.mxu0 0
    %4278 = vmatprep.subr.bf16.mxu0 0
    %4279 = vmatpush1.bf16.msra.mxu0 0
    %4280 = vmatprep.subr.bf16.mxu0 0
    %4281 = vmatpush1.bf16.msra.mxu0 0
    %4282 = vmatprep.subr.bf16.mxu0 0
    %4283 = vmatpush1.bf16.msra.mxu0 0
    %4284 = vmatprep.mubr.bf16.mxu0 0
    %4285 = vmatmul.mubr.bf16.gmra.mrb[0].mxu0 %v4250
    %v4286 = vpop.f32.mrb[0].mxu0
    %v4287 = vadd.f32 %v4236, %v4286
    %v4288 = vpop.f32.mrb[0].mxu0
    %v4289 = vpop.f32.mrb[0].mxu0
    %v4290 = vadd.f32 %v4236, %v4289
    %v4291 = vpop.f32.mrb[0].mxu0
    %4292 = vdwg.mxu0
    %v4293 = vpack.c.bf16 %v2962, %v2961
    %v4294 = vlaneseq
    %v4295 = vshrl.u32 %v4294, 7
    %v4296 = vsub.s32 0, %v4295
    %v4297 = vrot.slane %v4227, %v4296
    %v4302 = vunpack.c.l.b16 %v4214
    %v4303 = vunpack.c.l.b16 %v4215
    %v4304 = vunpack.c.l.b16 %v4216
    %v4305 = vunpack.c.l.b16 %v4217
    %v4306 = vpack.c.b16 %v4303, %v4302
    %v4307 = vpack.c.b16 %v4305, %v4304
    %v4311 = vsel %vm139, %v4293, 0
    %4313 = vmatprep.subr.bf16.mxu0 0
    %4314 = vmatpush1.bf16.msra.mxu0 %v4306
    %4315 = vmatprep.subr.bf16.mxu0 0
    %4316 = vmatpush1.bf16.msra.mxu0 %v4307
    %4317 = vmatprep.subr.bf16.mxu0 0
    %4318 = vmatpush1.bf16.msra.mxu0 0
    %4319 = vmatprep.subr.bf16.mxu0 0
    %4320 = vmatpush1.bf16.msra.mxu0 0
    %4321 = vmatprep.subr.bf16.mxu0 0
    %4322 = vmatpush1.bf16.msra.mxu0 0
    %4323 = vmatprep.subr.bf16.mxu0 0
    %4324 = vmatpush1.bf16.msra.mxu0 0
    %4325 = vmatprep.subr.bf16.mxu0 0
    %4326 = vmatpush1.bf16.msra.mxu0 0
    %4327 = vmatprep.subr.bf16.mxu0 0
    %4328 = vmatpush1.bf16.msra.mxu0 0
    %4329 = vmatprep.subr.bf16.mxu0 0
    %4330 = vmatpush1.bf16.msra.mxu0 0
    %4331 = vmatprep.subr.bf16.mxu0 0
    %4332 = vmatpush1.bf16.msra.mxu0 0
    %4333 = vmatprep.subr.bf16.mxu0 0
    %4334 = vmatpush1.bf16.msra.mxu0 0
    %4335 = vmatprep.subr.bf16.mxu0 0
    %4336 = vmatpush1.bf16.msra.mxu0 0
    %4337 = vmatprep.subr.bf16.mxu0 0
    %4338 = vmatpush1.bf16.msra.mxu0 0
    %4339 = vmatprep.subr.bf16.mxu0 0
    %4340 = vmatpush1.bf16.msra.mxu0 0
    %4341 = vmatprep.subr.bf16.mxu0 0
    %4342 = vmatpush1.bf16.msra.mxu0 0
    %4343 = vmatprep.subr.bf16.mxu0 0
    %4344 = vmatpush1.bf16.msra.mxu0 0
    %4345 = vmatprep.mubr.bf16.mxu0 0
    %4346 = vmatmul.mubr.bf16.gmra.mrb[0].mxu0 %v4311
    %v4347 = vpop.f32.mrb[0].mxu0
    %v4348 = vadd.f32 %v4297, %v4347
    %v4349 = vpop.f32.mrb[0].mxu0
    %v4350 = vpop.f32.mrb[0].mxu0
    %v4351 = vadd.f32 %v4297, %v4350
    %v4352 = vpop.f32.mrb[0].mxu0
    %4353 = vdwg.mxu0
    %v4354 = vlaneseq
    %v4355 = vshrl.u32 %v4354, 7
    %v4356 = vsub.s32 0, %v4355
    %v4357 = vrot.slane %v4228, %v4356
    %v4362 = vunpack.c.l.b16 %v4218
    %v4363 = vunpack.c.l.b16 %v4219
    %v4364 = vunpack.c.l.b16 %v4220
    %v4365 = vunpack.c.l.b16 %v4221
    %v4366 = vpack.c.b16 %v4363, %v4362
    %v4367 = vpack.c.b16 %v4365, %v4364
    %4370 = vmatprep.subr.bf16.mxu0 0
    %4371 = vmatpush1.bf16.msra.mxu0 %v4366
    %4372 = vmatprep.subr.bf16.mxu0 0
    %4373 = vmatpush1.bf16.msra.mxu0 %v4367
    %4374 = vmatprep.subr.bf16.mxu0 0
    %4375 = vmatpush1.bf16.msra.mxu0 0
    %4376 = vmatprep.subr.bf16.mxu0 0
    %4377 = vmatpush1.bf16.msra.mxu0 0
    %4378 = vmatprep.subr.bf16.mxu0 0
    %4379 = vmatpush1.bf16.msra.mxu0 0
    %4380 = vmatprep.subr.bf16.mxu0 0
    %4381 = vmatpush1.bf16.msra.mxu0 0
    %4382 = vmatprep.subr.bf16.mxu0 0
    %4383 = vmatpush1.bf16.msra.mxu0 0
    %4384 = vmatprep.subr.bf16.mxu0 0
    %4385 = vmatpush1.bf16.msra.mxu0 0
    %4386 = vmatprep.subr.bf16.mxu0 0
    %4387 = vmatpush1.bf16.msra.mxu0 0
    %4388 = vmatprep.subr.bf16.mxu0 0
    %4389 = vmatpush1.bf16.msra.mxu0 0
    %4390 = vmatprep.subr.bf16.mxu0 0
    %4391 = vmatpush1.bf16.msra.mxu0 0
    %4392 = vmatprep.subr.bf16.mxu0 0
    %4393 = vmatpush1.bf16.msra.mxu0 0
    %4394 = vmatprep.subr.bf16.mxu0 0
    %4395 = vmatpush1.bf16.msra.mxu0 0
    %4396 = vmatprep.subr.bf16.mxu0 0
    %4397 = vmatpush1.bf16.msra.mxu0 0
    %4398 = vmatprep.subr.bf16.mxu0 0
    %4399 = vmatpush1.bf16.msra.mxu0 0
    %4400 = vmatprep.subr.bf16.mxu0 0
    %4401 = vmatpush1.bf16.msra.mxu0 0
    %4402 = vmatprep.mubr.bf16.mxu0 0
    %4403 = vmatmul.mubr.bf16.gmra.mrb[0].mxu0 %v4311
    %v4404 = vpop.f32.mrb[0].mxu0
    %v4405 = vadd.f32 %v4357, %v4404
    %v4406 = vpop.f32.mrb[0].mxu0
    %v4407 = vpop.f32.mrb[0].mxu0
    %v4408 = vadd.f32 %v4357, %v4407
    %v4409 = vpop.f32.mrb[0].mxu0
    %4410 = vdwg.mxu0
    %4412 = vrot.lane.b32.xlu0 %v4287, 120
    %v4413 = vpop.permute.xlu0 %4412
    %4415 = vrot.lane.b32.xlu0 %v4287, 112
    %v4416 = vpop.permute.xlu0 %4415
    %4418 = vrot.lane.b32.xlu0 %v4287, 104
    %v4419 = vpop.permute.xlu0 %4418
    %4422 = vrot.lane.b32.xlu0 %v4290, 120
    %v4423 = vpop.permute.xlu0 %4422
    %4425 = vrot.lane.b32.xlu0 %v4290, 112
    %v4426 = vpop.permute.xlu0 %4425
    %4428 = vrot.lane.b32.xlu0 %v4290, 104
    %v4429 = vpop.permute.xlu0 %4428
    %4432 = vrot.lane.b32.xlu0 %v4348, 120
    %v4433 = vpop.permute.xlu0 %4432
    %4435 = vrot.lane.b32.xlu0 %v4348, 112
    %v4436 = vpop.permute.xlu0 %4435
    %4438 = vrot.lane.b32.xlu0 %v4348, 104
    %v4439 = vpop.permute.xlu0 %4438
    %4442 = vrot.lane.b32.xlu0 %v4351, 120
    %v4443 = vpop.permute.xlu0 %4442
    %4445 = vrot.lane.b32.xlu0 %v4351, 112
    %v4446 = vpop.permute.xlu0 %4445
    %4448 = vrot.lane.b32.xlu0 %v4351, 104
    %v4449 = vpop.permute.xlu0 %4448
    %4452 = vrot.lane.b32.xlu0 %v4405, 120
    %v4453 = vpop.permute.xlu0 %4452
    %4455 = vrot.lane.b32.xlu0 %v4405, 112
    %v4456 = vpop.permute.xlu0 %4455
    %4458 = vrot.lane.b32.xlu0 %v4405, 104
    %v4459 = vpop.permute.xlu0 %4458
    %4462 = vrot.lane.b32.xlu0 %v4408, 120
    %v4463 = vpop.permute.xlu0 %4462
    %4465 = vrot.lane.b32.xlu0 %v4408, 112
    %v4466 = vpop.permute.xlu0 %4465
    %4468 = vrot.lane.b32.xlu0 %v4408, 104
    %v4469 = vpop.permute.xlu0 %4468
    %v4471 = vpack.c.bf16 %v4287, %v4287
    %v4472 = vpack.c.bf16 %v4413, %v4413
    %v4473 = vpack.c.bf16 %v4416, %v4416
    %v4474 = vpack.c.bf16 %v4419, %v4419
    %v4475 = vpack.c.bf16 %v4290, %v4290
    %v4476 = vpack.c.bf16 %v4423, %v4423
    %v4477 = vpack.c.bf16 %v4426, %v4426
    %v4478 = vpack.c.bf16 %v4429, %v4429
    %v4479 = vpack.c.bf16 %v4348, %v4348
    %v4480 = vpack.c.bf16 %v4433, %v4433
    %v4481 = vpack.c.bf16 %v4436, %v4436
    %v4482 = vpack.c.bf16 %v4439, %v4439
    %v4483 = vpack.c.bf16 %v4351, %v4351
    %v4484 = vpack.c.bf16 %v4443, %v4443
    %v4485 = vpack.c.bf16 %v4446, %v4446
    %v4486 = vpack.c.bf16 %v4449, %v4449
    %v4488 = vsel %vm374, %v4471, 0
    %v4491 = vsel %vm374, %v4479, 0
    %4493 = vmatprep.subr.bf16.mxu0 0
    %4494 = vmatpush1.bf16.xpose.msra.mxu0 %v4491
    %4495 = vmatprep.subr.bf16.mxu0 0
    %4496 = vmatpush1.bf16.xpose.msra.mxu0 0
    %4497 = vmatprep.subr.bf16.mxu0 0
    %4498 = vmatpush1.bf16.xpose.msra.mxu0 0
    %4499 = vmatprep.subr.bf16.mxu0 0
    %4500 = vmatpush1.bf16.xpose.msra.mxu0 0
    %4501 = vmatprep.subr.bf16.mxu0 0
    %4502 = vmatpush1.bf16.xpose.msra.mxu0 0
    %4503 = vmatprep.subr.bf16.mxu0 0
    %4504 = vmatpush1.bf16.xpose.msra.mxu0 0
    %4505 = vmatprep.subr.bf16.mxu0 0
    %4506 = vmatpush1.bf16.xpose.msra.mxu0 0
    %4507 = vmatprep.subr.bf16.mxu0 0
    %4508 = vmatpush1.bf16.xpose.msra.mxu0 0
    %4509 = vmatprep.subr.bf16.mxu0 0
    %4510 = vmatpush1.bf16.xpose.msra.mxu0 0
    %4511 = vmatprep.subr.bf16.mxu0 0
    %4512 = vmatpush1.bf16.xpose.msra.mxu0 0
    %4513 = vmatprep.subr.bf16.mxu0 0
    %4514 = vmatpush1.bf16.xpose.msra.mxu0 0
    %4515 = vmatprep.subr.bf16.mxu0 0
    %4516 = vmatpush1.bf16.xpose.msra.mxu0 0
    %4517 = vmatprep.subr.bf16.mxu0 0
    %4518 = vmatpush1.bf16.xpose.msra.mxu0 0
    %4519 = vmatprep.subr.bf16.mxu0 0
    %4520 = vmatpush1.bf16.xpose.msra.mxu0 0
    %4521 = vmatprep.subr.bf16.mxu0 0
    %4522 = vmatpush1.bf16.xpose.msra.mxu0 0
    %4523 = vmatprep.subr.bf16.mxu0 0
    %4524 = vmatpush1.bf16.xpose.msra.mxu0 0
    %4525 = vmatprep.mubr.bf16.mxu0 0
    %4526 = vmatmul.mubr.bf16.gmra.mrb[0].mxu0 %v4488
    %v4527 = vpop.f32.mrb[0].mxu0
    %v4528 = vadd.f32 0.0, %v4527
    %v4529 = vpop.f32.mrb[0].mxu0
    %v4530 = vpop.f32.mrb[0].mxu0
    %v4531 = vpop.f32.mrb[0].mxu0
    %4532 = vdwg.mxu0
    %v4534 = vsel %vm374, %v4472, 0
    %v4537 = vsel %vm374, %v4480, 0
    %4539 = vmatprep.subr.bf16.mxu0 0
    %4540 = vmatpush1.bf16.xpose.msra.mxu0 %v4537
    %4541 = vmatprep.subr.bf16.mxu0 0
    %4542 = vmatpush1.bf16.xpose.msra.mxu0 0
    %4543 = vmatprep.subr.bf16.mxu0 0
    %4544 = vmatpush1.bf16.xpose.msra.mxu0 0
    %4545 = vmatprep.subr.bf16.mxu0 0
    %4546 = vmatpush1.bf16.xpose.msra.mxu0 0
    %4547 = vmatprep.subr.bf16.mxu0 0
    %4548 = vmatpush1.bf16.xpose.msra.mxu0 0
    %4549 = vmatprep.subr.bf16.mxu0 0
    %4550 = vmatpush1.bf16.xpose.msra.mxu0 0
    %4551 = vmatprep.subr.bf16.mxu0 0
    %4552 = vmatpush1.bf16.xpose.msra.mxu0 0
    %4553 = vmatprep.subr.bf16.mxu0 0
    %4554 = vmatpush1.bf16.xpose.msra.mxu0 0
    %4555 = vmatprep.subr.bf16.mxu0 0
    %4556 = vmatpush1.bf16.xpose.msra.mxu0 0
    %4557 = vmatprep.subr.bf16.mxu0 0
    %4558 = vmatpush1.bf16.xpose.msra.mxu0 0
    %4559 = vmatprep.subr.bf16.mxu0 0
    %4560 = vmatpush1.bf16.xpose.msra.mxu0 0
    %4561 = vmatprep.subr.bf16.mxu0 0
    %4562 = vmatpush1.bf16.xpose.msra.mxu0 0
    %4563 = vmatprep.subr.bf16.mxu0 0
    %4564 = vmatpush1.bf16.xpose.msra.mxu0 0
    %4565 = vmatprep.subr.bf16.mxu0 0
    %4566 = vmatpush1.bf16.xpose.msra.mxu0 0
    %4567 = vmatprep.subr.bf16.mxu0 0
    %4568 = vmatpush1.bf16.xpose.msra.mxu0 0
    %4569 = vmatprep.subr.bf16.mxu0 0
    %4570 = vmatpush1.bf16.xpose.msra.mxu0 0
    %4571 = vmatprep.mubr.bf16.mxu0 0
    %4572 = vmatmul.mubr.bf16.gmra.mrb[0].mxu0 %v4534
    %v4573 = vpop.f32.mrb[0].mxu0
    %v4574 = vadd.f32 0.0, %v4573
    %v4575 = vpop.f32.mrb[0].mxu0
    %v4576 = vpop.f32.mrb[0].mxu0
    %v4577 = vpop.f32.mrb[0].mxu0
    %4578 = vdwg.mxu0
    %v4580 = vsel %vm374, %v4473, 0
    %v4583 = vsel %vm374, %v4481, 0
    %4585 = vmatprep.subr.bf16.mxu0 0
    %4586 = vmatpush1.bf16.xpose.msra.mxu0 %v4583
    %4587 = vmatprep.subr.bf16.mxu0 0
    %4588 = vmatpush1.bf16.xpose.msra.mxu0 0
    %4589 = vmatprep.subr.bf16.mxu0 0
    %4590 = vmatpush1.bf16.xpose.msra.mxu0 0
    %4591 = vmatprep.subr.bf16.mxu0 0
    %4592 = vmatpush1.bf16.xpose.msra.mxu0 0
    %4593 = vmatprep.subr.bf16.mxu0 0
    %4594 = vmatpush1.bf16.xpose.msra.mxu0 0
    %4595 = vmatprep.subr.bf16.mxu0 0
    %4596 = vmatpush1.bf16.xpose.msra.mxu0 0
    %4597 = vmatprep.subr.bf16.mxu0 0
    %4598 = vmatpush1.bf16.xpose.msra.mxu0 0
    %4599 = vmatprep.subr.bf16.mxu0 0
    %4600 = vmatpush1.bf16.xpose.msra.mxu0 0
    %4601 = vmatprep.subr.bf16.mxu0 0
    %4602 = vmatpush1.bf16.xpose.msra.mxu0 0
    %4603 = vmatprep.subr.bf16.mxu0 0
    %4604 = vmatpush1.bf16.xpose.msra.mxu0 0
    %4605 = vmatprep.subr.bf16.mxu0 0
    %4606 = vmatpush1.bf16.xpose.msra.mxu0 0
    %4607 = vmatprep.subr.bf16.mxu0 0
    %4608 = vmatpush1.bf16.xpose.msra.mxu0 0
    %4609 = vmatprep.subr.bf16.mxu0 0
    %4610 = vmatpush1.bf16.xpose.msra.mxu0 0
    %4611 = vmatprep.subr.bf16.mxu0 0
    %4612 = vmatpush1.bf16.xpose.msra.mxu0 0
    %4613 = vmatprep.subr.bf16.mxu0 0
    %4614 = vmatpush1.bf16.xpose.msra.mxu0 0
    %4615 = vmatprep.subr.bf16.mxu0 0
    %4616 = vmatpush1.bf16.xpose.msra.mxu0 0
    %4617 = vmatprep.mubr.bf16.mxu0 0
    %4618 = vmatmul.mubr.bf16.gmra.mrb[0].mxu0 %v4580
    %v4619 = vpop.f32.mrb[0].mxu0
    %v4620 = vadd.f32 0.0, %v4619
    %v4621 = vpop.f32.mrb[0].mxu0
    %v4622 = vpop.f32.mrb[0].mxu0
    %v4623 = vpop.f32.mrb[0].mxu0
    %4624 = vdwg.mxu0
    %v4626 = vsel %vm374, %v4474, 0
    %v4629 = vsel %vm374, %v4482, 0
    %4631 = vmatprep.subr.bf16.mxu0 0
    %4632 = vmatpush1.bf16.xpose.msra.mxu0 %v4629
    %4633 = vmatprep.subr.bf16.mxu0 0
    %4634 = vmatpush1.bf16.xpose.msra.mxu0 0
    %4635 = vmatprep.subr.bf16.mxu0 0
    %4636 = vmatpush1.bf16.xpose.msra.mxu0 0
    %4637 = vmatprep.subr.bf16.mxu0 0
    %4638 = vmatpush1.bf16.xpose.msra.mxu0 0
    %4639 = vmatprep.subr.bf16.mxu0 0
    %4640 = vmatpush1.bf16.xpose.msra.mxu0 0
    %4641 = vmatprep.subr.bf16.mxu0 0
    %4642 = vmatpush1.bf16.xpose.msra.mxu0 0
    %4643 = vmatprep.subr.bf16.mxu0 0
    %4644 = vmatpush1.bf16.xpose.msra.mxu0 0
    %4645 = vmatprep.subr.bf16.mxu0 0
    %4646 = vmatpush1.bf16.xpose.msra.mxu0 0
    %4647 = vmatprep.subr.bf16.mxu0 0
    %4648 = vmatpush1.bf16.xpose.msra.mxu0 0
    %4649 = vmatprep.subr.bf16.mxu0 0
    %4650 = vmatpush1.bf16.xpose.msra.mxu0 0
    %4651 = vmatprep.subr.bf16.mxu0 0
    %4652 = vmatpush1.bf16.xpose.msra.mxu0 0
    %4653 = vmatprep.subr.bf16.mxu0 0
    %4654 = vmatpush1.bf16.xpose.msra.mxu0 0
    %4655 = vmatprep.subr.bf16.mxu0 0
    %4656 = vmatpush1.bf16.xpose.msra.mxu0 0
    %4657 = vmatprep.subr.bf16.mxu0 0
    %4658 = vmatpush1.bf16.xpose.msra.mxu0 0
    %4659 = vmatprep.subr.bf16.mxu0 0
    %4660 = vmatpush1.bf16.xpose.msra.mxu0 0
    %4661 = vmatprep.subr.bf16.mxu0 0
    %4662 = vmatpush1.bf16.xpose.msra.mxu0 0
    %4663 = vmatprep.mubr.bf16.mxu0 0
    %4664 = vmatmul.mubr.bf16.gmra.mrb[0].mxu0 %v4626
    %v4665 = vpop.f32.mrb[0].mxu0
    %v4666 = vadd.f32 0.0, %v4665
    %v4667 = vpop.f32.mrb[0].mxu0
    %v4668 = vpop.f32.mrb[0].mxu0
    %v4669 = vpop.f32.mrb[0].mxu0
    %4670 = vdwg.mxu0
    %v4672 = vsel %vm374, %v4475, 0
    %v4675 = vsel %vm374, %v4483, 0
    %4677 = vmatprep.subr.bf16.mxu0 0
    %4678 = vmatpush1.bf16.xpose.msra.mxu0 %v4675
    %4679 = vmatprep.subr.bf16.mxu0 0
    %4680 = vmatpush1.bf16.xpose.msra.mxu0 0
    %4681 = vmatprep.subr.bf16.mxu0 0
    %4682 = vmatpush1.bf16.xpose.msra.mxu0 0
    %4683 = vmatprep.subr.bf16.mxu0 0
    %4684 = vmatpush1.bf16.xpose.msra.mxu0 0
    %4685 = vmatprep.subr.bf16.mxu0 0
    %4686 = vmatpush1.bf16.xpose.msra.mxu0 0
    %4687 = vmatprep.subr.bf16.mxu0 0
    %4688 = vmatpush1.bf16.xpose.msra.mxu0 0
    %4689 = vmatprep.subr.bf16.mxu0 0
    %4690 = vmatpush1.bf16.xpose.msra.mxu0 0
    %4691 = vmatprep.subr.bf16.mxu0 0
    %4692 = vmatpush1.bf16.xpose.msra.mxu0 0
    %4693 = vmatprep.subr.bf16.mxu0 0
    %4694 = vmatpush1.bf16.xpose.msra.mxu0 0
    %4695 = vmatprep.subr.bf16.mxu0 0
    %4696 = vmatpush1.bf16.xpose.msra.mxu0 0
    %4697 = vmatprep.subr.bf16.mxu0 0
    %4698 = vmatpush1.bf16.xpose.msra.mxu0 0
    %4699 = vmatprep.subr.bf16.mxu0 0
    %4700 = vmatpush1.bf16.xpose.msra.mxu0 0
    %4701 = vmatprep.subr.bf16.mxu0 0
    %4702 = vmatpush1.bf16.xpose.msra.mxu0 0
    %4703 = vmatprep.subr.bf16.mxu0 0
    %4704 = vmatpush1.bf16.xpose.msra.mxu0 0
    %4705 = vmatprep.subr.bf16.mxu0 0
    %4706 = vmatpush1.bf16.xpose.msra.mxu0 0
    %4707 = vmatprep.subr.bf16.mxu0 0
    %4708 = vmatpush1.bf16.xpose.msra.mxu0 0
    %4709 = vmatprep.mubr.bf16.mxu0 0
    %4710 = vmatmul.mubr.bf16.gmra.mrb[0].mxu0 %v4672
    %v4711 = vpop.f32.mrb[0].mxu0
    %v4712 = vadd.f32 0.0, %v4711
    %v4713 = vpop.f32.mrb[0].mxu0
    %v4714 = vpop.f32.mrb[0].mxu0
    %v4715 = vpop.f32.mrb[0].mxu0
    %4716 = vdwg.mxu0
    %v4718 = vsel %vm374, %v4476, 0
    %v4721 = vsel %vm374, %v4484, 0
    %4723 = vmatprep.subr.bf16.mxu0 0
    %4724 = vmatpush1.bf16.xpose.msra.mxu0 %v4721
    %4725 = vmatprep.subr.bf16.mxu0 0
    %4726 = vmatpush1.bf16.xpose.msra.mxu0 0
    %4727 = vmatprep.subr.bf16.mxu0 0
    %4728 = vmatpush1.bf16.xpose.msra.mxu0 0
    %4729 = vmatprep.subr.bf16.mxu0 0
    %4730 = vmatpush1.bf16.xpose.msra.mxu0 0
    %4731 = vmatprep.subr.bf16.mxu0 0
    %4732 = vmatpush1.bf16.xpose.msra.mxu0 0
    %4733 = vmatprep.subr.bf16.mxu0 0
    %4734 = vmatpush1.bf16.xpose.msra.mxu0 0
    %4735 = vmatprep.subr.bf16.mxu0 0
    %4736 = vmatpush1.bf16.xpose.msra.mxu0 0
    %4737 = vmatprep.subr.bf16.mxu0 0
    %4738 = vmatpush1.bf16.xpose.msra.mxu0 0
    %4739 = vmatprep.subr.bf16.mxu0 0
    %4740 = vmatpush1.bf16.xpose.msra.mxu0 0
    %4741 = vmatprep.subr.bf16.mxu0 0
    %4742 = vmatpush1.bf16.xpose.msra.mxu0 0
    %4743 = vmatprep.subr.bf16.mxu0 0
    %4744 = vmatpush1.bf16.xpose.msra.mxu0 0
    %4745 = vmatprep.subr.bf16.mxu0 0
    %4746 = vmatpush1.bf16.xpose.msra.mxu0 0
    %4747 = vmatprep.subr.bf16.mxu0 0
    %4748 = vmatpush1.bf16.xpose.msra.mxu0 0
    %4749 = vmatprep.subr.bf16.mxu0 0
    %4750 = vmatpush1.bf16.xpose.msra.mxu0 0
    %4751 = vmatprep.subr.bf16.mxu0 0
    %4752 = vmatpush1.bf16.xpose.msra.mxu0 0
    %4753 = vmatprep.subr.bf16.mxu0 0
    %4754 = vmatpush1.bf16.xpose.msra.mxu0 0
    %4755 = vmatprep.mubr.bf16.mxu0 0
    %4756 = vmatmul.mubr.bf16.gmra.mrb[0].mxu0 %v4718
    %v4757 = vpop.f32.mrb[0].mxu0
    %v4758 = vadd.f32 0.0, %v4757
    %v4759 = vpop.f32.mrb[0].mxu0
    %v4760 = vpop.f32.mrb[0].mxu0
    %v4761 = vpop.f32.mrb[0].mxu0
    %4762 = vdwg.mxu0
    %v4764 = vsel %vm374, %v4477, 0
    %v4767 = vsel %vm374, %v4485, 0
    %4769 = vmatprep.subr.bf16.mxu0 0
    %4770 = vmatpush1.bf16.xpose.msra.mxu0 %v4767
    %4771 = vmatprep.subr.bf16.mxu0 0
    %4772 = vmatpush1.bf16.xpose.msra.mxu0 0
    %4773 = vmatprep.subr.bf16.mxu0 0
    %4774 = vmatpush1.bf16.xpose.msra.mxu0 0
    %4775 = vmatprep.subr.bf16.mxu0 0
    %4776 = vmatpush1.bf16.xpose.msra.mxu0 0
    %4777 = vmatprep.subr.bf16.mxu0 0
    %4778 = vmatpush1.bf16.xpose.msra.mxu0 0
    %4779 = vmatprep.subr.bf16.mxu0 0
    %4780 = vmatpush1.bf16.xpose.msra.mxu0 0
    %4781 = vmatprep.subr.bf16.mxu0 0
    %4782 = vmatpush1.bf16.xpose.msra.mxu0 0
    %4783 = vmatprep.subr.bf16.mxu0 0
    %4784 = vmatpush1.bf16.xpose.msra.mxu0 0
    %4785 = vmatprep.subr.bf16.mxu0 0
    %4786 = vmatpush1.bf16.xpose.msra.mxu0 0
    %4787 = vmatprep.subr.bf16.mxu0 0
    %4788 = vmatpush1.bf16.xpose.msra.mxu0 0
    %4789 = vmatprep.subr.bf16.mxu0 0
    %4790 = vmatpush1.bf16.xpose.msra.mxu0 0
    %4791 = vmatprep.subr.bf16.mxu0 0
    %4792 = vmatpush1.bf16.xpose.msra.mxu0 0
    %4793 = vmatprep.subr.bf16.mxu0 0
    %4794 = vmatpush1.bf16.xpose.msra.mxu0 0
    %4795 = vmatprep.subr.bf16.mxu0 0
    %4796 = vmatpush1.bf16.xpose.msra.mxu0 0
    %4797 = vmatprep.subr.bf16.mxu0 0
    %4798 = vmatpush1.bf16.xpose.msra.mxu0 0
    %4799 = vmatprep.subr.bf16.mxu0 0
    %4800 = vmatpush1.bf16.xpose.msra.mxu0 0
    %4801 = vmatprep.mubr.bf16.mxu0 0
    %4802 = vmatmul.mubr.bf16.gmra.mrb[0].mxu0 %v4764
    %v4803 = vpop.f32.mrb[0].mxu0
    %v4804 = vadd.f32 0.0, %v4803
    %v4805 = vpop.f32.mrb[0].mxu0
    %v4806 = vpop.f32.mrb[0].mxu0
    %v4807 = vpop.f32.mrb[0].mxu0
    %4808 = vdwg.mxu0
    %v4810 = vsel %vm374, %v4478, 0
    %v4813 = vsel %vm374, %v4486, 0
    %4815 = vmatprep.subr.bf16.mxu0 0
    %4816 = vmatpush1.bf16.xpose.msra.mxu0 %v4813
    %4817 = vmatprep.subr.bf16.mxu0 0
    %4818 = vmatpush1.bf16.xpose.msra.mxu0 0
    %4819 = vmatprep.subr.bf16.mxu0 0
    %4820 = vmatpush1.bf16.xpose.msra.mxu0 0
    %4821 = vmatprep.subr.bf16.mxu0 0
    %4822 = vmatpush1.bf16.xpose.msra.mxu0 0
    %4823 = vmatprep.subr.bf16.mxu0 0
    %4824 = vmatpush1.bf16.xpose.msra.mxu0 0
    %4825 = vmatprep.subr.bf16.mxu0 0
    %4826 = vmatpush1.bf16.xpose.msra.mxu0 0
    %4827 = vmatprep.subr.bf16.mxu0 0
    %4828 = vmatpush1.bf16.xpose.msra.mxu0 0
    %4829 = vmatprep.subr.bf16.mxu0 0
    %4830 = vmatpush1.bf16.xpose.msra.mxu0 0
    %4831 = vmatprep.subr.bf16.mxu0 0
    %4832 = vmatpush1.bf16.xpose.msra.mxu0 0
    %4833 = vmatprep.subr.bf16.mxu0 0
    %4834 = vmatpush1.bf16.xpose.msra.mxu0 0
    %4835 = vmatprep.subr.bf16.mxu0 0
    %4836 = vmatpush1.bf16.xpose.msra.mxu0 0
    %4837 = vmatprep.subr.bf16.mxu0 0
    %4838 = vmatpush1.bf16.xpose.msra.mxu0 0
    %4839 = vmatprep.subr.bf16.mxu0 0
    %4840 = vmatpush1.bf16.xpose.msra.mxu0 0
    %4841 = vmatprep.subr.bf16.mxu0 0
    %4842 = vmatpush1.bf16.xpose.msra.mxu0 0
    %4843 = vmatprep.subr.bf16.mxu0 0
    %4844 = vmatpush1.bf16.xpose.msra.mxu0 0
    %4845 = vmatprep.subr.bf16.mxu0 0
    %4846 = vmatpush1.bf16.xpose.msra.mxu0 0
    %4847 = vmatprep.mubr.bf16.mxu0 0
    %4848 = vmatmul.mubr.bf16.gmra.mrb[0].mxu0 %v4810
    %v4849 = vpop.f32.mrb[0].mxu0
    %v4850 = vadd.f32 0.0, %v4849
    %v4851 = vpop.f32.mrb[0].mxu0
    %v4852 = vpop.f32.mrb[0].mxu0
    %v4853 = vpop.f32.mrb[0].mxu0
    %4854 = vdwg.mxu0
    %v4855 = vsel %vm374, %v4528, -inf
    %4856 = vmax.xlane.f32.xlu0 %v4855
    %v4857 = vpop.xlane.xlu0 %4856
    %v4858 = vsel %vm374, %v4574, -inf
    %4859 = vmax.xlane.f32.xlu0 %v4858
    %v4860 = vpop.xlane.xlu0 %4859
    %v4861 = vsel %vm374, %v4620, -inf
    %4862 = vmax.xlane.f32.xlu0 %v4861
    %v4863 = vpop.xlane.xlu0 %4862
    %v4864 = vsel %vm374, %v4666, -inf
    %4865 = vmax.xlane.f32.xlu0 %v4864
    %v4866 = vpop.xlane.xlu0 %4865
    %v4867 = vsel %vm374, %v4712, -inf
    %4868 = vmax.xlane.f32.xlu0 %v4867
    %v4869 = vpop.xlane.xlu0 %4868
    %v4870 = vsel %vm374, %v4758, -inf
    %4871 = vmax.xlane.f32.xlu0 %v4870
    %v4872 = vpop.xlane.xlu0 %4871
    %v4873 = vsel %vm374, %v4804, -inf
    %4874 = vmax.xlane.f32.xlu0 %v4873
    %v4875 = vpop.xlane.xlu0 %4874
    %v4876 = vsel %vm374, %v4850, -inf
    %4877 = vmax.xlane.f32.xlu0 %v4876
    %v4878 = vpop.xlane.xlu0 %4877
    %v4879 = vsub.f32 %v4528, %v4857
    %v4880 = vsub.f32 %v4574, %v4860
    %v4881 = vsub.f32 %v4620, %v4863
    %v4882 = vsub.f32 %v4666, %v4866
    %v4883 = vsub.f32 %v4712, %v4869
    %v4884 = vsub.f32 %v4758, %v4872
    %v4885 = vsub.f32 %v4804, %v4875
    %v4886 = vsub.f32 %v4850, %v4878
    %v4887 = vmul.f32 %v4879, 1.442695
    %v4888 = vpow.pop %v4887
    %v4889 = vmul.f32 %v4880, 1.442695
    %v4890 = vpow.pop %v4889
    %v4891 = vmul.f32 %v4881, 1.442695
    %v4892 = vpow.pop %v4891
    %v4893 = vmul.f32 %v4882, 1.442695
    %v4894 = vpow.pop %v4893
    %v4895 = vmul.f32 %v4883, 1.442695
    %v4896 = vpow.pop %v4895
    %v4897 = vmul.f32 %v4884, 1.442695
    %v4898 = vpow.pop %v4897
    %v4899 = vmul.f32 %v4885, 1.442695
    %v4900 = vpow.pop %v4899
    %v4901 = vmul.f32 %v4886, 1.442695
    %v4902 = vpow.pop %v4901
    %v4903 = vsel %vm374, %v4888, 0.0
    %4904 = vadd.xlane.f32.xlu0 %v4903
    %v4905 = vpop.xlane.xlu0 %4904
    %v4906 = vsel %vm374, %v4890, 0.0
    %4907 = vadd.xlane.f32.xlu0 %v4906
    %v4908 = vpop.xlane.xlu0 %4907
    %v4909 = vsel %vm374, %v4892, 0.0
    %4910 = vadd.xlane.f32.xlu0 %v4909
    %v4911 = vpop.xlane.xlu0 %4910
    %v4912 = vsel %vm374, %v4894, 0.0
    %4913 = vadd.xlane.f32.xlu0 %v4912
    %v4914 = vpop.xlane.xlu0 %4913
    %v4915 = vsel %vm374, %v4896, 0.0
    %4916 = vadd.xlane.f32.xlu0 %v4915
    %v4917 = vpop.xlane.xlu0 %4916
    %v4918 = vsel %vm374, %v4898, 0.0
    %4919 = vadd.xlane.f32.xlu0 %v4918
    %v4920 = vpop.xlane.xlu0 %4919
    %v4921 = vsel %vm374, %v4900, 0.0
    %4922 = vadd.xlane.f32.xlu0 %v4921
    %v4923 = vpop.xlane.xlu0 %4922
    %v4924 = vsel %vm374, %v4902, 0.0
    %4925 = vadd.xlane.f32.xlu0 %v4924
    %v4926 = vpop.xlane.xlu0 %4925
    %v4927 = vrcp.pop %v4905
    %v4928 = vmul.f32 %v4888, %v4927
    %v4929 = vrcp.pop %v4908
    %v4930 = vmul.f32 %v4890, %v4929
    %v4931 = vrcp.pop %v4911
    %v4932 = vmul.f32 %v4892, %v4931
    %v4933 = vrcp.pop %v4914
    %v4934 = vmul.f32 %v4894, %v4933
    %v4935 = vrcp.pop %v4917
    %v4936 = vmul.f32 %v4896, %v4935
    %v4937 = vrcp.pop %v4920
    %v4938 = vmul.f32 %v4898, %v4937
    %v4939 = vrcp.pop %v4923
    %v4940 = vmul.f32 %v4900, %v4939
    %v4941 = vrcp.pop %v4926
    %v4942 = vmul.f32 %v4902, %v4941
    %v4943 = vpack.c.bf16 %v4928, %v4928
    %v4944 = vpack.c.bf16 %v4930, %v4930
    %v4945 = vpack.c.bf16 %v4932, %v4932
    %v4946 = vpack.c.bf16 %v4934, %v4934
    %v4947 = vpack.c.bf16 %v4936, %v4936
    %v4948 = vpack.c.bf16 %v4938, %v4938
    %v4949 = vpack.c.bf16 %v4940, %v4940
    %v4950 = vpack.c.bf16 %v4942, %v4942
    %v4951 = vpack.c.bf16 %v4405, %v4405
    %v4952 = vpack.c.bf16 %v4453, %v4453
    %v4953 = vpack.c.bf16 %v4456, %v4456
    %v4954 = vpack.c.bf16 %v4459, %v4459
    %v4955 = vpack.c.bf16 %v4408, %v4408
    %v4956 = vpack.c.bf16 %v4463, %v4463
    %v4957 = vpack.c.bf16 %v4466, %v4466
    %v4958 = vpack.c.bf16 %v4469, %v4469
    %v4960 = vsel %vm374, %v4943, 0
    %v4963 = vsel %vm850, %v4951, 0
    %4965 = vmatprep.subr.bf16.mxu0 0
    %4966 = vmatpush1.bf16.msra.mxu0 %v4963
    %4967 = vmatprep.subr.bf16.mxu0 0
    %4968 = vmatpush1.bf16.msra.mxu0 0
    %4969 = vmatprep.subr.bf16.mxu0 0
    %4970 = vmatpush1.bf16.msra.mxu0 0
    %4971 = vmatprep.subr.bf16.mxu0 0
    %4972 = vmatpush1.bf16.msra.mxu0 0
    %4973 = vmatprep.subr.bf16.mxu0 0
    %4974 = vmatpush1.bf16.msra.mxu0 0
    %4975 = vmatprep.subr.bf16.mxu0 0
    %4976 = vmatpush1.bf16.msra.mxu0 0
    %4977 = vmatprep.subr.bf16.mxu0 0
    %4978 = vmatpush1.bf16.msra.mxu0 0
    %4979 = vmatprep.subr.bf16.mxu0 0
    %4980 = vmatpush1.bf16.msra.mxu0 0
    %4981 = vmatprep.subr.bf16.mxu0 0
    %4982 = vmatpush1.bf16.msra.mxu0 0
    %4983 = vmatprep.subr.bf16.mxu0 0
    %4984 = vmatpush1.bf16.msra.mxu0 0
    %4985 = vmatprep.subr.bf16.mxu0 0
    %4986 = vmatpush1.bf16.msra.mxu0 0
    %4987 = vmatprep.subr.bf16.mxu0 0
    %4988 = vmatpush1.bf16.msra.mxu0 0
    %4989 = vmatprep.subr.bf16.mxu0 0
    %4990 = vmatpush1.bf16.msra.mxu0 0
    %4991 = vmatprep.subr.bf16.mxu0 0
    %4992 = vmatpush1.bf16.msra.mxu0 0
    %4993 = vmatprep.subr.bf16.mxu0 0
    %4994 = vmatpush1.bf16.msra.mxu0 0
    %4995 = vmatprep.subr.bf16.mxu0 0
    %4996 = vmatpush1.bf16.msra.mxu0 0
    %4997 = vmatprep.mubr.bf16.mxu0 0
    %4998 = vmatmul.mubr.bf16.gmra.mrb[0].mxu0 %v4960
    %v4999 = vpop.f32.mrb[0].mxu0
    %v5000 = vadd.f32 0.0, %v4999
    %v5001 = vpop.f32.mrb[0].mxu0
    %v5002 = vpop.f32.mrb[0].mxu0
    %v5003 = vpop.f32.mrb[0].mxu0
    %5004 = vdwg.mxu0
    %v5006 = vsel %vm374, %v4944, 0
    %v5009 = vsel %vm850, %v4952, 0
    %5011 = vmatprep.subr.bf16.mxu0 0
    %5012 = vmatpush1.bf16.msra.mxu0 %v5009
    %5013 = vmatprep.subr.bf16.mxu0 0
    %5014 = vmatpush1.bf16.msra.mxu0 0
    %5015 = vmatprep.subr.bf16.mxu0 0
    %5016 = vmatpush1.bf16.msra.mxu0 0
    %5017 = vmatprep.subr.bf16.mxu0 0
    %5018 = vmatpush1.bf16.msra.mxu0 0
    %5019 = vmatprep.subr.bf16.mxu0 0
    %5020 = vmatpush1.bf16.msra.mxu0 0
    %5021 = vmatprep.subr.bf16.mxu0 0
    %5022 = vmatpush1.bf16.msra.mxu0 0
    %5023 = vmatprep.subr.bf16.mxu0 0
    %5024 = vmatpush1.bf16.msra.mxu0 0
    %5025 = vmatprep.subr.bf16.mxu0 0
    %5026 = vmatpush1.bf16.msra.mxu0 0
    %5027 = vmatprep.subr.bf16.mxu0 0
    %5028 = vmatpush1.bf16.msra.mxu0 0
    %5029 = vmatprep.subr.bf16.mxu0 0
    %5030 = vmatpush1.bf16.msra.mxu0 0
    %5031 = vmatprep.subr.bf16.mxu0 0
    %5032 = vmatpush1.bf16.msra.mxu0 0
    %5033 = vmatprep.subr.bf16.mxu0 0
    %5034 = vmatpush1.bf16.msra.mxu0 0
    %5035 = vmatprep.subr.bf16.mxu0 0
    %5036 = vmatpush1.bf16.msra.mxu0 0
    %5037 = vmatprep.subr.bf16.mxu0 0
    %5038 = vmatpush1.bf16.msra.mxu0 0
    %5039 = vmatprep.subr.bf16.mxu0 0
    %5040 = vmatpush1.bf16.msra.mxu0 0
    %5041 = vmatprep.subr.bf16.mxu0 0
    %5042 = vmatpush1.bf16.msra.mxu0 0
    %5043 = vmatprep.mubr.bf16.mxu0 0
    %5044 = vmatmul.mubr.bf16.gmra.mrb[0].mxu0 %v5006
    %v5045 = vpop.f32.mrb[0].mxu0
    %v5046 = vadd.f32 0.0, %v5045
    %v5047 = vpop.f32.mrb[0].mxu0
    %v5048 = vpop.f32.mrb[0].mxu0
    %v5049 = vpop.f32.mrb[0].mxu0
    %5050 = vdwg.mxu0
    %v5052 = vsel %vm374, %v4945, 0
    %v5055 = vsel %vm850, %v4953, 0
    %5057 = vmatprep.subr.bf16.mxu0 0
    %5058 = vmatpush1.bf16.msra.mxu0 %v5055
    %5059 = vmatprep.subr.bf16.mxu0 0
    %5060 = vmatpush1.bf16.msra.mxu0 0
    %5061 = vmatprep.subr.bf16.mxu0 0
    %5062 = vmatpush1.bf16.msra.mxu0 0
    %5063 = vmatprep.subr.bf16.mxu0 0
    %5064 = vmatpush1.bf16.msra.mxu0 0
    %5065 = vmatprep.subr.bf16.mxu0 0
    %5066 = vmatpush1.bf16.msra.mxu0 0
    %5067 = vmatprep.subr.bf16.mxu0 0
    %5068 = vmatpush1.bf16.msra.mxu0 0
    %5069 = vmatprep.subr.bf16.mxu0 0
    %5070 = vmatpush1.bf16.msra.mxu0 0
    %5071 = vmatprep.subr.bf16.mxu0 0
    %5072 = vmatpush1.bf16.msra.mxu0 0
    %5073 = vmatprep.subr.bf16.mxu0 0
    %5074 = vmatpush1.bf16.msra.mxu0 0
    %5075 = vmatprep.subr.bf16.mxu0 0
    %5076 = vmatpush1.bf16.msra.mxu0 0
    %5077 = vmatprep.subr.bf16.mxu0 0
    %5078 = vmatpush1.bf16.msra.mxu0 0
    %5079 = vmatprep.subr.bf16.mxu0 0
    %5080 = vmatpush1.bf16.msra.mxu0 0
    %5081 = vmatprep.subr.bf16.mxu0 0
    %5082 = vmatpush1.bf16.msra.mxu0 0
    %5083 = vmatprep.subr.bf16.mxu0 0
    %5084 = vmatpush1.bf16.msra.mxu0 0
    %5085 = vmatprep.subr.bf16.mxu0 0
    %5086 = vmatpush1.bf16.msra.mxu0 0
    %5087 = vmatprep.subr.bf16.mxu0 0
    %5088 = vmatpush1.bf16.msra.mxu0 0
    %5089 = vmatprep.mubr.bf16.mxu0 0
    %5090 = vmatmul.mubr.bf16.gmra.mrb[0].mxu0 %v5052
    %v5091 = vpop.f32.mrb[0].mxu0
    %v5092 = vadd.f32 0.0, %v5091
    %v5093 = vpop.f32.mrb[0].mxu0
    %v5094 = vpop.f32.mrb[0].mxu0
    %v5095 = vpop.f32.mrb[0].mxu0
    %5096 = vdwg.mxu0
    %v5098 = vsel %vm374, %v4946, 0
    %v5101 = vsel %vm850, %v4954, 0
    %5103 = vmatprep.subr.bf16.mxu0 0
    %5104 = vmatpush1.bf16.msra.mxu0 %v5101
    %5105 = vmatprep.subr.bf16.mxu0 0
    %5106 = vmatpush1.bf16.msra.mxu0 0
    %5107 = vmatprep.subr.bf16.mxu0 0
    %5108 = vmatpush1.bf16.msra.mxu0 0
    %5109 = vmatprep.subr.bf16.mxu0 0
    %5110 = vmatpush1.bf16.msra.mxu0 0
    %5111 = vmatprep.subr.bf16.mxu0 0
    %5112 = vmatpush1.bf16.msra.mxu0 0
    %5113 = vmatprep.subr.bf16.mxu0 0
    %5114 = vmatpush1.bf16.msra.mxu0 0
    %5115 = vmatprep.subr.bf16.mxu0 0
    %5116 = vmatpush1.bf16.msra.mxu0 0
    %5117 = vmatprep.subr.bf16.mxu0 0
    %5118 = vmatpush1.bf16.msra.mxu0 0
    %5119 = vmatprep.subr.bf16.mxu0 0
    %5120 = vmatpush1.bf16.msra.mxu0 0
    %5121 = vmatprep.subr.bf16.mxu0 0
    %5122 = vmatpush1.bf16.msra.mxu0 0
    %5123 = vmatprep.subr.bf16.mxu0 0
    %5124 = vmatpush1.bf16.msra.mxu0 0
    %5125 = vmatprep.subr.bf16.mxu0 0
    %5126 = vmatpush1.bf16.msra.mxu0 0
    %5127 = vmatprep.subr.bf16.mxu0 0
    %5128 = vmatpush1.bf16.msra.mxu0 0
    %5129 = vmatprep.subr.bf16.mxu0 0
    %5130 = vmatpush1.bf16.msra.mxu0 0
    %5131 = vmatprep.subr.bf16.mxu0 0
    %5132 = vmatpush1.bf16.msra.mxu0 0
    %5133 = vmatprep.subr.bf16.mxu0 0
    %5134 = vmatpush1.bf16.msra.mxu0 0
    %5135 = vmatprep.mubr.bf16.mxu0 0
    %5136 = vmatmul.mubr.bf16.gmra.mrb[0].mxu0 %v5098
    %v5137 = vpop.f32.mrb[0].mxu0
    %v5138 = vadd.f32 0.0, %v5137
    %v5139 = vpop.f32.mrb[0].mxu0
    %v5140 = vpop.f32.mrb[0].mxu0
    %v5141 = vpop.f32.mrb[0].mxu0
    %5142 = vdwg.mxu0
    %v5144 = vsel %vm374, %v4947, 0
    %v5147 = vsel %vm850, %v4955, 0
    %5149 = vmatprep.subr.bf16.mxu0 0
    %5150 = vmatpush1.bf16.msra.mxu0 %v5147
    %5151 = vmatprep.subr.bf16.mxu0 0
    %5152 = vmatpush1.bf16.msra.mxu0 0
    %5153 = vmatprep.subr.bf16.mxu0 0
    %5154 = vmatpush1.bf16.msra.mxu0 0
    %5155 = vmatprep.subr.bf16.mxu0 0
    %5156 = vmatpush1.bf16.msra.mxu0 0
    %5157 = vmatprep.subr.bf16.mxu0 0
    %5158 = vmatpush1.bf16.msra.mxu0 0
    %5159 = vmatprep.subr.bf16.mxu0 0
    %5160 = vmatpush1.bf16.msra.mxu0 0
    %5161 = vmatprep.subr.bf16.mxu0 0
    %5162 = vmatpush1.bf16.msra.mxu0 0
    %5163 = vmatprep.subr.bf16.mxu0 0
    %5164 = vmatpush1.bf16.msra.mxu0 0
    %5165 = vmatprep.subr.bf16.mxu0 0
    %5166 = vmatpush1.bf16.msra.mxu0 0
    %5167 = vmatprep.subr.bf16.mxu0 0
    %5168 = vmatpush1.bf16.msra.mxu0 0
    %5169 = vmatprep.subr.bf16.mxu0 0
    %5170 = vmatpush1.bf16.msra.mxu0 0
    %5171 = vmatprep.subr.bf16.mxu0 0
    %5172 = vmatpush1.bf16.msra.mxu0 0
    %5173 = vmatprep.subr.bf16.mxu0 0
    %5174 = vmatpush1.bf16.msra.mxu0 0
    %5175 = vmatprep.subr.bf16.mxu0 0
    %5176 = vmatpush1.bf16.msra.mxu0 0
    %5177 = vmatprep.subr.bf16.mxu0 0
    %5178 = vmatpush1.bf16.msra.mxu0 0
    %5179 = vmatprep.subr.bf16.mxu0 0
    %5180 = vmatpush1.bf16.msra.mxu0 0
    %5181 = vmatprep.mubr.bf16.mxu0 0
    %5182 = vmatmul.mubr.bf16.gmra.mrb[0].mxu0 %v5144
    %v5183 = vpop.f32.mrb[0].mxu0
    %v5184 = vadd.f32 0.0, %v5183
    %v5185 = vpop.f32.mrb[0].mxu0
    %v5186 = vpop.f32.mrb[0].mxu0
    %v5187 = vpop.f32.mrb[0].mxu0
    %5188 = vdwg.mxu0
    %v5190 = vsel %vm374, %v4948, 0
    %v5193 = vsel %vm850, %v4956, 0
    %5195 = vmatprep.subr.bf16.mxu0 0
    %5196 = vmatpush1.bf16.msra.mxu0 %v5193
    %5197 = vmatprep.subr.bf16.mxu0 0
    %5198 = vmatpush1.bf16.msra.mxu0 0
    %5199 = vmatprep.subr.bf16.mxu0 0
    %5200 = vmatpush1.bf16.msra.mxu0 0
    %5201 = vmatprep.subr.bf16.mxu0 0
    %5202 = vmatpush1.bf16.msra.mxu0 0
    %5203 = vmatprep.subr.bf16.mxu0 0
    %5204 = vmatpush1.bf16.msra.mxu0 0
    %5205 = vmatprep.subr.bf16.mxu0 0
    %5206 = vmatpush1.bf16.msra.mxu0 0
    %5207 = vmatprep.subr.bf16.mxu0 0
    %5208 = vmatpush1.bf16.msra.mxu0 0
    %5209 = vmatprep.subr.bf16.mxu0 0
    %5210 = vmatpush1.bf16.msra.mxu0 0
    %5211 = vmatprep.subr.bf16.mxu0 0
    %5212 = vmatpush1.bf16.msra.mxu0 0
    %5213 = vmatprep.subr.bf16.mxu0 0
    %5214 = vmatpush1.bf16.msra.mxu0 0
    %5215 = vmatprep.subr.bf16.mxu0 0
    %5216 = vmatpush1.bf16.msra.mxu0 0
    %5217 = vmatprep.subr.bf16.mxu0 0
    %5218 = vmatpush1.bf16.msra.mxu0 0
    %5219 = vmatprep.subr.bf16.mxu0 0
    %5220 = vmatpush1.bf16.msra.mxu0 0
    %5221 = vmatprep.subr.bf16.mxu0 0
    %5222 = vmatpush1.bf16.msra.mxu0 0
    %5223 = vmatprep.subr.bf16.mxu0 0
    %5224 = vmatpush1.bf16.msra.mxu0 0
    %5225 = vmatprep.subr.bf16.mxu0 0
    %5226 = vmatpush1.bf16.msra.mxu0 0
    %5227 = vmatprep.mubr.bf16.mxu0 0
    %5228 = vmatmul.mubr.bf16.gmra.mrb[0].mxu0 %v5190
    %v5229 = vpop.f32.mrb[0].mxu0
    %v5230 = vadd.f32 0.0, %v5229
    %v5231 = vpop.f32.mrb[0].mxu0
    %v5232 = vpop.f32.mrb[0].mxu0
    %v5233 = vpop.f32.mrb[0].mxu0
    %5234 = vdwg.mxu0
    %v5236 = vsel %vm374, %v4949, 0
    %v5239 = vsel %vm850, %v4957, 0
    %5241 = vmatprep.subr.bf16.mxu0 0
    %5242 = vmatpush1.bf16.msra.mxu0 %v5239
    %5243 = vmatprep.subr.bf16.mxu0 0
    %5244 = vmatpush1.bf16.msra.mxu0 0
    %5245 = vmatprep.subr.bf16.mxu0 0
    %5246 = vmatpush1.bf16.msra.mxu0 0
    %5247 = vmatprep.subr.bf16.mxu0 0
    %5248 = vmatpush1.bf16.msra.mxu0 0
    %5249 = vmatprep.subr.bf16.mxu0 0
    %5250 = vmatpush1.bf16.msra.mxu0 0
    %5251 = vmatprep.subr.bf16.mxu0 0
    %5252 = vmatpush1.bf16.msra.mxu0 0
    %5253 = vmatprep.subr.bf16.mxu0 0
    %5254 = vmatpush1.bf16.msra.mxu0 0
    %5255 = vmatprep.subr.bf16.mxu0 0
    %5256 = vmatpush1.bf16.msra.mxu0 0
    %5257 = vmatprep.subr.bf16.mxu0 0
    %5258 = vmatpush1.bf16.msra.mxu0 0
    %5259 = vmatprep.subr.bf16.mxu0 0
    %5260 = vmatpush1.bf16.msra.mxu0 0
    %5261 = vmatprep.subr.bf16.mxu0 0
    %5262 = vmatpush1.bf16.msra.mxu0 0
    %5263 = vmatprep.subr.bf16.mxu0 0
    %5264 = vmatpush1.bf16.msra.mxu0 0
    %5265 = vmatprep.subr.bf16.mxu0 0
    %5266 = vmatpush1.bf16.msra.mxu0 0
    %5267 = vmatprep.subr.bf16.mxu0 0
    %5268 = vmatpush1.bf16.msra.mxu0 0
    %5269 = vmatprep.subr.bf16.mxu0 0
    %5270 = vmatpush1.bf16.msra.mxu0 0
    %5271 = vmatprep.subr.bf16.mxu0 0
    %5272 = vmatpush1.bf16.msra.mxu0 0
    %5273 = vmatprep.mubr.bf16.mxu0 0
    %5274 = vmatmul.mubr.bf16.gmra.mrb[0].mxu0 %v5236
    %v5275 = vpop.f32.mrb[0].mxu0
    %v5276 = vadd.f32 0.0, %v5275
    %v5277 = vpop.f32.mrb[0].mxu0
    %v5278 = vpop.f32.mrb[0].mxu0
    %v5279 = vpop.f32.mrb[0].mxu0
    %5280 = vdwg.mxu0
    %v5282 = vsel %vm374, %v4950, 0
    %v5285 = vsel %vm850, %v4958, 0
    %5287 = vmatprep.subr.bf16.mxu0 0
    %5288 = vmatpush1.bf16.msra.mxu0 %v5285
    %5289 = vmatprep.subr.bf16.mxu0 0
    %5290 = vmatpush1.bf16.msra.mxu0 0
    %5291 = vmatprep.subr.bf16.mxu0 0
    %5292 = vmatpush1.bf16.msra.mxu0 0
    %5293 = vmatprep.subr.bf16.mxu0 0
    %5294 = vmatpush1.bf16.msra.mxu0 0
    %5295 = vmatprep.subr.bf16.mxu0 0
    %5296 = vmatpush1.bf16.msra.mxu0 0
    %5297 = vmatprep.subr.bf16.mxu0 0
    %5298 = vmatpush1.bf16.msra.mxu0 0
    %5299 = vmatprep.subr.bf16.mxu0 0
    %5300 = vmatpush1.bf16.msra.mxu0 0
    %5301 = vmatprep.subr.bf16.mxu0 0
    %5302 = vmatpush1.bf16.msra.mxu0 0
    %5303 = vmatprep.subr.bf16.mxu0 0
    %5304 = vmatpush1.bf16.msra.mxu0 0
    %5305 = vmatprep.subr.bf16.mxu0 0
    %5306 = vmatpush1.bf16.msra.mxu0 0
    %5307 = vmatprep.subr.bf16.mxu0 0
    %5308 = vmatpush1.bf16.msra.mxu0 0
    %5309 = vmatprep.subr.bf16.mxu0 0
    %5310 = vmatpush1.bf16.msra.mxu0 0
    %5311 = vmatprep.subr.bf16.mxu0 0
    %5312 = vmatpush1.bf16.msra.mxu0 0
    %5313 = vmatprep.subr.bf16.mxu0 0
    %5314 = vmatpush1.bf16.msra.mxu0 0
    %5315 = vmatprep.subr.bf16.mxu0 0
    %5316 = vmatpush1.bf16.msra.mxu0 0
    %5317 = vmatprep.subr.bf16.mxu0 0
    %5318 = vmatpush1.bf16.msra.mxu0 0
    %5319 = vmatprep.mubr.bf16.mxu0 0
    %5320 = vmatmul.mubr.bf16.gmra.mrb[0].mxu0 %v5282
    %v5321 = vpop.f32.mrb[0].mxu0
    %v5322 = vadd.f32 0.0, %v5321
    %v5323 = vpop.f32.mrb[0].mxu0
    %v5324 = vpop.f32.mrb[0].mxu0
    %v5325 = vpop.f32.mrb[0].mxu0
    %5326 = vdwg.mxu0
    %5328 = vrot.lane.b32.xlu0 %v5046, 8
    %v5329 = vpop.permute.xlu0 %5328
    %5332 = vrot.lane.b32.xlu0 %v5092, 16
    %v5333 = vpop.permute.xlu0 %5332
    %5336 = vrot.lane.b32.xlu0 %v5138, 24
    %v5337 = vpop.permute.xlu0 %5336
    %v5339 = vsel %vm374, %v5000, %v5329
    %v5340 = vsel %vm1229, %v5339, %v5333
    %v5341 = vsel %vm1231, %v5340, %v5337
    %5343 = vrot.lane.b32.xlu0 %v5230, 8
    %v5344 = vpop.permute.xlu0 %5343
    %5347 = vrot.lane.b32.xlu0 %v5276, 16
    %v5348 = vpop.permute.xlu0 %5347
    %5351 = vrot.lane.b32.xlu0 %v5322, 24
    %v5352 = vpop.permute.xlu0 %5351
    %v5354 = vsel %vm374, %v5184, %v5344
    %v5355 = vsel %vm1229, %v5354, %v5348
    %v5356 = vsel %vm1231, %v5355, %v5352
    %v5357 = vpack.c.bf16 %v5356, %v5341
    %v5358 = vlaneseq
    %v5359 = vshrl.u32 %v5358, 7
    %v5360 = vsub.s32 0, %v5359
    %v5361 = vrot.slane %v4229, %v5360
    %v5366 = vunpack.c.l.b16 %v4222
    %v5367 = vunpack.c.l.b16 %v4223
    %v5368 = vunpack.c.l.b16 %v4224
    %v5369 = vunpack.c.l.b16 %v4225
    %v5370 = vpack.c.b16 %v5367, %v5366
    %v5371 = vpack.c.b16 %v5369, %v5368
    %v5375 = vsel %vm139, %v5357, 0
    %5377 = vmatprep.subr.bf16.mxu0 0
    %5378 = vmatpush1.bf16.msra.mxu0 %v5370
    %5379 = vmatprep.subr.bf16.mxu0 0
    %5380 = vmatpush1.bf16.msra.mxu0 %v5371
    %5381 = vmatprep.subr.bf16.mxu0 0
    %5382 = vmatpush1.bf16.msra.mxu0 0
    %5383 = vmatprep.subr.bf16.mxu0 0
    %5384 = vmatpush1.bf16.msra.mxu0 0
    %5385 = vmatprep.subr.bf16.mxu0 0
    %5386 = vmatpush1.bf16.msra.mxu0 0
    %5387 = vmatprep.subr.bf16.mxu0 0
    %5388 = vmatpush1.bf16.msra.mxu0 0
    %5389 = vmatprep.subr.bf16.mxu0 0
    %5390 = vmatpush1.bf16.msra.mxu0 0
    %5391 = vmatprep.subr.bf16.mxu0 0
    %5392 = vmatpush1.bf16.msra.mxu0 0
    %5393 = vmatprep.subr.bf16.mxu0 0
    %5394 = vmatpush1.bf16.msra.mxu0 0
    %5395 = vmatprep.subr.bf16.mxu0 0
    %5396 = vmatpush1.bf16.msra.mxu0 0
    %5397 = vmatprep.subr.bf16.mxu0 0
    %5398 = vmatpush1.bf16.msra.mxu0 0
    %5399 = vmatprep.subr.bf16.mxu0 0
    %5400 = vmatpush1.bf16.msra.mxu0 0
    %5401 = vmatprep.subr.bf16.mxu0 0
    %5402 = vmatpush1.bf16.msra.mxu0 0
    %5403 = vmatprep.subr.bf16.mxu0 0
    %5404 = vmatpush1.bf16.msra.mxu0 0
    %5405 = vmatprep.subr.bf16.mxu0 0
    %5406 = vmatpush1.bf16.msra.mxu0 0
    %5407 = vmatprep.subr.bf16.mxu0 0
    %5408 = vmatpush1.bf16.msra.mxu0 0
    %5409 = vmatprep.mubr.bf16.mxu0 0
    %5410 = vmatmul.mubr.bf16.gmra.mrb[0].mxu0 %v5375
    %v5411 = vpop.f32.mrb[0].mxu0
    %v5412 = vadd.f32 %v5361, %v5411
    %v5413 = vpop.f32.mrb[0].mxu0
    %v5414 = vpop.f32.mrb[0].mxu0
    %v5415 = vadd.f32 %v5361, %v5414
    %v5416 = vpop.f32.mrb[0].mxu0
    %5417 = vdwg.mxu0
    %v5418 = vadd.f32 %v4207, %v5412
    %v5419 = vadd.f32 %v4208, %v5415
    %v5420 = vsel %vm139, %v5418, 0.0
    %5421 = vadd.xlane.f32.xlu0 %v5420
    %v5422 = vpop.xlane.xlu0 %5421
    %v5423 = vsel %vm139, %v5419, 0.0
    %5424 = vadd.xlane.f32.xlu0 %v5423
    %v5425 = vpop.xlane.xlu0 %5424
    %v5426 = vmul.f32 %v5422, %v1317
    %v5427 = vmul.f32 %v5425, %v1317
    %v5428 = vsub.f32 %v5418, %v5426
    %v5429 = vsub.f32 %v5419, %v5427
    %v5430 = vmul.f32 %v5428, %v5428
    %v5431 = vmul.f32 %v5429, %v5429
    %v5432 = vsel %vm139, %v5430, 0.0
    %5433 = vadd.xlane.f32.xlu0 %v5432
    %v5434 = vpop.xlane.xlu0 %5433
    %v5435 = vsel %vm139, %v5431, 0.0
    %5436 = vadd.xlane.f32.xlu0 %v5435
    %v5437 = vpop.xlane.xlu0 %5436
    %v5438 = vmul.f32 %v5434, %v1317
    %v5439 = vmul.f32 %v5437, %v1317
    %v5440 = vadd.f32 %v5438, 1e-05
    %v5441 = vadd.f32 %v5439, 1e-05
    %v5442 = vrsqrt.pop %v5440
    %v5443 = vrsqrt.pop %v5441
    %v5444 = vmul.f32 %v5428, %v5442
    %v5445 = vmul.f32 %v5429, %v5443
    %v5446 = vlaneseq
    %v5447 = vshrl.u32 %v5446, 7
    %v5448 = vsub.s32 0, %v5447
    %v5449 = vrot.slane %v4230, %v5448
    %v5450 = vmul.f32 %v5444, %v5449
    %v5451 = vmul.f32 %v5445, %v5449
    %v5452 = vlaneseq
    %v5453 = vshrl.u32 %v5452, 7
    %v5454 = vsub.s32 0, %v5453
    %v5455 = vrot.slane %v4231, %v5454
    %v5456 = vadd.f32 %v5450, %v5455
    %v5457 = vadd.f32 %v5451, %v5455
    %v5458 = vld [vmem:[%s7] sm:$0xf]
    %v5459 = vld [vmem:[%s7 + $0x4] sm:$0xf]
    %v5460 = vld [vmem:[%s7 + $0x8] sm:$0xf]
    %v5461 = vld [vmem:[%s7 + $0xc] sm:$0xf]
    %v5462 = vld [vmem:[%s7 + $0x10] sm:$0xf]
    %v5463 = vld [vmem:[%s7 + $0x14] sm:$0xf]
    %v5464 = vld [vmem:[%s7 + $0x18] sm:$0xf]
    %v5465 = vld [vmem:[%s7 + $0x1c] sm:$0xf]
    %v5466 = vld [vmem:[%s9] sm:$0x1]
    %v5467 = vld [vmem:[%s8 + $0xc] sm:$0x1]
    %v5468 = vld [vmem:[%s8 + $0xd] sm:$0x1]
    %v5469 = vld [vmem:[%s8 + $0xe] sm:$0x1]
    %v5470 = vpack.c.bf16 %v5457, %v5456
    %v5472 = vlaneseq
    %v5473 = vshrl.u32 %v5472, 7
    %v5474 = vsub.s32 0, %v5473
    %v5475 = vrot.slane %v5466, %v5474
    %v5481 = vunpack.c.l.b16 %v5458
    %v5482 = vunpack.c.l.b16 %v5459
    %v5483 = vunpack.c.l.b16 %v5460
    %v5484 = vunpack.c.l.b16 %v5461
    %v5485 = vpack.c.b16 %v5482, %v5481
    %v5486 = vpack.c.b16 %v5484, %v5483
    %v5490 = vsel %vm139, %v5470, 0
    %5492 = vmatprep.subr.bf16.mxu0 0
    %5493 = vmatpush1.bf16.msra.mxu0 %v5485
    %5494 = vmatprep.subr.bf16.mxu0 0
    %5495 = vmatpush1.bf16.msra.mxu0 %v5486
    %5496 = vmatprep.subr.bf16.mxu0 0
    %5497 = vmatpush1.bf16.msra.mxu0 0
    %5498 = vmatprep.subr.bf16.mxu0 0
    %5499 = vmatpush1.bf16.msra.mxu0 0
    %5500 = vmatprep.subr.bf16.mxu0 0
    %5501 = vmatpush1.bf16.msra.mxu0 0
    %5502 = vmatprep.subr.bf16.mxu0 0
    %5503 = vmatpush1.bf16.msra.mxu0 0
    %5504 = vmatprep.subr.bf16.mxu0 0
    %5505 = vmatpush1.bf16.msra.mxu0 0
    %5506 = vmatprep.subr.bf16.mxu0 0
    %5507 = vmatpush1.bf16.msra.mxu0 0
    %5508 = vmatprep.subr.bf16.mxu0 0
    %5509 = vmatpush1.bf16.msra.mxu0 0
    %5510 = vmatprep.subr.bf16.mxu0 0
    %5511 = vmatpush1.bf16.msra.mxu0 0
    %5512 = vmatprep.subr.bf16.mxu0 0
    %5513 = vmatpush1.bf16.msra.mxu0 0
    %5514 = vmatprep.subr.bf16.mxu0 0
    %5515 = vmatpush1.bf16.msra.mxu0 0
    %5516 = vmatprep.subr.bf16.mxu0 0
    %5517 = vmatpush1.bf16.msra.mxu0 0
    %5518 = vmatprep.subr.bf16.mxu0 0
    %5519 = vmatpush1.bf16.msra.mxu0 0
    %5520 = vmatprep.subr.bf16.mxu0 0
    %5521 = vmatpush1.bf16.msra.mxu0 0
    %5522 = vmatprep.subr.bf16.mxu0 0
    %5523 = vmatpush1.bf16.msra.mxu0 0
    %5524 = vmatprep.mubr.bf16.mxu0 0
    %5525 = vmatmul.mubr.bf16.gmra.mrb[0].mxu0 %v5490
    %v5526 = vpop.f32.mrb[0].mxu0
    %v5527 = vadd.f32 %v5475, %v5526
    %v5528 = vpop.f32.mrb[0].mxu0
    %v5529 = vpop.f32.mrb[0].mxu0
    %v5530 = vadd.f32 %v5475, %v5529
    %v5531 = vpop.f32.mrb[0].mxu0
    %5532 = vdwg.mxu0
    %v5533 = vmax.f32 %v5527, 0.0
    %v5534 = vmax.f32 %v5530, 0.0
    %v5535 = vpack.c.bf16 %v5534, %v5533
    %v5536 = vlaneseq
    %v5537 = vshrl.u32 %v5536, 7
    %v5538 = vsub.s32 0, %v5537
    %v5539 = vrot.slane %v5467, %v5538
    %v5544 = vunpack.c.l.b16 %v5462
    %v5545 = vunpack.c.l.b16 %v5463
    %v5546 = vunpack.c.l.b16 %v5464
    %v5547 = vunpack.c.l.b16 %v5465
    %v5548 = vpack.c.b16 %v5545, %v5544
    %v5549 = vpack.c.b16 %v5547, %v5546
    %v5551 = vsel %vm1442, %v5535, 0
    %v5554 = vsel %vm1442, %v5548, 0
    %v5557 = vsel %vm1442, %v5549, 0
    %5559 = vmatprep.subr.bf16.mxu0 0
    %5560 = vmatpush1.bf16.xpose.msra.mxu0 %v5554
    %5561 = vmatprep.subr.bf16.mxu0 0
    %5562 = vmatpush1.bf16.xpose.msra.mxu0 %v5557
    %5563 = vmatprep.subr.bf16.mxu0 0
    %5564 = vmatpush1.bf16.xpose.msra.mxu0 0
    %5565 = vmatprep.subr.bf16.mxu0 0
    %5566 = vmatpush1.bf16.xpose.msra.mxu0 0
    %5567 = vmatprep.subr.bf16.mxu0 0
    %5568 = vmatpush1.bf16.xpose.msra.mxu0 0
    %5569 = vmatprep.subr.bf16.mxu0 0
    %5570 = vmatpush1.bf16.xpose.msra.mxu0 0
    %5571 = vmatprep.subr.bf16.mxu0 0
    %5572 = vmatpush1.bf16.xpose.msra.mxu0 0
    %5573 = vmatprep.subr.bf16.mxu0 0
    %5574 = vmatpush1.bf16.xpose.msra.mxu0 0
    %5575 = vmatprep.subr.bf16.mxu0 0
    %5576 = vmatpush1.bf16.xpose.msra.mxu0 0
    %5577 = vmatprep.subr.bf16.mxu0 0
    %5578 = vmatpush1.bf16.xpose.msra.mxu0 0
    %5579 = vmatprep.subr.bf16.mxu0 0
    %5580 = vmatpush1.bf16.xpose.msra.mxu0 0
    %5581 = vmatprep.subr.bf16.mxu0 0
    %5582 = vmatpush1.bf16.xpose.msra.mxu0 0
    %5583 = vmatprep.subr.bf16.mxu0 0
    %5584 = vmatpush1.bf16.xpose.msra.mxu0 0
    %5585 = vmatprep.subr.bf16.mxu0 0
    %5586 = vmatpush1.bf16.xpose.msra.mxu0 0
    %5587 = vmatprep.subr.bf16.mxu0 0
    %5588 = vmatpush1.bf16.xpose.msra.mxu0 0
    %5589 = vmatprep.subr.bf16.mxu0 0
    %5590 = vmatpush1.bf16.xpose.msra.mxu0 0
    %5591 = vmatprep.mubr.bf16.mxu0 0
    %5592 = vmatmul.mubr.bf16.gmra.mrb[0].mxu0 %v5551
    %v5593 = vpop.f32.mrb[0].mxu0
    %v5594 = vadd.f32 %v5539, %v5593
    %v5595 = vpop.f32.mrb[0].mxu0
    %v5596 = vpop.f32.mrb[0].mxu0
    %v5597 = vadd.f32 %v5539, %v5596
    %v5598 = vpop.f32.mrb[0].mxu0
    %5599 = vdwg.mxu0
    %v5600 = vadd.f32 %v5456, %v5594
    %v5601 = vadd.f32 %v5457, %v5597
    %v5602 = vsel %vm139, %v5600, 0.0
    %5603 = vadd.xlane.f32.xlu0 %v5602
    %v5604 = vpop.xlane.xlu0 %5603
    %v5605 = vsel %vm139, %v5601, 0.0
    %5606 = vadd.xlane.f32.xlu0 %v5605
    %v5607 = vpop.xlane.xlu0 %5606
    %v5608 = vmul.f32 %v5604, %v1317
    %v5609 = vmul.f32 %v5607, %v1317
    %v5610 = vsub.f32 %v5600, %v5608
    %v5611 = vsub.f32 %v5601, %v5609
    %v5612 = vmul.f32 %v5610, %v5610
    %v5613 = vmul.f32 %v5611, %v5611
    %v5614 = vsel %vm139, %v5612, 0.0
    %5615 = vadd.xlane.f32.xlu0 %v5614
    %v5616 = vpop.xlane.xlu0 %5615
    %v5617 = vsel %vm139, %v5613, 0.0
    %5618 = vadd.xlane.f32.xlu0 %v5617
    %v5619 = vpop.xlane.xlu0 %5618
    %v5620 = vmul.f32 %v5616, %v1317
    %v5621 = vmul.f32 %v5619, %v1317
    %v5622 = vadd.f32 %v5620, 1e-05
    %v5623 = vadd.f32 %v5621, 1e-05
    %v5624 = vrsqrt.pop %v5622
    %v5625 = vrsqrt.pop %v5623
    %v5626 = vmul.f32 %v5610, %v5624
    %v5627 = vmul.f32 %v5611, %v5625
    %v5628 = vlaneseq
    %v5629 = vshrl.u32 %v5628, 7
    %v5630 = vsub.s32 0, %v5629
    %v5631 = vrot.slane %v5468, %v5630
    %v5632 = vmul.f32 %v5626, %v5631
    %v5633 = vmul.f32 %v5627, %v5631
    %v5634 = vlaneseq
    %v5635 = vshrl.u32 %v5634, 7
    %v5636 = vsub.s32 0, %v5635
    %v5637 = vrot.slane %v5469, %v5636
    %v5638 = vadd.f32 %v5632, %v5637
    %v5639 = vadd.f32 %v5633, %v5637
    %s5640 = scalar_lea.vmem [#allocation8], 128
    %v5641 = vld [vmem:[%s5640] sm:$0xf]
    %v5642 = vld [vmem:[%s5640 + $0x4] sm:$0xf]
    %v5643 = vld [vmem:[%s5640 + $0x8] sm:$0xf]
    %v5644 = vld [vmem:[%s5640 + $0xc] sm:$0xf]
    %v5645 = vld [vmem:[%s5640 + $0x10] sm:$0xf]
    %v5646 = vld [vmem:[%s5640 + $0x14] sm:$0xf]
    %v5647 = vld [vmem:[%s5640 + $0x18] sm:$0xf]
    %v5648 = vld [vmem:[%s5640 + $0x1c] sm:$0xf]
    %v5649 = vld [vmem:[%s5640 + $0x20] sm:$0xf]
    %v5650 = vld [vmem:[%s5640 + $0x24] sm:$0xf]
    %v5651 = vld [vmem:[%s5640 + $0x28] sm:$0xf]
    %v5652 = vld [vmem:[%s5640 + $0x2c] sm:$0xf]
    %v5653 = vld [vmem:[%s5640 + $0x30] sm:$0xf]
    %v5654 = vld [vmem:[%s5640 + $0x34] sm:$0xf]
    %v5655 = vld [vmem:[%s5640 + $0x38] sm:$0xf]
    %v5656 = vld [vmem:[%s5640 + $0x3c] sm:$0xf]
    %s5657 = scalar_lea.vmem %s8, 16
    %v5658 = vld [vmem:[%s5657] sm:$0x1]
    %v5659 = vld [vmem:[%s5657 + $0x1] sm:$0x1]
    %v5660 = vld [vmem:[%s5657 + $0x2] sm:$0x1]
    %v5661 = vld [vmem:[%s5657 + $0x3] sm:$0x1]
    %v5662 = vld [vmem:[%s5657 + $0x4] sm:$0x1]
    %v5663 = vld [vmem:[%s5657 + $0x5] sm:$0x1]
    %v5664 = vpack.c.bf16 %v5639, %v5638
    %v5665 = vlaneseq
    %v5666 = vshrl.u32 %v5665, 7
    %v5667 = vsub.s32 0, %v5666
    %v5668 = vrot.slane %v5658, %v5667
    %v5673 = vunpack.c.l.b16 %v5641
    %v5674 = vunpack.c.l.b16 %v5642
    %v5675 = vunpack.c.l.b16 %v5643
    %v5676 = vunpack.c.l.b16 %v5644
    %v5677 = vpack.c.b16 %v5674, %v5673
    %v5678 = vpack.c.b16 %v5676, %v5675
    %v5682 = vsel %vm139, %v5664, 0
    %5684 = vmatprep.subr.bf16.mxu0 0
    %5685 = vmatpush1.bf16.msra.mxu0 %v5677
    %5686 = vmatprep.subr.bf16.mxu0 0
    %5687 = vmatpush1.bf16.msra.mxu0 %v5678
    %5688 = vmatprep.subr.bf16.mxu0 0
    %5689 = vmatpush1.bf16.msra.mxu0 0
    %5690 = vmatprep.subr.bf16.mxu0 0
    %5691 = vmatpush1.bf16.msra.mxu0 0
    %5692 = vmatprep.subr.bf16.mxu0 0
    %5693 = vmatpush1.bf16.msra.mxu0 0
    %5694 = vmatprep.subr.bf16.mxu0 0
    %5695 = vmatpush1.bf16.msra.mxu0 0
    %5696 = vmatprep.subr.bf16.mxu0 0
    %5697 = vmatpush1.bf16.msra.mxu0 0
    %5698 = vmatprep.subr.bf16.mxu0 0
    %5699 = vmatpush1.bf16.msra.mxu0 0
    %5700 = vmatprep.subr.bf16.mxu0 0
    %5701 = vmatpush1.bf16.msra.mxu0 0
    %5702 = vmatprep.subr.bf16.mxu0 0
    %5703 = vmatpush1.bf16.msra.mxu0 0
    %5704 = vmatprep.subr.bf16.mxu0 0
    %5705 = vmatpush1.bf16.msra.mxu0 0
    %5706 = vmatprep.subr.bf16.mxu0 0
    %5707 = vmatpush1.bf16.msra.mxu0 0
    %5708 = vmatprep.subr.bf16.mxu0 0
    %5709 = vmatpush1.bf16.msra.mxu0 0
    %5710 = vmatprep.subr.bf16.mxu0 0
    %5711 = vmatpush1.bf16.msra.mxu0 0
    %5712 = vmatprep.subr.bf16.mxu0 0
    %5713 = vmatpush1.bf16.msra.mxu0 0
    %5714 = vmatprep.subr.bf16.mxu0 0
    %5715 = vmatpush1.bf16.msra.mxu0 0
    %5716 = vmatprep.mubr.bf16.mxu0 0
    %5717 = vmatmul.mubr.bf16.gmra.mrb[0].mxu0 %v5682
    %v5718 = vpop.f32.mrb[0].mxu0
    %v5719 = vadd.f32 %v5668, %v5718
    %v5720 = vpop.f32.mrb[0].mxu0
    %v5721 = vpop.f32.mrb[0].mxu0
    %v5722 = vadd.f32 %v5668, %v5721
    %v5723 = vpop.f32.mrb[0].mxu0
    %5724 = vdwg.mxu0
    %v5725 = vlaneseq
    %v5726 = vshrl.u32 %v5725, 7
    %v5727 = vsub.s32 0, %v5726
    %v5728 = vrot.slane %v5659, %v5727
    %v5733 = vunpack.c.l.b16 %v5645
    %v5734 = vunpack.c.l.b16 %v5646
    %v5735 = vunpack.c.l.b16 %v5647
    %v5736 = vunpack.c.l.b16 %v5648
    %v5737 = vpack.c.b16 %v5734, %v5733
    %v5738 = vpack.c.b16 %v5736, %v5735
    %5741 = vmatprep.subr.bf16.mxu0 0
    %5742 = vmatpush1.bf16.msra.mxu0 %v5737
    %5743 = vmatprep.subr.bf16.mxu0 0
    %5744 = vmatpush1.bf16.msra.mxu0 %v5738
    %5745 = vmatprep.subr.bf16.mxu0 0
    %5746 = vmatpush1.bf16.msra.mxu0 0
    %5747 = vmatprep.subr.bf16.mxu0 0
    %5748 = vmatpush1.bf16.msra.mxu0 0
    %5749 = vmatprep.subr.bf16.mxu0 0
    %5750 = vmatpush1.bf16.msra.mxu0 0
    %5751 = vmatprep.subr.bf16.mxu0 0
    %5752 = vmatpush1.bf16.msra.mxu0 0
    %5753 = vmatprep.subr.bf16.mxu0 0
    %5754 = vmatpush1.bf16.msra.mxu0 0
    %5755 = vmatprep.subr.bf16.mxu0 0
    %5756 = vmatpush1.bf16.msra.mxu0 0
    %5757 = vmatprep.subr.bf16.mxu0 0
    %5758 = vmatpush1.bf16.msra.mxu0 0
    %5759 = vmatprep.subr.bf16.mxu0 0
    %5760 = vmatpush1.bf16.msra.mxu0 0
    %5761 = vmatprep.subr.bf16.mxu0 0
    %5762 = vmatpush1.bf16.msra.mxu0 0
    %5763 = vmatprep.subr.bf16.mxu0 0
    %5764 = vmatpush1.bf16.msra.mxu0 0
    %5765 = vmatprep.subr.bf16.mxu0 0
    %5766 = vmatpush1.bf16.msra.mxu0 0
    %5767 = vmatprep.subr.bf16.mxu0 0
    %5768 = vmatpush1.bf16.msra.mxu0 0
    %5769 = vmatprep.subr.bf16.mxu0 0
    %5770 = vmatpush1.bf16.msra.mxu0 0
    %5771 = vmatprep.subr.bf16.mxu0 0
    %5772 = vmatpush1.bf16.msra.mxu0 0
    %5773 = vmatprep.mubr.bf16.mxu0 0
    %5774 = vmatmul.mubr.bf16.gmra.mrb[0].mxu0 %v5682
    %v5775 = vpop.f32.mrb[0].mxu0
    %v5776 = vadd.f32 %v5728, %v5775
    %v5777 = vpop.f32.mrb[0].mxu0
    %v5778 = vpop.f32.mrb[0].mxu0
    %v5779 = vadd.f32 %v5728, %v5778
    %v5780 = vpop.f32.mrb[0].mxu0
    %5781 = vdwg.mxu0
    %v5782 = vlaneseq
    %v5783 = vshrl.u32 %v5782, 7
    %v5784 = vsub.s32 0, %v5783
    %v5785 = vrot.slane %v5660, %v5784
    %v5790 = vunpack.c.l.b16 %v5649
    %v5791 = vunpack.c.l.b16 %v5650
    %v5792 = vunpack.c.l.b16 %v5651
    %v5793 = vunpack.c.l.b16 %v5652
    %v5794 = vpack.c.b16 %v5791, %v5790
    %v5795 = vpack.c.b16 %v5793, %v5792
    %5798 = vmatprep.subr.bf16.mxu0 0
    %5799 = vmatpush1.bf16.msra.mxu0 %v5794
    %5800 = vmatprep.subr.bf16.mxu0 0
    %5801 = vmatpush1.bf16.msra.mxu0 %v5795
    %5802 = vmatprep.subr.bf16.mxu0 0
    %5803 = vmatpush1.bf16.msra.mxu0 0
    %5804 = vmatprep.subr.bf16.mxu0 0
    %5805 = vmatpush1.bf16.msra.mxu0 0
    %5806 = vmatprep.subr.bf16.mxu0 0
    %5807 = vmatpush1.bf16.msra.mxu0 0
    %5808 = vmatprep.subr.bf16.mxu0 0
    %5809 = vmatpush1.bf16.msra.mxu0 0
    %5810 = vmatprep.subr.bf16.mxu0 0
    %5811 = vmatpush1.bf16.msra.mxu0 0
    %5812 = vmatprep.subr.bf16.mxu0 0
    %5813 = vmatpush1.bf16.msra.mxu0 0
    %5814 = vmatprep.subr.bf16.mxu0 0
    %5815 = vmatpush1.bf16.msra.mxu0 0
    %5816 = vmatprep.subr.bf16.mxu0 0
    %5817 = vmatpush1.bf16.msra.mxu0 0
    %5818 = vmatprep.subr.bf16.mxu0 0
    %5819 = vmatpush1.bf16.msra.mxu0 0
    %5820 = vmatprep.subr.bf16.mxu0 0
    %5821 = vmatpush1.bf16.msra.mxu0 0
    %5822 = vmatprep.subr.bf16.mxu0 0
    %5823 = vmatpush1.bf16.msra.mxu0 0
    %5824 = vmatprep.subr.bf16.mxu0 0
    %5825 = vmatpush1.bf16.msra.mxu0 0
    %5826 = vmatprep.subr.bf16.mxu0 0
    %5827 = vmatpush1.bf16.msra.mxu0 0
    %5828 = vmatprep.subr.bf16.mxu0 0
    %5829 = vmatpush1.bf16.msra.mxu0 0
    %5830 = vmatprep.mubr.bf16.mxu0 0
    %5831 = vmatmul.mubr.bf16.gmra.mrb[0].mxu0 %v5682
    %v5832 = vpop.f32.mrb[0].mxu0
    %v5833 = vadd.f32 %v5785, %v5832
    %v5834 = vpop.f32.mrb[0].mxu0
    %v5835 = vpop.f32.mrb[0].mxu0
    %v5836 = vadd.f32 %v5785, %v5835
    %v5837 = vpop.f32.mrb[0].mxu0
    %5838 = vdwg.mxu0
    %5840 = vrot.lane.b32.xlu0 %v5719, 120
    %v5841 = vpop.permute.xlu0 %5840
    %5843 = vrot.lane.b32.xlu0 %v5719, 112
    %v5844 = vpop.permute.xlu0 %5843
    %5846 = vrot.lane.b32.xlu0 %v5719, 104
    %v5847 = vpop.permute.xlu0 %5846
    %5850 = vrot.lane.b32.xlu0 %v5722, 120
    %v5851 = vpop.permute.xlu0 %5850
    %5853 = vrot.lane.b32.xlu0 %v5722, 112
    %v5854 = vpop.permute.xlu0 %5853
    %5856 = vrot.lane.b32.xlu0 %v5722, 104
    %v5857 = vpop.permute.xlu0 %5856
    %5860 = vrot.lane.b32.xlu0 %v5776, 120
    %v5861 = vpop.permute.xlu0 %5860
    %5863 = vrot.lane.b32.xlu0 %v5776, 112
    %v5864 = vpop.permute.xlu0 %5863
    %5866 = vrot.lane.b32.xlu0 %v5776, 104
    %v5867 = vpop.permute.xlu0 %5866
    %5870 = vrot.lane.b32.xlu0 %v5779, 120
    %v5871 = vpop.permute.xlu0 %5870
    %5873 = vrot.lane.b32.xlu0 %v5779, 112
    %v5874 = vpop.permute.xlu0 %5873
    %5876 = vrot.lane.b32.xlu0 %v5779, 104
    %v5877 = vpop.permute.xlu0 %5876
    %5880 = vrot.lane.b32.xlu0 %v5833, 120
    %v5881 = vpop.permute.xlu0 %5880
    %5883 = vrot.lane.b32.xlu0 %v5833, 112
    %v5884 = vpop.permute.xlu0 %5883
    %5886 = vrot.lane.b32.xlu0 %v5833, 104
    %v5887 = vpop.permute.xlu0 %5886
    %5890 = vrot.lane.b32.xlu0 %v5836, 120
    %v5891 = vpop.permute.xlu0 %5890
    %5893 = vrot.lane.b32.xlu0 %v5836, 112
    %v5894 = vpop.permute.xlu0 %5893
    %5896 = vrot.lane.b32.xlu0 %v5836, 104
    %v5897 = vpop.permute.xlu0 %5896
    %v5899 = vpack.c.bf16 %v5719, %v5719
    %v5900 = vpack.c.bf16 %v5841, %v5841
    %v5901 = vpack.c.bf16 %v5844, %v5844
    %v5902 = vpack.c.bf16 %v5847, %v5847
    %v5903 = vpack.c.bf16 %v5722, %v5722
    %v5904 = vpack.c.bf16 %v5851, %v5851
    %v5905 = vpack.c.bf16 %v5854, %v5854
    %v5906 = vpack.c.bf16 %v5857, %v5857
    %v5907 = vpack.c.bf16 %v5776, %v5776
    %v5908 = vpack.c.bf16 %v5861, %v5861
    %v5909 = vpack.c.bf16 %v5864, %v5864
    %v5910 = vpack.c.bf16 %v5867, %v5867
    %v5911 = vpack.c.bf16 %v5779, %v5779
    %v5912 = vpack.c.bf16 %v5871, %v5871
    %v5913 = vpack.c.bf16 %v5874, %v5874
    %v5914 = vpack.c.bf16 %v5877, %v5877
    %v5916 = vsel %vm374, %v5899, 0
    %v5919 = vsel %vm374, %v5907, 0
    %5921 = vmatprep.subr.bf16.mxu0 0
    %5922 = vmatpush1.bf16.xpose.msra.mxu0 %v5919
    %5923 = vmatprep.subr.bf16.mxu0 0
    %5924 = vmatpush1.bf16.xpose.msra.mxu0 0
    %5925 = vmatprep.subr.bf16.mxu0 0
    %5926 = vmatpush1.bf16.xpose.msra.mxu0 0
    %5927 = vmatprep.subr.bf16.mxu0 0
    %5928 = vmatpush1.bf16.xpose.msra.mxu0 0
    %5929 = vmatprep.subr.bf16.mxu0 0
    %5930 = vmatpush1.bf16.xpose.msra.mxu0 0
    %5931 = vmatprep.subr.bf16.mxu0 0
    %5932 = vmatpush1.bf16.xpose.msra.mxu0 0
    %5933 = vmatprep.subr.bf16.mxu0 0
    %5934 = vmatpush1.bf16.xpose.msra.mxu0 0
    %5935 = vmatprep.subr.bf16.mxu0 0
    %5936 = vmatpush1.bf16.xpose.msra.mxu0 0
    %5937 = vmatprep.subr.bf16.mxu0 0
    %5938 = vmatpush1.bf16.xpose.msra.mxu0 0
    %5939 = vmatprep.subr.bf16.mxu0 0
    %5940 = vmatpush1.bf16.xpose.msra.mxu0 0
    %5941 = vmatprep.subr.bf16.mxu0 0
    %5942 = vmatpush1.bf16.xpose.msra.mxu0 0
    %5943 = vmatprep.subr.bf16.mxu0 0
    %5944 = vmatpush1.bf16.xpose.msra.mxu0 0
    %5945 = vmatprep.subr.bf16.mxu0 0
    %5946 = vmatpush1.bf16.xpose.msra.mxu0 0
    %5947 = vmatprep.subr.bf16.mxu0 0
    %5948 = vmatpush1.bf16.xpose.msra.mxu0 0
    %5949 = vmatprep.subr.bf16.mxu0 0
    %5950 = vmatpush1.bf16.xpose.msra.mxu0 0
    %5951 = vmatprep.subr.bf16.mxu0 0
    %5952 = vmatpush1.bf16.xpose.msra.mxu0 0
    %5953 = vmatprep.mubr.bf16.mxu0 0
    %5954 = vmatmul.mubr.bf16.gmra.mrb[0].mxu0 %v5916
    %v5955 = vpop.f32.mrb[0].mxu0
    %v5956 = vadd.f32 %v97, %v5955
    %v5957 = vpop.f32.mrb[0].mxu0
    %v5958 = vpop.f32.mrb[0].mxu0
    %v5959 = vpop.f32.mrb[0].mxu0
    %5960 = vdwg.mxu0
    %v5962 = vsel %vm374, %v5900, 0
    %v5965 = vsel %vm374, %v5908, 0
    %5967 = vmatprep.subr.bf16.mxu0 0
    %5968 = vmatpush1.bf16.xpose.msra.mxu0 %v5965
    %5969 = vmatprep.subr.bf16.mxu0 0
    %5970 = vmatpush1.bf16.xpose.msra.mxu0 0
    %5971 = vmatprep.subr.bf16.mxu0 0
    %5972 = vmatpush1.bf16.xpose.msra.mxu0 0
    %5973 = vmatprep.subr.bf16.mxu0 0
    %5974 = vmatpush1.bf16.xpose.msra.mxu0 0
    %5975 = vmatprep.subr.bf16.mxu0 0
    %5976 = vmatpush1.bf16.xpose.msra.mxu0 0
    %5977 = vmatprep.subr.bf16.mxu0 0
    %5978 = vmatpush1.bf16.xpose.msra.mxu0 0
    %5979 = vmatprep.subr.bf16.mxu0 0
    %5980 = vmatpush1.bf16.xpose.msra.mxu0 0
    %5981 = vmatprep.subr.bf16.mxu0 0
    %5982 = vmatpush1.bf16.xpose.msra.mxu0 0
    %5983 = vmatprep.subr.bf16.mxu0 0
    %5984 = vmatpush1.bf16.xpose.msra.mxu0 0
    %5985 = vmatprep.subr.bf16.mxu0 0
    %5986 = vmatpush1.bf16.xpose.msra.mxu0 0
    %5987 = vmatprep.subr.bf16.mxu0 0
    %5988 = vmatpush1.bf16.xpose.msra.mxu0 0
    %5989 = vmatprep.subr.bf16.mxu0 0
    %5990 = vmatpush1.bf16.xpose.msra.mxu0 0
    %5991 = vmatprep.subr.bf16.mxu0 0
    %5992 = vmatpush1.bf16.xpose.msra.mxu0 0
    %5993 = vmatprep.subr.bf16.mxu0 0
    %5994 = vmatpush1.bf16.xpose.msra.mxu0 0
    %5995 = vmatprep.subr.bf16.mxu0 0
    %5996 = vmatpush1.bf16.xpose.msra.mxu0 0
    %5997 = vmatprep.subr.bf16.mxu0 0
    %5998 = vmatpush1.bf16.xpose.msra.mxu0 0
    %5999 = vmatprep.mubr.bf16.mxu0 0
    %6000 = vmatmul.mubr.bf16.gmra.mrb[0].mxu0 %v5962
    %v6001 = vpop.f32.mrb[0].mxu0
    %v6002 = vadd.f32 %v97, %v6001
    %v6003 = vpop.f32.mrb[0].mxu0
    %v6004 = vpop.f32.mrb[0].mxu0
    %v6005 = vpop.f32.mrb[0].mxu0
    %6006 = vdwg.mxu0
    %v6008 = vsel %vm374, %v5901, 0
    %v6011 = vsel %vm374, %v5909, 0
    %6013 = vmatprep.subr.bf16.mxu0 0
    %6014 = vmatpush1.bf16.xpose.msra.mxu0 %v6011
    %6015 = vmatprep.subr.bf16.mxu0 0
    %6016 = vmatpush1.bf16.xpose.msra.mxu0 0
    %6017 = vmatprep.subr.bf16.mxu0 0
    %6018 = vmatpush1.bf16.xpose.msra.mxu0 0
    %6019 = vmatprep.subr.bf16.mxu0 0
    %6020 = vmatpush1.bf16.xpose.msra.mxu0 0
    %6021 = vmatprep.subr.bf16.mxu0 0
    %6022 = vmatpush1.bf16.xpose.msra.mxu0 0
    %6023 = vmatprep.subr.bf16.mxu0 0
    %6024 = vmatpush1.bf16.xpose.msra.mxu0 0
    %6025 = vmatprep.subr.bf16.mxu0 0
    %6026 = vmatpush1.bf16.xpose.msra.mxu0 0
    %6027 = vmatprep.subr.bf16.mxu0 0
    %6028 = vmatpush1.bf16.xpose.msra.mxu0 0
    %6029 = vmatprep.subr.bf16.mxu0 0
    %6030 = vmatpush1.bf16.xpose.msra.mxu0 0
    %6031 = vmatprep.subr.bf16.mxu0 0
    %6032 = vmatpush1.bf16.xpose.msra.mxu0 0
    %6033 = vmatprep.subr.bf16.mxu0 0
    %6034 = vmatpush1.bf16.xpose.msra.mxu0 0
    %6035 = vmatprep.subr.bf16.mxu0 0
    %6036 = vmatpush1.bf16.xpose.msra.mxu0 0
    %6037 = vmatprep.subr.bf16.mxu0 0
    %6038 = vmatpush1.bf16.xpose.msra.mxu0 0
    %6039 = vmatprep.subr.bf16.mxu0 0
    %6040 = vmatpush1.bf16.xpose.msra.mxu0 0
    %6041 = vmatprep.subr.bf16.mxu0 0
    %6042 = vmatpush1.bf16.xpose.msra.mxu0 0
    %6043 = vmatprep.subr.bf16.mxu0 0
    %6044 = vmatpush1.bf16.xpose.msra.mxu0 0
    %6045 = vmatprep.mubr.bf16.mxu0 0
    %6046 = vmatmul.mubr.bf16.gmra.mrb[0].mxu0 %v6008
    %v6047 = vpop.f32.mrb[0].mxu0
    %v6048 = vadd.f32 %v97, %v6047
    %v6049 = vpop.f32.mrb[0].mxu0
    %v6050 = vpop.f32.mrb[0].mxu0
    %v6051 = vpop.f32.mrb[0].mxu0
    %6052 = vdwg.mxu0
    %v6054 = vsel %vm374, %v5902, 0
    %v6057 = vsel %vm374, %v5910, 0
    %6059 = vmatprep.subr.bf16.mxu0 0
    %6060 = vmatpush1.bf16.xpose.msra.mxu0 %v6057
    %6061 = vmatprep.subr.bf16.mxu0 0
    %6062 = vmatpush1.bf16.xpose.msra.mxu0 0
    %6063 = vmatprep.subr.bf16.mxu0 0
    %6064 = vmatpush1.bf16.xpose.msra.mxu0 0
    %6065 = vmatprep.subr.bf16.mxu0 0
    %6066 = vmatpush1.bf16.xpose.msra.mxu0 0
    %6067 = vmatprep.subr.bf16.mxu0 0
    %6068 = vmatpush1.bf16.xpose.msra.mxu0 0
    %6069 = vmatprep.subr.bf16.mxu0 0
    %6070 = vmatpush1.bf16.xpose.msra.mxu0 0
    %6071 = vmatprep.subr.bf16.mxu0 0
    %6072 = vmatpush1.bf16.xpose.msra.mxu0 0
    %6073 = vmatprep.subr.bf16.mxu0 0
    %6074 = vmatpush1.bf16.xpose.msra.mxu0 0
    %6075 = vmatprep.subr.bf16.mxu0 0
    %6076 = vmatpush1.bf16.xpose.msra.mxu0 0
    %6077 = vmatprep.subr.bf16.mxu0 0
    %6078 = vmatpush1.bf16.xpose.msra.mxu0 0
    %6079 = vmatprep.subr.bf16.mxu0 0
    %6080 = vmatpush1.bf16.xpose.msra.mxu0 0
    %6081 = vmatprep.subr.bf16.mxu0 0
    %6082 = vmatpush1.bf16.xpose.msra.mxu0 0
    %6083 = vmatprep.subr.bf16.mxu0 0
    %6084 = vmatpush1.bf16.xpose.msra.mxu0 0
    %6085 = vmatprep.subr.bf16.mxu0 0
    %6086 = vmatpush1.bf16.xpose.msra.mxu0 0
    %6087 = vmatprep.subr.bf16.mxu0 0
    %6088 = vmatpush1.bf16.xpose.msra.mxu0 0
    %6089 = vmatprep.subr.bf16.mxu0 0
    %6090 = vmatpush1.bf16.xpose.msra.mxu0 0
    %6091 = vmatprep.mubr.bf16.mxu0 0
    %6092 = vmatmul.mubr.bf16.gmra.mrb[0].mxu0 %v6054
    %v6093 = vpop.f32.mrb[0].mxu0
    %v6094 = vadd.f32 %v97, %v6093
    %v6095 = vpop.f32.mrb[0].mxu0
    %v6096 = vpop.f32.mrb[0].mxu0
    %v6097 = vpop.f32.mrb[0].mxu0
    %6098 = vdwg.mxu0
    %v6100 = vsel %vm374, %v5903, 0
    %v6103 = vsel %vm374, %v5911, 0
    %6105 = vmatprep.subr.bf16.mxu0 0
    %6106 = vmatpush1.bf16.xpose.msra.mxu0 %v6103
    %6107 = vmatprep.subr.bf16.mxu0 0
    %6108 = vmatpush1.bf16.xpose.msra.mxu0 0
    %6109 = vmatprep.subr.bf16.mxu0 0
    %6110 = vmatpush1.bf16.xpose.msra.mxu0 0
    %6111 = vmatprep.subr.bf16.mxu0 0
    %6112 = vmatpush1.bf16.xpose.msra.mxu0 0
    %6113 = vmatprep.subr.bf16.mxu0 0
    %6114 = vmatpush1.bf16.xpose.msra.mxu0 0
    %6115 = vmatprep.subr.bf16.mxu0 0
    %6116 = vmatpush1.bf16.xpose.msra.mxu0 0
    %6117 = vmatprep.subr.bf16.mxu0 0
    %6118 = vmatpush1.bf16.xpose.msra.mxu0 0
    %6119 = vmatprep.subr.bf16.mxu0 0
    %6120 = vmatpush1.bf16.xpose.msra.mxu0 0
    %6121 = vmatprep.subr.bf16.mxu0 0
    %6122 = vmatpush1.bf16.xpose.msra.mxu0 0
    %6123 = vmatprep.subr.bf16.mxu0 0
    %6124 = vmatpush1.bf16.xpose.msra.mxu0 0
    %6125 = vmatprep.subr.bf16.mxu0 0
    %6126 = vmatpush1.bf16.xpose.msra.mxu0 0
    %6127 = vmatprep.subr.bf16.mxu0 0
    %6128 = vmatpush1.bf16.xpose.msra.mxu0 0
    %6129 = vmatprep.subr.bf16.mxu0 0
    %6130 = vmatpush1.bf16.xpose.msra.mxu0 0
    %6131 = vmatprep.subr.bf16.mxu0 0
    %6132 = vmatpush1.bf16.xpose.msra.mxu0 0
    %6133 = vmatprep.subr.bf16.mxu0 0
    %6134 = vmatpush1.bf16.xpose.msra.mxu0 0
    %6135 = vmatprep.subr.bf16.mxu0 0
    %6136 = vmatpush1.bf16.xpose.msra.mxu0 0
    %6137 = vmatprep.mubr.bf16.mxu0 0
    %6138 = vmatmul.mubr.bf16.gmra.mrb[0].mxu0 %v6100
    %v6139 = vpop.f32.mrb[0].mxu0
    %v6140 = vadd.f32 %v97, %v6139
    %v6141 = vpop.f32.mrb[0].mxu0
    %v6142 = vpop.f32.mrb[0].mxu0
    %v6143 = vpop.f32.mrb[0].mxu0
    %6144 = vdwg.mxu0
    %v6146 = vsel %vm374, %v5904, 0
    %v6149 = vsel %vm374, %v5912, 0
    %6151 = vmatprep.subr.bf16.mxu0 0
    %6152 = vmatpush1.bf16.xpose.msra.mxu0 %v6149
    %6153 = vmatprep.subr.bf16.mxu0 0
    %6154 = vmatpush1.bf16.xpose.msra.mxu0 0
    %6155 = vmatprep.subr.bf16.mxu0 0
    %6156 = vmatpush1.bf16.xpose.msra.mxu0 0
    %6157 = vmatprep.subr.bf16.mxu0 0
    %6158 = vmatpush1.bf16.xpose.msra.mxu0 0
    %6159 = vmatprep.subr.bf16.mxu0 0
    %6160 = vmatpush1.bf16.xpose.msra.mxu0 0
    %6161 = vmatprep.subr.bf16.mxu0 0
    %6162 = vmatpush1.bf16.xpose.msra.mxu0 0
    %6163 = vmatprep.subr.bf16.mxu0 0
    %6164 = vmatpush1.bf16.xpose.msra.mxu0 0
    %6165 = vmatprep.subr.bf16.mxu0 0
    %6166 = vmatpush1.bf16.xpose.msra.mxu0 0
    %6167 = vmatprep.subr.bf16.mxu0 0
    %6168 = vmatpush1.bf16.xpose.msra.mxu0 0
    %6169 = vmatprep.subr.bf16.mxu0 0
    %6170 = vmatpush1.bf16.xpose.msra.mxu0 0
    %6171 = vmatprep.subr.bf16.mxu0 0
    %6172 = vmatpush1.bf16.xpose.msra.mxu0 0
    %6173 = vmatprep.subr.bf16.mxu0 0
    %6174 = vmatpush1.bf16.xpose.msra.mxu0 0
    %6175 = vmatprep.subr.bf16.mxu0 0
    %6176 = vmatpush1.bf16.xpose.msra.mxu0 0
    %6177 = vmatprep.subr.bf16.mxu0 0
    %6178 = vmatpush1.bf16.xpose.msra.mxu0 0
    %6179 = vmatprep.subr.bf16.mxu0 0
    %6180 = vmatpush1.bf16.xpose.msra.mxu0 0
    %6181 = vmatprep.subr.bf16.mxu0 0
    %6182 = vmatpush1.bf16.xpose.msra.mxu0 0
    %6183 = vmatprep.mubr.bf16.mxu0 0
    %6184 = vmatmul.mubr.bf16.gmra.mrb[0].mxu0 %v6146
    %v6185 = vpop.f32.mrb[0].mxu0
    %v6186 = vadd.f32 %v97, %v6185
    %v6187 = vpop.f32.mrb[0].mxu0
    %v6188 = vpop.f32.mrb[0].mxu0
    %v6189 = vpop.f32.mrb[0].mxu0
    %6190 = vdwg.mxu0
    %v6192 = vsel %vm374, %v5905, 0
    %v6195 = vsel %vm374, %v5913, 0
    %6197 = vmatprep.subr.bf16.mxu0 0
    %6198 = vmatpush1.bf16.xpose.msra.mxu0 %v6195
    %6199 = vmatprep.subr.bf16.mxu0 0
    %6200 = vmatpush1.bf16.xpose.msra.mxu0 0
    %6201 = vmatprep.subr.bf16.mxu0 0
    %6202 = vmatpush1.bf16.xpose.msra.mxu0 0
    %6203 = vmatprep.subr.bf16.mxu0 0
    %6204 = vmatpush1.bf16.xpose.msra.mxu0 0
    %6205 = vmatprep.subr.bf16.mxu0 0
    %6206 = vmatpush1.bf16.xpose.msra.mxu0 0
    %6207 = vmatprep.subr.bf16.mxu0 0
    %6208 = vmatpush1.bf16.xpose.msra.mxu0 0
    %6209 = vmatprep.subr.bf16.mxu0 0
    %6210 = vmatpush1.bf16.xpose.msra.mxu0 0
    %6211 = vmatprep.subr.bf16.mxu0 0
    %6212 = vmatpush1.bf16.xpose.msra.mxu0 0
    %6213 = vmatprep.subr.bf16.mxu0 0
    %6214 = vmatpush1.bf16.xpose.msra.mxu0 0
    %6215 = vmatprep.subr.bf16.mxu0 0
    %6216 = vmatpush1.bf16.xpose.msra.mxu0 0
    %6217 = vmatprep.subr.bf16.mxu0 0
    %6218 = vmatpush1.bf16.xpose.msra.mxu0 0
    %6219 = vmatprep.subr.bf16.mxu0 0
    %6220 = vmatpush1.bf16.xpose.msra.mxu0 0
    %6221 = vmatprep.subr.bf16.mxu0 0
    %6222 = vmatpush1.bf16.xpose.msra.mxu0 0
    %6223 = vmatprep.subr.bf16.mxu0 0
    %6224 = vmatpush1.bf16.xpose.msra.mxu0 0
    %6225 = vmatprep.subr.bf16.mxu0 0
    %6226 = vmatpush1.bf16.xpose.msra.mxu0 0
    %6227 = vmatprep.subr.bf16.mxu0 0
    %6228 = vmatpush1.bf16.xpose.msra.mxu0 0
    %6229 = vmatprep.mubr.bf16.mxu0 0
    %6230 = vmatmul.mubr.bf16.gmra.mrb[0].mxu0 %v6192
    %v6231 = vpop.f32.mrb[0].mxu0
    %v6232 = vadd.f32 %v97, %v6231
    %v6233 = vpop.f32.mrb[0].mxu0
    %v6234 = vpop.f32.mrb[0].mxu0
    %v6235 = vpop.f32.mrb[0].mxu0
    %6236 = vdwg.mxu0
    %v6238 = vsel %vm374, %v5906, 0
    %v6241 = vsel %vm374, %v5914, 0
    %6243 = vmatprep.subr.bf16.mxu0 0
    %6244 = vmatpush1.bf16.xpose.msra.mxu0 %v6241
    %6245 = vmatprep.subr.bf16.mxu0 0
    %6246 = vmatpush1.bf16.xpose.msra.mxu0 0
    %6247 = vmatprep.subr.bf16.mxu0 0
    %6248 = vmatpush1.bf16.xpose.msra.mxu0 0
    %6249 = vmatprep.subr.bf16.mxu0 0
    %6250 = vmatpush1.bf16.xpose.msra.mxu0 0
    %6251 = vmatprep.subr.bf16.mxu0 0
    %6252 = vmatpush1.bf16.xpose.msra.mxu0 0
    %6253 = vmatprep.subr.bf16.mxu0 0
    %6254 = vmatpush1.bf16.xpose.msra.mxu0 0
    %6255 = vmatprep.subr.bf16.mxu0 0
    %6256 = vmatpush1.bf16.xpose.msra.mxu0 0
    %6257 = vmatprep.subr.bf16.mxu0 0
    %6258 = vmatpush1.bf16.xpose.msra.mxu0 0
    %6259 = vmatprep.subr.bf16.mxu0 0
    %6260 = vmatpush1.bf16.xpose.msra.mxu0 0
    %6261 = vmatprep.subr.bf16.mxu0 0
    %6262 = vmatpush1.bf16.xpose.msra.mxu0 0
    %6263 = vmatprep.subr.bf16.mxu0 0
    %6264 = vmatpush1.bf16.xpose.msra.mxu0 0
    %6265 = vmatprep.subr.bf16.mxu0 0
    %6266 = vmatpush1.bf16.xpose.msra.mxu0 0
    %6267 = vmatprep.subr.bf16.mxu0 0
    %6268 = vmatpush1.bf16.xpose.msra.mxu0 0
    %6269 = vmatprep.subr.bf16.mxu0 0
    %6270 = vmatpush1.bf16.xpose.msra.mxu0 0
    %6271 = vmatprep.subr.bf16.mxu0 0
    %6272 = vmatpush1.bf16.xpose.msra.mxu0 0
    %6273 = vmatprep.subr.bf16.mxu0 0
    %6274 = vmatpush1.bf16.xpose.msra.mxu0 0
    %6275 = vmatprep.mubr.bf16.mxu0 0
    %6276 = vmatmul.mubr.bf16.gmra.mrb[0].mxu0 %v6238
    %v6277 = vpop.f32.mrb[0].mxu0
    %v6278 = vadd.f32 %v97, %v6277
    %v6279 = vpop.f32.mrb[0].mxu0
    %v6280 = vpop.f32.mrb[0].mxu0
    %v6281 = vpop.f32.mrb[0].mxu0
    %6282 = vdwg.mxu0
    %v6283 = vsel %vm374, %v5956, -inf
    %6284 = vmax.xlane.f32.xlu0 %v6283
    %v6285 = vpop.xlane.xlu0 %6284
    %v6286 = vsel %vm374, %v6002, -inf
    %6287 = vmax.xlane.f32.xlu0 %v6286
    %v6288 = vpop.xlane.xlu0 %6287
    %v6289 = vsel %vm374, %v6048, -inf
    %6290 = vmax.xlane.f32.xlu0 %v6289
    %v6291 = vpop.xlane.xlu0 %6290
    %v6292 = vsel %vm374, %v6094, -inf
    %6293 = vmax.xlane.f32.xlu0 %v6292
    %v6294 = vpop.xlane.xlu0 %6293
    %v6295 = vsel %vm374, %v6140, -inf
    %6296 = vmax.xlane.f32.xlu0 %v6295
    %v6297 = vpop.xlane.xlu0 %6296
    %v6298 = vsel %vm374, %v6186, -inf
    %6299 = vmax.xlane.f32.xlu0 %v6298
    %v6300 = vpop.xlane.xlu0 %6299
    %v6301 = vsel %vm374, %v6232, -inf
    %6302 = vmax.xlane.f32.xlu0 %v6301
    %v6303 = vpop.xlane.xlu0 %6302
    %v6304 = vsel %vm374, %v6278, -inf
    %6305 = vmax.xlane.f32.xlu0 %v6304
    %v6306 = vpop.xlane.xlu0 %6305
    %v6307 = vsub.f32 %v5956, %v6285
    %v6308 = vsub.f32 %v6002, %v6288
    %v6309 = vsub.f32 %v6048, %v6291
    %v6310 = vsub.f32 %v6094, %v6294
    %v6311 = vsub.f32 %v6140, %v6297
    %v6312 = vsub.f32 %v6186, %v6300
    %v6313 = vsub.f32 %v6232, %v6303
    %v6314 = vsub.f32 %v6278, %v6306
    %v6315 = vmul.f32 %v6307, 1.442695
    %v6316 = vpow.pop %v6315
    %v6317 = vmul.f32 %v6308, 1.442695
    %v6318 = vpow.pop %v6317
    %v6319 = vmul.f32 %v6309, 1.442695
    %v6320 = vpow.pop %v6319
    %v6321 = vmul.f32 %v6310, 1.442695
    %v6322 = vpow.pop %v6321
    %v6323 = vmul.f32 %v6311, 1.442695
    %v6324 = vpow.pop %v6323
    %v6325 = vmul.f32 %v6312, 1.442695
    %v6326 = vpow.pop %v6325
    %v6327 = vmul.f32 %v6313, 1.442695
    %v6328 = vpow.pop %v6327
    %v6329 = vmul.f32 %v6314, 1.442695
    %v6330 = vpow.pop %v6329
    %v6331 = vsel %vm374, %v6316, 0.0
    %6332 = vadd.xlane.f32.xlu0 %v6331
    %v6333 = vpop.xlane.xlu0 %6332
    %v6334 = vsel %vm374, %v6318, 0.0
    %6335 = vadd.xlane.f32.xlu0 %v6334
    %v6336 = vpop.xlane.xlu0 %6335
    %v6337 = vsel %vm374, %v6320, 0.0
    %6338 = vadd.xlane.f32.xlu0 %v6337
    %v6339 = vpop.xlane.xlu0 %6338
    %v6340 = vsel %vm374, %v6322, 0.0
    %6341 = vadd.xlane.f32.xlu0 %v6340
    %v6342 = vpop.xlane.xlu0 %6341
    %v6343 = vsel %vm374, %v6324, 0.0
    %6344 = vadd.xlane.f32.xlu0 %v6343
    %v6345 = vpop.xlane.xlu0 %6344
    %v6346 = vsel %vm374, %v6326, 0.0
    %6347 = vadd.xlane.f32.xlu0 %v6346
    %v6348 = vpop.xlane.xlu0 %6347
    %v6349 = vsel %vm374, %v6328, 0.0
    %6350 = vadd.xlane.f32.xlu0 %v6349
    %v6351 = vpop.xlane.xlu0 %6350
    %v6352 = vsel %vm374, %v6330, 0.0
    %6353 = vadd.xlane.f32.xlu0 %v6352
    %v6354 = vpop.xlane.xlu0 %6353
    %v6355 = vrcp.pop %v6333
    %v6356 = vmul.f32 %v6316, %v6355
    %v6357 = vrcp.pop %v6336
    %v6358 = vmul.f32 %v6318, %v6357
    %v6359 = vrcp.pop %v6339
    %v6360 = vmul.f32 %v6320, %v6359
    %v6361 = vrcp.pop %v6342
    %v6362 = vmul.f32 %v6322, %v6361
    %v6363 = vrcp.pop %v6345
    %v6364 = vmul.f32 %v6324, %v6363
    %v6365 = vrcp.pop %v6348
    %v6366 = vmul.f32 %v6326, %v6365
    %v6367 = vrcp.pop %v6351
    %v6368 = vmul.f32 %v6328, %v6367
    %v6369 = vrcp.pop %v6354
    %v6370 = vmul.f32 %v6330, %v6369
    %v6371 = vpack.c.bf16 %v6356, %v6356
    %v6372 = vpack.c.bf16 %v6358, %v6358
    %v6373 = vpack.c.bf16 %v6360, %v6360
    %v6374 = vpack.c.bf16 %v6362, %v6362
    %v6375 = vpack.c.bf16 %v6364, %v6364
    %v6376 = vpack.c.bf16 %v6366, %v6366
    %v6377 = vpack.c.bf16 %v6368, %v6368
    %v6378 = vpack.c.bf16 %v6370, %v6370
    %v6379 = vpack.c.bf16 %v5833, %v5833
    %v6380 = vpack.c.bf16 %v5881, %v5881
    %v6381 = vpack.c.bf16 %v5884, %v5884
    %v6382 = vpack.c.bf16 %v5887, %v5887
    %v6383 = vpack.c.bf16 %v5836, %v5836
    %v6384 = vpack.c.bf16 %v5891, %v5891
    %v6385 = vpack.c.bf16 %v5894, %v5894
    %v6386 = vpack.c.bf16 %v5897, %v5897
    %v6388 = vsel %vm374, %v6371, 0
    %v6391 = vsel %vm850, %v6379, 0
    %6393 = vmatprep.subr.bf16.mxu0 0
    %6394 = vmatpush1.bf16.msra.mxu0 %v6391
    %6395 = vmatprep.subr.bf16.mxu0 0
    %6396 = vmatpush1.bf16.msra.mxu0 0
    %6397 = vmatprep.subr.bf16.mxu0 0
    %6398 = vmatpush1.bf16.msra.mxu0 0
    %6399 = vmatprep.subr.bf16.mxu0 0
    %6400 = vmatpush1.bf16.msra.mxu0 0
    %6401 = vmatprep.subr.bf16.mxu0 0
    %6402 = vmatpush1.bf16.msra.mxu0 0
    %6403 = vmatprep.subr.bf16.mxu0 0
    %6404 = vmatpush1.bf16.msra.mxu0 0
    %6405 = vmatprep.subr.bf16.mxu0 0
    %6406 = vmatpush1.bf16.msra.mxu0 0
    %6407 = vmatprep.subr.bf16.mxu0 0
    %6408 = vmatpush1.bf16.msra.mxu0 0
    %6409 = vmatprep.subr.bf16.mxu0 0
    %6410 = vmatpush1.bf16.msra.mxu0 0
    %6411 = vmatprep.subr.bf16.mxu0 0
    %6412 = vmatpush1.bf16.msra.mxu0 0
    %6413 = vmatprep.subr.bf16.mxu0 0
    %6414 = vmatpush1.bf16.msra.mxu0 0
    %6415 = vmatprep.subr.bf16.mxu0 0
    %6416 = vmatpush1.bf16.msra.mxu0 0
    %6417 = vmatprep.subr.bf16.mxu0 0
    %6418 = vmatpush1.bf16.msra.mxu0 0
    %6419 = vmatprep.subr.bf16.mxu0 0
    %6420 = vmatpush1.bf16.msra.mxu0 0
    %6421 = vmatprep.subr.bf16.mxu0 0
    %6422 = vmatpush1.bf16.msra.mxu0 0
    %6423 = vmatprep.subr.bf16.mxu0 0
    %6424 = vmatpush1.bf16.msra.mxu0 0
    %6425 = vmatprep.mubr.bf16.mxu0 0
    %6426 = vmatmul.mubr.bf16.gmra.mrb[0].mxu0 %v6388
    %v6427 = vpop.f32.mrb[0].mxu0
    %v6428 = vadd.f32 0.0, %v6427
    %v6429 = vpop.f32.mrb[0].mxu0
    %v6430 = vpop.f32.mrb[0].mxu0
    %v6431 = vpop.f32.mrb[0].mxu0
    %6432 = vdwg.mxu0
    %v6434 = vsel %vm374, %v6372, 0
    %v6437 = vsel %vm850, %v6380, 0
    %6439 = vmatprep.subr.bf16.mxu0 0
    %6440 = vmatpush1.bf16.msra.mxu0 %v6437
    %6441 = vmatprep.subr.bf16.mxu0 0
    %6442 = vmatpush1.bf16.msra.mxu0 0
    %6443 = vmatprep.subr.bf16.mxu0 0
    %6444 = vmatpush1.bf16.msra.mxu0 0
    %6445 = vmatprep.subr.bf16.mxu0 0
    %6446 = vmatpush1.bf16.msra.mxu0 0
    %6447 = vmatprep.subr.bf16.mxu0 0
    %6448 = vmatpush1.bf16.msra.mxu0 0
    %6449 = vmatprep.subr.bf16.mxu0 0
    %6450 = vmatpush1.bf16.msra.mxu0 0
    %6451 = vmatprep.subr.bf16.mxu0 0
    %6452 = vmatpush1.bf16.msra.mxu0 0
    %6453 = vmatprep.subr.bf16.mxu0 0
    %6454 = vmatpush1.bf16.msra.mxu0 0
    %6455 = vmatprep.subr.bf16.mxu0 0
    %6456 = vmatpush1.bf16.msra.mxu0 0
    %6457 = vmatprep.subr.bf16.mxu0 0
    %6458 = vmatpush1.bf16.msra.mxu0 0
    %6459 = vmatprep.subr.bf16.mxu0 0
    %6460 = vmatpush1.bf16.msra.mxu0 0
    %6461 = vmatprep.subr.bf16.mxu0 0
    %6462 = vmatpush1.bf16.msra.mxu0 0
    %6463 = vmatprep.subr.bf16.mxu0 0
    %6464 = vmatpush1.bf16.msra.mxu0 0
    %6465 = vmatprep.subr.bf16.mxu0 0
    %6466 = vmatpush1.bf16.msra.mxu0 0
    %6467 = vmatprep.subr.bf16.mxu0 0
    %6468 = vmatpush1.bf16.msra.mxu0 0
    %6469 = vmatprep.subr.bf16.mxu0 0
    %6470 = vmatpush1.bf16.msra.mxu0 0
    %6471 = vmatprep.mubr.bf16.mxu0 0
    %6472 = vmatmul.mubr.bf16.gmra.mrb[0].mxu0 %v6434
    %v6473 = vpop.f32.mrb[0].mxu0
    %v6474 = vadd.f32 0.0, %v6473
    %v6475 = vpop.f32.mrb[0].mxu0
    %v6476 = vpop.f32.mrb[0].mxu0
    %v6477 = vpop.f32.mrb[0].mxu0
    %6478 = vdwg.mxu0
    %v6480 = vsel %vm374, %v6373, 0
    %v6483 = vsel %vm850, %v6381, 0
    %6485 = vmatprep.subr.bf16.mxu0 0
    %6486 = vmatpush1.bf16.msra.mxu0 %v6483
    %6487 = vmatprep.subr.bf16.mxu0 0
    %6488 = vmatpush1.bf16.msra.mxu0 0
    %6489 = vmatprep.subr.bf16.mxu0 0
    %6490 = vmatpush1.bf16.msra.mxu0 0
    %6491 = vmatprep.subr.bf16.mxu0 0
    %6492 = vmatpush1.bf16.msra.mxu0 0
    %6493 = vmatprep.subr.bf16.mxu0 0
    %6494 = vmatpush1.bf16.msra.mxu0 0
    %6495 = vmatprep.subr.bf16.mxu0 0
    %6496 = vmatpush1.bf16.msra.mxu0 0
    %6497 = vmatprep.subr.bf16.mxu0 0
    %6498 = vmatpush1.bf16.msra.mxu0 0
    %6499 = vmatprep.subr.bf16.mxu0 0
    %6500 = vmatpush1.bf16.msra.mxu0 0
    %6501 = vmatprep.subr.bf16.mxu0 0
    %6502 = vmatpush1.bf16.msra.mxu0 0
    %6503 = vmatprep.subr.bf16.mxu0 0
    %6504 = vmatpush1.bf16.msra.mxu0 0
    %6505 = vmatprep.subr.bf16.mxu0 0
    %6506 = vmatpush1.bf16.msra.mxu0 0
    %6507 = vmatprep.subr.bf16.mxu0 0
    %6508 = vmatpush1.bf16.msra.mxu0 0
    %6509 = vmatprep.subr.bf16.mxu0 0
    %6510 = vmatpush1.bf16.msra.mxu0 0
    %6511 = vmatprep.subr.bf16.mxu0 0
    %6512 = vmatpush1.bf16.msra.mxu0 0
    %6513 = vmatprep.subr.bf16.mxu0 0
    %6514 = vmatpush1.bf16.msra.mxu0 0
    %6515 = vmatprep.subr.bf16.mxu0 0
    %6516 = vmatpush1.bf16.msra.mxu0 0
    %6517 = vmatprep.mubr.bf16.mxu0 0
    %6518 = vmatmul.mubr.bf16.gmra.mrb[0].mxu0 %v6480
    %v6519 = vpop.f32.mrb[0].mxu0
    %v6520 = vadd.f32 0.0, %v6519
    %v6521 = vpop.f32.mrb[0].mxu0
    %v6522 = vpop.f32.mrb[0].mxu0
    %v6523 = vpop.f32.mrb[0].mxu0
    %6524 = vdwg.mxu0
    %v6526 = vsel %vm374, %v6374, 0
    %v6529 = vsel %vm850, %v6382, 0
    %6531 = vmatprep.subr.bf16.mxu0 0
    %6532 = vmatpush1.bf16.msra.mxu0 %v6529
    %6533 = vmatprep.subr.bf16.mxu0 0
    %6534 = vmatpush1.bf16.msra.mxu0 0
    %6535 = vmatprep.subr.bf16.mxu0 0
    %6536 = vmatpush1.bf16.msra.mxu0 0
    %6537 = vmatprep.subr.bf16.mxu0 0
    %6538 = vmatpush1.bf16.msra.mxu0 0
    %6539 = vmatprep.subr.bf16.mxu0 0
    %6540 = vmatpush1.bf16.msra.mxu0 0
    %6541 = vmatprep.subr.bf16.mxu0 0
    %6542 = vmatpush1.bf16.msra.mxu0 0
    %6543 = vmatprep.subr.bf16.mxu0 0
    %6544 = vmatpush1.bf16.msra.mxu0 0
    %6545 = vmatprep.subr.bf16.mxu0 0
    %6546 = vmatpush1.bf16.msra.mxu0 0
    %6547 = vmatprep.subr.bf16.mxu0 0
    %6548 = vmatpush1.bf16.msra.mxu0 0
    %6549 = vmatprep.subr.bf16.mxu0 0
    %6550 = vmatpush1.bf16.msra.mxu0 0
    %6551 = vmatprep.subr.bf16.mxu0 0
    %6552 = vmatpush1.bf16.msra.mxu0 0
    %6553 = vmatprep.subr.bf16.mxu0 0
    %6554 = vmatpush1.bf16.msra.mxu0 0
    %6555 = vmatprep.subr.bf16.mxu0 0
    %6556 = vmatpush1.bf16.msra.mxu0 0
    %6557 = vmatprep.subr.bf16.mxu0 0
    %6558 = vmatpush1.bf16.msra.mxu0 0
    %6559 = vmatprep.subr.bf16.mxu0 0
    %6560 = vmatpush1.bf16.msra.mxu0 0
    %6561 = vmatprep.subr.bf16.mxu0 0
    %6562 = vmatpush1.bf16.msra.mxu0 0
    %6563 = vmatprep.mubr.bf16.mxu0 0
    %6564 = vmatmul.mubr.bf16.gmra.mrb[0].mxu0 %v6526
    %v6565 = vpop.f32.mrb[0].mxu0
    %v6566 = vadd.f32 0.0, %v6565
    %v6567 = vpop.f32.mrb[0].mxu0
    %v6568 = vpop.f32.mrb[0].mxu0
    %v6569 = vpop.f32.mrb[0].mxu0
    %6570 = vdwg.mxu0
    %v6572 = vsel %vm374, %v6375, 0
    %v6575 = vsel %vm850, %v6383, 0
    %6577 = vmatprep.subr.bf16.mxu0 0
    %6578 = vmatpush1.bf16.msra.mxu0 %v6575
    %6579 = vmatprep.subr.bf16.mxu0 0
    %6580 = vmatpush1.bf16.msra.mxu0 0
    %6581 = vmatprep.subr.bf16.mxu0 0
    %6582 = vmatpush1.bf16.msra.mxu0 0
    %6583 = vmatprep.subr.bf16.mxu0 0
    %6584 = vmatpush1.bf16.msra.mxu0 0
    %6585 = vmatprep.subr.bf16.mxu0 0
    %6586 = vmatpush1.bf16.msra.mxu0 0
    %6587 = vmatprep.subr.bf16.mxu0 0
    %6588 = vmatpush1.bf16.msra.mxu0 0
    %6589 = vmatprep.subr.bf16.mxu0 0
    %6590 = vmatpush1.bf16.msra.mxu0 0
    %6591 = vmatprep.subr.bf16.mxu0 0
    %6592 = vmatpush1.bf16.msra.mxu0 0
    %6593 = vmatprep.subr.bf16.mxu0 0
    %6594 = vmatpush1.bf16.msra.mxu0 0
    %6595 = vmatprep.subr.bf16.mxu0 0
    %6596 = vmatpush1.bf16.msra.mxu0 0
    %6597 = vmatprep.subr.bf16.mxu0 0
    %6598 = vmatpush1.bf16.msra.mxu0 0
    %6599 = vmatprep.subr.bf16.mxu0 0
    %6600 = vmatpush1.bf16.msra.mxu0 0
    %6601 = vmatprep.subr.bf16.mxu0 0
    %6602 = vmatpush1.bf16.msra.mxu0 0
    %6603 = vmatprep.subr.bf16.mxu0 0
    %6604 = vmatpush1.bf16.msra.mxu0 0
    %6605 = vmatprep.subr.bf16.mxu0 0
    %6606 = vmatpush1.bf16.msra.mxu0 0
    %6607 = vmatprep.subr.bf16.mxu0 0
    %6608 = vmatpush1.bf16.msra.mxu0 0
    %6609 = vmatprep.mubr.bf16.mxu0 0
    %6610 = vmatmul.mubr.bf16.gmra.mrb[0].mxu0 %v6572
    %v6611 = vpop.f32.mrb[0].mxu0
    %v6612 = vadd.f32 0.0, %v6611
    %v6613 = vpop.f32.mrb[0].mxu0
    %v6614 = vpop.f32.mrb[0].mxu0
    %v6615 = vpop.f32.mrb[0].mxu0
    %6616 = vdwg.mxu0
    %v6618 = vsel %vm374, %v6376, 0
    %v6621 = vsel %vm850, %v6384, 0
    %6623 = vmatprep.subr.bf16.mxu0 0
    %6624 = vmatpush1.bf16.msra.mxu0 %v6621
    %6625 = vmatprep.subr.bf16.mxu0 0
    %6626 = vmatpush1.bf16.msra.mxu0 0
    %6627 = vmatprep.subr.bf16.mxu0 0
    %6628 = vmatpush1.bf16.msra.mxu0 0
    %6629 = vmatprep.subr.bf16.mxu0 0
    %6630 = vmatpush1.bf16.msra.mxu0 0
    %6631 = vmatprep.subr.bf16.mxu0 0
    %6632 = vmatpush1.bf16.msra.mxu0 0
    %6633 = vmatprep.subr.bf16.mxu0 0
    %6634 = vmatpush1.bf16.msra.mxu0 0
    %6635 = vmatprep.subr.bf16.mxu0 0
    %6636 = vmatpush1.bf16.msra.mxu0 0
    %6637 = vmatprep.subr.bf16.mxu0 0
    %6638 = vmatpush1.bf16.msra.mxu0 0
    %6639 = vmatprep.subr.bf16.mxu0 0
    %6640 = vmatpush1.bf16.msra.mxu0 0
    %6641 = vmatprep.subr.bf16.mxu0 0
    %6642 = vmatpush1.bf16.msra.mxu0 0
    %6643 = vmatprep.subr.bf16.mxu0 0
    %6644 = vmatpush1.bf16.msra.mxu0 0
    %6645 = vmatprep.subr.bf16.mxu0 0
    %6646 = vmatpush1.bf16.msra.mxu0 0
    %6647 = vmatprep.subr.bf16.mxu0 0
    %6648 = vmatpush1.bf16.msra.mxu0 0
    %6649 = vmatprep.subr.bf16.mxu0 0
    %6650 = vmatpush1.bf16.msra.mxu0 0
    %6651 = vmatprep.subr.bf16.mxu0 0
    %6652 = vmatpush1.bf16.msra.mxu0 0
    %6653 = vmatprep.subr.bf16.mxu0 0
    %6654 = vmatpush1.bf16.msra.mxu0 0
    %6655 = vmatprep.mubr.bf16.mxu0 0
    %6656 = vmatmul.mubr.bf16.gmra.mrb[0].mxu0 %v6618
    %v6657 = vpop.f32.mrb[0].mxu0
    %v6658 = vadd.f32 0.0, %v6657
    %v6659 = vpop.f32.mrb[0].mxu0
    %v6660 = vpop.f32.mrb[0].mxu0
    %v6661 = vpop.f32.mrb[0].mxu0
    %6662 = vdwg.mxu0
    %v6664 = vsel %vm374, %v6377, 0
    %v6667 = vsel %vm850, %v6385, 0
    %6669 = vmatprep.subr.bf16.mxu0 0
    %6670 = vmatpush1.bf16.msra.mxu0 %v6667
    %6671 = vmatprep.subr.bf16.mxu0 0
    %6672 = vmatpush1.bf16.msra.mxu0 0
    %6673 = vmatprep.subr.bf16.mxu0 0
    %6674 = vmatpush1.bf16.msra.mxu0 0
    %6675 = vmatprep.subr.bf16.mxu0 0
    %6676 = vmatpush1.bf16.msra.mxu0 0
    %6677 = vmatprep.subr.bf16.mxu0 0
    %6678 = vmatpush1.bf16.msra.mxu0 0
    %6679 = vmatprep.subr.bf16.mxu0 0
    %6680 = vmatpush1.bf16.msra.mxu0 0
    %6681 = vmatprep.subr.bf16.mxu0 0
    %6682 = vmatpush1.bf16.msra.mxu0 0
    %6683 = vmatprep.subr.bf16.mxu0 0
    %6684 = vmatpush1.bf16.msra.mxu0 0
    %6685 = vmatprep.subr.bf16.mxu0 0
    %6686 = vmatpush1.bf16.msra.mxu0 0
    %6687 = vmatprep.subr.bf16.mxu0 0
    %6688 = vmatpush1.bf16.msra.mxu0 0
    %6689 = vmatprep.subr.bf16.mxu0 0
    %6690 = vmatpush1.bf16.msra.mxu0 0
    %6691 = vmatprep.subr.bf16.mxu0 0
    %6692 = vmatpush1.bf16.msra.mxu0 0
    %6693 = vmatprep.subr.bf16.mxu0 0
    %6694 = vmatpush1.bf16.msra.mxu0 0
    %6695 = vmatprep.subr.bf16.mxu0 0
    %6696 = vmatpush1.bf16.msra.mxu0 0
    %6697 = vmatprep.subr.bf16.mxu0 0
    %6698 = vmatpush1.bf16.msra.mxu0 0
    %6699 = vmatprep.subr.bf16.mxu0 0
    %6700 = vmatpush1.bf16.msra.mxu0 0
    %6701 = vmatprep.mubr.bf16.mxu0 0
    %6702 = vmatmul.mubr.bf16.gmra.mrb[0].mxu0 %v6664
    %v6703 = vpop.f32.mrb[0].mxu0
    %v6704 = vadd.f32 0.0, %v6703
    %v6705 = vpop.f32.mrb[0].mxu0
    %v6706 = vpop.f32.mrb[0].mxu0
    %v6707 = vpop.f32.mrb[0].mxu0
    %6708 = vdwg.mxu0
    %v6710 = vsel %vm374, %v6378, 0
    %v6713 = vsel %vm850, %v6386, 0
    %6715 = vmatprep.subr.bf16.mxu0 0
    %6716 = vmatpush1.bf16.msra.mxu0 %v6713
    %6717 = vmatprep.subr.bf16.mxu0 0
    %6718 = vmatpush1.bf16.msra.mxu0 0
    %6719 = vmatprep.subr.bf16.mxu0 0
    %6720 = vmatpush1.bf16.msra.mxu0 0
    %6721 = vmatprep.subr.bf16.mxu0 0
    %6722 = vmatpush1.bf16.msra.mxu0 0
    %6723 = vmatprep.subr.bf16.mxu0 0
    %6724 = vmatpush1.bf16.msra.mxu0 0
    %6725 = vmatprep.subr.bf16.mxu0 0
    %6726 = vmatpush1.bf16.msra.mxu0 0
    %6727 = vmatprep.subr.bf16.mxu0 0
    %6728 = vmatpush1.bf16.msra.mxu0 0
    %6729 = vmatprep.subr.bf16.mxu0 0
    %6730 = vmatpush1.bf16.msra.mxu0 0
    %6731 = vmatprep.subr.bf16.mxu0 0
    %6732 = vmatpush1.bf16.msra.mxu0 0
    %6733 = vmatprep.subr.bf16.mxu0 0
    %6734 = vmatpush1.bf16.msra.mxu0 0
    %6735 = vmatprep.subr.bf16.mxu0 0
    %6736 = vmatpush1.bf16.msra.mxu0 0
    %6737 = vmatprep.subr.bf16.mxu0 0
    %6738 = vmatpush1.bf16.msra.mxu0 0
    %6739 = vmatprep.subr.bf16.mxu0 0
    %6740 = vmatpush1.bf16.msra.mxu0 0
    %6741 = vmatprep.subr.bf16.mxu0 0
    %6742 = vmatpush1.bf16.msra.mxu0 0
    %6743 = vmatprep.subr.bf16.mxu0 0
    %6744 = vmatpush1.bf16.msra.mxu0 0
    %6745 = vmatprep.subr.bf16.mxu0 0
    %6746 = vmatpush1.bf16.msra.mxu0 0
    %6747 = vmatprep.mubr.bf16.mxu0 0
    %6748 = vmatmul.mubr.bf16.gmra.mrb[0].mxu0 %v6710
    %v6749 = vpop.f32.mrb[0].mxu0
    %v6750 = vadd.f32 0.0, %v6749
    %v6751 = vpop.f32.mrb[0].mxu0
    %v6752 = vpop.f32.mrb[0].mxu0
    %v6753 = vpop.f32.mrb[0].mxu0
    %6754 = vdwg.mxu0
    %6756 = vrot.lane.b32.xlu0 %v6474, 8
    %v6757 = vpop.permute.xlu0 %6756
    %6760 = vrot.lane.b32.xlu0 %v6520, 16
    %v6761 = vpop.permute.xlu0 %6760
    %6764 = vrot.lane.b32.xlu0 %v6566, 24
    %v6765 = vpop.permute.xlu0 %6764
    %v6767 = vsel %vm374, %v6428, %v6757
    %v6768 = vsel %vm1229, %v6767, %v6761
    %v6769 = vsel %vm1231, %v6768, %v6765
    %6771 = vrot.lane.b32.xlu0 %v6658, 8
    %v6772 = vpop.permute.xlu0 %6771
    %6775 = vrot.lane.b32.xlu0 %v6704, 16
    %v6776 = vpop.permute.xlu0 %6775
    %6779 = vrot.lane.b32.xlu0 %v6750, 24
    %v6780 = vpop.permute.xlu0 %6779
    %v6782 = vsel %vm374, %v6612, %v6772
    %v6783 = vsel %vm1229, %v6782, %v6776
    %v6784 = vsel %vm1231, %v6783, %v6780
    %v6785 = vpack.c.bf16 %v6784, %v6769
    %v6786 = vlaneseq
    %v6787 = vshrl.u32 %v6786, 7
    %v6788 = vsub.s32 0, %v6787
    %v6789 = vrot.slane %v5661, %v6788
    %v6794 = vunpack.c.l.b16 %v5653
    %v6795 = vunpack.c.l.b16 %v5654
    %v6796 = vunpack.c.l.b16 %v5655
    %v6797 = vunpack.c.l.b16 %v5656
    %v6798 = vpack.c.b16 %v6795, %v6794
    %v6799 = vpack.c.b16 %v6797, %v6796
    %v6803 = vsel %vm139, %v6785, 0
    %6805 = vmatprep.subr.bf16.mxu0 0
    %6806 = vmatpush1.bf16.msra.mxu0 %v6798
    %6807 = vmatprep.subr.bf16.mxu0 0
    %6808 = vmatpush1.bf16.msra.mxu0 %v6799
    %6809 = vmatprep.subr.bf16.mxu0 0
    %6810 = vmatpush1.bf16.msra.mxu0 0
    %6811 = vmatprep.subr.bf16.mxu0 0
    %6812 = vmatpush1.bf16.msra.mxu0 0
    %6813 = vmatprep.subr.bf16.mxu0 0
    %6814 = vmatpush1.bf16.msra.mxu0 0
    %6815 = vmatprep.subr.bf16.mxu0 0
    %6816 = vmatpush1.bf16.msra.mxu0 0
    %6817 = vmatprep.subr.bf16.mxu0 0
    %6818 = vmatpush1.bf16.msra.mxu0 0
    %6819 = vmatprep.subr.bf16.mxu0 0
    %6820 = vmatpush1.bf16.msra.mxu0 0
    %6821 = vmatprep.subr.bf16.mxu0 0
    %6822 = vmatpush1.bf16.msra.mxu0 0
    %6823 = vmatprep.subr.bf16.mxu0 0
    %6824 = vmatpush1.bf16.msra.mxu0 0
    %6825 = vmatprep.subr.bf16.mxu0 0
    %6826 = vmatpush1.bf16.msra.mxu0 0
    %6827 = vmatprep.subr.bf16.mxu0 0
    %6828 = vmatpush1.bf16.msra.mxu0 0
    %6829 = vmatprep.subr.bf16.mxu0 0
    %6830 = vmatpush1.bf16.msra.mxu0 0
    %6831 = vmatprep.subr.bf16.mxu0 0
    %6832 = vmatpush1.bf16.msra.mxu0 0
    %6833 = vmatprep.subr.bf16.mxu0 0
    %6834 = vmatpush1.bf16.msra.mxu0 0
    %6835 = vmatprep.subr.bf16.mxu0 0
    %6836 = vmatpush1.bf16.msra.mxu0 0
    %6837 = vmatprep.mubr.bf16.mxu0 0
    %6838 = vmatmul.mubr.bf16.gmra.mrb[0].mxu0 %v6803
    %v6839 = vpop.f32.mrb[0].mxu0
    %v6840 = vadd.f32 %v6789, %v6839
    %v6841 = vpop.f32.mrb[0].mxu0
    %v6842 = vpop.f32.mrb[0].mxu0
    %v6843 = vadd.f32 %v6789, %v6842
    %v6844 = vpop.f32.mrb[0].mxu0
    %6845 = vdwg.mxu0
    %v6846 = vadd.f32 %v5638, %v6840
    %v6847 = vadd.f32 %v5639, %v6843
    %v6848 = vsel %vm139, %v6846, 0.0
    %6849 = vadd.xlane.f32.xlu0 %v6848
    %v6850 = vpop.xlane.xlu0 %6849
    %v6851 = vsel %vm139, %v6847, 0.0
    %6852 = vadd.xlane.f32.xlu0 %v6851
    %v6853 = vpop.xlane.xlu0 %6852
    %v6854 = vmul.f32 %v6850, %v1317
    %v6855 = vmul.f32 %v6853, %v1317
    %v6856 = vsub.f32 %v6846, %v6854
    %v6857 = vsub.f32 %v6847, %v6855
    %v6858 = vmul.f32 %v6856, %v6856
    %v6859 = vmul.f32 %v6857, %v6857
    %v6860 = vsel %vm139, %v6858, 0.0
    %6861 = vadd.xlane.f32.xlu0 %v6860
    %v6862 = vpop.xlane.xlu0 %6861
    %v6863 = vsel %vm139, %v6859, 0.0
    %6864 = vadd.xlane.f32.xlu0 %v6863
    %v6865 = vpop.xlane.xlu0 %6864
    %v6866 = vmul.f32 %v6862, %v1317
    %v6867 = vmul.f32 %v6865, %v1317
    %v6868 = vadd.f32 %v6866, 1e-05
    %v6869 = vadd.f32 %v6867, 1e-05
    %v6870 = vrsqrt.pop %v6868
    %v6871 = vrsqrt.pop %v6869
    %v6872 = vmul.f32 %v6856, %v6870
    %v6873 = vmul.f32 %v6857, %v6871
    %v6874 = vlaneseq
    %v6875 = vshrl.u32 %v6874, 7
    %v6876 = vsub.s32 0, %v6875
    %v6877 = vrot.slane %v5662, %v6876
    %v6878 = vmul.f32 %v6872, %v6877
    %v6879 = vmul.f32 %v6873, %v6877
    %v6880 = vlaneseq
    %v6881 = vshrl.u32 %v6880, 7
    %v6882 = vsub.s32 0, %v6881
    %v6883 = vrot.slane %v5663, %v6882
    %v6884 = vadd.f32 %v6878, %v6883
    %v6885 = vadd.f32 %v6879, %v6883
    %s6886 = scalar_lea.vmem [#allocation8], 192
    %v6887 = vld [vmem:[%s6886] sm:$0xf]
    %v6888 = vld [vmem:[%s6886 + $0x4] sm:$0xf]
    %v6889 = vld [vmem:[%s6886 + $0x8] sm:$0xf]
    %v6890 = vld [vmem:[%s6886 + $0xc] sm:$0xf]
    %v6891 = vld [vmem:[%s6886 + $0x10] sm:$0xf]
    %v6892 = vld [vmem:[%s6886 + $0x14] sm:$0xf]
    %v6893 = vld [vmem:[%s6886 + $0x18] sm:$0xf]
    %v6894 = vld [vmem:[%s6886 + $0x1c] sm:$0xf]
    %v6895 = vld [vmem:[%s6886 + $0x20] sm:$0xf]
    %v6896 = vld [vmem:[%s6886 + $0x24] sm:$0xf]
    %v6897 = vld [vmem:[%s6886 + $0x28] sm:$0xf]
    %v6898 = vld [vmem:[%s6886 + $0x2c] sm:$0xf]
    %v6899 = vld [vmem:[%s6886 + $0x30] sm:$0xf]
    %v6900 = vld [vmem:[%s6886 + $0x34] sm:$0xf]
    %v6901 = vld [vmem:[%s6886 + $0x38] sm:$0xf]
    %v6902 = vld [vmem:[%s6886 + $0x3c] sm:$0xf]
    %v6903 = vld [vmem:[%s5657 + $0x6] sm:$0x1]
    %v6904 = vld [vmem:[%s5657 + $0x7] sm:$0x1]
    %v6905 = vld [vmem:[%s5657 + $0x8] sm:$0x1]
    %v6906 = vld [vmem:[%s5657 + $0x9] sm:$0x1]
    %v6907 = vld [vmem:[%s5657 + $0xa] sm:$0x1]
    %v6908 = vld [vmem:[%s5657 + $0xb] sm:$0x1]
    %v6909 = vpack.c.bf16 %v6885, %v6884
    %v6910 = vlaneseq
    %v6911 = vshrl.u32 %v6910, 7
    %v6912 = vsub.s32 0, %v6911
    %v6913 = vrot.slane %v6903, %v6912
    %v6918 = vunpack.c.l.b16 %v6887
    %v6919 = vunpack.c.l.b16 %v6888
    %v6920 = vunpack.c.l.b16 %v6889
    %v6921 = vunpack.c.l.b16 %v6890
    %v6922 = vpack.c.b16 %v6919, %v6918
    %v6923 = vpack.c.b16 %v6921, %v6920
    %v6927 = vsel %vm139, %v6909, 0
    %6929 = vmatprep.subr.bf16.mxu0 0
    %6930 = vmatpush1.bf16.msra.mxu0 %v6922
    %6931 = vmatprep.subr.bf16.mxu0 0
    %6932 = vmatpush1.bf16.msra.mxu0 %v6923
    %6933 = vmatprep.subr.bf16.mxu0 0
    %6934 = vmatpush1.bf16.msra.mxu0 0
    %6935 = vmatprep.subr.bf16.mxu0 0
    %6936 = vmatpush1.bf16.msra.mxu0 0
    %6937 = vmatprep.subr.bf16.mxu0 0
    %6938 = vmatpush1.bf16.msra.mxu0 0
    %6939 = vmatprep.subr.bf16.mxu0 0
    %6940 = vmatpush1.bf16.msra.mxu0 0
    %6941 = vmatprep.subr.bf16.mxu0 0
    %6942 = vmatpush1.bf16.msra.mxu0 0
    %6943 = vmatprep.subr.bf16.mxu0 0
    %6944 = vmatpush1.bf16.msra.mxu0 0
    %6945 = vmatprep.subr.bf16.mxu0 0
    %6946 = vmatpush1.bf16.msra.mxu0 0
    %6947 = vmatprep.subr.bf16.mxu0 0
    %6948 = vmatpush1.bf16.msra.mxu0 0
    %6949 = vmatprep.subr.bf16.mxu0 0
    %6950 = vmatpush1.bf16.msra.mxu0 0
    %6951 = vmatprep.subr.bf16.mxu0 0
    %6952 = vmatpush1.bf16.msra.mxu0 0
    %6953 = vmatprep.subr.bf16.mxu0 0
    %6954 = vmatpush1.bf16.msra.mxu0 0
    %6955 = vmatprep.subr.bf16.mxu0 0
    %6956 = vmatpush1.bf16.msra.mxu0 0
    %6957 = vmatprep.subr.bf16.mxu0 0
    %6958 = vmatpush1.bf16.msra.mxu0 0
    %6959 = vmatprep.subr.bf16.mxu0 0
    %6960 = vmatpush1.bf16.msra.mxu0 0
    %6961 = vmatprep.mubr.bf16.mxu0 0
    %6962 = vmatmul.mubr.bf16.gmra.mrb[0].mxu0 %v6927
    %v6963 = vpop.f32.mrb[0].mxu0
    %v6964 = vadd.f32 %v6913, %v6963
    %v6965 = vpop.f32.mrb[0].mxu0
    %v6966 = vpop.f32.mrb[0].mxu0
    %v6967 = vadd.f32 %v6913, %v6966
    %v6968 = vpop.f32.mrb[0].mxu0
    %6969 = vdwg.mxu0
    %v6970 = vlaneseq
    %v6971 = vshrl.u32 %v6970, 7
    %v6972 = vsub.s32 0, %v6971
    %v6973 = vrot.slane %v6904, %v6972
    %v6978 = vunpack.c.l.b16 %v6891
    %v6979 = vunpack.c.l.b16 %v6892
    %v6980 = vunpack.c.l.b16 %v6893
    %v6981 = vunpack.c.l.b16 %v6894
    %v6982 = vpack.c.b16 %v6979, %v6978
    %v6983 = vpack.c.b16 %v6981, %v6980
    %6986 = vmatprep.subr.bf16.mxu0 0
    %6987 = vmatpush1.bf16.msra.mxu0 %v6982
    %6988 = vmatprep.subr.bf16.mxu0 0
    %6989 = vmatpush1.bf16.msra.mxu0 %v6983
    %6990 = vmatprep.subr.bf16.mxu0 0
    %6991 = vmatpush1.bf16.msra.mxu0 0
    %6992 = vmatprep.subr.bf16.mxu0 0
    %6993 = vmatpush1.bf16.msra.mxu0 0
    %6994 = vmatprep.subr.bf16.mxu0 0
    %6995 = vmatpush1.bf16.msra.mxu0 0
    %6996 = vmatprep.subr.bf16.mxu0 0
    %6997 = vmatpush1.bf16.msra.mxu0 0
    %6998 = vmatprep.subr.bf16.mxu0 0
    %6999 = vmatpush1.bf16.msra.mxu0 0
    %7000 = vmatprep.subr.bf16.mxu0 0
    %7001 = vmatpush1.bf16.msra.mxu0 0
    %7002 = vmatprep.subr.bf16.mxu0 0
    %7003 = vmatpush1.bf16.msra.mxu0 0
    %7004 = vmatprep.subr.bf16.mxu0 0
    %7005 = vmatpush1.bf16.msra.mxu0 0
    %7006 = vmatprep.subr.bf16.mxu0 0
    %7007 = vmatpush1.bf16.msra.mxu0 0
    %7008 = vmatprep.subr.bf16.mxu0 0
    %7009 = vmatpush1.bf16.msra.mxu0 0
    %7010 = vmatprep.subr.bf16.mxu0 0
    %7011 = vmatpush1.bf16.msra.mxu0 0
    %7012 = vmatprep.subr.bf16.mxu0 0
    %7013 = vmatpush1.bf16.msra.mxu0 0
    %7014 = vmatprep.subr.bf16.mxu0 0
    %7015 = vmatpush1.bf16.msra.mxu0 0
    %7016 = vmatprep.subr.bf16.mxu0 0
    %7017 = vmatpush1.bf16.msra.mxu0 0
    %7018 = vmatprep.mubr.bf16.mxu0 0
    %7019 = vmatmul.mubr.bf16.gmra.mrb[0].mxu0 %v4311
    %v7020 = vpop.f32.mrb[0].mxu0
    %v7021 = vadd.f32 %v6973, %v7020
    %v7022 = vpop.f32.mrb[0].mxu0
    %v7023 = vpop.f32.mrb[0].mxu0
    %v7024 = vadd.f32 %v6973, %v7023
    %v7025 = vpop.f32.mrb[0].mxu0
    %7026 = vdwg.mxu0
    %v7027 = vlaneseq
    %v7028 = vshrl.u32 %v7027, 7
    %v7029 = vsub.s32 0, %v7028
    %v7030 = vrot.slane %v6905, %v7029
    %v7035 = vunpack.c.l.b16 %v6895
    %v7036 = vunpack.c.l.b16 %v6896
    %v7037 = vunpack.c.l.b16 %v6897
    %v7038 = vunpack.c.l.b16 %v6898
    %v7039 = vpack.c.b16 %v7036, %v7035
    %v7040 = vpack.c.b16 %v7038, %v7037
    %7043 = vmatprep.subr.bf16.mxu0 0
    %7044 = vmatpush1.bf16.msra.mxu0 %v7039
    %7045 = vmatprep.subr.bf16.mxu0 0
    %7046 = vmatpush1.bf16.msra.mxu0 %v7040
    %7047 = vmatprep.subr.bf16.mxu0 0
    %7048 = vmatpush1.bf16.msra.mxu0 0
    %7049 = vmatprep.subr.bf16.mxu0 0
    %7050 = vmatpush1.bf16.msra.mxu0 0
    %7051 = vmatprep.subr.bf16.mxu0 0
    %7052 = vmatpush1.bf16.msra.mxu0 0
    %7053 = vmatprep.subr.bf16.mxu0 0
    %7054 = vmatpush1.bf16.msra.mxu0 0
    %7055 = vmatprep.subr.bf16.mxu0 0
    %7056 = vmatpush1.bf16.msra.mxu0 0
    %7057 = vmatprep.subr.bf16.mxu0 0
    %7058 = vmatpush1.bf16.msra.mxu0 0
    %7059 = vmatprep.subr.bf16.mxu0 0
    %7060 = vmatpush1.bf16.msra.mxu0 0
    %7061 = vmatprep.subr.bf16.mxu0 0
    %7062 = vmatpush1.bf16.msra.mxu0 0
    %7063 = vmatprep.subr.bf16.mxu0 0
    %7064 = vmatpush1.bf16.msra.mxu0 0
    %7065 = vmatprep.subr.bf16.mxu0 0
    %7066 = vmatpush1.bf16.msra.mxu0 0
    %7067 = vmatprep.subr.bf16.mxu0 0
    %7068 = vmatpush1.bf16.msra.mxu0 0
    %7069 = vmatprep.subr.bf16.mxu0 0
    %7070 = vmatpush1.bf16.msra.mxu0 0
    %7071 = vmatprep.subr.bf16.mxu0 0
    %7072 = vmatpush1.bf16.msra.mxu0 0
    %7073 = vmatprep.subr.bf16.mxu0 0
    %7074 = vmatpush1.bf16.msra.mxu0 0
    %7075 = vmatprep.mubr.bf16.mxu0 0
    %7076 = vmatmul.mubr.bf16.gmra.mrb[0].mxu0 %v4311
    %v7077 = vpop.f32.mrb[0].mxu0
    %v7078 = vadd.f32 %v7030, %v7077
    %v7079 = vpop.f32.mrb[0].mxu0
    %v7080 = vpop.f32.mrb[0].mxu0
    %v7081 = vadd.f32 %v7030, %v7080
    %v7082 = vpop.f32.mrb[0].mxu0
    %7083 = vdwg.mxu0
    %7085 = vrot.lane.b32.xlu0 %v6964, 120
    %v7086 = vpop.permute.xlu0 %7085
    %7088 = vrot.lane.b32.xlu0 %v6964, 112
    %v7089 = vpop.permute.xlu0 %7088
    %7091 = vrot.lane.b32.xlu0 %v6964, 104
    %v7092 = vpop.permute.xlu0 %7091
    %7095 = vrot.lane.b32.xlu0 %v6967, 120
    %v7096 = vpop.permute.xlu0 %7095
    %7098 = vrot.lane.b32.xlu0 %v6967, 112
    %v7099 = vpop.permute.xlu0 %7098
    %7101 = vrot.lane.b32.xlu0 %v6967, 104
    %v7102 = vpop.permute.xlu0 %7101
    %7105 = vrot.lane.b32.xlu0 %v7021, 120
    %v7106 = vpop.permute.xlu0 %7105
    %7108 = vrot.lane.b32.xlu0 %v7021, 112
    %v7109 = vpop.permute.xlu0 %7108
    %7111 = vrot.lane.b32.xlu0 %v7021, 104
    %v7112 = vpop.permute.xlu0 %7111
    %7115 = vrot.lane.b32.xlu0 %v7024, 120
    %v7116 = vpop.permute.xlu0 %7115
    %7118 = vrot.lane.b32.xlu0 %v7024, 112
    %v7119 = vpop.permute.xlu0 %7118
    %7121 = vrot.lane.b32.xlu0 %v7024, 104
    %v7122 = vpop.permute.xlu0 %7121
    %7125 = vrot.lane.b32.xlu0 %v7078, 120
    %v7126 = vpop.permute.xlu0 %7125
    %7128 = vrot.lane.b32.xlu0 %v7078, 112
    %v7129 = vpop.permute.xlu0 %7128
    %7131 = vrot.lane.b32.xlu0 %v7078, 104
    %v7132 = vpop.permute.xlu0 %7131
    %7135 = vrot.lane.b32.xlu0 %v7081, 120
    %v7136 = vpop.permute.xlu0 %7135
    %7138 = vrot.lane.b32.xlu0 %v7081, 112
    %v7139 = vpop.permute.xlu0 %7138
    %7141 = vrot.lane.b32.xlu0 %v7081, 104
    %v7142 = vpop.permute.xlu0 %7141
    %v7144 = vpack.c.bf16 %v6964, %v6964
    %v7145 = vpack.c.bf16 %v7086, %v7086
    %v7146 = vpack.c.bf16 %v7089, %v7089
    %v7147 = vpack.c.bf16 %v7092, %v7092
    %v7148 = vpack.c.bf16 %v6967, %v6967
    %v7149 = vpack.c.bf16 %v7096, %v7096
    %v7150 = vpack.c.bf16 %v7099, %v7099
    %v7151 = vpack.c.bf16 %v7102, %v7102
    %v7152 = vpack.c.bf16 %v7021, %v7021
    %v7153 = vpack.c.bf16 %v7106, %v7106
    %v7154 = vpack.c.bf16 %v7109, %v7109
    %v7155 = vpack.c.bf16 %v7112, %v7112
    %v7156 = vpack.c.bf16 %v7024, %v7024
    %v7157 = vpack.c.bf16 %v7116, %v7116
    %v7158 = vpack.c.bf16 %v7119, %v7119
    %v7159 = vpack.c.bf16 %v7122, %v7122
    %v7161 = vsel %vm374, %v7144, 0
    %v7164 = vsel %vm374, %v7152, 0
    %7166 = vmatprep.subr.bf16.mxu0 0
    %7167 = vmatpush1.bf16.xpose.msra.mxu0 %v7164
    %7168 = vmatprep.subr.bf16.mxu0 0
    %7169 = vmatpush1.bf16.xpose.msra.mxu0 0
    %7170 = vmatprep.subr.bf16.mxu0 0
    %7171 = vmatpush1.bf16.xpose.msra.mxu0 0
    %7172 = vmatprep.subr.bf16.mxu0 0
    %7173 = vmatpush1.bf16.xpose.msra.mxu0 0
    %7174 = vmatprep.subr.bf16.mxu0 0
    %7175 = vmatpush1.bf16.xpose.msra.mxu0 0
    %7176 = vmatprep.subr.bf16.mxu0 0
    %7177 = vmatpush1.bf16.xpose.msra.mxu0 0
    %7178 = vmatprep.subr.bf16.mxu0 0
    %7179 = vmatpush1.bf16.xpose.msra.mxu0 0
    %7180 = vmatprep.subr.bf16.mxu0 0
    %7181 = vmatpush1.bf16.xpose.msra.mxu0 0
    %7182 = vmatprep.subr.bf16.mxu0 0
    %7183 = vmatpush1.bf16.xpose.msra.mxu0 0
    %7184 = vmatprep.subr.bf16.mxu0 0
    %7185 = vmatpush1.bf16.xpose.msra.mxu0 0
    %7186 = vmatprep.subr.bf16.mxu0 0
    %7187 = vmatpush1.bf16.xpose.msra.mxu0 0
    %7188 = vmatprep.subr.bf16.mxu0 0
    %7189 = vmatpush1.bf16.xpose.msra.mxu0 0
    %7190 = vmatprep.subr.bf16.mxu0 0
    %7191 = vmatpush1.bf16.xpose.msra.mxu0 0
    %7192 = vmatprep.subr.bf16.mxu0 0
    %7193 = vmatpush1.bf16.xpose.msra.mxu0 0
    %7194 = vmatprep.subr.bf16.mxu0 0
    %7195 = vmatpush1.bf16.xpose.msra.mxu0 0
    %7196 = vmatprep.subr.bf16.mxu0 0
    %7197 = vmatpush1.bf16.xpose.msra.mxu0 0
    %7198 = vmatprep.mubr.bf16.mxu0 0
    %7199 = vmatmul.mubr.bf16.gmra.mrb[0].mxu0 %v7161
    %v7200 = vpop.f32.mrb[0].mxu0
    %v7201 = vadd.f32 0.0, %v7200
    %v7202 = vpop.f32.mrb[0].mxu0
    %v7203 = vpop.f32.mrb[0].mxu0
    %v7204 = vpop.f32.mrb[0].mxu0
    %7205 = vdwg.mxu0
    %v7207 = vsel %vm374, %v7145, 0
    %v7210 = vsel %vm374, %v7153, 0
    %7212 = vmatprep.subr.bf16.mxu0 0
    %7213 = vmatpush1.bf16.xpose.msra.mxu0 %v7210
    %7214 = vmatprep.subr.bf16.mxu0 0
    %7215 = vmatpush1.bf16.xpose.msra.mxu0 0
    %7216 = vmatprep.subr.bf16.mxu0 0
    %7217 = vmatpush1.bf16.xpose.msra.mxu0 0
    %7218 = vmatprep.subr.bf16.mxu0 0
    %7219 = vmatpush1.bf16.xpose.msra.mxu0 0
    %7220 = vmatprep.subr.bf16.mxu0 0
    %7221 = vmatpush1.bf16.xpose.msra.mxu0 0
    %7222 = vmatprep.subr.bf16.mxu0 0
    %7223 = vmatpush1.bf16.xpose.msra.mxu0 0
    %7224 = vmatprep.subr.bf16.mxu0 0
    %7225 = vmatpush1.bf16.xpose.msra.mxu0 0
    %7226 = vmatprep.subr.bf16.mxu0 0
    %7227 = vmatpush1.bf16.xpose.msra.mxu0 0
    %7228 = vmatprep.subr.bf16.mxu0 0
    %7229 = vmatpush1.bf16.xpose.msra.mxu0 0
    %7230 = vmatprep.subr.bf16.mxu0 0
    %7231 = vmatpush1.bf16.xpose.msra.mxu0 0
    %7232 = vmatprep.subr.bf16.mxu0 0
    %7233 = vmatpush1.bf16.xpose.msra.mxu0 0
    %7234 = vmatprep.subr.bf16.mxu0 0
    %7235 = vmatpush1.bf16.xpose.msra.mxu0 0
    %7236 = vmatprep.subr.bf16.mxu0 0
    %7237 = vmatpush1.bf16.xpose.msra.mxu0 0
    %7238 = vmatprep.subr.bf16.mxu0 0
    %7239 = vmatpush1.bf16.xpose.msra.mxu0 0
    %7240 = vmatprep.subr.bf16.mxu0 0
    %7241 = vmatpush1.bf16.xpose.msra.mxu0 0
    %7242 = vmatprep.subr.bf16.mxu0 0
    %7243 = vmatpush1.bf16.xpose.msra.mxu0 0
    %7244 = vmatprep.mubr.bf16.mxu0 0
    %7245 = vmatmul.mubr.bf16.gmra.mrb[0].mxu0 %v7207
    %v7246 = vpop.f32.mrb[0].mxu0
    %v7247 = vadd.f32 0.0, %v7246
    %v7248 = vpop.f32.mrb[0].mxu0
    %v7249 = vpop.f32.mrb[0].mxu0
    %v7250 = vpop.f32.mrb[0].mxu0
    %7251 = vdwg.mxu0
    %v7253 = vsel %vm374, %v7146, 0
    %v7256 = vsel %vm374, %v7154, 0
    %7258 = vmatprep.subr.bf16.mxu0 0
    %7259 = vmatpush1.bf16.xpose.msra.mxu0 %v7256
    %7260 = vmatprep.subr.bf16.mxu0 0
    %7261 = vmatpush1.bf16.xpose.msra.mxu0 0
    %7262 = vmatprep.subr.bf16.mxu0 0
    %7263 = vmatpush1.bf16.xpose.msra.mxu0 0
    %7264 = vmatprep.subr.bf16.mxu0 0
    %7265 = vmatpush1.bf16.xpose.msra.mxu0 0
    %7266 = vmatprep.subr.bf16.mxu0 0
    %7267 = vmatpush1.bf16.xpose.msra.mxu0 0
    %7268 = vmatprep.subr.bf16.mxu0 0
    %7269 = vmatpush1.bf16.xpose.msra.mxu0 0
    %7270 = vmatprep.subr.bf16.mxu0 0
    %7271 = vmatpush1.bf16.xpose.msra.mxu0 0
    %7272 = vmatprep.subr.bf16.mxu0 0
    %7273 = vmatpush1.bf16.xpose.msra.mxu0 0
    %7274 = vmatprep.subr.bf16.mxu0 0
    %7275 = vmatpush1.bf16.xpose.msra.mxu0 0
    %7276 = vmatprep.subr.bf16.mxu0 0
    %7277 = vmatpush1.bf16.xpose.msra.mxu0 0
    %7278 = vmatprep.subr.bf16.mxu0 0
    %7279 = vmatpush1.bf16.xpose.msra.mxu0 0
    %7280 = vmatprep.subr.bf16.mxu0 0
    %7281 = vmatpush1.bf16.xpose.msra.mxu0 0
    %7282 = vmatprep.subr.bf16.mxu0 0
    %7283 = vmatpush1.bf16.xpose.msra.mxu0 0
    %7284 = vmatprep.subr.bf16.mxu0 0
    %7285 = vmatpush1.bf16.xpose.msra.mxu0 0
    %7286 = vmatprep.subr.bf16.mxu0 0
    %7287 = vmatpush1.bf16.xpose.msra.mxu0 0
    %7288 = vmatprep.subr.bf16.mxu0 0
    %7289 = vmatpush1.bf16.xpose.msra.mxu0 0
    %7290 = vmatprep.mubr.bf16.mxu0 0
    %7291 = vmatmul.mubr.bf16.gmra.mrb[0].mxu0 %v7253
    %v7292 = vpop.f32.mrb[0].mxu0
    %v7293 = vadd.f32 0.0, %v7292
    %v7294 = vpop.f32.mrb[0].mxu0
    %v7295 = vpop.f32.mrb[0].mxu0
    %v7296 = vpop.f32.mrb[0].mxu0
    %7297 = vdwg.mxu0
    %v7299 = vsel %vm374, %v7147, 0
    %v7302 = vsel %vm374, %v7155, 0
    %7304 = vmatprep.subr.bf16.mxu0 0
    %7305 = vmatpush1.bf16.xpose.msra.mxu0 %v7302
    %7306 = vmatprep.subr.bf16.mxu0 0
    %7307 = vmatpush1.bf16.xpose.msra.mxu0 0
    %7308 = vmatprep.subr.bf16.mxu0 0
    %7309 = vmatpush1.bf16.xpose.msra.mxu0 0
    %7310 = vmatprep.subr.bf16.mxu0 0
    %7311 = vmatpush1.bf16.xpose.msra.mxu0 0
    %7312 = vmatprep.subr.bf16.mxu0 0
    %7313 = vmatpush1.bf16.xpose.msra.mxu0 0
    %7314 = vmatprep.subr.bf16.mxu0 0
    %7315 = vmatpush1.bf16.xpose.msra.mxu0 0
    %7316 = vmatprep.subr.bf16.mxu0 0
    %7317 = vmatpush1.bf16.xpose.msra.mxu0 0
    %7318 = vmatprep.subr.bf16.mxu0 0
    %7319 = vmatpush1.bf16.xpose.msra.mxu0 0
    %7320 = vmatprep.subr.bf16.mxu0 0
    %7321 = vmatpush1.bf16.xpose.msra.mxu0 0
    %7322 = vmatprep.subr.bf16.mxu0 0
    %7323 = vmatpush1.bf16.xpose.msra.mxu0 0
    %7324 = vmatprep.subr.bf16.mxu0 0
    %7325 = vmatpush1.bf16.xpose.msra.mxu0 0
    %7326 = vmatprep.subr.bf16.mxu0 0
    %7327 = vmatpush1.bf16.xpose.msra.mxu0 0
    %7328 = vmatprep.subr.bf16.mxu0 0
    %7329 = vmatpush1.bf16.xpose.msra.mxu0 0
    %7330 = vmatprep.subr.bf16.mxu0 0
    %7331 = vmatpush1.bf16.xpose.msra.mxu0 0
    %7332 = vmatprep.subr.bf16.mxu0 0
    %7333 = vmatpush1.bf16.xpose.msra.mxu0 0
    %7334 = vmatprep.subr.bf16.mxu0 0
    %7335 = vmatpush1.bf16.xpose.msra.mxu0 0
    %7336 = vmatprep.mubr.bf16.mxu0 0
    %7337 = vmatmul.mubr.bf16.gmra.mrb[0].mxu0 %v7299
    %v7338 = vpop.f32.mrb[0].mxu0
    %v7339 = vadd.f32 0.0, %v7338
    %v7340 = vpop.f32.mrb[0].mxu0
    %v7341 = vpop.f32.mrb[0].mxu0
    %v7342 = vpop.f32.mrb[0].mxu0
    %7343 = vdwg.mxu0
    %v7345 = vsel %vm374, %v7148, 0
    %v7348 = vsel %vm374, %v7156, 0
    %7350 = vmatprep.subr.bf16.mxu0 0
    %7351 = vmatpush1.bf16.xpose.msra.mxu0 %v7348
    %7352 = vmatprep.subr.bf16.mxu0 0
    %7353 = vmatpush1.bf16.xpose.msra.mxu0 0
    %7354 = vmatprep.subr.bf16.mxu0 0
    %7355 = vmatpush1.bf16.xpose.msra.mxu0 0
    %7356 = vmatprep.subr.bf16.mxu0 0
    %7357 = vmatpush1.bf16.xpose.msra.mxu0 0
    %7358 = vmatprep.subr.bf16.mxu0 0
    %7359 = vmatpush1.bf16.xpose.msra.mxu0 0
    %7360 = vmatprep.subr.bf16.mxu0 0
    %7361 = vmatpush1.bf16.xpose.msra.mxu0 0
    %7362 = vmatprep.subr.bf16.mxu0 0
    %7363 = vmatpush1.bf16.xpose.msra.mxu0 0
    %7364 = vmatprep.subr.bf16.mxu0 0
    %7365 = vmatpush1.bf16.xpose.msra.mxu0 0
    %7366 = vmatprep.subr.bf16.mxu0 0
    %7367 = vmatpush1.bf16.xpose.msra.mxu0 0
    %7368 = vmatprep.subr.bf16.mxu0 0
    %7369 = vmatpush1.bf16.xpose.msra.mxu0 0
    %7370 = vmatprep.subr.bf16.mxu0 0
    %7371 = vmatpush1.bf16.xpose.msra.mxu0 0
    %7372 = vmatprep.subr.bf16.mxu0 0
    %7373 = vmatpush1.bf16.xpose.msra.mxu0 0
    %7374 = vmatprep.subr.bf16.mxu0 0
    %7375 = vmatpush1.bf16.xpose.msra.mxu0 0
    %7376 = vmatprep.subr.bf16.mxu0 0
    %7377 = vmatpush1.bf16.xpose.msra.mxu0 0
    %7378 = vmatprep.subr.bf16.mxu0 0
    %7379 = vmatpush1.bf16.xpose.msra.mxu0 0
    %7380 = vmatprep.subr.bf16.mxu0 0
    %7381 = vmatpush1.bf16.xpose.msra.mxu0 0
    %7382 = vmatprep.mubr.bf16.mxu0 0
    %7383 = vmatmul.mubr.bf16.gmra.mrb[0].mxu0 %v7345
    %v7384 = vpop.f32.mrb[0].mxu0
    %v7385 = vadd.f32 0.0, %v7384
    %v7386 = vpop.f32.mrb[0].mxu0
    %v7387 = vpop.f32.mrb[0].mxu0
    %v7388 = vpop.f32.mrb[0].mxu0
    %7389 = vdwg.mxu0
    %v7391 = vsel %vm374, %v7149, 0
    %v7394 = vsel %vm374, %v7157, 0
    %7396 = vmatprep.subr.bf16.mxu0 0
    %7397 = vmatpush1.bf16.xpose.msra.mxu0 %v7394
    %7398 = vmatprep.subr.bf16.mxu0 0
    %7399 = vmatpush1.bf16.xpose.msra.mxu0 0
    %7400 = vmatprep.subr.bf16.mxu0 0
    %7401 = vmatpush1.bf16.xpose.msra.mxu0 0
    %7402 = vmatprep.subr.bf16.mxu0 0
    %7403 = vmatpush1.bf16.xpose.msra.mxu0 0
    %7404 = vmatprep.subr.bf16.mxu0 0
    %7405 = vmatpush1.bf16.xpose.msra.mxu0 0
    %7406 = vmatprep.subr.bf16.mxu0 0
    %7407 = vmatpush1.bf16.xpose.msra.mxu0 0
    %7408 = vmatprep.subr.bf16.mxu0 0
    %7409 = vmatpush1.bf16.xpose.msra.mxu0 0
    %7410 = vmatprep.subr.bf16.mxu0 0
    %7411 = vmatpush1.bf16.xpose.msra.mxu0 0
    %7412 = vmatprep.subr.bf16.mxu0 0
    %7413 = vmatpush1.bf16.xpose.msra.mxu0 0
    %7414 = vmatprep.subr.bf16.mxu0 0
    %7415 = vmatpush1.bf16.xpose.msra.mxu0 0
    %7416 = vmatprep.subr.bf16.mxu0 0
    %7417 = vmatpush1.bf16.xpose.msra.mxu0 0
    %7418 = vmatprep.subr.bf16.mxu0 0
    %7419 = vmatpush1.bf16.xpose.msra.mxu0 0
    %7420 = vmatprep.subr.bf16.mxu0 0
    %7421 = vmatpush1.bf16.xpose.msra.mxu0 0
    %7422 = vmatprep.subr.bf16.mxu0 0
    %7423 = vmatpush1.bf16.xpose.msra.mxu0 0
    %7424 = vmatprep.subr.bf16.mxu0 0
    %7425 = vmatpush1.bf16.xpose.msra.mxu0 0
    %7426 = vmatprep.subr.bf16.mxu0 0
    %7427 = vmatpush1.bf16.xpose.msra.mxu0 0
    %7428 = vmatprep.mubr.bf16.mxu0 0
    %7429 = vmatmul.mubr.bf16.gmra.mrb[0].mxu0 %v7391
    %v7430 = vpop.f32.mrb[0].mxu0
    %v7431 = vadd.f32 0.0, %v7430
    %v7432 = vpop.f32.mrb[0].mxu0
    %v7433 = vpop.f32.mrb[0].mxu0
    %v7434 = vpop.f32.mrb[0].mxu0
    %7435 = vdwg.mxu0
    %v7437 = vsel %vm374, %v7150, 0
    %v7440 = vsel %vm374, %v7158, 0
    %7442 = vmatprep.subr.bf16.mxu0 0
    %7443 = vmatpush1.bf16.xpose.msra.mxu0 %v7440
    %7444 = vmatprep.subr.bf16.mxu0 0
    %7445 = vmatpush1.bf16.xpose.msra.mxu0 0
    %7446 = vmatprep.subr.bf16.mxu0 0
    %7447 = vmatpush1.bf16.xpose.msra.mxu0 0
    %7448 = vmatprep.subr.bf16.mxu0 0
    %7449 = vmatpush1.bf16.xpose.msra.mxu0 0
    %7450 = vmatprep.subr.bf16.mxu0 0
    %7451 = vmatpush1.bf16.xpose.msra.mxu0 0
    %7452 = vmatprep.subr.bf16.mxu0 0
    %7453 = vmatpush1.bf16.xpose.msra.mxu0 0
    %7454 = vmatprep.subr.bf16.mxu0 0
    %7455 = vmatpush1.bf16.xpose.msra.mxu0 0
    %7456 = vmatprep.subr.bf16.mxu0 0
    %7457 = vmatpush1.bf16.xpose.msra.mxu0 0
    %7458 = vmatprep.subr.bf16.mxu0 0
    %7459 = vmatpush1.bf16.xpose.msra.mxu0 0
    %7460 = vmatprep.subr.bf16.mxu0 0
    %7461 = vmatpush1.bf16.xpose.msra.mxu0 0
    %7462 = vmatprep.subr.bf16.mxu0 0
    %7463 = vmatpush1.bf16.xpose.msra.mxu0 0
    %7464 = vmatprep.subr.bf16.mxu0 0
    %7465 = vmatpush1.bf16.xpose.msra.mxu0 0
    %7466 = vmatprep.subr.bf16.mxu0 0
    %7467 = vmatpush1.bf16.xpose.msra.mxu0 0
    %7468 = vmatprep.subr.bf16.mxu0 0
    %7469 = vmatpush1.bf16.xpose.msra.mxu0 0
    %7470 = vmatprep.subr.bf16.mxu0 0
    %7471 = vmatpush1.bf16.xpose.msra.mxu0 0
    %7472 = vmatprep.subr.bf16.mxu0 0
    %7473 = vmatpush1.bf16.xpose.msra.mxu0 0
    %7474 = vmatprep.mubr.bf16.mxu0 0
    %7475 = vmatmul.mubr.bf16.gmra.mrb[0].mxu0 %v7437
    %v7476 = vpop.f32.mrb[0].mxu0
    %v7477 = vadd.f32 0.0, %v7476
    %v7478 = vpop.f32.mrb[0].mxu0
    %v7479 = vpop.f32.mrb[0].mxu0
    %v7480 = vpop.f32.mrb[0].mxu0
    %7481 = vdwg.mxu0
    %v7483 = vsel %vm374, %v7151, 0
    %v7486 = vsel %vm374, %v7159, 0
    %7488 = vmatprep.subr.bf16.mxu0 0
    %7489 = vmatpush1.bf16.xpose.msra.mxu0 %v7486
    %7490 = vmatprep.subr.bf16.mxu0 0
    %7491 = vmatpush1.bf16.xpose.msra.mxu0 0
    %7492 = vmatprep.subr.bf16.mxu0 0
    %7493 = vmatpush1.bf16.xpose.msra.mxu0 0
    %7494 = vmatprep.subr.bf16.mxu0 0
    %7495 = vmatpush1.bf16.xpose.msra.mxu0 0
    %7496 = vmatprep.subr.bf16.mxu0 0
    %7497 = vmatpush1.bf16.xpose.msra.mxu0 0
    %7498 = vmatprep.subr.bf16.mxu0 0
    %7499 = vmatpush1.bf16.xpose.msra.mxu0 0
    %7500 = vmatprep.subr.bf16.mxu0 0
    %7501 = vmatpush1.bf16.xpose.msra.mxu0 0
    %7502 = vmatprep.subr.bf16.mxu0 0
    %7503 = vmatpush1.bf16.xpose.msra.mxu0 0
    %7504 = vmatprep.subr.bf16.mxu0 0
    %7505 = vmatpush1.bf16.xpose.msra.mxu0 0
    %7506 = vmatprep.subr.bf16.mxu0 0
    %7507 = vmatpush1.bf16.xpose.msra.mxu0 0
    %7508 = vmatprep.subr.bf16.mxu0 0
    %7509 = vmatpush1.bf16.xpose.msra.mxu0 0
    %7510 = vmatprep.subr.bf16.mxu0 0
    %7511 = vmatpush1.bf16.xpose.msra.mxu0 0
    %7512 = vmatprep.subr.bf16.mxu0 0
    %7513 = vmatpush1.bf16.xpose.msra.mxu0 0
    %7514 = vmatprep.subr.bf16.mxu0 0
    %7515 = vmatpush1.bf16.xpose.msra.mxu0 0
    %7516 = vmatprep.subr.bf16.mxu0 0
    %7517 = vmatpush1.bf16.xpose.msra.mxu0 0
    %7518 = vmatprep.subr.bf16.mxu0 0
    %7519 = vmatpush1.bf16.xpose.msra.mxu0 0
    %7520 = vmatprep.mubr.bf16.mxu0 0
    %7521 = vmatmul.mubr.bf16.gmra.mrb[0].mxu0 %v7483
    %v7522 = vpop.f32.mrb[0].mxu0
    %v7523 = vadd.f32 0.0, %v7522
    %v7524 = vpop.f32.mrb[0].mxu0
    %v7525 = vpop.f32.mrb[0].mxu0
    %v7526 = vpop.f32.mrb[0].mxu0
    %7527 = vdwg.mxu0
    %v7528 = vsel %vm374, %v7201, -inf
    %7529 = vmax.xlane.f32.xlu0 %v7528
    %v7530 = vpop.xlane.xlu0 %7529
    %v7531 = vsel %vm374, %v7247, -inf
    %7532 = vmax.xlane.f32.xlu0 %v7531
    %v7533 = vpop.xlane.xlu0 %7532
    %v7534 = vsel %vm374, %v7293, -inf
    %7535 = vmax.xlane.f32.xlu0 %v7534
    %v7536 = vpop.xlane.xlu0 %7535
    %v7537 = vsel %vm374, %v7339, -inf
    %7538 = vmax.xlane.f32.xlu0 %v7537
    %v7539 = vpop.xlane.xlu0 %7538
    %v7540 = vsel %vm374, %v7385, -inf
    %7541 = vmax.xlane.f32.xlu0 %v7540
    %v7542 = vpop.xlane.xlu0 %7541
    %v7543 = vsel %vm374, %v7431, -inf
    %7544 = vmax.xlane.f32.xlu0 %v7543
    %v7545 = vpop.xlane.xlu0 %7544
    %v7546 = vsel %vm374, %v7477, -inf
    %7547 = vmax.xlane.f32.xlu0 %v7546
    %v7548 = vpop.xlane.xlu0 %7547
    %v7549 = vsel %vm374, %v7523, -inf
    %7550 = vmax.xlane.f32.xlu0 %v7549
    %v7551 = vpop.xlane.xlu0 %7550
    %v7552 = vsub.f32 %v7201, %v7530
    %v7553 = vsub.f32 %v7247, %v7533
    %v7554 = vsub.f32 %v7293, %v7536
    %v7555 = vsub.f32 %v7339, %v7539
    %v7556 = vsub.f32 %v7385, %v7542
    %v7557 = vsub.f32 %v7431, %v7545
    %v7558 = vsub.f32 %v7477, %v7548
    %v7559 = vsub.f32 %v7523, %v7551
    %v7560 = vmul.f32 %v7552, 1.442695
    %v7561 = vpow.pop %v7560
    %v7562 = vmul.f32 %v7553, 1.442695
    %v7563 = vpow.pop %v7562
    %v7564 = vmul.f32 %v7554, 1.442695
    %v7565 = vpow.pop %v7564
    %v7566 = vmul.f32 %v7555, 1.442695
    %v7567 = vpow.pop %v7566
    %v7568 = vmul.f32 %v7556, 1.442695
    %v7569 = vpow.pop %v7568
    %v7570 = vmul.f32 %v7557, 1.442695
    %v7571 = vpow.pop %v7570
    %v7572 = vmul.f32 %v7558, 1.442695
    %v7573 = vpow.pop %v7572
    %v7574 = vmul.f32 %v7559, 1.442695
    %v7575 = vpow.pop %v7574
    %v7576 = vsel %vm374, %v7561, 0.0
    %7577 = vadd.xlane.f32.xlu0 %v7576
    %v7578 = vpop.xlane.xlu0 %7577
    %v7579 = vsel %vm374, %v7563, 0.0
    %7580 = vadd.xlane.f32.xlu0 %v7579
    %v7581 = vpop.xlane.xlu0 %7580
    %v7582 = vsel %vm374, %v7565, 0.0
    %7583 = vadd.xlane.f32.xlu0 %v7582
    %v7584 = vpop.xlane.xlu0 %7583
    %v7585 = vsel %vm374, %v7567, 0.0
    %7586 = vadd.xlane.f32.xlu0 %v7585
    %v7587 = vpop.xlane.xlu0 %7586
    %v7588 = vsel %vm374, %v7569, 0.0
    %7589 = vadd.xlane.f32.xlu0 %v7588
    %v7590 = vpop.xlane.xlu0 %7589
    %v7591 = vsel %vm374, %v7571, 0.0
    %7592 = vadd.xlane.f32.xlu0 %v7591
    %v7593 = vpop.xlane.xlu0 %7592
    %v7594 = vsel %vm374, %v7573, 0.0
    %7595 = vadd.xlane.f32.xlu0 %v7594
    %v7596 = vpop.xlane.xlu0 %7595
    %v7597 = vsel %vm374, %v7575, 0.0
    %7598 = vadd.xlane.f32.xlu0 %v7597
    %v7599 = vpop.xlane.xlu0 %7598
    %v7600 = vrcp.pop %v7578
    %v7601 = vmul.f32 %v7561, %v7600
    %v7602 = vrcp.pop %v7581
    %v7603 = vmul.f32 %v7563, %v7602
    %v7604 = vrcp.pop %v7584
    %v7605 = vmul.f32 %v7565, %v7604
    %v7606 = vrcp.pop %v7587
    %v7607 = vmul.f32 %v7567, %v7606
    %v7608 = vrcp.pop %v7590
    %v7609 = vmul.f32 %v7569, %v7608
    %v7610 = vrcp.pop %v7593
    %v7611 = vmul.f32 %v7571, %v7610
    %v7612 = vrcp.pop %v7596
    %v7613 = vmul.f32 %v7573, %v7612
    %v7614 = vrcp.pop %v7599
    %v7615 = vmul.f32 %v7575, %v7614
    %v7616 = vpack.c.bf16 %v7601, %v7601
    %v7617 = vpack.c.bf16 %v7603, %v7603
    %v7618 = vpack.c.bf16 %v7605, %v7605
    %v7619 = vpack.c.bf16 %v7607, %v7607
    %v7620 = vpack.c.bf16 %v7609, %v7609
    %v7621 = vpack.c.bf16 %v7611, %v7611
    %v7622 = vpack.c.bf16 %v7613, %v7613
    %v7623 = vpack.c.bf16 %v7615, %v7615
    %v7624 = vpack.c.bf16 %v7078, %v7078
    %v7625 = vpack.c.bf16 %v7126, %v7126
    %v7626 = vpack.c.bf16 %v7129, %v7129
    %v7627 = vpack.c.bf16 %v7132, %v7132
    %v7628 = vpack.c.bf16 %v7081, %v7081
    %v7629 = vpack.c.bf16 %v7136, %v7136
    %v7630 = vpack.c.bf16 %v7139, %v7139
    %v7631 = vpack.c.bf16 %v7142, %v7142
    %v7633 = vsel %vm374, %v7616, 0
    %v7636 = vsel %vm850, %v7624, 0
    %7638 = vmatprep.subr.bf16.mxu0 0
    %7639 = vmatpush1.bf16.msra.mxu0 %v7636
    %7640 = vmatprep.subr.bf16.mxu0 0
    %7641 = vmatpush1.bf16.msra.mxu0 0
    %7642 = vmatprep.subr.bf16.mxu0 0
    %7643 = vmatpush1.bf16.msra.mxu0 0
    %7644 = vmatprep.subr.bf16.mxu0 0
    %7645 = vmatpush1.bf16.msra.mxu0 0
    %7646 = vmatprep.subr.bf16.mxu0 0
    %7647 = vmatpush1.bf16.msra.mxu0 0
    %7648 = vmatprep.subr.bf16.mxu0 0
    %7649 = vmatpush1.bf16.msra.mxu0 0
    %7650 = vmatprep.subr.bf16.mxu0 0
    %7651 = vmatpush1.bf16.msra.mxu0 0
    %7652 = vmatprep.subr.bf16.mxu0 0
    %7653 = vmatpush1.bf16.msra.mxu0 0
    %7654 = vmatprep.subr.bf16.mxu0 0
    %7655 = vmatpush1.bf16.msra.mxu0 0
    %7656 = vmatprep.subr.bf16.mxu0 0
    %7657 = vmatpush1.bf16.msra.mxu0 0
    %7658 = vmatprep.subr.bf16.mxu0 0
    %7659 = vmatpush1.bf16.msra.mxu0 0
    %7660 = vmatprep.subr.bf16.mxu0 0
    %7661 = vmatpush1.bf16.msra.mxu0 0
    %7662 = vmatprep.subr.bf16.mxu0 0
    %7663 = vmatpush1.bf16.msra.mxu0 0
    %7664 = vmatprep.subr.bf16.mxu0 0
    %7665 = vmatpush1.bf16.msra.mxu0 0
    %7666 = vmatprep.subr.bf16.mxu0 0
    %7667 = vmatpush1.bf16.msra.mxu0 0
    %7668 = vmatprep.subr.bf16.mxu0 0
    %7669 = vmatpush1.bf16.msra.mxu0 0
    %7670 = vmatprep.mubr.bf16.mxu0 0
    %7671 = vmatmul.mubr.bf16.gmra.mrb[0].mxu0 %v7633
    %v7672 = vpop.f32.mrb[0].mxu0
    %v7673 = vadd.f32 0.0, %v7672
    %v7674 = vpop.f32.mrb[0].mxu0
    %v7675 = vpop.f32.mrb[0].mxu0
    %v7676 = vpop.f32.mrb[0].mxu0
    %7677 = vdwg.mxu0
    %v7679 = vsel %vm374, %v7617, 0
    %v7682 = vsel %vm850, %v7625, 0
    %7684 = vmatprep.subr.bf16.mxu0 0
    %7685 = vmatpush1.bf16.msra.mxu0 %v7682
    %7686 = vmatprep.subr.bf16.mxu0 0
    %7687 = vmatpush1.bf16.msra.mxu0 0
    %7688 = vmatprep.subr.bf16.mxu0 0
    %7689 = vmatpush1.bf16.msra.mxu0 0
    %7690 = vmatprep.subr.bf16.mxu0 0
    %7691 = vmatpush1.bf16.msra.mxu0 0
    %7692 = vmatprep.subr.bf16.mxu0 0
    %7693 = vmatpush1.bf16.msra.mxu0 0
    %7694 = vmatprep.subr.bf16.mxu0 0
    %7695 = vmatpush1.bf16.msra.mxu0 0
    %7696 = vmatprep.subr.bf16.mxu0 0
    %7697 = vmatpush1.bf16.msra.mxu0 0
    %7698 = vmatprep.subr.bf16.mxu0 0
    %7699 = vmatpush1.bf16.msra.mxu0 0
    %7700 = vmatprep.subr.bf16.mxu0 0
    %7701 = vmatpush1.bf16.msra.mxu0 0
    %7702 = vmatprep.subr.bf16.mxu0 0
    %7703 = vmatpush1.bf16.msra.mxu0 0
    %7704 = vmatprep.subr.bf16.mxu0 0
    %7705 = vmatpush1.bf16.msra.mxu0 0
    %7706 = vmatprep.subr.bf16.mxu0 0
    %7707 = vmatpush1.bf16.msra.mxu0 0
    %7708 = vmatprep.subr.bf16.mxu0 0
    %7709 = vmatpush1.bf16.msra.mxu0 0
    %7710 = vmatprep.subr.bf16.mxu0 0
    %7711 = vmatpush1.bf16.msra.mxu0 0
    %7712 = vmatprep.subr.bf16.mxu0 0
    %7713 = vmatpush1.bf16.msra.mxu0 0
    %7714 = vmatprep.subr.bf16.mxu0 0
    %7715 = vmatpush1.bf16.msra.mxu0 0
    %7716 = vmatprep.mubr.bf16.mxu0 0
    %7717 = vmatmul.mubr.bf16.gmra.mrb[0].mxu0 %v7679
    %v7718 = vpop.f32.mrb[0].mxu0
    %v7719 = vadd.f32 0.0, %v7718
    %v7720 = vpop.f32.mrb[0].mxu0
    %v7721 = vpop.f32.mrb[0].mxu0
    %v7722 = vpop.f32.mrb[0].mxu0
    %7723 = vdwg.mxu0
    %v7725 = vsel %vm374, %v7618, 0
    %v7728 = vsel %vm850, %v7626, 0
    %7730 = vmatprep.subr.bf16.mxu0 0
    %7731 = vmatpush1.bf16.msra.mxu0 %v7728
    %7732 = vmatprep.subr.bf16.mxu0 0
    %7733 = vmatpush1.bf16.msra.mxu0 0
    %7734 = vmatprep.subr.bf16.mxu0 0
    %7735 = vmatpush1.bf16.msra.mxu0 0
    %7736 = vmatprep.subr.bf16.mxu0 0
    %7737 = vmatpush1.bf16.msra.mxu0 0
    %7738 = vmatprep.subr.bf16.mxu0 0
    %7739 = vmatpush1.bf16.msra.mxu0 0
    %7740 = vmatprep.subr.bf16.mxu0 0
    %7741 = vmatpush1.bf16.msra.mxu0 0
    %7742 = vmatprep.subr.bf16.mxu0 0
    %7743 = vmatpush1.bf16.msra.mxu0 0
    %7744 = vmatprep.subr.bf16.mxu0 0
    %7745 = vmatpush1.bf16.msra.mxu0 0
    %7746 = vmatprep.subr.bf16.mxu0 0
    %7747 = vmatpush1.bf16.msra.mxu0 0
    %7748 = vmatprep.subr.bf16.mxu0 0
    %7749 = vmatpush1.bf16.msra.mxu0 0
    %7750 = vmatprep.subr.bf16.mxu0 0
    %7751 = vmatpush1.bf16.msra.mxu0 0
    %7752 = vmatprep.subr.bf16.mxu0 0
    %7753 = vmatpush1.bf16.msra.mxu0 0
    %7754 = vmatprep.subr.bf16.mxu0 0
    %7755 = vmatpush1.bf16.msra.mxu0 0
    %7756 = vmatprep.subr.bf16.mxu0 0
    %7757 = vmatpush1.bf16.msra.mxu0 0
    %7758 = vmatprep.subr.bf16.mxu0 0
    %7759 = vmatpush1.bf16.msra.mxu0 0
    %7760 = vmatprep.subr.bf16.mxu0 0
    %7761 = vmatpush1.bf16.msra.mxu0 0
    %7762 = vmatprep.mubr.bf16.mxu0 0
    %7763 = vmatmul.mubr.bf16.gmra.mrb[0].mxu0 %v7725
    %v7764 = vpop.f32.mrb[0].mxu0
    %v7765 = vadd.f32 0.0, %v7764
    %v7766 = vpop.f32.mrb[0].mxu0
    %v7767 = vpop.f32.mrb[0].mxu0
    %v7768 = vpop.f32.mrb[0].mxu0
    %7769 = vdwg.mxu0
    %v7771 = vsel %vm374, %v7619, 0
    %v7774 = vsel %vm850, %v7627, 0
    %7776 = vmatprep.subr.bf16.mxu0 0
    %7777 = vmatpush1.bf16.msra.mxu0 %v7774
    %7778 = vmatprep.subr.bf16.mxu0 0
    %7779 = vmatpush1.bf16.msra.mxu0 0
    %7780 = vmatprep.subr.bf16.mxu0 0
    %7781 = vmatpush1.bf16.msra.mxu0 0
    %7782 = vmatprep.subr.bf16.mxu0 0
    %7783 = vmatpush1.bf16.msra.mxu0 0
    %7784 = vmatprep.subr.bf16.mxu0 0
    %7785 = vmatpush1.bf16.msra.mxu0 0
    %7786 = vmatprep.subr.bf16.mxu0 0
    %7787 = vmatpush1.bf16.msra.mxu0 0
    %7788 = vmatprep.subr.bf16.mxu0 0
    %7789 = vmatpush1.bf16.msra.mxu0 0
    %7790 = vmatprep.subr.bf16.mxu0 0
    %7791 = vmatpush1.bf16.msra.mxu0 0
    %7792 = vmatprep.subr.bf16.mxu0 0
    %7793 = vmatpush1.bf16.msra.mxu0 0
    %7794 = vmatprep.subr.bf16.mxu0 0
    %7795 = vmatpush1.bf16.msra.mxu0 0
    %7796 = vmatprep.subr.bf16.mxu0 0
    %7797 = vmatpush1.bf16.msra.mxu0 0
    %7798 = vmatprep.subr.bf16.mxu0 0
    %7799 = vmatpush1.bf16.msra.mxu0 0
    %7800 = vmatprep.subr.bf16.mxu0 0
    %7801 = vmatpush1.bf16.msra.mxu0 0
    %7802 = vmatprep.subr.bf16.mxu0 0
    %7803 = vmatpush1.bf16.msra.mxu0 0
    %7804 = vmatprep.subr.bf16.mxu0 0
    %7805 = vmatpush1.bf16.msra.mxu0 0
    %7806 = vmatprep.subr.bf16.mxu0 0
    %7807 = vmatpush1.bf16.msra.mxu0 0
    %7808 = vmatprep.mubr.bf16.mxu0 0
    %7809 = vmatmul.mubr.bf16.gmra.mrb[0].mxu0 %v7771
    %v7810 = vpop.f32.mrb[0].mxu0
    %v7811 = vadd.f32 0.0, %v7810
    %v7812 = vpop.f32.mrb[0].mxu0
    %v7813 = vpop.f32.mrb[0].mxu0
    %v7814 = vpop.f32.mrb[0].mxu0
    %7815 = vdwg.mxu0
    %v7817 = vsel %vm374, %v7620, 0
    %v7820 = vsel %vm850, %v7628, 0
    %7822 = vmatprep.subr.bf16.mxu0 0
    %7823 = vmatpush1.bf16.msra.mxu0 %v7820
    %7824 = vmatprep.subr.bf16.mxu0 0
    %7825 = vmatpush1.bf16.msra.mxu0 0
    %7826 = vmatprep.subr.bf16.mxu0 0
    %7827 = vmatpush1.bf16.msra.mxu0 0
    %7828 = vmatprep.subr.bf16.mxu0 0
    %7829 = vmatpush1.bf16.msra.mxu0 0
    %7830 = vmatprep.subr.bf16.mxu0 0
    %7831 = vmatpush1.bf16.msra.mxu0 0
    %7832 = vmatprep.subr.bf16.mxu0 0
    %7833 = vmatpush1.bf16.msra.mxu0 0
    %7834 = vmatprep.subr.bf16.mxu0 0
    %7835 = vmatpush1.bf16.msra.mxu0 0
    %7836 = vmatprep.subr.bf16.mxu0 0
    %7837 = vmatpush1.bf16.msra.mxu0 0
    %7838 = vmatprep.subr.bf16.mxu0 0
    %7839 = vmatpush1.bf16.msra.mxu0 0
    %7840 = vmatprep.subr.bf16.mxu0 0
    %7841 = vmatpush1.bf16.msra.mxu0 0
    %7842 = vmatprep.subr.bf16.mxu0 0
    %7843 = vmatpush1.bf16.msra.mxu0 0
    %7844 = vmatprep.subr.bf16.mxu0 0
    %7845 = vmatpush1.bf16.msra.mxu0 0
    %7846 = vmatprep.subr.bf16.mxu0 0
    %7847 = vmatpush1.bf16.msra.mxu0 0
    %7848 = vmatprep.subr.bf16.mxu0 0
    %7849 = vmatpush1.bf16.msra.mxu0 0
    %7850 = vmatprep.subr.bf16.mxu0 0
    %7851 = vmatpush1.bf16.msra.mxu0 0
    %7852 = vmatprep.subr.bf16.mxu0 0
    %7853 = vmatpush1.bf16.msra.mxu0 0
    %7854 = vmatprep.mubr.bf16.mxu0 0
    %7855 = vmatmul.mubr.bf16.gmra.mrb[0].mxu0 %v7817
    %v7856 = vpop.f32.mrb[0].mxu0
    %v7857 = vadd.f32 0.0, %v7856
    %v7858 = vpop.f32.mrb[0].mxu0
    %v7859 = vpop.f32.mrb[0].mxu0
    %v7860 = vpop.f32.mrb[0].mxu0
    %7861 = vdwg.mxu0
    %v7863 = vsel %vm374, %v7621, 0
    %v7866 = vsel %vm850, %v7629, 0
    %7868 = vmatprep.subr.bf16.mxu0 0
    %7869 = vmatpush1.bf16.msra.mxu0 %v7866
    %7870 = vmatprep.subr.bf16.mxu0 0
    %7871 = vmatpush1.bf16.msra.mxu0 0
    %7872 = vmatprep.subr.bf16.mxu0 0
    %7873 = vmatpush1.bf16.msra.mxu0 0
    %7874 = vmatprep.subr.bf16.mxu0 0
    %7875 = vmatpush1.bf16.msra.mxu0 0
    %7876 = vmatprep.subr.bf16.mxu0 0
    %7877 = vmatpush1.bf16.msra.mxu0 0
    %7878 = vmatprep.subr.bf16.mxu0 0
    %7879 = vmatpush1.bf16.msra.mxu0 0
    %7880 = vmatprep.subr.bf16.mxu0 0
    %7881 = vmatpush1.bf16.msra.mxu0 0
    %7882 = vmatprep.subr.bf16.mxu0 0
    %7883 = vmatpush1.bf16.msra.mxu0 0
    %7884 = vmatprep.subr.bf16.mxu0 0
    %7885 = vmatpush1.bf16.msra.mxu0 0
    %7886 = vmatprep.subr.bf16.mxu0 0
    %7887 = vmatpush1.bf16.msra.mxu0 0
    %7888 = vmatprep.subr.bf16.mxu0 0
    %7889 = vmatpush1.bf16.msra.mxu0 0
    %7890 = vmatprep.subr.bf16.mxu0 0
    %7891 = vmatpush1.bf16.msra.mxu0 0
    %7892 = vmatprep.subr.bf16.mxu0 0
    %7893 = vmatpush1.bf16.msra.mxu0 0
    %7894 = vmatprep.subr.bf16.mxu0 0
    %7895 = vmatpush1.bf16.msra.mxu0 0
    %7896 = vmatprep.subr.bf16.mxu0 0
    %7897 = vmatpush1.bf16.msra.mxu0 0
    %7898 = vmatprep.subr.bf16.mxu0 0
    %7899 = vmatpush1.bf16.msra.mxu0 0
    %7900 = vmatprep.mubr.bf16.mxu0 0
    %7901 = vmatmul.mubr.bf16.gmra.mrb[0].mxu0 %v7863
    %v7902 = vpop.f32.mrb[0].mxu0
    %v7903 = vadd.f32 0.0, %v7902
    %v7904 = vpop.f32.mrb[0].mxu0
    %v7905 = vpop.f32.mrb[0].mxu0
    %v7906 = vpop.f32.mrb[0].mxu0
    %7907 = vdwg.mxu0
    %v7909 = vsel %vm374, %v7622, 0
    %v7912 = vsel %vm850, %v7630, 0
    %7914 = vmatprep.subr.bf16.mxu0 0
    %7915 = vmatpush1.bf16.msra.mxu0 %v7912
    %7916 = vmatprep.subr.bf16.mxu0 0
    %7917 = vmatpush1.bf16.msra.mxu0 0
    %7918 = vmatprep.subr.bf16.mxu0 0
    %7919 = vmatpush1.bf16.msra.mxu0 0
    %7920 = vmatprep.subr.bf16.mxu0 0
    %7921 = vmatpush1.bf16.msra.mxu0 0
    %7922 = vmatprep.subr.bf16.mxu0 0
    %7923 = vmatpush1.bf16.msra.mxu0 0
    %7924 = vmatprep.subr.bf16.mxu0 0
    %7925 = vmatpush1.bf16.msra.mxu0 0
    %7926 = vmatprep.subr.bf16.mxu0 0
    %7927 = vmatpush1.bf16.msra.mxu0 0
    %7928 = vmatprep.subr.bf16.mxu0 0
    %7929 = vmatpush1.bf16.msra.mxu0 0
    %7930 = vmatprep.subr.bf16.mxu0 0
    %7931 = vmatpush1.bf16.msra.mxu0 0
    %7932 = vmatprep.subr.bf16.mxu0 0
    %7933 = vmatpush1.bf16.msra.mxu0 0
    %7934 = vmatprep.subr.bf16.mxu0 0
    %7935 = vmatpush1.bf16.msra.mxu0 0
    %7936 = vmatprep.subr.bf16.mxu0 0
    %7937 = vmatpush1.bf16.msra.mxu0 0
    %7938 = vmatprep.subr.bf16.mxu0 0
    %7939 = vmatpush1.bf16.msra.mxu0 0
    %7940 = vmatprep.subr.bf16.mxu0 0
    %7941 = vmatpush1.bf16.msra.mxu0 0
    %7942 = vmatprep.subr.bf16.mxu0 0
    %7943 = vmatpush1.bf16.msra.mxu0 0
    %7944 = vmatprep.subr.bf16.mxu0 0
    %7945 = vmatpush1.bf16.msra.mxu0 0
    %7946 = vmatprep.mubr.bf16.mxu0 0
    %7947 = vmatmul.mubr.bf16.gmra.mrb[0].mxu0 %v7909
    %v7948 = vpop.f32.mrb[0].mxu0
    %v7949 = vadd.f32 0.0, %v7948
    %v7950 = vpop.f32.mrb[0].mxu0
    %v7951 = vpop.f32.mrb[0].mxu0
    %v7952 = vpop.f32.mrb[0].mxu0
    %7953 = vdwg.mxu0
    %v7955 = vsel %vm374, %v7623, 0
    %v7958 = vsel %vm850, %v7631, 0
    %7960 = vmatprep.subr.bf16.mxu0 0
    %7961 = vmatpush1.bf16.msra.mxu0 %v7958
    %7962 = vmatprep.subr.bf16.mxu0 0
    %7963 = vmatpush1.bf16.msra.mxu0 0
    %7964 = vmatprep.subr.bf16.mxu0 0
    %7965 = vmatpush1.bf16.msra.mxu0 0
    %7966 = vmatprep.subr.bf16.mxu0 0
    %7967 = vmatpush1.bf16.msra.mxu0 0
    %7968 = vmatprep.subr.bf16.mxu0 0
    %7969 = vmatpush1.bf16.msra.mxu0 0
    %7970 = vmatprep.subr.bf16.mxu0 0
    %7971 = vmatpush1.bf16.msra.mxu0 0
    %7972 = vmatprep.subr.bf16.mxu0 0
    %7973 = vmatpush1.bf16.msra.mxu0 0
    %7974 = vmatprep.subr.bf16.mxu0 0
    %7975 = vmatpush1.bf16.msra.mxu0 0
    %7976 = vmatprep.subr.bf16.mxu0 0
    %7977 = vmatpush1.bf16.msra.mxu0 0
    %7978 = vmatprep.subr.bf16.mxu0 0
    %7979 = vmatpush1.bf16.msra.mxu0 0
    %7980 = vmatprep.subr.bf16.mxu0 0
    %7981 = vmatpush1.bf16.msra.mxu0 0
    %7982 = vmatprep.subr.bf16.mxu0 0
    %7983 = vmatpush1.bf16.msra.mxu0 0
    %7984 = vmatprep.subr.bf16.mxu0 0
    %7985 = vmatpush1.bf16.msra.mxu0 0
    %7986 = vmatprep.subr.bf16.mxu0 0
    %7987 = vmatpush1.bf16.msra.mxu0 0
    %7988 = vmatprep.subr.bf16.mxu0 0
    %7989 = vmatpush1.bf16.msra.mxu0 0
    %7990 = vmatprep.subr.bf16.mxu0 0
    %7991 = vmatpush1.bf16.msra.mxu0 0
    %7992 = vmatprep.mubr.bf16.mxu0 0
    %7993 = vmatmul.mubr.bf16.gmra.mrb[0].mxu0 %v7955
    %v7994 = vpop.f32.mrb[0].mxu0
    %v7995 = vadd.f32 0.0, %v7994
    %v7996 = vpop.f32.mrb[0].mxu0
    %v7997 = vpop.f32.mrb[0].mxu0
    %v7998 = vpop.f32.mrb[0].mxu0
    %7999 = vdwg.mxu0
    %8001 = vrot.lane.b32.xlu0 %v7719, 8
    %v8002 = vpop.permute.xlu0 %8001
    %8005 = vrot.lane.b32.xlu0 %v7765, 16
    %v8006 = vpop.permute.xlu0 %8005
    %8009 = vrot.lane.b32.xlu0 %v7811, 24
    %v8010 = vpop.permute.xlu0 %8009
    %v8012 = vsel %vm374, %v7673, %v8002
    %v8013 = vsel %vm1229, %v8012, %v8006
    %v8014 = vsel %vm1231, %v8013, %v8010
    %8016 = vrot.lane.b32.xlu0 %v7903, 8
    %v8017 = vpop.permute.xlu0 %8016
    %8020 = vrot.lane.b32.xlu0 %v7949, 16
    %v8021 = vpop.permute.xlu0 %8020
    %8024 = vrot.lane.b32.xlu0 %v7995, 24
    %v8025 = vpop.permute.xlu0 %8024
    %v8027 = vsel %vm374, %v7857, %v8017
    %v8028 = vsel %vm1229, %v8027, %v8021
    %v8029 = vsel %vm1231, %v8028, %v8025
    %v8030 = vpack.c.bf16 %v8029, %v8014
    %v8031 = vlaneseq
    %v8032 = vshrl.u32 %v8031, 7
    %v8033 = vsub.s32 0, %v8032
    %v8034 = vrot.slane %v6906, %v8033
    %v8039 = vunpack.c.l.b16 %v6899
    %v8040 = vunpack.c.l.b16 %v6900
    %v8041 = vunpack.c.l.b16 %v6901
    %v8042 = vunpack.c.l.b16 %v6902
    %v8043 = vpack.c.b16 %v8040, %v8039
    %v8044 = vpack.c.b16 %v8042, %v8041
    %v8048 = vsel %vm139, %v8030, 0
    %8050 = vmatprep.subr.bf16.mxu0 0
    %8051 = vmatpush1.bf16.msra.mxu0 %v8043
    %8052 = vmatprep.subr.bf16.mxu0 0
    %8053 = vmatpush1.bf16.msra.mxu0 %v8044
    %8054 = vmatprep.subr.bf16.mxu0 0
    %8055 = vmatpush1.bf16.msra.mxu0 0
    %8056 = vmatprep.subr.bf16.mxu0 0
    %8057 = vmatpush1.bf16.msra.mxu0 0
    %8058 = vmatprep.subr.bf16.mxu0 0
    %8059 = vmatpush1.bf16.msra.mxu0 0
    %8060 = vmatprep.subr.bf16.mxu0 0
    %8061 = vmatpush1.bf16.msra.mxu0 0
    %8062 = vmatprep.subr.bf16.mxu0 0
    %8063 = vmatpush1.bf16.msra.mxu0 0
    %8064 = vmatprep.subr.bf16.mxu0 0
    %8065 = vmatpush1.bf16.msra.mxu0 0
    %8066 = vmatprep.subr.bf16.mxu0 0
    %8067 = vmatpush1.bf16.msra.mxu0 0
    %8068 = vmatprep.subr.bf16.mxu0 0
    %8069 = vmatpush1.bf16.msra.mxu0 0
    %8070 = vmatprep.subr.bf16.mxu0 0
    %8071 = vmatpush1.bf16.msra.mxu0 0
    %8072 = vmatprep.subr.bf16.mxu0 0
    %8073 = vmatpush1.bf16.msra.mxu0 0
    %8074 = vmatprep.subr.bf16.mxu0 0
    %8075 = vmatpush1.bf16.msra.mxu0 0
    %8076 = vmatprep.subr.bf16.mxu0 0
    %8077 = vmatpush1.bf16.msra.mxu0 0
    %8078 = vmatprep.subr.bf16.mxu0 0
    %8079 = vmatpush1.bf16.msra.mxu0 0
    %8080 = vmatprep.subr.bf16.mxu0 0
    %8081 = vmatpush1.bf16.msra.mxu0 0
    %8082 = vmatprep.mubr.bf16.mxu0 0
    %8083 = vmatmul.mubr.bf16.gmra.mrb[0].mxu0 %v8048
    %v8084 = vpop.f32.mrb[0].mxu0
    %v8085 = vadd.f32 %v8034, %v8084
    %v8086 = vpop.f32.mrb[0].mxu0
    %v8087 = vpop.f32.mrb[0].mxu0
    %v8088 = vadd.f32 %v8034, %v8087
    %v8089 = vpop.f32.mrb[0].mxu0
    %8090 = vdwg.mxu0
    %v8091 = vadd.f32 %v6884, %v8085
    %v8092 = vadd.f32 %v6885, %v8088
    %v8093 = vsel %vm139, %v8091, 0.0
    %8094 = vadd.xlane.f32.xlu0 %v8093
    %v8095 = vpop.xlane.xlu0 %8094
    %v8096 = vsel %vm139, %v8092, 0.0
    %8097 = vadd.xlane.f32.xlu0 %v8096
    %v8098 = vpop.xlane.xlu0 %8097
    %v8099 = vmul.f32 %v8095, %v1317
    %v8100 = vmul.f32 %v8098, %v1317
    %v8101 = vsub.f32 %v8091, %v8099
    %v8102 = vsub.f32 %v8092, %v8100
    %v8103 = vmul.f32 %v8101, %v8101
    %v8104 = vmul.f32 %v8102, %v8102
    %v8105 = vsel %vm139, %v8103, 0.0
    %8106 = vadd.xlane.f32.xlu0 %v8105
    %v8107 = vpop.xlane.xlu0 %8106
    %v8108 = vsel %vm139, %v8104, 0.0
    %8109 = vadd.xlane.f32.xlu0 %v8108
    %v8110 = vpop.xlane.xlu0 %8109
    %v8111 = vmul.f32 %v8107, %v1317
    %v8112 = vmul.f32 %v8110, %v1317
    %v8113 = vadd.f32 %v8111, 1e-05
    %v8114 = vadd.f32 %v8112, 1e-05
    %v8115 = vrsqrt.pop %v8113
    %v8116 = vrsqrt.pop %v8114
    %v8117 = vmul.f32 %v8101, %v8115
    %v8118 = vmul.f32 %v8102, %v8116
    %v8119 = vlaneseq
    %v8120 = vshrl.u32 %v8119, 7
    %v8121 = vsub.s32 0, %v8120
    %v8122 = vrot.slane %v6907, %v8121
    %v8123 = vmul.f32 %v8117, %v8122
    %v8124 = vmul.f32 %v8118, %v8122
    %v8125 = vlaneseq
    %v8126 = vshrl.u32 %v8125, 7
    %v8127 = vsub.s32 0, %v8126
    %v8128 = vrot.slane %v6908, %v8127
    %v8129 = vadd.f32 %v8123, %v8128
    %v8130 = vadd.f32 %v8124, %v8128
    %s8131 = scalar_lea.vmem %s7, 32
    %v8132 = vld [vmem:[%s8131] sm:$0xf]
    %v8133 = vld [vmem:[%s8131 + $0x4] sm:$0xf]
    %v8134 = vld [vmem:[%s8131 + $0x8] sm:$0xf]
    %v8135 = vld [vmem:[%s8131 + $0xc] sm:$0xf]
    %v8136 = vld [vmem:[%s8131 + $0x10] sm:$0xf]
    %v8137 = vld [vmem:[%s8131 + $0x14] sm:$0xf]
    %v8138 = vld [vmem:[%s8131 + $0x18] sm:$0xf]
    %v8139 = vld [vmem:[%s8131 + $0x1c] sm:$0xf]
    %s8140 = scalar_lea.vmem %s9, 1
    %v8141 = vld [vmem:[%s8140] sm:$0x1]
    %v8142 = vld [vmem:[%s5657 + $0xc] sm:$0x1]
    %v8143 = vld [vmem:[%s5657 + $0xd] sm:$0x1]
    %v8144 = vld [vmem:[%s5657 + $0xe] sm:$0x1]
    %v8145 = vpack.c.bf16 %v8130, %v8129
    %v8147 = vlaneseq
    %v8148 = vshrl.u32 %v8147, 7
    %v8149 = vsub.s32 0, %v8148
    %v8150 = vrot.slane %v8141, %v8149
    %v8156 = vunpack.c.l.b16 %v8132
    %v8157 = vunpack.c.l.b16 %v8133
    %v8158 = vunpack.c.l.b16 %v8134
    %v8159 = vunpack.c.l.b16 %v8135
    %v8160 = vpack.c.b16 %v8157, %v8156
    %v8161 = vpack.c.b16 %v8159, %v8158
    %v8165 = vsel %vm139, %v8145, 0
    %8167 = vmatprep.subr.bf16.mxu0 0
    %8168 = vmatpush1.bf16.msra.mxu0 %v8160
    %8169 = vmatprep.subr.bf16.mxu0 0
    %8170 = vmatpush1.bf16.msra.mxu0 %v8161
    %8171 = vmatprep.subr.bf16.mxu0 0
    %8172 = vmatpush1.bf16.msra.mxu0 0
    %8173 = vmatprep.subr.bf16.mxu0 0
    %8174 = vmatpush1.bf16.msra.mxu0 0
    %8175 = vmatprep.subr.bf16.mxu0 0
    %8176 = vmatpush1.bf16.msra.mxu0 0
    %8177 = vmatprep.subr.bf16.mxu0 0
    %8178 = vmatpush1.bf16.msra.mxu0 0
    %8179 = vmatprep.subr.bf16.mxu0 0
    %8180 = vmatpush1.bf16.msra.mxu0 0
    %8181 = vmatprep.subr.bf16.mxu0 0
    %8182 = vmatpush1.bf16.msra.mxu0 0
    %8183 = vmatprep.subr.bf16.mxu0 0
    %8184 = vmatpush1.bf16.msra.mxu0 0
    %8185 = vmatprep.subr.bf16.mxu0 0
    %8186 = vmatpush1.bf16.msra.mxu0 0
    %8187 = vmatprep.subr.bf16.mxu0 0
    %8188 = vmatpush1.bf16.msra.mxu0 0
    %8189 = vmatprep.subr.bf16.mxu0 0
    %8190 = vmatpush1.bf16.msra.mxu0 0
    %8191 = vmatprep.subr.bf16.mxu0 0
    %8192 = vmatpush1.bf16.msra.mxu0 0
    %8193 = vmatprep.subr.bf16.mxu0 0
    %8194 = vmatpush1.bf16.msra.mxu0 0
    %8195 = vmatprep.subr.bf16.mxu0 0
    %8196 = vmatpush1.bf16.msra.mxu0 0
    %8197 = vmatprep.subr.bf16.mxu0 0
    %8198 = vmatpush1.bf16.msra.mxu0 0
    %8199 = vmatprep.mubr.bf16.mxu0 0
    %8200 = vmatmul.mubr.bf16.gmra.mrb[0].mxu0 %v8165
    %v8201 = vpop.f32.mrb[0].mxu0
    %v8202 = vadd.f32 %v8150, %v8201
    %v8203 = vpop.f32.mrb[0].mxu0
    %v8204 = vpop.f32.mrb[0].mxu0
    %v8205 = vadd.f32 %v8150, %v8204
    %v8206 = vpop.f32.mrb[0].mxu0
    %8207 = vdwg.mxu0
    %v8208 = vmax.f32 %v8202, 0.0
    %v8209 = vmax.f32 %v8205, 0.0
    %v8210 = vpack.c.bf16 %v8209, %v8208
    %v8211 = vlaneseq
    %v8212 = vshrl.u32 %v8211, 7
    %v8213 = vsub.s32 0, %v8212
    %v8214 = vrot.slane %v8142, %v8213
    %v8219 = vunpack.c.l.b16 %v8136
    %v8220 = vunpack.c.l.b16 %v8137
    %v8221 = vunpack.c.l.b16 %v8138
    %v8222 = vunpack.c.l.b16 %v8139
    %v8223 = vpack.c.b16 %v8220, %v8219
    %v8224 = vpack.c.b16 %v8222, %v8221
    %v8226 = vsel %vm1442, %v8210, 0
    %v8229 = vsel %vm1442, %v8223, 0
    %v8232 = vsel %vm1442, %v8224, 0
    %8234 = vmatprep.subr.bf16.mxu0 0
    %8235 = vmatpush1.bf16.xpose.msra.mxu0 %v8229
    %8236 = vmatprep.subr.bf16.mxu0 0
    %8237 = vmatpush1.bf16.xpose.msra.mxu0 %v8232
    %8238 = vmatprep.subr.bf16.mxu0 0
    %8239 = vmatpush1.bf16.xpose.msra.mxu0 0
    %8240 = vmatprep.subr.bf16.mxu0 0
    %8241 = vmatpush1.bf16.xpose.msra.mxu0 0
    %8242 = vmatprep.subr.bf16.mxu0 0
    %8243 = vmatpush1.bf16.xpose.msra.mxu0 0
    %8244 = vmatprep.subr.bf16.mxu0 0
    %8245 = vmatpush1.bf16.xpose.msra.mxu0 0
    %8246 = vmatprep.subr.bf16.mxu0 0
    %8247 = vmatpush1.bf16.xpose.msra.mxu0 0
    %8248 = vmatprep.subr.bf16.mxu0 0
    %8249 = vmatpush1.bf16.xpose.msra.mxu0 0
    %8250 = vmatprep.subr.bf16.mxu0 0
    %8251 = vmatpush1.bf16.xpose.msra.mxu0 0
    %8252 = vmatprep.subr.bf16.mxu0 0
    %8253 = vmatpush1.bf16.xpose.msra.mxu0 0
    %8254 = vmatprep.subr.bf16.mxu0 0
    %8255 = vmatpush1.bf16.xpose.msra.mxu0 0
    %8256 = vmatprep.subr.bf16.mxu0 0
    %8257 = vmatpush1.bf16.xpose.msra.mxu0 0
    %8258 = vmatprep.subr.bf16.mxu0 0
    %8259 = vmatpush1.bf16.xpose.msra.mxu0 0
    %8260 = vmatprep.subr.bf16.mxu0 0
    %8261 = vmatpush1.bf16.xpose.msra.mxu0 0
    %8262 = vmatprep.subr.bf16.mxu0 0
    %8263 = vmatpush1.bf16.xpose.msra.mxu0 0
    %8264 = vmatprep.subr.bf16.mxu0 0
    %8265 = vmatpush1.bf16.xpose.msra.mxu0 0
    %8266 = vmatprep.mubr.bf16.mxu0 0
    %8267 = vmatmul.mubr.bf16.gmra.mrb[0].mxu0 %v8226
    %v8268 = vpop.f32.mrb[0].mxu0
    %v8269 = vadd.f32 %v8214, %v8268
    %v8270 = vpop.f32.mrb[0].mxu0
    %v8271 = vpop.f32.mrb[0].mxu0
    %v8272 = vadd.f32 %v8214, %v8271
    %v8273 = vpop.f32.mrb[0].mxu0
    %8274 = vdwg.mxu0
    %v8275 = vadd.f32 %v8129, %v8269
    %v8276 = vadd.f32 %v8130, %v8272
    %v8277 = vsel %vm139, %v8275, 0.0
    %8278 = vadd.xlane.f32.xlu0 %v8277
    %v8279 = vpop.xlane.xlu0 %8278
    %v8280 = vsel %vm139, %v8276, 0.0
    %8281 = vadd.xlane.f32.xlu0 %v8280
    %v8282 = vpop.xlane.xlu0 %8281
    %v8283 = vmul.f32 %v8279, %v1317
    %v8284 = vmul.f32 %v8282, %v1317
    %v8285 = vsub.f32 %v8275, %v8283
    %v8286 = vsub.f32 %v8276, %v8284
    %v8287 = vmul.f32 %v8285, %v8285
    %v8288 = vmul.f32 %v8286, %v8286
    %v8289 = vsel %vm139, %v8287, 0.0
    %8290 = vadd.xlane.f32.xlu0 %v8289
    %v8291 = vpop.xlane.xlu0 %8290
    %v8292 = vsel %vm139, %v8288, 0.0
    %8293 = vadd.xlane.f32.xlu0 %v8292
    %v8294 = vpop.xlane.xlu0 %8293
    %v8295 = vmul.f32 %v8291, %v1317
    %v8296 = vmul.f32 %v8294, %v1317
    %v8297 = vadd.f32 %v8295, 1e-05
    %v8298 = vadd.f32 %v8296, 1e-05
    %v8299 = vrsqrt.pop %v8297
    %v8300 = vrsqrt.pop %v8298
    %v8301 = vmul.f32 %v8285, %v8299
    %v8302 = vmul.f32 %v8286, %v8300
    %v8303 = vlaneseq
    %v8304 = vshrl.u32 %v8303, 7
    %v8305 = vsub.s32 0, %v8304
    %v8306 = vrot.slane %v8143, %v8305
    %v8307 = vmul.f32 %v8301, %v8306
    %v8308 = vmul.f32 %v8302, %v8306
    %v8309 = vlaneseq
    %v8310 = vshrl.u32 %v8309, 7
    %v8311 = vsub.s32 0, %v8310
    %v8312 = vrot.slane %v8144, %v8311
    %v8313 = vadd.f32 %v8307, %v8312
    %v8314 = vadd.f32 %v8308, %v8312
    %8315 = vst.msk [vmem:[#allocation10] sm:$0xff] %vm139, %v8313
    %8316 = vst.msk [vmem:[#allocation10 + $0x8] sm:$0xff] %vm139, %v8314
    // Predicated region
    $region58: #{tpu_custom_call.1} parent=1 // pred_check
      _
    $region59: #{tpu_custom_call.1} parent=1 // pred_check_branch
      %8318 = sbr.rel (0) target = $region61
    $region60: #{tpu_custom_call.1} parent=1 // pred_region
      %s8320 = ssub.s32 256, 256
      %8321 = vsyncadd [#allocation4], %s8320
      %s8322 = sshll.u32 [#allocation10], 4
      %s8323 = int_to_ptr.vmem [resolvable:$true] %s8322
      %8328 = dma.vmem_to_hbm [thread:$0]  %s8323, 256, %s10, [#allocation4], 128, 128, 8
    $region61: #{tpu_custom_call.1} parent=1 // pred_fallthru
      _
    // Predicated region
    $region62: #{tpu_custom_call.1} parent=1 // pred_check
      _
    $region63: #{tpu_custom_call.1} parent=1 // pred_check_branch
      %8330 = sbr.rel (0) target = $region65
    $region64: #{tpu_custom_call.1} parent=1 // pred_region
      %8331 = dma.done [#allocation4], 256
    $region65: #{tpu_custom_call.1} parent=1 // pred_fallthru
      _
    %8332 = vsyncpa [#allocation3], 1
    %8333 = vsyncpa [#allocation6], 1
    %8334 = vsyncpa [#allocation9], 1
    %8335 = vsyncpa [#allocation4], 1

</llo_original>
